<compile_context>
chip_gen: v6e
topology: v6e:2x2x1
jax: 0.10.0
libtpu: 0.0.40
codegen_flags: <defaults>
</compile_context>

<pallas_src>
import functools
import math

import jax
import jax.numpy as jnp
from jax.experimental import pallas as pl
from jax.experimental.pallas import tpu as pltpu

# ---- model hyper-params (small, consistent with the module) -----------------
D_MODEL = 32       # = qc = kc
NHEAD = 4
HEAD_DIM = D_MODEL // NHEAD
D_FFN = 64
DEPTH = 1
LN_EPS = 1e-5
MASK_NEG = -1e30   # finite "negative infinity" for the additive key mask
TARGET_ROWS = 256  # ~rows per grid step; keeps scores vreg pressure moderate

_KERNEL_WEIGHT_ORDER = (
    "sa_wqkv", "sa_bqkv", "sa_wo", "sa_vec",
    "ca_wqkv", "ca_bqkv", "ca_wo", "ca_vec",
    "ffn_w1", "ffn_b1", "ffn_w2", "ffn_vec",
)


# ---- shared in-kernel math ---------------------------------------------------
def _layernorm(x, w, b):
    # x: (M, E) f32, w/b: (1, E)
    mean = jnp.mean(x, axis=-1, keepdims=True)
    var = jnp.mean((x - mean) ** 2, axis=-1, keepdims=True)
    return (x - mean) * jax.lax.rsqrt(var + LN_EPS) * w + b


def _attn_block(xq, xkv, b, lq, lk, amask,
                wqkv_ref, bqkv_ref, wo_ref, vec_ref, d, nhead):
    """y = LayerNorm(xq + OutProj(MHA(xq, xkv, xkv, additive key mask))).

    xq:  (B_blk*lq, E) flat slab; xkv: (B_blk*lk, E) flat slab.
    amask: None or (B_blk, lq, lk) additive mask (already broadcast).
    wqkv_ref: (depth, 3, H, E, dh) with Q pre-scaled by 1/sqrt(dh).
    bqkv_ref: (depth, 3, H, 1, dh); wo_ref: (depth, H, dh, E); vec_ref: (depth, 3, E).
    """
    e = xq.shape[-1]
    dh = e // nhead
    contribs = []
    for h in range(nhead):                       # static unroll; nhead = 4
        # Per-head projections through pre-split weights: results land at lane
        # 0 (no sub-vreg lane extracts); cross-attn applies Q only to xq and
        # K/V only to xkv (no discarded projection slabs).
        q = jnp.dot(xq, wqkv_ref[d, 0, h], preferred_element_type=jnp.float32)
        q = q + bqkv_ref[d, 0, h]                # Q weight/bias pre-scaled
        k = jnp.dot(xkv, wqkv_ref[d, 1, h], preferred_element_type=jnp.float32)
        k = k + bqkv_ref[d, 1, h]
        v = jnp.dot(xkv, wqkv_ref[d, 2, h], preferred_element_type=jnp.float32)
        v = v + bqkv_ref[d, 2, h]

        q3 = q.reshape(b, lq, dh)                # layout-preserving leading split
        k3 = k.reshape(b, lk, dh)
        v3 = v.reshape(b, lk, dh)

        # Contract over dh via dimension numbers: no explicit K transpose (XLU).
        s = jnp.einsum('bqd,bkd->bqk', q3, k3,
                       preferred_element_type=jnp.float32)     # (B, lq, lk)
        if amask is not None:
            s = s + amask
        s = s - jnp.max(s, axis=-1, keepdims=True)
        p = jnp.exp(s)
        p = p * pl.reciprocal(jnp.sum(p, axis=-1, keepdims=True), approx=True)
        ho = jnp.einsum('bqk,bkd->bqd', p, v3,
                        preferred_element_type=jnp.float32)    # (B, lq, dh)
        # Project through this head's out-proj row block (no head concat).
        contribs.append(jnp.dot(ho.reshape(b * lq, dh), wo_ref[d, h],
                                preferred_element_type=jnp.float32))

    # Tree-reassociated head sum: (c0+c1)+(c2+c3) shortens the pop->add chain.
    while len(contribs) > 1:
        contribs = [contribs[i] + contribs[i + 1] if i + 1 < len(contribs)
                    else contribs[i] for i in range(0, len(contribs), 2)]

    vec = vec_ref[d]                              # (3, E): [out_bias, ln_w, ln_b]
    y = xq + contribs[0] + vec[0:1, :]
    return _layernorm(y, vec[1:2, :], vec[2:3, :])


def _ffn_block(x, w1_ref, b1_ref, w2_ref, vec_ref, d):
    """y = LayerNorm(x + Linear2(relu(Linear1(x))))."""
    h = jnp.dot(x, w1_ref[d], preferred_element_type=jnp.float32) + b1_ref[d]
    h = jnp.maximum(h, 0.0)
    vec = vec_ref[d]
    o = jnp.dot(h, w2_ref[d], preferred_element_type=jnp.float32) + vec[0:1, :]
    return _layernorm(x + o, vec[1:2, :], vec[2:3, :])


# ---- fused kernel: whole forward pass for B_blk batch elements ----------------
def _fused_kernel(*refs, depth, nhead, b_blk, seq_q, seq_k, has_mask):
    i = 0
    x_ref = refs[i]; i += 1
    kv_ref = refs[i]; i += 1
    mask_ref = None
    if has_mask:
        mask_ref = refs[i]; i += 1
    (sa_wqkv, sa_bqkv, sa_wo, sa_vec,
     ca_wqkv, ca_bqkv, ca_wo, ca_vec,
     ffn_w1, ffn_b1, ffn_w2, ffn_vec,
     out_ref) = refs[i:]

    x = x_ref[...].astype(jnp.float32)        # (B_blk*L, E) flat slab
    kvx = kv_ref[...].astype(jnp.float32)     # (B_blk*S, E) flat slab
    amask = None
    if has_mask:
        # Hoist the (B,1,S)->(B,L,S) broadcast once (not per head / per layer).
        amask = jnp.broadcast_to(mask_ref[...], (b_blk, seq_q, seq_k))

    # depth == 1 here; static unroll keeps the body compact.
    # TODO(synk): switch to lax.fori_loop over d (dynamic ref[d]) if depth > ~2.
    for d in range(depth):
        # self-attention (no key padding mask on this path)
        x = _attn_block(x, x, b_blk, seq_q, seq_q, None,
                        sa_wqkv, sa_bqkv, sa_wo, sa_vec, d, nhead)
        # cross-attention (key_padding_mask only here)
        x = _attn_block(x, kvx, b_blk, seq_q, seq_k, amask,
                        ca_wqkv, ca_bqkv, ca_wo, ca_vec, d, nhead)
        # FFN
        x = _ffn_block(x, ffn_w1, ffn_b1, ffn_w2, ffn_vec, d)

    out_ref[...] = x.astype(out_ref.dtype)    # one contiguous (B_blk*L, E) store


# ---- batch-block selection -----------------------------------------------------
def _choose_batch_block(n, rows_per_elem, target_rows=TARGET_ROWS):
    """Largest divisor of n giving ~target_rows rows/step while keeping >=2 grid
    steps when n >= 2 (so both v7x TensorCores get work)."""
    want = max(1, target_rows // max(rows_per_elem, 1))
    cap = max(1, n // 2) if n >= 2 else 1
    upper = max(1, min(want, cap))
    best = 1
    for b in range(1, upper + 1):
        if n % b == 0:
            best = b
    return best


# ---- pallas_call wrapper --------------------------------------------------------
def _fused_forward(x, kvx, kparams, add_mask):
    """x: (N, L, E), kvx: (N, S, E), add_mask: None or (N, 1, S) additive f32."""
    n, l, e = x.shape
    s = kvx.shape[1]
    depth = kparams["sa_wqkv"].shape[0]
    b_blk = _choose_batch_block(n, l)
    grid = n // b_blk
    has_mask = add_mask is not None

    x_flat = x.reshape(n * l, e)              # wrapper-side flatten (no in-kernel relayout)
    kv_flat = kvx.reshape(n * s, e)

    kernel = functools.partial(_fused_kernel, depth=depth, nhead=NHEAD,
                               b_blk=b_blk, seq_q=l, seq_k=s, has_mask=has_mask)

    in_specs = [
        pl.BlockSpec((b_blk * l, e), lambda b: (b, 0)),
        pl.BlockSpec((b_blk * s, e), lambda b: (b, 0)),
    ]
    args = [x_flat, kv_flat]
    if has_mask:
        in_specs.append(pl.BlockSpec((b_blk, 1, s), lambda b: (b, 0, 0)))
        args.append(add_mask)
    for name in _KERNEL_WEIGHT_ORDER:
        w = kparams[name]
        in_specs.append(pl.BlockSpec(w.shape, lambda b, _nd=w.ndim: (0,) * _nd))
        args.append(w)

    out_flat = pl.pallas_call(
        kernel,
        out_shape=jax.ShapeDtypeStruct((n * l, e), x.dtype),
        grid=(grid,),
        in_specs=in_specs,
        out_specs=pl.BlockSpec((b_blk * l, e), lambda b: (b, 0)),
        compiler_params=pltpu.CompilerParams(
            dimension_semantics=("parallel",)),   # v7x: 2 TCs split the grid
    )(*args)
    return out_flat.reshape(n, l, e)


# ---- host-side parameter prep (per-head split, scale folding) -------------------
def _prepare_kernel_params(params):
    """Natural (PyTorch-like) params -> kernel layout.

    wqkv (depth, E, 3E)  -> (depth, 3, H, E, dh)  [Q pre-scaled by 1/sqrt(dh)]
    bqkv (depth, 1, 3E)  -> (depth, 3, H, 1, dh)  [Q bias pre-scaled]
    wo   (depth, E, E)   -> (depth, H, dh, E)     [per-head out-proj row blocks]
    """
    depth, e, _ = params["sa_wqkv"].shape
    h = NHEAD
    dh = e // h
    scale = 1.0 / math.sqrt(dh)

    def prep(wqkv, bqkv, wo):
        w = wqkv.reshape(depth, e, 3, h, dh).transpose(0, 2, 3, 1, 4)
        bb = bqkv.reshape(depth, 1, 3, h, dh).transpose(0, 2, 3, 1, 4)
        w = w.at[:, 0].multiply(scale)
        bb = bb.at[:, 0].multiply(scale)
        wo_h = wo.reshape(depth, h, dh, e)
        return w, bb, wo_h

    kp = {}
    kp["sa_wqkv"], kp["sa_bqkv"], kp["sa_wo"] = prep(
        params["sa_wqkv"], params["sa_bqkv"], params["sa_wo"])
    kp["ca_wqkv"], kp["ca_bqkv"], kp["ca_wo"] = prep(
        params["ca_wqkv"], params["ca_bqkv"], params["ca_wo"])
    kp["sa_vec"] = params["sa_vec"]
    kp["ca_vec"] = params["ca_vec"]
    for name in ("ffn_w1", "ffn_b1", "ffn_w2", "ffn_vec"):
        kp[name] = params[name]
    return kp


def _flatten_inputs(q, kv, mask):
    qn, qc, qh_, qw_ = q.shape
    kn, kc, kh_, kw_ = kv.shape
    L = qh_ * qw_
    S = kh_ * kw_
    x = q.reshape(qn, qc, L).transpose(0, 2, 1)        # (N, L, E)
    kvx = kv.reshape(kn, kc, S).transpose(0, 2, 1)     # (N, S, E)
    add_mask = None
    if mask is not None:
        add_mask = jnp.where(mask.reshape(kn, 1, S), MASK_NEG, 0.0).astype(jnp.float32)
    return x, kvx, add_mask


@jax.jit
def mask_guide_attention(q, kv, params, mask=None):
    """q: (qn, qc, qh, qw), kv: (kn, kc, kh, kw) NCHW;
    mask: optional (kn, kh*kw) bool key_padding_mask (True = ignore)."""
    qn, qc, qh_, qw_ = q.shape
    x, kvx, add_mask = _flatten_inputs(q, kv, mask)
    kparams = _prepare_kernel_params(params)   # tiny reshapes; hoist out of jit in prod
    out = _fused_forward(x, kvx, kparams, add_mask)
    return out.transpose(0, 2, 1).reshape(qn, qc, qh_, qw_)


# ---- pure-JAX reference (same math, natural params, no Pallas) -------------------
def _reference_forward(x, kvx, params, add_mask):
    depth = params["sa_wqkv"].shape[0]
    nhead = NHEAD

    def ln(y, w, b):
        m = jnp.mean(y, -1, keepdims=True)
        v = jnp.mean((y - m) ** 2, -1, keepdims=True)
        return (y - m) * jax.lax.rsqrt(v + LN_EPS) * w + b

    def attn(xq, xkv, wqkv, wo, bqkv, vec, amask):
        E = xq.shape[-1]
        dh = E // nhead
        qkv_q = xq @ wqkv + bqkv
        qkv_k = xkv @ wqkv + bqkv
        q = qkv_q[..., :E]
        k = qkv_k[..., E:2 * E]
        v = qkv_k[..., 2 * E:]
        N, L, _ = q.shape
        S = k.shape[1]
        qh = q.reshape(N, L, nhead, dh).transpose(0, 2, 1, 3)
        kh = k.reshape(N, S, nhead, dh).transpose(0, 2, 1, 3)
        vh = v.reshape(N, S, nhead, dh).transpose(0, 2, 1, 3)
        logits = jnp.einsum("nhld,nhsd->nhls", qh, kh) / math.sqrt(dh)
        if amask is not None:
            logits = logits + amask[:, None, :, :]
        p = jax.nn.softmax(logits, axis=-1)
        o = jnp.einsum("nhls,nhsd->nhld", p, vh).transpose(0, 2, 1, 3).reshape(N, L, E)
        o = o @ wo + vec[0]
        return ln(xq + o, vec[1], vec[2])

    def ffn(xin, w1, b1, w2, vec):
        h = jnp.maximum(xin @ w1 + b1, 0.0)
        o = h @ w2 + vec[0]
        return ln(xin + o, vec[1], vec[2])

    out = x
    for i in range(depth):
        out = attn(out, out, params["sa_wqkv"][i], params["sa_wo"][i],
                   params["sa_bqkv"][i], params["sa_vec"][i], None)
        out = attn(out, kvx, params["ca_wqkv"][i], params["ca_wo"][i],
                   params["ca_bqkv"][i], params["ca_vec"][i], add_mask)
        out = ffn(out, params["ffn_w1"][i], params["ffn_b1"][i],
                  params["ffn_w2"][i], params["ffn_vec"][i])
    return out


@jax.jit
def mask_guide_attention_reference(q, kv, params, mask=None):
    qn, qc, qh_, qw_ = q.shape
    x, kvx, add_mask = _flatten_inputs(q, kv, mask)
    out = _reference_forward(x, kvx, params, add_mask)
    return out.transpose(0, 2, 1).reshape(qn, qc, qh_, qw_)


# ---- parameter init (deterministic, xavier-uniform like the module) --------------
def _xavier(key, shape):
    fan_in, fan_out = shape
    limit = math.sqrt(6.0 / (fan_in + fan_out))
    return jax.random.uniform(key, shape, jnp.float32, -limit, limit)


def init_params(key, d_model, d_ffn, depth):
    E, F = d_model, d_ffn
    attn_vec = jnp.concatenate([jnp.zeros((1, E), jnp.float32),   # out-proj bias
                                jnp.ones((1, E), jnp.float32),    # ln weight
                                jnp.zeros((1, E), jnp.float32)],  # ln bias
                               axis=0)
    ffn_vec = attn_vec                                            # [b2, ln_w, ln_b]
    layers = []
    for i in range(depth):
        k = jax.random.fold_in(key, i)
        k_sa1, k_sa2, k_ca1, k_ca2, k_f1, k_f2 = jax.random.split(k, 6)
        layers.append(dict(
            sa_wqkv=_xavier(k_sa1, (E, 3 * E)),
            sa_wo=_xavier(k_sa2, (E, E)),
            sa_bqkv=jnp.zeros((1, 3 * E), jnp.float32),
            sa_vec=attn_vec,
            ca_wqkv=_xavier(k_ca1, (E, 3 * E)),
            ca_wo=_xavier(k_ca2, (E, E)),
            ca_bqkv=jnp.zeros((1, 3 * E), jnp.float32),
            ca_vec=attn_vec,
            ffn_w1=_xavier(k_f1, (E, F)),
            ffn_b1=jnp.zeros((1, F), jnp.float32),
            ffn_w2=_xavier(k_f2, (F, E)),
            ffn_vec=ffn_vec,
        ))
    # stack over depth so the kernel operand count is independent of depth
    return {name: jnp.stack([lyr[name] for lyr in layers], axis=0)
            for name in layers[0]}


# ---- main -------------------------------------------------------------------------
if __name__ == "__main__":
    key = jax.random.PRNGKey(0)
    k_q, k_kv, k_p, k_q8, k_kv8 = jax.random.split(key, 5)

    qn, qc, qh_, qw_ = 2, D_MODEL, 8, 8
    kn, kc, kh_, kw_ = 2, D_MODEL, 8, 8

    q = jax.random.normal(k_q, (qn, qc, qh_, qw_), jnp.float32)
    kv = jax.random.normal(k_kv, (kn, kc, kh_, kw_), jnp.float32)
    params = init_params(k_p, D_MODEL, D_FFN, DEPTH)

    # --- path 1: mask=None (matches the module's default usage), N=2, B_blk=1, grid=2
    out = jax.block_until_ready(mask_guide_attention(q, kv, params, mask=None))
    assert out.shape == (qn, qc, qh_, qw_)
    assert bool(jnp.all(jnp.isfinite(out)))
    ref = mask_guide_attention_reference(q, kv, params, mask=None)
    err = float(jnp.max(jnp.abs(out - ref)))
    assert err < 2e-2, f"no-mask mismatch vs reference: {err}"

    # --- path 2: with a key_padding_mask on the cross-attention ---
    S = kh_ * kw_
    mask = jnp.zeros((kn, S), jnp.bool_).at[1, S // 2:].set(True)
    out_m = jax.block_until_ready(mask_guide_attention(q, kv, params, mask=mask))
    assert bool(jnp.all(jnp.isfinite(out_m)))
    ref_m = mask_guide_attention_reference(q, kv, params, mask=mask)
    err_m = float(jnp.max(jnp.abs(out_m - ref_m)))
    assert err_m < 2e-2, f"masked mismatch vs reference: {err_m}"

    # --- path 3: larger batch exercises batch blocking (N=8 -> B_blk=4, grid=2) ---
    q8 = jax.random.normal(k_q8, (8, qc, qh_, qw_), jnp.float32)
    kv8 = jax.random.normal(k_kv8, (8, kc, kh_, kw_), jnp.float32)
    mask8 = jnp.zeros((8, S), jnp.bool_).at[3, : S // 4].set(True).at[6, S // 2:].set(True)
    out_b = jax.block_until_ready(mask_guide_attention(q8, kv8, params, mask=mask8))
    assert bool(jnp.all(jnp.isfinite(out_b)))
    ref_b = mask_guide_attention_reference(q8, kv8, params, mask=mask8)
    err_b = float(jnp.max(jnp.abs(out_b - ref_b)))
    assert err_b < 2e-2, f"batched mismatch vs reference: {err_b}"

    print("KERNEL_OK")
</pallas_src>

<mosaic_0001>
module attributes {stable_mosaic.version = 11 : i64} {
  func.func @_fused_kernel(%arg0: i32, %arg1: memref<64x32xf32, #tpu.memory_space<vmem>>, %arg2: memref<64x32xf32, #tpu.memory_space<vmem>>, %arg3: memref<1x3x4x32x8xf32, #tpu.memory_space<vmem>>, %arg4: memref<1x3x4x1x8xf32, #tpu.memory_space<vmem>>, %arg5: memref<1x4x8x32xf32, #tpu.memory_space<vmem>>, %arg6: memref<1x3x32xf32, #tpu.memory_space<vmem>>, %arg7: memref<1x3x4x32x8xf32, #tpu.memory_space<vmem>>, %arg8: memref<1x3x4x1x8xf32, #tpu.memory_space<vmem>>, %arg9: memref<1x4x8x32xf32, #tpu.memory_space<vmem>>, %arg10: memref<1x3x32xf32, #tpu.memory_space<vmem>>, %arg11: memref<1x32x64xf32, #tpu.memory_space<vmem>>, %arg12: memref<1x1x64xf32, #tpu.memory_space<vmem>>, %arg13: memref<1x64x32xf32, #tpu.memory_space<vmem>>, %arg14: memref<1x3x32xf32, #tpu.memory_space<vmem>>, %arg15: memref<64x32xf32, #tpu.memory_space<vmem>>) attributes {dimension_semantics = [#tpu.dimension_semantics<parallel>], iteration_bounds = array<i64: 2>, scalar_prefetch = 0 : i64, scratch_operands = 0 : i64, tpu.core_type = #tpu.core_type<tc>, window_params = [{transform_indices = @transform_0, window_bounds = array<i64: 64, 32>}, {transform_indices = @transform_1, window_bounds = array<i64: 64, 32>}, {pipeline_mode = #tpu.pipeline_mode<synchronous>, transform_indices = @transform_2, window_bounds = array<i64: 1, 3, 4, 32, 8>}, {pipeline_mode = #tpu.pipeline_mode<synchronous>, transform_indices = @transform_3, window_bounds = array<i64: 1, 3, 4, 1, 8>}, {pipeline_mode = #tpu.pipeline_mode<synchronous>, transform_indices = @transform_4, window_bounds = array<i64: 1, 4, 8, 32>}, {pipeline_mode = #tpu.pipeline_mode<synchronous>, transform_indices = @transform_5, window_bounds = array<i64: 1, 3, 32>}, {pipeline_mode = #tpu.pipeline_mode<synchronous>, transform_indices = @transform_6, window_bounds = array<i64: 1, 3, 4, 32, 8>}, {pipeline_mode = #tpu.pipeline_mode<synchronous>, transform_indices = @transform_7, window_bounds = array<i64: 1, 3, 4, 1, 8>}, {pipeline_mode = #tpu.pipeline_mode<synchronous>, transform_indices = @transform_8, window_bounds = array<i64: 1, 4, 8, 32>}, {pipeline_mode = #tpu.pipeline_mode<synchronous>, transform_indices = @transform_9, window_bounds = array<i64: 1, 3, 32>}, {pipeline_mode = #tpu.pipeline_mode<synchronous>, transform_indices = @transform_10, window_bounds = array<i64: 1, 32, 64>}, {pipeline_mode = #tpu.pipeline_mode<synchronous>, transform_indices = @transform_11, window_bounds = array<i64: 1, 1, 64>}, {pipeline_mode = #tpu.pipeline_mode<synchronous>, transform_indices = @transform_12, window_bounds = array<i64: 1, 64, 32>}, {pipeline_mode = #tpu.pipeline_mode<synchronous>, transform_indices = @transform_13, window_bounds = array<i64: 1, 3, 32>}, {transform_indices = @transform_14, window_bounds = array<i64: 64, 32>}]} {
    %c0 = arith.constant 0 : index
    %c0_0 = arith.constant 0 : index
    %0 = vector.load %arg1[%c0, %c0_0] : memref<64x32xf32, #tpu.memory_space<vmem>>, vector<64x32xf32>
    %c0_1 = arith.constant 0 : index
    %c0_2 = arith.constant 0 : index
    %1 = vector.load %arg2[%c0_1, %c0_2] : memref<64x32xf32, #tpu.memory_space<vmem>>, vector<64x32xf32>
    %c0_3 = arith.constant 0 : index
    %c0_4 = arith.constant 0 : index
    %c0_5 = arith.constant 0 : index
    %c0_6 = arith.constant 0 : index
    %c0_7 = arith.constant 0 : index
    %2 = vector.load %arg3[%c0_3, %c0_4, %c0_5, %c0_6, %c0_7] : memref<1x3x4x32x8xf32, #tpu.memory_space<vmem>>, vector<1x1x1x32x8xf32>
    %3 = vector.shape_cast %2 : vector<1x1x1x32x8xf32> to vector<32x8xf32>
    %cst = arith.constant dense<0.000000e+00> : vector<64x8xf32>
    %4 = tpu.matmul %0, %3, %cst {dimension_numbers = #tpu.dot_dimension_numbers<[1], [0], [0], [1], [0, 0, 1, 1], [], []>} : vector<64x32xf32>, vector<32x8xf32>, vector<64x8xf32> -> vector<64x8xf32>
    %c0_8 = arith.constant 0 : index
    %c0_9 = arith.constant 0 : index
    %c0_10 = arith.constant 0 : index
    %c0_11 = arith.constant 0 : index
    %c0_12 = arith.constant 0 : index
    %5 = vector.load %arg4[%c0_8, %c0_9, %c0_10, %c0_11, %c0_12] : memref<1x3x4x1x8xf32, #tpu.memory_space<vmem>>, vector<1x1x1x1x8xf32>
    %6 = vector.shape_cast %5 : vector<1x1x1x1x8xf32> to vector<1x8xf32>
    %7 = vector.broadcast %6 : vector<1x8xf32> to vector<64x8xf32>
    %8 = arith.addf %4, %7 : vector<64x8xf32>
    %c0_13 = arith.constant 0 : index
    %c1 = arith.constant 1 : index
    %c0_14 = arith.constant 0 : index
    %c0_15 = arith.constant 0 : index
    %c0_16 = arith.constant 0 : index
    %9 = vector.load %arg3[%c0_13, %c1, %c0_14, %c0_15, %c0_16] : memref<1x3x4x32x8xf32, #tpu.memory_space<vmem>>, vector<1x1x1x32x8xf32>
    %10 = vector.shape_cast %9 : vector<1x1x1x32x8xf32> to vector<32x8xf32>
    %cst_17 = arith.constant dense<0.000000e+00> : vector<64x8xf32>
    %11 = tpu.matmul %0, %10, %cst_17 {dimension_numbers = #tpu.dot_dimension_numbers<[1], [0], [0], [1], [0, 0, 1, 1], [], []>} : vector<64x32xf32>, vector<32x8xf32>, vector<64x8xf32> -> vector<64x8xf32>
    %c0_18 = arith.constant 0 : index
    %c1_19 = arith.constant 1 : index
    %c0_20 = arith.constant 0 : index
    %c0_21 = arith.constant 0 : index
    %c0_22 = arith.constant 0 : index
    %12 = vector.load %arg4[%c0_18, %c1_19, %c0_20, %c0_21, %c0_22] : memref<1x3x4x1x8xf32, #tpu.memory_space<vmem>>, vector<1x1x1x1x8xf32>
    %13 = vector.shape_cast %12 : vector<1x1x1x1x8xf32> to vector<1x8xf32>
    %14 = vector.broadcast %13 : vector<1x8xf32> to vector<64x8xf32>
    %15 = arith.addf %11, %14 : vector<64x8xf32>
    %c0_23 = arith.constant 0 : index
    %c2 = arith.constant 2 : index
    %c0_24 = arith.constant 0 : index
    %c0_25 = arith.constant 0 : index
    %c0_26 = arith.constant 0 : index
    %16 = vector.load %arg3[%c0_23, %c2, %c0_24, %c0_25, %c0_26] : memref<1x3x4x32x8xf32, #tpu.memory_space<vmem>>, vector<1x1x1x32x8xf32>
    %17 = vector.shape_cast %16 : vector<1x1x1x32x8xf32> to vector<32x8xf32>
    %cst_27 = arith.constant dense<0.000000e+00> : vector<64x8xf32>
    %18 = tpu.matmul %0, %17, %cst_27 {dimension_numbers = #tpu.dot_dimension_numbers<[1], [0], [0], [1], [0, 0, 1, 1], [], []>} : vector<64x32xf32>, vector<32x8xf32>, vector<64x8xf32> -> vector<64x8xf32>
    %c0_28 = arith.constant 0 : index
    %c2_29 = arith.constant 2 : index
    %c0_30 = arith.constant 0 : index
    %c0_31 = arith.constant 0 : index
    %c0_32 = arith.constant 0 : index
    %19 = vector.load %arg4[%c0_28, %c2_29, %c0_30, %c0_31, %c0_32] : memref<1x3x4x1x8xf32, #tpu.memory_space<vmem>>, vector<1x1x1x1x8xf32>
    %20 = vector.shape_cast %19 : vector<1x1x1x1x8xf32> to vector<1x8xf32>
    %21 = vector.broadcast %20 : vector<1x8xf32> to vector<64x8xf32>
    %22 = arith.addf %18, %21 : vector<64x8xf32>
    %23 = vector.shape_cast %8 : vector<64x8xf32> to vector<1x64x8xf32>
    %24 = vector.shape_cast %15 : vector<64x8xf32> to vector<1x64x8xf32>
    %25 = vector.shape_cast %22 : vector<64x8xf32> to vector<1x64x8xf32>
    "tpu.trace_start"() <{level = 10 : i32, message = "bqd,bkd->bqk"}> : () -> ()
    %cst_33 = arith.constant dense<0.000000e+00> : vector<1x64x64xf32>
    %26 = tpu.matmul %23, %24, %cst_33 {dimension_numbers = #tpu.dot_dimension_numbers<[2], [2], [1], [1], [0, 0, 0, 1, 1, 1], [0], [0]>} : vector<1x64x8xf32>, vector<1x64x8xf32>, vector<1x64x64xf32> -> vector<1x64x64xf32>
    "tpu.trace_stop"() : () -> ()
    %cst_34 = arith.constant dense<0xFF800000> : vector<1x64xf32>
    %27 = vector.multi_reduction <maximumf>, %26, %cst_34 [2] : vector<1x64x64xf32> to vector<1x64xf32>
    %28 = vector.shape_cast %27 : vector<1x64xf32> to vector<1x64x1xf32>
    %29 = vector.broadcast %28 : vector<1x64x1xf32> to vector<1x64x64xf32>
    %30 = arith.subf %26, %29 : vector<1x64x64xf32>
    %31 = math.exp %30 : vector<1x64x64xf32>
    %cst_35 = arith.constant dense<0.000000e+00> : vector<1x64xf32>
    %32 = vector.multi_reduction <add>, %31, %cst_35 [2] : vector<1x64x64xf32> to vector<1x64xf32>
    %33 = vector.shape_cast %32 : vector<1x64xf32> to vector<1x64x1xf32>
    %34 = tpu.reciprocal %33 {approx = true} : vector<1x64x1xf32> -> vector<1x64x1xf32>
    %35 = vector.broadcast %34 : vector<1x64x1xf32> to vector<1x64x64xf32>
    %36 = arith.mulf %31, %35 : vector<1x64x64xf32>
    "tpu.trace_start"() <{level = 10 : i32, message = "bqk,bkd->bqd"}> : () -> ()
    %cst_36 = arith.constant dense<0.000000e+00> : vector<1x64x8xf32>
    %37 = tpu.matmul %36, %25, %cst_36 {dimension_numbers = #tpu.dot_dimension_numbers<[2], [1], [1], [2], [0, 0, 0, 1, 1, 2], [0], [0]>} : vector<1x64x64xf32>, vector<1x64x8xf32>, vector<1x64x8xf32> -> vector<1x64x8xf32>
    "tpu.trace_stop"() : () -> ()
    %38 = vector.shape_cast %37 : vector<1x64x8xf32> to vector<64x8xf32>
    %c0_37 = arith.constant 0 : index
    %c0_38 = arith.constant 0 : index
    %c0_39 = arith.constant 0 : index
    %c0_40 = arith.constant 0 : index
    %39 = vector.load %arg5[%c0_37, %c0_38, %c0_39, %c0_40] : memref<1x4x8x32xf32, #tpu.memory_space<vmem>>, vector<1x1x8x32xf32>
    %40 = vector.shape_cast %39 : vector<1x1x8x32xf32> to vector<8x32xf32>
    %cst_41 = arith.constant dense<0.000000e+00> : vector<64x32xf32>
    %41 = tpu.matmul %38, %40, %cst_41 {dimension_numbers = #tpu.dot_dimension_numbers<[1], [0], [0], [1], [0, 0, 1, 1], [], []>} : vector<64x8xf32>, vector<8x32xf32>, vector<64x32xf32> -> vector<64x32xf32>
    %c0_42 = arith.constant 0 : index
    %c0_43 = arith.constant 0 : index
    %c1_44 = arith.constant 1 : index
    %c0_45 = arith.constant 0 : index
    %c0_46 = arith.constant 0 : index
    %42 = vector.load %arg3[%c0_42, %c0_43, %c1_44, %c0_45, %c0_46] : memref<1x3x4x32x8xf32, #tpu.memory_space<vmem>>, vector<1x1x1x32x8xf32>
    %43 = vector.shape_cast %42 : vector<1x1x1x32x8xf32> to vector<32x8xf32>
    %cst_47 = arith.constant dense<0.000000e+00> : vector<64x8xf32>
    %44 = tpu.matmul %0, %43, %cst_47 {dimension_numbers = #tpu.dot_dimension_numbers<[1], [0], [0], [1], [0, 0, 1, 1], [], []>} : vector<64x32xf32>, vector<32x8xf32>, vector<64x8xf32> -> vector<64x8xf32>
    %c0_48 = arith.constant 0 : index
    %c0_49 = arith.constant 0 : index
    %c1_50 = arith.constant 1 : index
    %c0_51 = arith.constant 0 : index
    %c0_52 = arith.constant 0 : index
    %45 = vector.load %arg4[%c0_48, %c0_49, %c1_50, %c0_51, %c0_52] : memref<1x3x4x1x8xf32, #tpu.memory_space<vmem>>, vector<1x1x1x1x8xf32>
    %46 = vector.shape_cast %45 : vector<1x1x1x1x8xf32> to vector<1x8xf32>
    %47 = vector.broadcast %46 : vector<1x8xf32> to vector<64x8xf32>
    %48 = arith.addf %44, %47 : vector<64x8xf32>
    %c0_53 = arith.constant 0 : index
    %c1_54 = arith.constant 1 : index
    %c1_55 = arith.constant 1 : index
    %c0_56 = arith.constant 0 : index
    %c0_57 = arith.constant 0 : index
    %49 = vector.load %arg3[%c0_53, %c1_54, %c1_55, %c0_56, %c0_57] : memref<1x3x4x32x8xf32, #tpu.memory_space<vmem>>, vector<1x1x1x32x8xf32>
    %50 = vector.shape_cast %49 : vector<1x1x1x32x8xf32> to vector<32x8xf32>
    %cst_58 = arith.constant dense<0.000000e+00> : vector<64x8xf32>
    %51 = tpu.matmul %0, %50, %cst_58 {dimension_numbers = #tpu.dot_dimension_numbers<[1], [0], [0], [1], [0, 0, 1, 1], [], []>} : vector<64x32xf32>, vector<32x8xf32>, vector<64x8xf32> -> vector<64x8xf32>
    %c0_59 = arith.constant 0 : index
    %c1_60 = arith.constant 1 : index
    %c1_61 = arith.constant 1 : index
    %c0_62 = arith.constant 0 : index
    %c0_63 = arith.constant 0 : index
    %52 = vector.load %arg4[%c0_59, %c1_60, %c1_61, %c0_62, %c0_63] : memref<1x3x4x1x8xf32, #tpu.memory_space<vmem>>, vector<1x1x1x1x8xf32>
    %53 = vector.shape_cast %52 : vector<1x1x1x1x8xf32> to vector<1x8xf32>
    %54 = vector.broadcast %53 : vector<1x8xf32> to vector<64x8xf32>
    %55 = arith.addf %51, %54 : vector<64x8xf32>
    %c0_64 = arith.constant 0 : index
    %c2_65 = arith.constant 2 : index
    %c1_66 = arith.constant 1 : index
    %c0_67 = arith.constant 0 : index
    %c0_68 = arith.constant 0 : index
    %56 = vector.load %arg3[%c0_64, %c2_65, %c1_66, %c0_67, %c0_68] : memref<1x3x4x32x8xf32, #tpu.memory_space<vmem>>, vector<1x1x1x32x8xf32>
    %57 = vector.shape_cast %56 : vector<1x1x1x32x8xf32> to vector<32x8xf32>
    %cst_69 = arith.constant dense<0.000000e+00> : vector<64x8xf32>
    %58 = tpu.matmul %0, %57, %cst_69 {dimension_numbers = #tpu.dot_dimension_numbers<[1], [0], [0], [1], [0, 0, 1, 1], [], []>} : vector<64x32xf32>, vector<32x8xf32>, vector<64x8xf32> -> vector<64x8xf32>
    %c0_70 = arith.constant 0 : index
    %c2_71 = arith.constant 2 : index
    %c1_72 = arith.constant 1 : index
    %c0_73 = arith.constant 0 : index
    %c0_74 = arith.constant 0 : index
    %59 = vector.load %arg4[%c0_70, %c2_71, %c1_72, %c0_73, %c0_74] : memref<1x3x4x1x8xf32, #tpu.memory_space<vmem>>, vector<1x1x1x1x8xf32>
    %60 = vector.shape_cast %59 : vector<1x1x1x1x8xf32> to vector<1x8xf32>
    %61 = vector.broadcast %60 : vector<1x8xf32> to vector<64x8xf32>
    %62 = arith.addf %58, %61 : vector<64x8xf32>
    %63 = vector.shape_cast %48 : vector<64x8xf32> to vector<1x64x8xf32>
    %64 = vector.shape_cast %55 : vector<64x8xf32> to vector<1x64x8xf32>
    %65 = vector.shape_cast %62 : vector<64x8xf32> to vector<1x64x8xf32>
    "tpu.trace_start"() <{level = 10 : i32, message = "bqd,bkd->bqk"}> : () -> ()
    %cst_75 = arith.constant dense<0.000000e+00> : vector<1x64x64xf32>
    %66 = tpu.matmul %63, %64, %cst_75 {dimension_numbers = #tpu.dot_dimension_numbers<[2], [2], [1], [1], [0, 0, 0, 1, 1, 1], [0], [0]>} : vector<1x64x8xf32>, vector<1x64x8xf32>, vector<1x64x64xf32> -> vector<1x64x64xf32>
    "tpu.trace_stop"() : () -> ()
    %cst_76 = arith.constant dense<0xFF800000> : vector<1x64xf32>
    %67 = vector.multi_reduction <maximumf>, %66, %cst_76 [2] : vector<1x64x64xf32> to vector<1x64xf32>
    %68 = vector.shape_cast %67 : vector<1x64xf32> to vector<1x64x1xf32>
    %69 = vector.broadcast %68 : vector<1x64x1xf32> to vector<1x64x64xf32>
    %70 = arith.subf %66, %69 : vector<1x64x64xf32>
    %71 = math.exp %70 : vector<1x64x64xf32>
    %cst_77 = arith.constant dense<0.000000e+00> : vector<1x64xf32>
    %72 = vector.multi_reduction <add>, %71, %cst_77 [2] : vector<1x64x64xf32> to vector<1x64xf32>
    %73 = vector.shape_cast %72 : vector<1x64xf32> to vector<1x64x1xf32>
    %74 = tpu.reciprocal %73 {approx = true} : vector<1x64x1xf32> -> vector<1x64x1xf32>
    %75 = vector.broadcast %74 : vector<1x64x1xf32> to vector<1x64x64xf32>
    %76 = arith.mulf %71, %75 : vector<1x64x64xf32>
    "tpu.trace_start"() <{level = 10 : i32, message = "bqk,bkd->bqd"}> : () -> ()
    %cst_78 = arith.constant dense<0.000000e+00> : vector<1x64x8xf32>
    %77 = tpu.matmul %76, %65, %cst_78 {dimension_numbers = #tpu.dot_dimension_numbers<[2], [1], [1], [2], [0, 0, 0, 1, 1, 2], [0], [0]>} : vector<1x64x64xf32>, vector<1x64x8xf32>, vector<1x64x8xf32> -> vector<1x64x8xf32>
    "tpu.trace_stop"() : () -> ()
    %78 = vector.shape_cast %77 : vector<1x64x8xf32> to vector<64x8xf32>
    %c0_79 = arith.constant 0 : index
    %c1_80 = arith.constant 1 : index
    %c0_81 = arith.constant 0 : index
    %c0_82 = arith.constant 0 : index
    %79 = vector.load %arg5[%c0_79, %c1_80, %c0_81, %c0_82] : memref<1x4x8x32xf32, #tpu.memory_space<vmem>>, vector<1x1x8x32xf32>
    %80 = vector.shape_cast %79 : vector<1x1x8x32xf32> to vector<8x32xf32>
    %cst_83 = arith.constant dense<0.000000e+00> : vector<64x32xf32>
    %81 = tpu.matmul %78, %80, %cst_83 {dimension_numbers = #tpu.dot_dimension_numbers<[1], [0], [0], [1], [0, 0, 1, 1], [], []>} : vector<64x8xf32>, vector<8x32xf32>, vector<64x32xf32> -> vector<64x32xf32>
    %c0_84 = arith.constant 0 : index
    %c0_85 = arith.constant 0 : index
    %c2_86 = arith.constant 2 : index
    %c0_87 = arith.constant 0 : index
    %c0_88 = arith.constant 0 : index
    %82 = vector.load %arg3[%c0_84, %c0_85, %c2_86, %c0_87, %c0_88] : memref<1x3x4x32x8xf32, #tpu.memory_space<vmem>>, vector<1x1x1x32x8xf32>
    %83 = vector.shape_cast %82 : vector<1x1x1x32x8xf32> to vector<32x8xf32>
    %cst_89 = arith.constant dense<0.000000e+00> : vector<64x8xf32>
    %84 = tpu.matmul %0, %83, %cst_89 {dimension_numbers = #tpu.dot_dimension_numbers<[1], [0], [0], [1], [0, 0, 1, 1], [], []>} : vector<64x32xf32>, vector<32x8xf32>, vector<64x8xf32> -> vector<64x8xf32>
    %c0_90 = arith.constant 0 : index
    %c0_91 = arith.constant 0 : index
    %c2_92 = arith.constant 2 : index
    %c0_93 = arith.constant 0 : index
    %c0_94 = arith.constant 0 : index
    %85 = vector.load %arg4[%c0_90, %c0_91, %c2_92, %c0_93, %c0_94] : memref<1x3x4x1x8xf32, #tpu.memory_space<vmem>>, vector<1x1x1x1x8xf32>
    %86 = vector.shape_cast %85 : vector<1x1x1x1x8xf32> to vector<1x8xf32>
    %87 = vector.broadcast %86 : vector<1x8xf32> to vector<64x8xf32>
    %88 = arith.addf %84, %87 : vector<64x8xf32>
    %c0_95 = arith.constant 0 : index
    %c1_96 = arith.constant 1 : index
    %c2_97 = arith.constant 2 : index
    %c0_98 = arith.constant 0 : index
    %c0_99 = arith.constant 0 : index
    %89 = vector.load %arg3[%c0_95, %c1_96, %c2_97, %c0_98, %c0_99] : memref<1x3x4x32x8xf32, #tpu.memory_space<vmem>>, vector<1x1x1x32x8xf32>
    %90 = vector.shape_cast %89 : vector<1x1x1x32x8xf32> to vector<32x8xf32>
    %cst_100 = arith.constant dense<0.000000e+00> : vector<64x8xf32>
    %91 = tpu.matmul %0, %90, %cst_100 {dimension_numbers = #tpu.dot_dimension_numbers<[1], [0], [0], [1], [0, 0, 1, 1], [], []>} : vector<64x32xf32>, vector<32x8xf32>, vector<64x8xf32> -> vector<64x8xf32>
    %c0_101 = arith.constant 0 : index
    %c1_102 = arith.constant 1 : index
    %c2_103 = arith.constant 2 : index
    %c0_104 = arith.constant 0 : index
    %c0_105 = arith.constant 0 : index
    %92 = vector.load %arg4[%c0_101, %c1_102, %c2_103, %c0_104, %c0_105] : memref<1x3x4x1x8xf32, #tpu.memory_space<vmem>>, vector<1x1x1x1x8xf32>
    %93 = vector.shape_cast %92 : vector<1x1x1x1x8xf32> to vector<1x8xf32>
    %94 = vector.broadcast %93 : vector<1x8xf32> to vector<64x8xf32>
    %95 = arith.addf %91, %94 : vector<64x8xf32>
    %c0_106 = arith.constant 0 : index
    %c2_107 = arith.constant 2 : index
    %c2_108 = arith.constant 2 : index
    %c0_109 = arith.constant 0 : index
    %c0_110 = arith.constant 0 : index
    %96 = vector.load %arg3[%c0_106, %c2_107, %c2_108, %c0_109, %c0_110] : memref<1x3x4x32x8xf32, #tpu.memory_space<vmem>>, vector<1x1x1x32x8xf32>
    %97 = vector.shape_cast %96 : vector<1x1x1x32x8xf32> to vector<32x8xf32>
    %cst_111 = arith.constant dense<0.000000e+00> : vector<64x8xf32>
    %98 = tpu.matmul %0, %97, %cst_111 {dimension_numbers = #tpu.dot_dimension_numbers<[1], [0], [0], [1], [0, 0, 1, 1], [], []>} : vector<64x32xf32>, vector<32x8xf32>, vector<64x8xf32> -> vector<64x8xf32>
    %c0_112 = arith.constant 0 : index
    %c2_113 = arith.constant 2 : index
    %c2_114 = arith.constant 2 : index
    %c0_115 = arith.constant 0 : index
    %c0_116 = arith.constant 0 : index
    %99 = vector.load %arg4[%c0_112, %c2_113, %c2_114, %c0_115, %c0_116] : memref<1x3x4x1x8xf32, #tpu.memory_space<vmem>>, vector<1x1x1x1x8xf32>
    %100 = vector.shape_cast %99 : vector<1x1x1x1x8xf32> to vector<1x8xf32>
    %101 = vector.broadcast %100 : vector<1x8xf32> to vector<64x8xf32>
    %102 = arith.addf %98, %101 : vector<64x8xf32>
    %103 = vector.shape_cast %88 : vector<64x8xf32> to vector<1x64x8xf32>
    %104 = vector.shape_cast %95 : vector<64x8xf32> to vector<1x64x8xf32>
    %105 = vector.shape_cast %102 : vector<64x8xf32> to vector<1x64x8xf32>
    "tpu.trace_start"() <{level = 10 : i32, message = "bqd,bkd->bqk"}> : () -> ()
    %cst_117 = arith.constant dense<0.000000e+00> : vector<1x64x64xf32>
    %106 = tpu.matmul %103, %104, %cst_117 {dimension_numbers = #tpu.dot_dimension_numbers<[2], [2], [1], [1], [0, 0, 0, 1, 1, 1], [0], [0]>} : vector<1x64x8xf32>, vector<1x64x8xf32>, vector<1x64x64xf32> -> vector<1x64x64xf32>
    "tpu.trace_stop"() : () -> ()
    %cst_118 = arith.constant dense<0xFF800000> : vector<1x64xf32>
    %107 = vector.multi_reduction <maximumf>, %106, %cst_118 [2] : vector<1x64x64xf32> to vector<1x64xf32>
    %108 = vector.shape_cast %107 : vector<1x64xf32> to vector<1x64x1xf32>
    %109 = vector.broadcast %108 : vector<1x64x1xf32> to vector<1x64x64xf32>
    %110 = arith.subf %106, %109 : vector<1x64x64xf32>
    %111 = math.exp %110 : vector<1x64x64xf32>
    %cst_119 = arith.constant dense<0.000000e+00> : vector<1x64xf32>
    %112 = vector.multi_reduction <add>, %111, %cst_119 [2] : vector<1x64x64xf32> to vector<1x64xf32>
    %113 = vector.shape_cast %112 : vector<1x64xf32> to vector<1x64x1xf32>
    %114 = tpu.reciprocal %113 {approx = true} : vector<1x64x1xf32> -> vector<1x64x1xf32>
    %115 = vector.broadcast %114 : vector<1x64x1xf32> to vector<1x64x64xf32>
    %116 = arith.mulf %111, %115 : vector<1x64x64xf32>
    "tpu.trace_start"() <{level = 10 : i32, message = "bqk,bkd->bqd"}> : () -> ()
    %cst_120 = arith.constant dense<0.000000e+00> : vector<1x64x8xf32>
    %117 = tpu.matmul %116, %105, %cst_120 {dimension_numbers = #tpu.dot_dimension_numbers<[2], [1], [1], [2], [0, 0, 0, 1, 1, 2], [0], [0]>} : vector<1x64x64xf32>, vector<1x64x8xf32>, vector<1x64x8xf32> -> vector<1x64x8xf32>
    "tpu.trace_stop"() : () -> ()
    %118 = vector.shape_cast %117 : vector<1x64x8xf32> to vector<64x8xf32>
    %c0_121 = arith.constant 0 : index
    %c2_122 = arith.constant 2 : index
    %c0_123 = arith.constant 0 : index
    %c0_124 = arith.constant 0 : index
    %119 = vector.load %arg5[%c0_121, %c2_122, %c0_123, %c0_124] : memref<1x4x8x32xf32, #tpu.memory_space<vmem>>, vector<1x1x8x32xf32>
    %120 = vector.shape_cast %119 : vector<1x1x8x32xf32> to vector<8x32xf32>
    %cst_125 = arith.constant dense<0.000000e+00> : vector<64x32xf32>
    %121 = tpu.matmul %118, %120, %cst_125 {dimension_numbers = #tpu.dot_dimension_numbers<[1], [0], [0], [1], [0, 0, 1, 1], [], []>} : vector<64x8xf32>, vector<8x32xf32>, vector<64x32xf32> -> vector<64x32xf32>
    %c0_126 = arith.constant 0 : index
    %c0_127 = arith.constant 0 : index
    %c3 = arith.constant 3 : index
    %c0_128 = arith.constant 0 : index
    %c0_129 = arith.constant 0 : index
    %122 = vector.load %arg3[%c0_126, %c0_127, %c3, %c0_128, %c0_129] : memref<1x3x4x32x8xf32, #tpu.memory_space<vmem>>, vector<1x1x1x32x8xf32>
    %123 = vector.shape_cast %122 : vector<1x1x1x32x8xf32> to vector<32x8xf32>
    %cst_130 = arith.constant dense<0.000000e+00> : vector<64x8xf32>
    %124 = tpu.matmul %0, %123, %cst_130 {dimension_numbers = #tpu.dot_dimension_numbers<[1], [0], [0], [1], [0, 0, 1, 1], [], []>} : vector<64x32xf32>, vector<32x8xf32>, vector<64x8xf32> -> vector<64x8xf32>
    %c0_131 = arith.constant 0 : index
    %c0_132 = arith.constant 0 : index
    %c3_133 = arith.constant 3 : index
    %c0_134 = arith.constant 0 : index
    %c0_135 = arith.constant 0 : index
    %125 = vector.load %arg4[%c0_131, %c0_132, %c3_133, %c0_134, %c0_135] : memref<1x3x4x1x8xf32, #tpu.memory_space<vmem>>, vector<1x1x1x1x8xf32>
    %126 = vector.shape_cast %125 : vector<1x1x1x1x8xf32> to vector<1x8xf32>
    %127 = vector.broadcast %126 : vector<1x8xf32> to vector<64x8xf32>
    %128 = arith.addf %124, %127 : vector<64x8xf32>
    %c0_136 = arith.constant 0 : index
    %c1_137 = arith.constant 1 : index
    %c3_138 = arith.constant 3 : index
    %c0_139 = arith.constant 0 : index
    %c0_140 = arith.constant 0 : index
    %129 = vector.load %arg3[%c0_136, %c1_137, %c3_138, %c0_139, %c0_140] : memref<1x3x4x32x8xf32, #tpu.memory_space<vmem>>, vector<1x1x1x32x8xf32>
    %130 = vector.shape_cast %129 : vector<1x1x1x32x8xf32> to vector<32x8xf32>
    %cst_141 = arith.constant dense<0.000000e+00> : vector<64x8xf32>
    %131 = tpu.matmul %0, %130, %cst_141 {dimension_numbers = #tpu.dot_dimension_numbers<[1], [0], [0], [1], [0, 0, 1, 1], [], []>} : vector<64x32xf32>, vector<32x8xf32>, vector<64x8xf32> -> vector<64x8xf32>
    %c0_142 = arith.constant 0 : index
    %c1_143 = arith.constant 1 : index
    %c3_144 = arith.constant 3 : index
    %c0_145 = arith.constant 0 : index
    %c0_146 = arith.constant 0 : index
    %132 = vector.load %arg4[%c0_142, %c1_143, %c3_144, %c0_145, %c0_146] : memref<1x3x4x1x8xf32, #tpu.memory_space<vmem>>, vector<1x1x1x1x8xf32>
    %133 = vector.shape_cast %132 : vector<1x1x1x1x8xf32> to vector<1x8xf32>
    %134 = vector.broadcast %133 : vector<1x8xf32> to vector<64x8xf32>
    %135 = arith.addf %131, %134 : vector<64x8xf32>
    %c0_147 = arith.constant 0 : index
    %c2_148 = arith.constant 2 : index
    %c3_149 = arith.constant 3 : index
    %c0_150 = arith.constant 0 : index
    %c0_151 = arith.constant 0 : index
    %136 = vector.load %arg3[%c0_147, %c2_148, %c3_149, %c0_150, %c0_151] : memref<1x3x4x32x8xf32, #tpu.memory_space<vmem>>, vector<1x1x1x32x8xf32>
    %137 = vector.shape_cast %136 : vector<1x1x1x32x8xf32> to vector<32x8xf32>
    %cst_152 = arith.constant dense<0.000000e+00> : vector<64x8xf32>
    %138 = tpu.matmul %0, %137, %cst_152 {dimension_numbers = #tpu.dot_dimension_numbers<[1], [0], [0], [1], [0, 0, 1, 1], [], []>} : vector<64x32xf32>, vector<32x8xf32>, vector<64x8xf32> -> vector<64x8xf32>
    %c0_153 = arith.constant 0 : index
    %c2_154 = arith.constant 2 : index
    %c3_155 = arith.constant 3 : index
    %c0_156 = arith.constant 0 : index
    %c0_157 = arith.constant 0 : index
    %139 = vector.load %arg4[%c0_153, %c2_154, %c3_155, %c0_156, %c0_157] : memref<1x3x4x1x8xf32, #tpu.memory_space<vmem>>, vector<1x1x1x1x8xf32>
    %140 = vector.shape_cast %139 : vector<1x1x1x1x8xf32> to vector<1x8xf32>
    %141 = vector.broadcast %140 : vector<1x8xf32> to vector<64x8xf32>
    %142 = arith.addf %138, %141 : vector<64x8xf32>
    %143 = vector.shape_cast %128 : vector<64x8xf32> to vector<1x64x8xf32>
    %144 = vector.shape_cast %135 : vector<64x8xf32> to vector<1x64x8xf32>
    %145 = vector.shape_cast %142 : vector<64x8xf32> to vector<1x64x8xf32>
    "tpu.trace_start"() <{level = 10 : i32, message = "bqd,bkd->bqk"}> : () -> ()
    %cst_158 = arith.constant dense<0.000000e+00> : vector<1x64x64xf32>
    %146 = tpu.matmul %143, %144, %cst_158 {dimension_numbers = #tpu.dot_dimension_numbers<[2], [2], [1], [1], [0, 0, 0, 1, 1, 1], [0], [0]>} : vector<1x64x8xf32>, vector<1x64x8xf32>, vector<1x64x64xf32> -> vector<1x64x64xf32>
    "tpu.trace_stop"() : () -> ()
    %cst_159 = arith.constant dense<0xFF800000> : vector<1x64xf32>
    %147 = vector.multi_reduction <maximumf>, %146, %cst_159 [2] : vector<1x64x64xf32> to vector<1x64xf32>
    %148 = vector.shape_cast %147 : vector<1x64xf32> to vector<1x64x1xf32>
    %149 = vector.broadcast %148 : vector<1x64x1xf32> to vector<1x64x64xf32>
    %150 = arith.subf %146, %149 : vector<1x64x64xf32>
    %151 = math.exp %150 : vector<1x64x64xf32>
    %cst_160 = arith.constant dense<0.000000e+00> : vector<1x64xf32>
    %152 = vector.multi_reduction <add>, %151, %cst_160 [2] : vector<1x64x64xf32> to vector<1x64xf32>
    %153 = vector.shape_cast %152 : vector<1x64xf32> to vector<1x64x1xf32>
    %154 = tpu.reciprocal %153 {approx = true} : vector<1x64x1xf32> -> vector<1x64x1xf32>
    %155 = vector.broadcast %154 : vector<1x64x1xf32> to vector<1x64x64xf32>
    %156 = arith.mulf %151, %155 : vector<1x64x64xf32>
    "tpu.trace_start"() <{level = 10 : i32, message = "bqk,bkd->bqd"}> : () -> ()
    %cst_161 = arith.constant dense<0.000000e+00> : vector<1x64x8xf32>
    %157 = tpu.matmul %156, %145, %cst_161 {dimension_numbers = #tpu.dot_dimension_numbers<[2], [1], [1], [2], [0, 0, 0, 1, 1, 2], [0], [0]>} : vector<1x64x64xf32>, vector<1x64x8xf32>, vector<1x64x8xf32> -> vector<1x64x8xf32>
    "tpu.trace_stop"() : () -> ()
    %158 = vector.shape_cast %157 : vector<1x64x8xf32> to vector<64x8xf32>
    %c0_162 = arith.constant 0 : index
    %c3_163 = arith.constant 3 : index
    %c0_164 = arith.constant 0 : index
    %c0_165 = arith.constant 0 : index
    %159 = vector.load %arg5[%c0_162, %c3_163, %c0_164, %c0_165] : memref<1x4x8x32xf32, #tpu.memory_space<vmem>>, vector<1x1x8x32xf32>
    %160 = vector.shape_cast %159 : vector<1x1x8x32xf32> to vector<8x32xf32>
    %cst_166 = arith.constant dense<0.000000e+00> : vector<64x32xf32>
    %161 = tpu.matmul %158, %160, %cst_166 {dimension_numbers = #tpu.dot_dimension_numbers<[1], [0], [0], [1], [0, 0, 1, 1], [], []>} : vector<64x8xf32>, vector<8x32xf32>, vector<64x32xf32> -> vector<64x32xf32>
    %162 = arith.addf %41, %81 : vector<64x32xf32>
    %163 = arith.addf %121, %161 : vector<64x32xf32>
    %164 = arith.addf %162, %163 : vector<64x32xf32>
    %c0_167 = arith.constant 0 : index
    %c0_168 = arith.constant 0 : index
    %c0_169 = arith.constant 0 : index
    %165 = vector.load %arg6[%c0_167, %c0_168, %c0_169] : memref<1x3x32xf32, #tpu.memory_space<vmem>>, vector<1x3x32xf32>
    %166 = vector.shape_cast %165 : vector<1x3x32xf32> to vector<3x32xf32>
    %167 = arith.addf %0, %164 : vector<64x32xf32>
    %168 = vector.extract_strided_slice %166 {offsets = [0, 0], sizes = [1, 32], strides = [1, 1]} : vector<3x32xf32> to vector<1x32xf32>
    %169 = vector.broadcast %168 : vector<1x32xf32> to vector<64x32xf32>
    %170 = arith.addf %167, %169 : vector<64x32xf32>
    %171 = vector.extract_strided_slice %166 {offsets = [1, 0], sizes = [1, 32], strides = [1, 1]} : vector<3x32xf32> to vector<1x32xf32>
    %172 = vector.extract_strided_slice %166 {offsets = [2, 0], sizes = [1, 32], strides = [1, 1]} : vector<3x32xf32> to vector<1x32xf32>
    %cst_170 = arith.constant dense<0.000000e+00> : vector<64xf32>
    %173 = vector.multi_reduction <add>, %170, %cst_170 [1] : vector<64x32xf32> to vector<64xf32>
    %174 = vector.shape_cast %173 : vector<64xf32> to vector<64x1xf32>
    %cst_171 = arith.constant 3.200000e+01 : f32
    %175 = vector.broadcast %cst_171 : f32 to vector<64x1xf32>
    %176 = arith.divf %174, %175 : vector<64x1xf32>
    %177 = vector.broadcast %176 : vector<64x1xf32> to vector<64x32xf32>
    %178 = arith.subf %170, %177 : vector<64x32xf32>
    %179 = arith.mulf %178, %178 : vector<64x32xf32>
    %cst_172 = arith.constant dense<0.000000e+00> : vector<64xf32>
    %180 = vector.multi_reduction <add>, %179, %cst_172 [1] : vector<64x32xf32> to vector<64xf32>
    %181 = vector.shape_cast %180 : vector<64xf32> to vector<64x1xf32>
    %cst_173 = arith.constant 3.200000e+01 : f32
    %182 = vector.broadcast %cst_173 : f32 to vector<64x1xf32>
    %183 = arith.divf %181, %182 : vector<64x1xf32>
    %184 = vector.broadcast %176 : vector<64x1xf32> to vector<64x32xf32>
    %185 = arith.subf %170, %184 : vector<64x32xf32>
    %cst_174 = arith.constant 9.99999974E-6 : f32
    %186 = vector.broadcast %cst_174 : f32 to vector<64x1xf32>
    %187 = arith.addf %183, %186 : vector<64x1xf32>
    %188 = math.rsqrt %187 : vector<64x1xf32>
    %189 = vector.broadcast %188 : vector<64x1xf32> to vector<64x32xf32>
    %190 = arith.mulf %185, %189 : vector<64x32xf32>
    %191 = vector.broadcast %171 : vector<1x32xf32> to vector<64x32xf32>
    %192 = arith.mulf %190, %191 : vector<64x32xf32>
    %193 = vector.broadcast %172 : vector<1x32xf32> to vector<64x32xf32>
    %194 = arith.addf %192, %193 : vector<64x32xf32>
    %c0_175 = arith.constant 0 : index
    %c0_176 = arith.constant 0 : index
    %c0_177 = arith.constant 0 : index
    %c0_178 = arith.constant 0 : index
    %c0_179 = arith.constant 0 : index
    %195 = vector.load %arg7[%c0_175, %c0_176, %c0_177, %c0_178, %c0_179] : memref<1x3x4x32x8xf32, #tpu.memory_space<vmem>>, vector<1x1x1x32x8xf32>
    %196 = vector.shape_cast %195 : vector<1x1x1x32x8xf32> to vector<32x8xf32>
    %cst_180 = arith.constant dense<0.000000e+00> : vector<64x8xf32>
    %197 = tpu.matmul %194, %196, %cst_180 {dimension_numbers = #tpu.dot_dimension_numbers<[1], [0], [0], [1], [0, 0, 1, 1], [], []>} : vector<64x32xf32>, vector<32x8xf32>, vector<64x8xf32> -> vector<64x8xf32>
    %c0_181 = arith.constant 0 : index
    %c0_182 = arith.constant 0 : index
    %c0_183 = arith.constant 0 : index
    %c0_184 = arith.constant 0 : index
    %c0_185 = arith.constant 0 : index
    %198 = vector.load %arg8[%c0_181, %c0_182, %c0_183, %c0_184, %c0_185] : memref<1x3x4x1x8xf32, #tpu.memory_space<vmem>>, vector<1x1x1x1x8xf32>
    %199 = vector.shape_cast %198 : vector<1x1x1x1x8xf32> to vector<1x8xf32>
    %200 = vector.broadcast %199 : vector<1x8xf32> to vector<64x8xf32>
    %201 = arith.addf %197, %200 : vector<64x8xf32>
    %c0_186 = arith.constant 0 : index
    %c1_187 = arith.constant 1 : index
    %c0_188 = arith.constant 0 : index
    %c0_189 = arith.constant 0 : index
    %c0_190 = arith.constant 0 : index
    %202 = vector.load %arg7[%c0_186, %c1_187, %c0_188, %c0_189, %c0_190] : memref<1x3x4x32x8xf32, #tpu.memory_space<vmem>>, vector<1x1x1x32x8xf32>
    %203 = vector.shape_cast %202 : vector<1x1x1x32x8xf32> to vector<32x8xf32>
    %cst_191 = arith.constant dense<0.000000e+00> : vector<64x8xf32>
    %204 = tpu.matmul %1, %203, %cst_191 {dimension_numbers = #tpu.dot_dimension_numbers<[1], [0], [0], [1], [0, 0, 1, 1], [], []>} : vector<64x32xf32>, vector<32x8xf32>, vector<64x8xf32> -> vector<64x8xf32>
    %c0_192 = arith.constant 0 : index
    %c1_193 = arith.constant 1 : index
    %c0_194 = arith.constant 0 : index
    %c0_195 = arith.constant 0 : index
    %c0_196 = arith.constant 0 : index
    %205 = vector.load %arg8[%c0_192, %c1_193, %c0_194, %c0_195, %c0_196] : memref<1x3x4x1x8xf32, #tpu.memory_space<vmem>>, vector<1x1x1x1x8xf32>
    %206 = vector.shape_cast %205 : vector<1x1x1x1x8xf32> to vector<1x8xf32>
    %207 = vector.broadcast %206 : vector<1x8xf32> to vector<64x8xf32>
    %208 = arith.addf %204, %207 : vector<64x8xf32>
    %c0_197 = arith.constant 0 : index
    %c2_198 = arith.constant 2 : index
    %c0_199 = arith.constant 0 : index
    %c0_200 = arith.constant 0 : index
    %c0_201 = arith.constant 0 : index
    %209 = vector.load %arg7[%c0_197, %c2_198, %c0_199, %c0_200, %c0_201] : memref<1x3x4x32x8xf32, #tpu.memory_space<vmem>>, vector<1x1x1x32x8xf32>
    %210 = vector.shape_cast %209 : vector<1x1x1x32x8xf32> to vector<32x8xf32>
    %cst_202 = arith.constant dense<0.000000e+00> : vector<64x8xf32>
    %211 = tpu.matmul %1, %210, %cst_202 {dimension_numbers = #tpu.dot_dimension_numbers<[1], [0], [0], [1], [0, 0, 1, 1], [], []>} : vector<64x32xf32>, vector<32x8xf32>, vector<64x8xf32> -> vector<64x8xf32>
    %c0_203 = arith.constant 0 : index
    %c2_204 = arith.constant 2 : index
    %c0_205 = arith.constant 0 : index
    %c0_206 = arith.constant 0 : index
    %c0_207 = arith.constant 0 : index
    %212 = vector.load %arg8[%c0_203, %c2_204, %c0_205, %c0_206, %c0_207] : memref<1x3x4x1x8xf32, #tpu.memory_space<vmem>>, vector<1x1x1x1x8xf32>
    %213 = vector.shape_cast %212 : vector<1x1x1x1x8xf32> to vector<1x8xf32>
    %214 = vector.broadcast %213 : vector<1x8xf32> to vector<64x8xf32>
    %215 = arith.addf %211, %214 : vector<64x8xf32>
    %216 = vector.shape_cast %201 : vector<64x8xf32> to vector<1x64x8xf32>
    %217 = vector.shape_cast %208 : vector<64x8xf32> to vector<1x64x8xf32>
    %218 = vector.shape_cast %215 : vector<64x8xf32> to vector<1x64x8xf32>
    "tpu.trace_start"() <{level = 10 : i32, message = "bqd,bkd->bqk"}> : () -> ()
    %cst_208 = arith.constant dense<0.000000e+00> : vector<1x64x64xf32>
    %219 = tpu.matmul %216, %217, %cst_208 {dimension_numbers = #tpu.dot_dimension_numbers<[2], [2], [1], [1], [0, 0, 0, 1, 1, 1], [0], [0]>} : vector<1x64x8xf32>, vector<1x64x8xf32>, vector<1x64x64xf32> -> vector<1x64x64xf32>
    "tpu.trace_stop"() : () -> ()
    %cst_209 = arith.constant dense<0xFF800000> : vector<1x64xf32>
    %220 = vector.multi_reduction <maximumf>, %219, %cst_209 [2] : vector<1x64x64xf32> to vector<1x64xf32>
    %221 = vector.shape_cast %220 : vector<1x64xf32> to vector<1x64x1xf32>
    %222 = vector.broadcast %221 : vector<1x64x1xf32> to vector<1x64x64xf32>
    %223 = arith.subf %219, %222 : vector<1x64x64xf32>
    %224 = math.exp %223 : vector<1x64x64xf32>
    %cst_210 = arith.constant dense<0.000000e+00> : vector<1x64xf32>
    %225 = vector.multi_reduction <add>, %224, %cst_210 [2] : vector<1x64x64xf32> to vector<1x64xf32>
    %226 = vector.shape_cast %225 : vector<1x64xf32> to vector<1x64x1xf32>
    %227 = tpu.reciprocal %226 {approx = true} : vector<1x64x1xf32> -> vector<1x64x1xf32>
    %228 = vector.broadcast %227 : vector<1x64x1xf32> to vector<1x64x64xf32>
    %229 = arith.mulf %224, %228 : vector<1x64x64xf32>
    "tpu.trace_start"() <{level = 10 : i32, message = "bqk,bkd->bqd"}> : () -> ()
    %cst_211 = arith.constant dense<0.000000e+00> : vector<1x64x8xf32>
    %230 = tpu.matmul %229, %218, %cst_211 {dimension_numbers = #tpu.dot_dimension_numbers<[2], [1], [1], [2], [0, 0, 0, 1, 1, 2], [0], [0]>} : vector<1x64x64xf32>, vector<1x64x8xf32>, vector<1x64x8xf32> -> vector<1x64x8xf32>
    "tpu.trace_stop"() : () -> ()
    %231 = vector.shape_cast %230 : vector<1x64x8xf32> to vector<64x8xf32>
    %c0_212 = arith.constant 0 : index
    %c0_213 = arith.constant 0 : index
    %c0_214 = arith.constant 0 : index
    %c0_215 = arith.constant 0 : index
    %232 = vector.load %arg9[%c0_212, %c0_213, %c0_214, %c0_215] : memref<1x4x8x32xf32, #tpu.memory_space<vmem>>, vector<1x1x8x32xf32>
    %233 = vector.shape_cast %232 : vector<1x1x8x32xf32> to vector<8x32xf32>
    %cst_216 = arith.constant dense<0.000000e+00> : vector<64x32xf32>
    %234 = tpu.matmul %231, %233, %cst_216 {dimension_numbers = #tpu.dot_dimension_numbers<[1], [0], [0], [1], [0, 0, 1, 1], [], []>} : vector<64x8xf32>, vector<8x32xf32>, vector<64x32xf32> -> vector<64x32xf32>
    %c0_217 = arith.constant 0 : index
    %c0_218 = arith.constant 0 : index
    %c1_219 = arith.constant 1 : index
    %c0_220 = arith.constant 0 : index
    %c0_221 = arith.constant 0 : index
    %235 = vector.load %arg7[%c0_217, %c0_218, %c1_219, %c0_220, %c0_221] : memref<1x3x4x32x8xf32, #tpu.memory_space<vmem>>, vector<1x1x1x32x8xf32>
    %236 = vector.shape_cast %235 : vector<1x1x1x32x8xf32> to vector<32x8xf32>
    %cst_222 = arith.constant dense<0.000000e+00> : vector<64x8xf32>
    %237 = tpu.matmul %194, %236, %cst_222 {dimension_numbers = #tpu.dot_dimension_numbers<[1], [0], [0], [1], [0, 0, 1, 1], [], []>} : vector<64x32xf32>, vector<32x8xf32>, vector<64x8xf32> -> vector<64x8xf32>
    %c0_223 = arith.constant 0 : index
    %c0_224 = arith.constant 0 : index
    %c1_225 = arith.constant 1 : index
    %c0_226 = arith.constant 0 : index
    %c0_227 = arith.constant 0 : index
    %238 = vector.load %arg8[%c0_223, %c0_224, %c1_225, %c0_226, %c0_227] : memref<1x3x4x1x8xf32, #tpu.memory_space<vmem>>, vector<1x1x1x1x8xf32>
    %239 = vector.shape_cast %238 : vector<1x1x1x1x8xf32> to vector<1x8xf32>
    %240 = vector.broadcast %239 : vector<1x8xf32> to vector<64x8xf32>
    %241 = arith.addf %237, %240 : vector<64x8xf32>
    %c0_228 = arith.constant 0 : index
    %c1_229 = arith.constant 1 : index
    %c1_230 = arith.constant 1 : index
    %c0_231 = arith.constant 0 : index
    %c0_232 = arith.constant 0 : index
    %242 = vector.load %arg7[%c0_228, %c1_229, %c1_230, %c0_231, %c0_232] : memref<1x3x4x32x8xf32, #tpu.memory_space<vmem>>, vector<1x1x1x32x8xf32>
    %243 = vector.shape_cast %242 : vector<1x1x1x32x8xf32> to vector<32x8xf32>
    %cst_233 = arith.constant dense<0.000000e+00> : vector<64x8xf32>
    %244 = tpu.matmul %1, %243, %cst_233 {dimension_numbers = #tpu.dot_dimension_numbers<[1], [0], [0], [1], [0, 0, 1, 1], [], []>} : vector<64x32xf32>, vector<32x8xf32>, vector<64x8xf32> -> vector<64x8xf32>
    %c0_234 = arith.constant 0 : index
    %c1_235 = arith.constant 1 : index
    %c1_236 = arith.constant 1 : index
    %c0_237 = arith.constant 0 : index
    %c0_238 = arith.constant 0 : index
    %245 = vector.load %arg8[%c0_234, %c1_235, %c1_236, %c0_237, %c0_238] : memref<1x3x4x1x8xf32, #tpu.memory_space<vmem>>, vector<1x1x1x1x8xf32>
    %246 = vector.shape_cast %245 : vector<1x1x1x1x8xf32> to vector<1x8xf32>
    %247 = vector.broadcast %246 : vector<1x8xf32> to vector<64x8xf32>
    %248 = arith.addf %244, %247 : vector<64x8xf32>
    %c0_239 = arith.constant 0 : index
    %c2_240 = arith.constant 2 : index
    %c1_241 = arith.constant 1 : index
    %c0_242 = arith.constant 0 : index
    %c0_243 = arith.constant 0 : index
    %249 = vector.load %arg7[%c0_239, %c2_240, %c1_241, %c0_242, %c0_243] : memref<1x3x4x32x8xf32, #tpu.memory_space<vmem>>, vector<1x1x1x32x8xf32>
    %250 = vector.shape_cast %249 : vector<1x1x1x32x8xf32> to vector<32x8xf32>
    %cst_244 = arith.constant dense<0.000000e+00> : vector<64x8xf32>
    %251 = tpu.matmul %1, %250, %cst_244 {dimension_numbers = #tpu.dot_dimension_numbers<[1], [0], [0], [1], [0, 0, 1, 1], [], []>} : vector<64x32xf32>, vector<32x8xf32>, vector<64x8xf32> -> vector<64x8xf32>
    %c0_245 = arith.constant 0 : index
    %c2_246 = arith.constant 2 : index
    %c1_247 = arith.constant 1 : index
    %c0_248 = arith.constant 0 : index
    %c0_249 = arith.constant 0 : index
    %252 = vector.load %arg8[%c0_245, %c2_246, %c1_247, %c0_248, %c0_249] : memref<1x3x4x1x8xf32, #tpu.memory_space<vmem>>, vector<1x1x1x1x8xf32>
    %253 = vector.shape_cast %252 : vector<1x1x1x1x8xf32> to vector<1x8xf32>
    %254 = vector.broadcast %253 : vector<1x8xf32> to vector<64x8xf32>
    %255 = arith.addf %251, %254 : vector<64x8xf32>
    %256 = vector.shape_cast %241 : vector<64x8xf32> to vector<1x64x8xf32>
    %257 = vector.shape_cast %248 : vector<64x8xf32> to vector<1x64x8xf32>
    %258 = vector.shape_cast %255 : vector<64x8xf32> to vector<1x64x8xf32>
    "tpu.trace_start"() <{level = 10 : i32, message = "bqd,bkd->bqk"}> : () -> ()
    %cst_250 = arith.constant dense<0.000000e+00> : vector<1x64x64xf32>
    %259 = tpu.matmul %256, %257, %cst_250 {dimension_numbers = #tpu.dot_dimension_numbers<[2], [2], [1], [1], [0, 0, 0, 1, 1, 1], [0], [0]>} : vector<1x64x8xf32>, vector<1x64x8xf32>, vector<1x64x64xf32> -> vector<1x64x64xf32>
    "tpu.trace_stop"() : () -> ()
    %cst_251 = arith.constant dense<0xFF800000> : vector<1x64xf32>
    %260 = vector.multi_reduction <maximumf>, %259, %cst_251 [2] : vector<1x64x64xf32> to vector<1x64xf32>
    %261 = vector.shape_cast %260 : vector<1x64xf32> to vector<1x64x1xf32>
    %262 = vector.broadcast %261 : vector<1x64x1xf32> to vector<1x64x64xf32>
    %263 = arith.subf %259, %262 : vector<1x64x64xf32>
    %264 = math.exp %263 : vector<1x64x64xf32>
    %cst_252 = arith.constant dense<0.000000e+00> : vector<1x64xf32>
    %265 = vector.multi_reduction <add>, %264, %cst_252 [2] : vector<1x64x64xf32> to vector<1x64xf32>
    %266 = vector.shape_cast %265 : vector<1x64xf32> to vector<1x64x1xf32>
    %267 = tpu.reciprocal %266 {approx = true} : vector<1x64x1xf32> -> vector<1x64x1xf32>
    %268 = vector.broadcast %267 : vector<1x64x1xf32> to vector<1x64x64xf32>
    %269 = arith.mulf %264, %268 : vector<1x64x64xf32>
    "tpu.trace_start"() <{level = 10 : i32, message = "bqk,bkd->bqd"}> : () -> ()
    %cst_253 = arith.constant dense<0.000000e+00> : vector<1x64x8xf32>
    %270 = tpu.matmul %269, %258, %cst_253 {dimension_numbers = #tpu.dot_dimension_numbers<[2], [1], [1], [2], [0, 0, 0, 1, 1, 2], [0], [0]>} : vector<1x64x64xf32>, vector<1x64x8xf32>, vector<1x64x8xf32> -> vector<1x64x8xf32>
    "tpu.trace_stop"() : () -> ()
    %271 = vector.shape_cast %270 : vector<1x64x8xf32> to vector<64x8xf32>
    %c0_254 = arith.constant 0 : index
    %c1_255 = arith.constant 1 : index
    %c0_256 = arith.constant 0 : index
    %c0_257 = arith.constant 0 : index
    %272 = vector.load %arg9[%c0_254, %c1_255, %c0_256, %c0_257] : memref<1x4x8x32xf32, #tpu.memory_space<vmem>>, vector<1x1x8x32xf32>
    %273 = vector.shape_cast %272 : vector<1x1x8x32xf32> to vector<8x32xf32>
    %cst_258 = arith.constant dense<0.000000e+00> : vector<64x32xf32>
    %274 = tpu.matmul %271, %273, %cst_258 {dimension_numbers = #tpu.dot_dimension_numbers<[1], [0], [0], [1], [0, 0, 1, 1], [], []>} : vector<64x8xf32>, vector<8x32xf32>, vector<64x32xf32> -> vector<64x32xf32>
    %c0_259 = arith.constant 0 : index
    %c0_260 = arith.constant 0 : index
    %c2_261 = arith.constant 2 : index
    %c0_262 = arith.constant 0 : index
    %c0_263 = arith.constant 0 : index
    %275 = vector.load %arg7[%c0_259, %c0_260, %c2_261, %c0_262, %c0_263] : memref<1x3x4x32x8xf32, #tpu.memory_space<vmem>>, vector<1x1x1x32x8xf32>
    %276 = vector.shape_cast %275 : vector<1x1x1x32x8xf32> to vector<32x8xf32>
    %cst_264 = arith.constant dense<0.000000e+00> : vector<64x8xf32>
    %277 = tpu.matmul %194, %276, %cst_264 {dimension_numbers = #tpu.dot_dimension_numbers<[1], [0], [0], [1], [0, 0, 1, 1], [], []>} : vector<64x32xf32>, vector<32x8xf32>, vector<64x8xf32> -> vector<64x8xf32>
    %c0_265 = arith.constant 0 : index
    %c0_266 = arith.constant 0 : index
    %c2_267 = arith.constant 2 : index
    %c0_268 = arith.constant 0 : index
    %c0_269 = arith.constant 0 : index
    %278 = vector.load %arg8[%c0_265, %c0_266, %c2_267, %c0_268, %c0_269] : memref<1x3x4x1x8xf32, #tpu.memory_space<vmem>>, vector<1x1x1x1x8xf32>
    %279 = vector.shape_cast %278 : vector<1x1x1x1x8xf32> to vector<1x8xf32>
    %280 = vector.broadcast %279 : vector<1x8xf32> to vector<64x8xf32>
    %281 = arith.addf %277, %280 : vector<64x8xf32>
    %c0_270 = arith.constant 0 : index
    %c1_271 = arith.constant 1 : index
    %c2_272 = arith.constant 2 : index
    %c0_273 = arith.constant 0 : index
    %c0_274 = arith.constant 0 : index
    %282 = vector.load %arg7[%c0_270, %c1_271, %c2_272, %c0_273, %c0_274] : memref<1x3x4x32x8xf32, #tpu.memory_space<vmem>>, vector<1x1x1x32x8xf32>
    %283 = vector.shape_cast %282 : vector<1x1x1x32x8xf32> to vector<32x8xf32>
    %cst_275 = arith.constant dense<0.000000e+00> : vector<64x8xf32>
    %284 = tpu.matmul %1, %283, %cst_275 {dimension_numbers = #tpu.dot_dimension_numbers<[1], [0], [0], [1], [0, 0, 1, 1], [], []>} : vector<64x32xf32>, vector<32x8xf32>, vector<64x8xf32> -> vector<64x8xf32>
    %c0_276 = arith.constant 0 : index
    %c1_277 = arith.constant 1 : index
    %c2_278 = arith.constant 2 : index
    %c0_279 = arith.constant 0 : index
    %c0_280 = arith.constant 0 : index
    %285 = vector.load %arg8[%c0_276, %c1_277, %c2_278, %c0_279, %c0_280] : memref<1x3x4x1x8xf32, #tpu.memory_space<vmem>>, vector<1x1x1x1x8xf32>
    %286 = vector.shape_cast %285 : vector<1x1x1x1x8xf32> to vector<1x8xf32>
    %287 = vector.broadcast %286 : vector<1x8xf32> to vector<64x8xf32>
    %288 = arith.addf %284, %287 : vector<64x8xf32>
    %c0_281 = arith.constant 0 : index
    %c2_282 = arith.constant 2 : index
    %c2_283 = arith.constant 2 : index
    %c0_284 = arith.constant 0 : index
    %c0_285 = arith.constant 0 : index
    %289 = vector.load %arg7[%c0_281, %c2_282, %c2_283, %c0_284, %c0_285] : memref<1x3x4x32x8xf32, #tpu.memory_space<vmem>>, vector<1x1x1x32x8xf32>
    %290 = vector.shape_cast %289 : vector<1x1x1x32x8xf32> to vector<32x8xf32>
    %cst_286 = arith.constant dense<0.000000e+00> : vector<64x8xf32>
    %291 = tpu.matmul %1, %290, %cst_286 {dimension_numbers = #tpu.dot_dimension_numbers<[1], [0], [0], [1], [0, 0, 1, 1], [], []>} : vector<64x32xf32>, vector<32x8xf32>, vector<64x8xf32> -> vector<64x8xf32>
    %c0_287 = arith.constant 0 : index
    %c2_288 = arith.constant 2 : index
    %c2_289 = arith.constant 2 : index
    %c0_290 = arith.constant 0 : index
    %c0_291 = arith.constant 0 : index
    %292 = vector.load %arg8[%c0_287, %c2_288, %c2_289, %c0_290, %c0_291] : memref<1x3x4x1x8xf32, #tpu.memory_space<vmem>>, vector<1x1x1x1x8xf32>
    %293 = vector.shape_cast %292 : vector<1x1x1x1x8xf32> to vector<1x8xf32>
    %294 = vector.broadcast %293 : vector<1x8xf32> to vector<64x8xf32>
    %295 = arith.addf %291, %294 : vector<64x8xf32>
    %296 = vector.shape_cast %281 : vector<64x8xf32> to vector<1x64x8xf32>
    %297 = vector.shape_cast %288 : vector<64x8xf32> to vector<1x64x8xf32>
    %298 = vector.shape_cast %295 : vector<64x8xf32> to vector<1x64x8xf32>
    "tpu.trace_start"() <{level = 10 : i32, message = "bqd,bkd->bqk"}> : () -> ()
    %cst_292 = arith.constant dense<0.000000e+00> : vector<1x64x64xf32>
    %299 = tpu.matmul %296, %297, %cst_292 {dimension_numbers = #tpu.dot_dimension_numbers<[2], [2], [1], [1], [0, 0, 0, 1, 1, 1], [0], [0]>} : vector<1x64x8xf32>, vector<1x64x8xf32>, vector<1x64x64xf32> -> vector<1x64x64xf32>
    "tpu.trace_stop"() : () -> ()
    %cst_293 = arith.constant dense<0xFF800000> : vector<1x64xf32>
    %300 = vector.multi_reduction <maximumf>, %299, %cst_293 [2] : vector<1x64x64xf32> to vector<1x64xf32>
    %301 = vector.shape_cast %300 : vector<1x64xf32> to vector<1x64x1xf32>
    %302 = vector.broadcast %301 : vector<1x64x1xf32> to vector<1x64x64xf32>
    %303 = arith.subf %299, %302 : vector<1x64x64xf32>
    %304 = math.exp %303 : vector<1x64x64xf32>
    %cst_294 = arith.constant dense<0.000000e+00> : vector<1x64xf32>
    %305 = vector.multi_reduction <add>, %304, %cst_294 [2] : vector<1x64x64xf32> to vector<1x64xf32>
    %306 = vector.shape_cast %305 : vector<1x64xf32> to vector<1x64x1xf32>
    %307 = tpu.reciprocal %306 {approx = true} : vector<1x64x1xf32> -> vector<1x64x1xf32>
    %308 = vector.broadcast %307 : vector<1x64x1xf32> to vector<1x64x64xf32>
    %309 = arith.mulf %304, %308 : vector<1x64x64xf32>
    "tpu.trace_start"() <{level = 10 : i32, message = "bqk,bkd->bqd"}> : () -> ()
    %cst_295 = arith.constant dense<0.000000e+00> : vector<1x64x8xf32>
    %310 = tpu.matmul %309, %298, %cst_295 {dimension_numbers = #tpu.dot_dimension_numbers<[2], [1], [1], [2], [0, 0, 0, 1, 1, 2], [0], [0]>} : vector<1x64x64xf32>, vector<1x64x8xf32>, vector<1x64x8xf32> -> vector<1x64x8xf32>
    "tpu.trace_stop"() : () -> ()
    %311 = vector.shape_cast %310 : vector<1x64x8xf32> to vector<64x8xf32>
    %c0_296 = arith.constant 0 : index
    %c2_297 = arith.constant 2 : index
    %c0_298 = arith.constant 0 : index
    %c0_299 = arith.constant 0 : index
    %312 = vector.load %arg9[%c0_296, %c2_297, %c0_298, %c0_299] : memref<1x4x8x32xf32, #tpu.memory_space<vmem>>, vector<1x1x8x32xf32>
    %313 = vector.shape_cast %312 : vector<1x1x8x32xf32> to vector<8x32xf32>
    %cst_300 = arith.constant dense<0.000000e+00> : vector<64x32xf32>
    %314 = tpu.matmul %311, %313, %cst_300 {dimension_numbers = #tpu.dot_dimension_numbers<[1], [0], [0], [1], [0, 0, 1, 1], [], []>} : vector<64x8xf32>, vector<8x32xf32>, vector<64x32xf32> -> vector<64x32xf32>
    %c0_301 = arith.constant 0 : index
    %c0_302 = arith.constant 0 : index
    %c3_303 = arith.constant 3 : index
    %c0_304 = arith.constant 0 : index
    %c0_305 = arith.constant 0 : index
    %315 = vector.load %arg7[%c0_301, %c0_302, %c3_303, %c0_304, %c0_305] : memref<1x3x4x32x8xf32, #tpu.memory_space<vmem>>, vector<1x1x1x32x8xf32>
    %316 = vector.shape_cast %315 : vector<1x1x1x32x8xf32> to vector<32x8xf32>
    %cst_306 = arith.constant dense<0.000000e+00> : vector<64x8xf32>
    %317 = tpu.matmul %194, %316, %cst_306 {dimension_numbers = #tpu.dot_dimension_numbers<[1], [0], [0], [1], [0, 0, 1, 1], [], []>} : vector<64x32xf32>, vector<32x8xf32>, vector<64x8xf32> -> vector<64x8xf32>
    %c0_307 = arith.constant 0 : index
    %c0_308 = arith.constant 0 : index
    %c3_309 = arith.constant 3 : index
    %c0_310 = arith.constant 0 : index
    %c0_311 = arith.constant 0 : index
    %318 = vector.load %arg8[%c0_307, %c0_308, %c3_309, %c0_310, %c0_311] : memref<1x3x4x1x8xf32, #tpu.memory_space<vmem>>, vector<1x1x1x1x8xf32>
    %319 = vector.shape_cast %318 : vector<1x1x1x1x8xf32> to vector<1x8xf32>
    %320 = vector.broadcast %319 : vector<1x8xf32> to vector<64x8xf32>
    %321 = arith.addf %317, %320 : vector<64x8xf32>
    %c0_312 = arith.constant 0 : index
    %c1_313 = arith.constant 1 : index
    %c3_314 = arith.constant 3 : index
    %c0_315 = arith.constant 0 : index
    %c0_316 = arith.constant 0 : index
    %322 = vector.load %arg7[%c0_312, %c1_313, %c3_314, %c0_315, %c0_316] : memref<1x3x4x32x8xf32, #tpu.memory_space<vmem>>, vector<1x1x1x32x8xf32>
    %323 = vector.shape_cast %322 : vector<1x1x1x32x8xf32> to vector<32x8xf32>
    %cst_317 = arith.constant dense<0.000000e+00> : vector<64x8xf32>
    %324 = tpu.matmul %1, %323, %cst_317 {dimension_numbers = #tpu.dot_dimension_numbers<[1], [0], [0], [1], [0, 0, 1, 1], [], []>} : vector<64x32xf32>, vector<32x8xf32>, vector<64x8xf32> -> vector<64x8xf32>
    %c0_318 = arith.constant 0 : index
    %c1_319 = arith.constant 1 : index
    %c3_320 = arith.constant 3 : index
    %c0_321 = arith.constant 0 : index
    %c0_322 = arith.constant 0 : index
    %325 = vector.load %arg8[%c0_318, %c1_319, %c3_320, %c0_321, %c0_322] : memref<1x3x4x1x8xf32, #tpu.memory_space<vmem>>, vector<1x1x1x1x8xf32>
    %326 = vector.shape_cast %325 : vector<1x1x1x1x8xf32> to vector<1x8xf32>
    %327 = vector.broadcast %326 : vector<1x8xf32> to vector<64x8xf32>
    %328 = arith.addf %324, %327 : vector<64x8xf32>
    %c0_323 = arith.constant 0 : index
    %c2_324 = arith.constant 2 : index
    %c3_325 = arith.constant 3 : index
    %c0_326 = arith.constant 0 : index
    %c0_327 = arith.constant 0 : index
    %329 = vector.load %arg7[%c0_323, %c2_324, %c3_325, %c0_326, %c0_327] : memref<1x3x4x32x8xf32, #tpu.memory_space<vmem>>, vector<1x1x1x32x8xf32>
    %330 = vector.shape_cast %329 : vector<1x1x1x32x8xf32> to vector<32x8xf32>
    %cst_328 = arith.constant dense<0.000000e+00> : vector<64x8xf32>
    %331 = tpu.matmul %1, %330, %cst_328 {dimension_numbers = #tpu.dot_dimension_numbers<[1], [0], [0], [1], [0, 0, 1, 1], [], []>} : vector<64x32xf32>, vector<32x8xf32>, vector<64x8xf32> -> vector<64x8xf32>
    %c0_329 = arith.constant 0 : index
    %c2_330 = arith.constant 2 : index
    %c3_331 = arith.constant 3 : index
    %c0_332 = arith.constant 0 : index
    %c0_333 = arith.constant 0 : index
    %332 = vector.load %arg8[%c0_329, %c2_330, %c3_331, %c0_332, %c0_333] : memref<1x3x4x1x8xf32, #tpu.memory_space<vmem>>, vector<1x1x1x1x8xf32>
    %333 = vector.shape_cast %332 : vector<1x1x1x1x8xf32> to vector<1x8xf32>
    %334 = vector.broadcast %333 : vector<1x8xf32> to vector<64x8xf32>
    %335 = arith.addf %331, %334 : vector<64x8xf32>
    %336 = vector.shape_cast %321 : vector<64x8xf32> to vector<1x64x8xf32>
    %337 = vector.shape_cast %328 : vector<64x8xf32> to vector<1x64x8xf32>
    %338 = vector.shape_cast %335 : vector<64x8xf32> to vector<1x64x8xf32>
    "tpu.trace_start"() <{level = 10 : i32, message = "bqd,bkd->bqk"}> : () -> ()
    %cst_334 = arith.constant dense<0.000000e+00> : vector<1x64x64xf32>
    %339 = tpu.matmul %336, %337, %cst_334 {dimension_numbers = #tpu.dot_dimension_numbers<[2], [2], [1], [1], [0, 0, 0, 1, 1, 1], [0], [0]>} : vector<1x64x8xf32>, vector<1x64x8xf32>, vector<1x64x64xf32> -> vector<1x64x64xf32>
    "tpu.trace_stop"() : () -> ()
    %cst_335 = arith.constant dense<0xFF800000> : vector<1x64xf32>
    %340 = vector.multi_reduction <maximumf>, %339, %cst_335 [2] : vector<1x64x64xf32> to vector<1x64xf32>
    %341 = vector.shape_cast %340 : vector<1x64xf32> to vector<1x64x1xf32>
    %342 = vector.broadcast %341 : vector<1x64x1xf32> to vector<1x64x64xf32>
    %343 = arith.subf %339, %342 : vector<1x64x64xf32>
    %344 = math.exp %343 : vector<1x64x64xf32>
    %cst_336 = arith.constant dense<0.000000e+00> : vector<1x64xf32>
    %345 = vector.multi_reduction <add>, %344, %cst_336 [2] : vector<1x64x64xf32> to vector<1x64xf32>
    %346 = vector.shape_cast %345 : vector<1x64xf32> to vector<1x64x1xf32>
    %347 = tpu.reciprocal %346 {approx = true} : vector<1x64x1xf32> -> vector<1x64x1xf32>
    %348 = vector.broadcast %347 : vector<1x64x1xf32> to vector<1x64x64xf32>
    %349 = arith.mulf %344, %348 : vector<1x64x64xf32>
    "tpu.trace_start"() <{level = 10 : i32, message = "bqk,bkd->bqd"}> : () -> ()
    %cst_337 = arith.constant dense<0.000000e+00> : vector<1x64x8xf32>
    %350 = tpu.matmul %349, %338, %cst_337 {dimension_numbers = #tpu.dot_dimension_numbers<[2], [1], [1], [2], [0, 0, 0, 1, 1, 2], [0], [0]>} : vector<1x64x64xf32>, vector<1x64x8xf32>, vector<1x64x8xf32> -> vector<1x64x8xf32>
    "tpu.trace_stop"() : () -> ()
    %351 = vector.shape_cast %350 : vector<1x64x8xf32> to vector<64x8xf32>
    %c0_338 = arith.constant 0 : index
    %c3_339 = arith.constant 3 : index
    %c0_340 = arith.constant 0 : index
    %c0_341 = arith.constant 0 : index
    %352 = vector.load %arg9[%c0_338, %c3_339, %c0_340, %c0_341] : memref<1x4x8x32xf32, #tpu.memory_space<vmem>>, vector<1x1x8x32xf32>
    %353 = vector.shape_cast %352 : vector<1x1x8x32xf32> to vector<8x32xf32>
    %cst_342 = arith.constant dense<0.000000e+00> : vector<64x32xf32>
    %354 = tpu.matmul %351, %353, %cst_342 {dimension_numbers = #tpu.dot_dimension_numbers<[1], [0], [0], [1], [0, 0, 1, 1], [], []>} : vector<64x8xf32>, vector<8x32xf32>, vector<64x32xf32> -> vector<64x32xf32>
    %355 = arith.addf %234, %274 : vector<64x32xf32>
    %356 = arith.addf %314, %354 : vector<64x32xf32>
    %357 = arith.addf %355, %356 : vector<64x32xf32>
    %c0_343 = arith.constant 0 : index
    %c0_344 = arith.constant 0 : index
    %c0_345 = arith.constant 0 : index
    %358 = vector.load %arg10[%c0_343, %c0_344, %c0_345] : memref<1x3x32xf32, #tpu.memory_space<vmem>>, vector<1x3x32xf32>
    %359 = vector.shape_cast %358 : vector<1x3x32xf32> to vector<3x32xf32>
    %360 = arith.addf %194, %357 : vector<64x32xf32>
    %361 = vector.extract_strided_slice %359 {offsets = [0, 0], sizes = [1, 32], strides = [1, 1]} : vector<3x32xf32> to vector<1x32xf32>
    %362 = vector.broadcast %361 : vector<1x32xf32> to vector<64x32xf32>
    %363 = arith.addf %360, %362 : vector<64x32xf32>
    %364 = vector.extract_strided_slice %359 {offsets = [1, 0], sizes = [1, 32], strides = [1, 1]} : vector<3x32xf32> to vector<1x32xf32>
    %365 = vector.extract_strided_slice %359 {offsets = [2, 0], sizes = [1, 32], strides = [1, 1]} : vector<3x32xf32> to vector<1x32xf32>
    %cst_346 = arith.constant dense<0.000000e+00> : vector<64xf32>
    %366 = vector.multi_reduction <add>, %363, %cst_346 [1] : vector<64x32xf32> to vector<64xf32>
    %367 = vector.shape_cast %366 : vector<64xf32> to vector<64x1xf32>
    %cst_347 = arith.constant 3.200000e+01 : f32
    %368 = vector.broadcast %cst_347 : f32 to vector<64x1xf32>
    %369 = arith.divf %367, %368 : vector<64x1xf32>
    %370 = vector.broadcast %369 : vector<64x1xf32> to vector<64x32xf32>
    %371 = arith.subf %363, %370 : vector<64x32xf32>
    %372 = arith.mulf %371, %371 : vector<64x32xf32>
    %cst_348 = arith.constant dense<0.000000e+00> : vector<64xf32>
    %373 = vector.multi_reduction <add>, %372, %cst_348 [1] : vector<64x32xf32> to vector<64xf32>
    %374 = vector.shape_cast %373 : vector<64xf32> to vector<64x1xf32>
    %cst_349 = arith.constant 3.200000e+01 : f32
    %375 = vector.broadcast %cst_349 : f32 to vector<64x1xf32>
    %376 = arith.divf %374, %375 : vector<64x1xf32>
    %377 = vector.broadcast %369 : vector<64x1xf32> to vector<64x32xf32>
    %378 = arith.subf %363, %377 : vector<64x32xf32>
    %cst_350 = arith.constant 9.99999974E-6 : f32
    %379 = vector.broadcast %cst_350 : f32 to vector<64x1xf32>
    %380 = arith.addf %376, %379 : vector<64x1xf32>
    %381 = math.rsqrt %380 : vector<64x1xf32>
    %382 = vector.broadcast %381 : vector<64x1xf32> to vector<64x32xf32>
    %383 = arith.mulf %378, %382 : vector<64x32xf32>
    %384 = vector.broadcast %364 : vector<1x32xf32> to vector<64x32xf32>
    %385 = arith.mulf %383, %384 : vector<64x32xf32>
    %386 = vector.broadcast %365 : vector<1x32xf32> to vector<64x32xf32>
    %387 = arith.addf %385, %386 : vector<64x32xf32>
    %c0_351 = arith.constant 0 : index
    %c0_352 = arith.constant 0 : index
    %c0_353 = arith.constant 0 : index
    %388 = vector.load %arg11[%c0_351, %c0_352, %c0_353] : memref<1x32x64xf32, #tpu.memory_space<vmem>>, vector<1x32x64xf32>
    %389 = vector.shape_cast %388 : vector<1x32x64xf32> to vector<32x64xf32>
    %cst_354 = arith.constant dense<0.000000e+00> : vector<64x64xf32>
    %390 = tpu.matmul %387, %389, %cst_354 {dimension_numbers = #tpu.dot_dimension_numbers<[1], [0], [0], [1], [0, 0, 1, 1], [], []>} : vector<64x32xf32>, vector<32x64xf32>, vector<64x64xf32> -> vector<64x64xf32>
    %c0_355 = arith.constant 0 : index
    %c0_356 = arith.constant 0 : index
    %c0_357 = arith.constant 0 : index
    %391 = vector.load %arg12[%c0_355, %c0_356, %c0_357] : memref<1x1x64xf32, #tpu.memory_space<vmem>>, vector<1x1x64xf32>
    %392 = vector.shape_cast %391 : vector<1x1x64xf32> to vector<1x64xf32>
    %393 = vector.broadcast %392 : vector<1x64xf32> to vector<64x64xf32>
    %394 = arith.addf %390, %393 : vector<64x64xf32>
    %cst_358 = arith.constant 0.000000e+00 : f32
    %395 = vector.broadcast %cst_358 : f32 to vector<64x64xf32>
    %396 = arith.maximumf %394, %395 : vector<64x64xf32>
    %c0_359 = arith.constant 0 : index
    %c0_360 = arith.constant 0 : index
    %c0_361 = arith.constant 0 : index
    %397 = vector.load %arg14[%c0_359, %c0_360, %c0_361] : memref<1x3x32xf32, #tpu.memory_space<vmem>>, vector<1x3x32xf32>
    %398 = vector.shape_cast %397 : vector<1x3x32xf32> to vector<3x32xf32>
    %c0_362 = arith.constant 0 : index
    %c0_363 = arith.constant 0 : index
    %c0_364 = arith.constant 0 : index
    %399 = vector.load %arg13[%c0_362, %c0_363, %c0_364] : memref<1x64x32xf32, #tpu.memory_space<vmem>>, vector<1x64x32xf32>
    %400 = vector.shape_cast %399 : vector<1x64x32xf32> to vector<64x32xf32>
    %cst_365 = arith.constant dense<0.000000e+00> : vector<64x32xf32>
    %401 = tpu.matmul %396, %400, %cst_365 {dimension_numbers = #tpu.dot_dimension_numbers<[1], [0], [0], [1], [0, 0, 1, 1], [], []>} : vector<64x64xf32>, vector<64x32xf32>, vector<64x32xf32> -> vector<64x32xf32>
    %402 = vector.extract_strided_slice %398 {offsets = [0, 0], sizes = [1, 32], strides = [1, 1]} : vector<3x32xf32> to vector<1x32xf32>
    %403 = vector.broadcast %402 : vector<1x32xf32> to vector<64x32xf32>
    %404 = arith.addf %401, %403 : vector<64x32xf32>
    %405 = arith.addf %387, %404 : vector<64x32xf32>
    %406 = vector.extract_strided_slice %398 {offsets = [1, 0], sizes = [1, 32], strides = [1, 1]} : vector<3x32xf32> to vector<1x32xf32>
    %407 = vector.extract_strided_slice %398 {offsets = [2, 0], sizes = [1, 32], strides = [1, 1]} : vector<3x32xf32> to vector<1x32xf32>
    %cst_366 = arith.constant dense<0.000000e+00> : vector<64xf32>
    %408 = vector.multi_reduction <add>, %405, %cst_366 [1] : vector<64x32xf32> to vector<64xf32>
    %409 = vector.shape_cast %408 : vector<64xf32> to vector<64x1xf32>
    %cst_367 = arith.constant 3.200000e+01 : f32
    %410 = vector.broadcast %cst_367 : f32 to vector<64x1xf32>
    %411 = arith.divf %409, %410 : vector<64x1xf32>
    %412 = vector.broadcast %411 : vector<64x1xf32> to vector<64x32xf32>
    %413 = arith.subf %405, %412 : vector<64x32xf32>
    %414 = arith.mulf %413, %413 : vector<64x32xf32>
    %cst_368 = arith.constant dense<0.000000e+00> : vector<64xf32>
    %415 = vector.multi_reduction <add>, %414, %cst_368 [1] : vector<64x32xf32> to vector<64xf32>
    %416 = vector.shape_cast %415 : vector<64xf32> to vector<64x1xf32>
    %cst_369 = arith.constant 3.200000e+01 : f32
    %417 = vector.broadcast %cst_369 : f32 to vector<64x1xf32>
    %418 = arith.divf %416, %417 : vector<64x1xf32>
    %419 = vector.broadcast %411 : vector<64x1xf32> to vector<64x32xf32>
    %420 = arith.subf %405, %419 : vector<64x32xf32>
    %cst_370 = arith.constant 9.99999974E-6 : f32
    %421 = vector.broadcast %cst_370 : f32 to vector<64x1xf32>
    %422 = arith.addf %418, %421 : vector<64x1xf32>
    %423 = math.rsqrt %422 : vector<64x1xf32>
    %424 = vector.broadcast %423 : vector<64x1xf32> to vector<64x32xf32>
    %425 = arith.mulf %420, %424 : vector<64x32xf32>
    %426 = vector.broadcast %406 : vector<1x32xf32> to vector<64x32xf32>
    %427 = arith.mulf %425, %426 : vector<64x32xf32>
    %428 = vector.broadcast %407 : vector<1x32xf32> to vector<64x32xf32>
    %429 = arith.addf %427, %428 : vector<64x32xf32>
    %c0_371 = arith.constant 0 : index
    %c0_372 = arith.constant 0 : index
    %430 = vector.load %arg15[%c0_371, %c0_372] : memref<64x32xf32, #tpu.memory_space<vmem>>, vector<64x32xf32>
    tpu.vector_store %arg15[%c0_371, %c0_372], %429 {strides = array<i32>} : memref<64x32xf32, #tpu.memory_space<vmem>>, vector<64x32xf32>,
    return
  }
  func.func @transform_0(%arg0: i32) -> (i32, i32) {
    %c0_i32 = arith.constant 0 : i32
    %c0_i32_0 = arith.constant 0 : i32
    return %arg0, %c0_i32 : i32, i32
  }
  func.func @transform_1(%arg0: i32) -> (i32, i32) {
    %c0_i32 = arith.constant 0 : i32
    %c0_i32_0 = arith.constant 0 : i32
    return %arg0, %c0_i32 : i32, i32
  }
  func.func @transform_2(%arg0: i32) -> (i32, i32, i32, i32, i32) {
    %c0_i32 = arith.constant 0 : i32
    %c0_i32_0 = arith.constant 0 : i32
    %c0_i32_1 = arith.constant 0 : i32
    %c0_i32_2 = arith.constant 0 : i32
    %c0_i32_3 = arith.constant 0 : i32
    %c0_i32_4 = arith.constant 0 : i32
    return %c0_i32, %c0_i32_0, %c0_i32_1, %c0_i32_2, %c0_i32_3 : i32, i32, i32, i32, i32
  }
  func.func @transform_3(%arg0: i32) -> (i32, i32, i32, i32, i32) {
    %c0_i32 = arith.constant 0 : i32
    %c0_i32_0 = arith.constant 0 : i32
    %c0_i32_1 = arith.constant 0 : i32
    %c0_i32_2 = arith.constant 0 : i32
    %c0_i32_3 = arith.constant 0 : i32
    %c0_i32_4 = arith.constant 0 : i32
    return %c0_i32, %c0_i32_0, %c0_i32_1, %c0_i32_2, %c0_i32_3 : i32, i32, i32, i32, i32
  }
  func.func @transform_4(%arg0: i32) -> (i32, i32, i32, i32) {
    %c0_i32 = arith.constant 0 : i32
    %c0_i32_0 = arith.constant 0 : i32
    %c0_i32_1 = arith.constant 0 : i32
    %c0_i32_2 = arith.constant 0 : i32
    %c0_i32_3 = arith.constant 0 : i32
    return %c0_i32, %c0_i32_0, %c0_i32_1, %c0_i32_2 : i32, i32, i32, i32
  }
  func.func @transform_5(%arg0: i32) -> (i32, i32, i32) {
    %c0_i32 = arith.constant 0 : i32
    %c0_i32_0 = arith.constant 0 : i32
    %c0_i32_1 = arith.constant 0 : i32
    %c0_i32_2 = arith.constant 0 : i32
    return %c0_i32, %c0_i32_0, %c0_i32_1 : i32, i32, i32
  }
  func.func @transform_6(%arg0: i32) -> (i32, i32, i32, i32, i32) {
    %c0_i32 = arith.constant 0 : i32
    %c0_i32_0 = arith.constant 0 : i32
    %c0_i32_1 = arith.constant 0 : i32
    %c0_i32_2 = arith.constant 0 : i32
    %c0_i32_3 = arith.constant 0 : i32
    %c0_i32_4 = arith.constant 0 : i32
    return %c0_i32, %c0_i32_0, %c0_i32_1, %c0_i32_2, %c0_i32_3 : i32, i32, i32, i32, i32
  }
  func.func @transform_7(%arg0: i32) -> (i32, i32, i32, i32, i32) {
    %c0_i32 = arith.constant 0 : i32
    %c0_i32_0 = arith.constant 0 : i32
    %c0_i32_1 = arith.constant 0 : i32
    %c0_i32_2 = arith.constant 0 : i32
    %c0_i32_3 = arith.constant 0 : i32
    %c0_i32_4 = arith.constant 0 : i32
    return %c0_i32, %c0_i32_0, %c0_i32_1, %c0_i32_2, %c0_i32_3 : i32, i32, i32, i32, i32
  }
  func.func @transform_8(%arg0: i32) -> (i32, i32, i32, i32) {
    %c0_i32 = arith.constant 0 : i32
    %c0_i32_0 = arith.constant 0 : i32
    %c0_i32_1 = arith.constant 0 : i32
    %c0_i32_2 = arith.constant 0 : i32
    %c0_i32_3 = arith.constant 0 : i32
    return %c0_i32, %c0_i32_0, %c0_i32_1, %c0_i32_2 : i32, i32, i32, i32
  }
  func.func @transform_9(%arg0: i32) -> (i32, i32, i32) {
    %c0_i32 = arith.constant 0 : i32
    %c0_i32_0 = arith.constant 0 : i32
    %c0_i32_1 = arith.constant 0 : i32
    %c0_i32_2 = arith.constant 0 : i32
    return %c0_i32, %c0_i32_0, %c0_i32_1 : i32, i32, i32
  }
  func.func @transform_10(%arg0: i32) -> (i32, i32, i32) {
    %c0_i32 = arith.constant 0 : i32
    %c0_i32_0 = arith.constant 0 : i32
    %c0_i32_1 = arith.constant 0 : i32
    %c0_i32_2 = arith.constant 0 : i32
    return %c0_i32, %c0_i32_0, %c0_i32_1 : i32, i32, i32
  }
  func.func @transform_11(%arg0: i32) -> (i32, i32, i32) {
    %c0_i32 = arith.constant 0 : i32
    %c0_i32_0 = arith.constant 0 : i32
    %c0_i32_1 = arith.constant 0 : i32
    %c0_i32_2 = arith.constant 0 : i32
    return %c0_i32, %c0_i32_0, %c0_i32_1 : i32, i32, i32
  }
  func.func @transform_12(%arg0: i32) -> (i32, i32, i32) {
    %c0_i32 = arith.constant 0 : i32
    %c0_i32_0 = arith.constant 0 : i32
    %c0_i32_1 = arith.constant 0 : i32
    %c0_i32_2 = arith.constant 0 : i32
    return %c0_i32, %c0_i32_0, %c0_i32_1 : i32, i32, i32
  }
  func.func @transform_13(%arg0: i32) -> (i32, i32, i32) {
    %c0_i32 = arith.constant 0 : i32
    %c0_i32_0 = arith.constant 0 : i32
    %c0_i32_1 = arith.constant 0 : i32
    %c0_i32_2 = arith.constant 0 : i32
    return %c0_i32, %c0_i32_0, %c0_i32_1 : i32, i32, i32
  }
  func.func @transform_14(%arg0: i32) -> (i32, i32) {
    %c0_i32 = arith.constant 0 : i32
    %c0_i32_0 = arith.constant 0 : i32
    return %arg0, %c0_i32 : i32, i32
  }
}

</mosaic_0001>

<llo_original>
// kernel: mask_guide_attention.1
$region0: #{mask_guide_attention.1}
  #allocation0 [shape = 'u32[]', space=smem, size = 0x4, offset = 0x4, fixed_abs, tag = 'smem constant byte address 0x4 - core index']
  #allocation1 [shape = 'u32[144,128]{1,0:T(1,128)}', space=vmem, size = 0x12000, scoped, tag = 'internal scratch']
  %s0 = inlined_call_operand.vmem [shape: f32[128,32], index: 0, kind: input, shape index: {}]
  %s1 = inlined_call_operand.vmem [shape: f32[128,32], index: 1, kind: input, shape index: {}]
  %s2 = inlined_call_operand.vmem [shape: f32[1,3,4,32,8], index: 2, kind: input, shape index: {}]
  %s3 = inlined_call_operand.vmem [shape: f32[1,3,4,1,8], index: 3, kind: input, shape index: {}]
  %s4 = inlined_call_operand.vmem [shape: f32[1,4,8,32], index: 4, kind: input, shape index: {}]
  %s5 = inlined_call_operand.vmem [shape: f32[1,3,32], index: 5, kind: input, shape index: {}]
  %s6 = inlined_call_operand.vmem [shape: f32[1,3,4,32,8], index: 6, kind: input, shape index: {}]
  %s7 = inlined_call_operand.vmem [shape: f32[1,3,4,1,8], index: 7, kind: input, shape index: {}]
  %s8 = inlined_call_operand.vmem [shape: f32[1,4,8,32], index: 8, kind: input, shape index: {}]
  %s9 = inlined_call_operand.vmem [shape: f32[1,3,32], index: 9, kind: input, shape index: {}]
  %s10 = inlined_call_operand.vmem [shape: f32[1,32,64], index: 10, kind: input, shape index: {}]
  %s11 = inlined_call_operand.vmem [shape: f32[1,1,64], index: 11, kind: input, shape index: {}]
  %s12 = inlined_call_operand.vmem [shape: f32[1,64,32], index: 12, kind: input, shape index: {}]
  %s13 = inlined_call_operand.vmem [shape: f32[1,3,32], index: 13, kind: input, shape index: {}]
  %s14 = inlined_call_operand.hbm [shape: f32[128,32], index: 14, kind: output, shape index: {}]
  %s15 = sld [smem:[#allocation0]]
  $region89: #{mask_guide_attention.1} parent=0
    _
  %s17 = ssub.s32 1, %s15
  %s18 = scalar_select 0, %s17, %s15
  $region1: #{mask_guide_attention.1} parent=0
    #allocation2 [shape = 'u8[65536]{0}', space=vmem, size = 0x10000, scoped, tag = 'output window, operand 0']
    #allocation3 [shape = 's32[2]{0}', space=sflag, size = 0x8, scoped, tag = 'scoped memory for mask_guide_attention.1']
    %19 = vsyncpa [#allocation3], 0
    %s20 = scalar_lea.sflag [#allocation3], 1
    %21 = vsyncpa %s20, 0
    loop: start=0, step=1, limit=4
    $region2: #{mask_guide_attention.1} parent=1 // loop_pre_header
      _
    $region3: #{mask_guide_attention.1} parent=1 // loop_header
      %s23 = sphi 0, %s27
      %p24 = scmp.ge.s32.totalorder %s23, 4
      %s33 = sphi 0, %s35
      %s36 = sphi 0, %s33
      %s37 = sphi 0, %s36
      %s53 = sphi 0, %s37
      %s59 = sphi 0, %s61
      %s62 = sphi 0, %s59
      %s63 = sphi 0, %s62
      %s79 = sphi 0, %s63
      %s83 = sphi 0, %s83
      %s85 = sphi 0, %s83
      %s86 = sphi 0, %s85
      %s100 = sphi 0, %s86
      %s104 = sphi 0, %s104
      %s106 = sphi 0, %s104
      %s107 = sphi 0, %s106
      %s121 = sphi 0, %s107
      %s125 = sphi 0, %s125
      %s127 = sphi 0, %s125
      %s128 = sphi 0, %s127
      %s142 = sphi 0, %s128
      %s146 = sphi 0, %s146
      %s148 = sphi 0, %s146
      %s149 = sphi 0, %s148
      %s163 = sphi 0, %s149
      %s167 = sphi 0, %s167
      %s169 = sphi 0, %s167
      %s170 = sphi 0, %s169
      %s184 = sphi 0, %s170
      %s188 = sphi 0, %s188
      %s190 = sphi 0, %s188
      %s191 = sphi 0, %s190
      %s205 = sphi 0, %s191
      %s209 = sphi 0, %s209
      %s211 = sphi 0, %s209
      %s212 = sphi 0, %s211
      %s226 = sphi 0, %s212
      %s230 = sphi 0, %s230
      %s232 = sphi 0, %s230
      %s233 = sphi 0, %s232
      %s247 = sphi 0, %s233
      %s251 = sphi 0, %s251
      %s253 = sphi 0, %s251
      %s254 = sphi 0, %s253
      %s268 = sphi 0, %s254
      %s272 = sphi 0, %s272
      %s274 = sphi 0, %s272
      %s275 = sphi 0, %s274
      %s289 = sphi 0, %s275
      %s293 = sphi 0, %s293
      %s295 = sphi 0, %s293
      %s296 = sphi 0, %s295
      %s310 = sphi 0, %s296
      %s314 = sphi 0, %s314
      %s316 = sphi 0, %s314
      %s317 = sphi 0, %s316
      %s331 = sphi 0, %s317
      %s337 = sphi 0, %s339
      %s340 = sphi 0, %s337
      %s341 = sphi 0, %s340
      %s357 = sphi 0, %s341
    $region4: #{mask_guide_attention.1} parent=1 // loop_header_branch
      %26 = sbr.rel (%p24) target = $region8
    $region5: #{mask_guide_attention.1} parent=1 // loop_body
      %s28 = ssub.s32 %s23, 1
      %s29 = ssub.s32 %s23, 2
      %s30 = sadd.s32 %s23, 1
      %s31 = ssub.s32 %s23, %s30
      %p32 = scmp.eq.s32.totalorder %s31, 0
      %s34 = sadd.s32 %s33, 1
      %s35 = scalar_select %p32, %s33, %s34
      %p38 = pneg %p32
      %p39 = scmp.eq.s32.totalorder %s23, 1
      %p40 = por %p38, %p39
      %p41 = scmp.ne.s32.totalorder %s33, %s36
      %p42 = scmp.eq.s32.totalorder %s23, 0
      %p43 = por %p41, %p42
      %p44 = scmp.ne.s32.totalorder %s33, %s36
      %p45 = scmp.eq.s32.totalorder %s28, 1
      %p46 = por %p44, %p45
      %p47 = scmp.ne.s32.totalorder %s36, %s37
      %p48 = scmp.eq.s32.totalorder %s28, 0
      %p49 = por %p47, %p48
      %p50 = scmp.ne.s32.totalorder %s36, %s37
      %p51 = scmp.eq.s32.totalorder %s29, 1
      %p52 = por %p50, %p51
      %p54 = scmp.ne.s32.totalorder %s37, %s53
      %p55 = scmp.eq.s32.totalorder %s29, 0
      %p56 = por %p54, %p55
      %s57 = ssub.s32 %s23, %s30
      %p58 = scmp.eq.s32.totalorder %s57, 0
      %s60 = sadd.s32 %s59, 1
      %s61 = scalar_select %p58, %s59, %s60
      %p64 = pneg %p58
      %p65 = scmp.eq.s32.totalorder %s23, 1
      %p66 = por %p64, %p65
      %p67 = scmp.ne.s32.totalorder %s59, %s62
      %p68 = scmp.eq.s32.totalorder %s23, 0
      %p69 = por %p67, %p68
      %p70 = scmp.ne.s32.totalorder %s59, %s62
      %p71 = scmp.eq.s32.totalorder %s28, 1
      %p72 = por %p70, %p71
      %p73 = scmp.ne.s32.totalorder %s62, %s63
      %p74 = scmp.eq.s32.totalorder %s28, 0
      %p75 = por %p73, %p74
      %p76 = scmp.ne.s32.totalorder %s62, %s63
      %p77 = scmp.eq.s32.totalorder %s29, 1
      %p78 = por %p76, %p77
      %p80 = scmp.ne.s32.totalorder %s63, %s79
      %p81 = scmp.eq.s32.totalorder %s29, 0
      %p82 = por %p80, %p81
      %s84 = sadd.s32 %s83, 1
      %p87 = scmp.eq.s32.totalorder %s23, 1
      %p88 = scmp.ne.s32.totalorder %s83, %s85
      %p89 = scmp.eq.s32.totalorder %s23, 0
      %p90 = por %p88, %p89
      %p91 = scmp.ne.s32.totalorder %s83, %s85
      %p92 = scmp.eq.s32.totalorder %s28, 1
      %p93 = por %p91, %p92
      %p94 = scmp.ne.s32.totalorder %s85, %s86
      %p95 = scmp.eq.s32.totalorder %s28, 0
      %p96 = por %p94, %p95
      %p97 = scmp.ne.s32.totalorder %s85, %s86
      %p98 = scmp.eq.s32.totalorder %s29, 1
      %p99 = por %p97, %p98
      %p101 = scmp.ne.s32.totalorder %s86, %s100
      %p102 = scmp.eq.s32.totalorder %s29, 0
      %p103 = por %p101, %p102
      %s105 = sadd.s32 %s104, 1
      %p108 = scmp.eq.s32.totalorder %s23, 1
      %p109 = scmp.ne.s32.totalorder %s104, %s106
      %p110 = scmp.eq.s32.totalorder %s23, 0
      %p111 = por %p109, %p110
      %p112 = scmp.ne.s32.totalorder %s104, %s106
      %p113 = scmp.eq.s32.totalorder %s28, 1
      %p114 = por %p112, %p113
      %p115 = scmp.ne.s32.totalorder %s106, %s107
      %p116 = scmp.eq.s32.totalorder %s28, 0
      %p117 = por %p115, %p116
      %p118 = scmp.ne.s32.totalorder %s106, %s107
      %p119 = scmp.eq.s32.totalorder %s29, 1
      %p120 = por %p118, %p119
      %p122 = scmp.ne.s32.totalorder %s107, %s121
      %p123 = scmp.eq.s32.totalorder %s29, 0
      %p124 = por %p122, %p123
      %s126 = sadd.s32 %s125, 1
      %p129 = scmp.eq.s32.totalorder %s23, 1
      %p130 = scmp.ne.s32.totalorder %s125, %s127
      %p131 = scmp.eq.s32.totalorder %s23, 0
      %p132 = por %p130, %p131
      %p133 = scmp.ne.s32.totalorder %s125, %s127
      %p134 = scmp.eq.s32.totalorder %s28, 1
      %p135 = por %p133, %p134
      %p136 = scmp.ne.s32.totalorder %s127, %s128
      %p137 = scmp.eq.s32.totalorder %s28, 0
      %p138 = por %p136, %p137
      %p139 = scmp.ne.s32.totalorder %s127, %s128
      %p140 = scmp.eq.s32.totalorder %s29, 1
      %p141 = por %p139, %p140
      %p143 = scmp.ne.s32.totalorder %s128, %s142
      %p144 = scmp.eq.s32.totalorder %s29, 0
      %p145 = por %p143, %p144
      %s147 = sadd.s32 %s146, 1
      %p150 = scmp.eq.s32.totalorder %s23, 1
      %p151 = scmp.ne.s32.totalorder %s146, %s148
      %p152 = scmp.eq.s32.totalorder %s23, 0
      %p153 = por %p151, %p152
      %p154 = scmp.ne.s32.totalorder %s146, %s148
      %p155 = scmp.eq.s32.totalorder %s28, 1
      %p156 = por %p154, %p155
      %p157 = scmp.ne.s32.totalorder %s148, %s149
      %p158 = scmp.eq.s32.totalorder %s28, 0
      %p159 = por %p157, %p158
      %p160 = scmp.ne.s32.totalorder %s148, %s149
      %p161 = scmp.eq.s32.totalorder %s29, 1
      %p162 = por %p160, %p161
      %p164 = scmp.ne.s32.totalorder %s149, %s163
      %p165 = scmp.eq.s32.totalorder %s29, 0
      %p166 = por %p164, %p165
      %s168 = sadd.s32 %s167, 1
      %p171 = scmp.eq.s32.totalorder %s23, 1
      %p172 = scmp.ne.s32.totalorder %s167, %s169
      %p173 = scmp.eq.s32.totalorder %s23, 0
      %p174 = por %p172, %p173
      %p175 = scmp.ne.s32.totalorder %s167, %s169
      %p176 = scmp.eq.s32.totalorder %s28, 1
      %p177 = por %p175, %p176
      %p178 = scmp.ne.s32.totalorder %s169, %s170
      %p179 = scmp.eq.s32.totalorder %s28, 0
      %p180 = por %p178, %p179
      %p181 = scmp.ne.s32.totalorder %s169, %s170
      %p182 = scmp.eq.s32.totalorder %s29, 1
      %p183 = por %p181, %p182
      %p185 = scmp.ne.s32.totalorder %s170, %s184
      %p186 = scmp.eq.s32.totalorder %s29, 0
      %p187 = por %p185, %p186
      %s189 = sadd.s32 %s188, 1
      %p192 = scmp.eq.s32.totalorder %s23, 1
      %p193 = scmp.ne.s32.totalorder %s188, %s190
      %p194 = scmp.eq.s32.totalorder %s23, 0
      %p195 = por %p193, %p194
      %p196 = scmp.ne.s32.totalorder %s188, %s190
      %p197 = scmp.eq.s32.totalorder %s28, 1
      %p198 = por %p196, %p197
      %p199 = scmp.ne.s32.totalorder %s190, %s191
      %p200 = scmp.eq.s32.totalorder %s28, 0
      %p201 = por %p199, %p200
      %p202 = scmp.ne.s32.totalorder %s190, %s191
      %p203 = scmp.eq.s32.totalorder %s29, 1
      %p204 = por %p202, %p203
      %p206 = scmp.ne.s32.totalorder %s191, %s205
      %p207 = scmp.eq.s32.totalorder %s29, 0
      %p208 = por %p206, %p207
      %s210 = sadd.s32 %s209, 1
      %p213 = scmp.eq.s32.totalorder %s23, 1
      %p214 = scmp.ne.s32.totalorder %s209, %s211
      %p215 = scmp.eq.s32.totalorder %s23, 0
      %p216 = por %p214, %p215
      %p217 = scmp.ne.s32.totalorder %s209, %s211
      %p218 = scmp.eq.s32.totalorder %s28, 1
      %p219 = por %p217, %p218
      %p220 = scmp.ne.s32.totalorder %s211, %s212
      %p221 = scmp.eq.s32.totalorder %s28, 0
      %p222 = por %p220, %p221
      %p223 = scmp.ne.s32.totalorder %s211, %s212
      %p224 = scmp.eq.s32.totalorder %s29, 1
      %p225 = por %p223, %p224
      %p227 = scmp.ne.s32.totalorder %s212, %s226
      %p228 = scmp.eq.s32.totalorder %s29, 0
      %p229 = por %p227, %p228
      %s231 = sadd.s32 %s230, 1
      %p234 = scmp.eq.s32.totalorder %s23, 1
      %p235 = scmp.ne.s32.totalorder %s230, %s232
      %p236 = scmp.eq.s32.totalorder %s23, 0
      %p237 = por %p235, %p236
      %p238 = scmp.ne.s32.totalorder %s230, %s232
      %p239 = scmp.eq.s32.totalorder %s28, 1
      %p240 = por %p238, %p239
      %p241 = scmp.ne.s32.totalorder %s232, %s233
      %p242 = scmp.eq.s32.totalorder %s28, 0
      %p243 = por %p241, %p242
      %p244 = scmp.ne.s32.totalorder %s232, %s233
      %p245 = scmp.eq.s32.totalorder %s29, 1
      %p246 = por %p244, %p245
      %p248 = scmp.ne.s32.totalorder %s233, %s247
      %p249 = scmp.eq.s32.totalorder %s29, 0
      %p250 = por %p248, %p249
      %s252 = sadd.s32 %s251, 1
      %p255 = scmp.eq.s32.totalorder %s23, 1
      %p256 = scmp.ne.s32.totalorder %s251, %s253
      %p257 = scmp.eq.s32.totalorder %s23, 0
      %p258 = por %p256, %p257
      %p259 = scmp.ne.s32.totalorder %s251, %s253
      %p260 = scmp.eq.s32.totalorder %s28, 1
      %p261 = por %p259, %p260
      %p262 = scmp.ne.s32.totalorder %s253, %s254
      %p263 = scmp.eq.s32.totalorder %s28, 0
      %p264 = por %p262, %p263
      %p265 = scmp.ne.s32.totalorder %s253, %s254
      %p266 = scmp.eq.s32.totalorder %s29, 1
      %p267 = por %p265, %p266
      %p269 = scmp.ne.s32.totalorder %s254, %s268
      %p270 = scmp.eq.s32.totalorder %s29, 0
      %p271 = por %p269, %p270
      %s273 = sadd.s32 %s272, 1
      %p276 = scmp.eq.s32.totalorder %s23, 1
      %p277 = scmp.ne.s32.totalorder %s272, %s274
      %p278 = scmp.eq.s32.totalorder %s23, 0
      %p279 = por %p277, %p278
      %p280 = scmp.ne.s32.totalorder %s272, %s274
      %p281 = scmp.eq.s32.totalorder %s28, 1
      %p282 = por %p280, %p281
      %p283 = scmp.ne.s32.totalorder %s274, %s275
      %p284 = scmp.eq.s32.totalorder %s28, 0
      %p285 = por %p283, %p284
      %p286 = scmp.ne.s32.totalorder %s274, %s275
      %p287 = scmp.eq.s32.totalorder %s29, 1
      %p288 = por %p286, %p287
      %p290 = scmp.ne.s32.totalorder %s275, %s289
      %p291 = scmp.eq.s32.totalorder %s29, 0
      %p292 = por %p290, %p291
      %s294 = sadd.s32 %s293, 1
      %p297 = scmp.eq.s32.totalorder %s23, 1
      %p298 = scmp.ne.s32.totalorder %s293, %s295
      %p299 = scmp.eq.s32.totalorder %s23, 0
      %p300 = por %p298, %p299
      %p301 = scmp.ne.s32.totalorder %s293, %s295
      %p302 = scmp.eq.s32.totalorder %s28, 1
      %p303 = por %p301, %p302
      %p304 = scmp.ne.s32.totalorder %s295, %s296
      %p305 = scmp.eq.s32.totalorder %s28, 0
      %p306 = por %p304, %p305
      %p307 = scmp.ne.s32.totalorder %s295, %s296
      %p308 = scmp.eq.s32.totalorder %s29, 1
      %p309 = por %p307, %p308
      %p311 = scmp.ne.s32.totalorder %s296, %s310
      %p312 = scmp.eq.s32.totalorder %s29, 0
      %p313 = por %p311, %p312
      %s315 = sadd.s32 %s314, 1
      %p318 = scmp.eq.s32.totalorder %s23, 1
      %p319 = scmp.ne.s32.totalorder %s314, %s316
      %p320 = scmp.eq.s32.totalorder %s23, 0
      %p321 = por %p319, %p320
      %p322 = scmp.ne.s32.totalorder %s314, %s316
      %p323 = scmp.eq.s32.totalorder %s28, 1
      %p324 = por %p322, %p323
      %p325 = scmp.ne.s32.totalorder %s316, %s317
      %p326 = scmp.eq.s32.totalorder %s28, 0
      %p327 = por %p325, %p326
      %p328 = scmp.ne.s32.totalorder %s316, %s317
      %p329 = scmp.eq.s32.totalorder %s29, 1
      %p330 = por %p328, %p329
      %p332 = scmp.ne.s32.totalorder %s317, %s331
      %p333 = scmp.eq.s32.totalorder %s29, 0
      %p334 = por %p332, %p333
      %s335 = ssub.s32 %s23, %s30
      %p336 = scmp.eq.s32.totalorder %s335, 0
      %s338 = sadd.s32 %s337, 1
      %s339 = scalar_select %p336, %s337, %s338
      %p342 = pneg %p336
      %p343 = scmp.eq.s32.totalorder %s23, 1
      %p344 = por %p342, %p343
      %p345 = scmp.ne.s32.totalorder %s337, %s340
      %p346 = scmp.eq.s32.totalorder %s23, 0
      %p347 = por %p345, %p346
      %p348 = scmp.ne.s32.totalorder %s337, %s340
      %p349 = scmp.eq.s32.totalorder %s28, 1
      %p350 = por %p348, %p349
      %p351 = scmp.ne.s32.totalorder %s340, %s341
      %p352 = scmp.eq.s32.totalorder %s28, 0
      %p353 = por %p351, %p352
      %p354 = scmp.ne.s32.totalorder %s340, %s341
      %p355 = scmp.eq.s32.totalorder %s29, 1
      %p356 = por %p354, %p355
      %p358 = scmp.ne.s32.totalorder %s341, %s357
      %p359 = scmp.eq.s32.totalorder %s29, 0
      %p360 = por %p358, %p359
      %p361 = scmp.le.s32.totalorder 1, %s23
      %p362 = scmp.lt.s32.totalorder %s23, 3
      %p363 = pnand %p361, %p362
      %p364 = pneg %p363
      // Predicated region
      $region9: #{mask_guide_attention.1} parent=5 // pred_check
        _
      $region10: #{mask_guide_attention.1} parent=5 // pred_check_branch
        %366 = sbr.rel (%p363) target = $region12
      $region11: #{mask_guide_attention.1} parent=5 // pred_region
        %s367 = ssub.s32 %s23, 1
        // Predicated region
        $region13: #{mask_guide_attention.1} parent=11 // pred_check
          %p368 = pneg %p96
        $region14: #{mask_guide_attention.1} parent=11 // pred_check_branch
          %370 = sbr.rel (%p368) target = $region16
        $region15: #{mask_guide_attention.1} parent=11 // pred_region
          _
        $region16: #{mask_guide_attention.1} parent=11 // pred_fallthru
          _
        // Predicated region
        $region17: #{mask_guide_attention.1} parent=11 // pred_check
          %p371 = pneg %p117
        $region18: #{mask_guide_attention.1} parent=11 // pred_check_branch
          %373 = sbr.rel (%p371) target = $region20
        $region19: #{mask_guide_attention.1} parent=11 // pred_region
          _
        $region20: #{mask_guide_attention.1} parent=11 // pred_fallthru
          _
        // Predicated region
        $region21: #{mask_guide_attention.1} parent=11 // pred_check
          %p374 = pneg %p138
        $region22: #{mask_guide_attention.1} parent=11 // pred_check_branch
          %376 = sbr.rel (%p374) target = $region24
        $region23: #{mask_guide_attention.1} parent=11 // pred_region
          _
        $region24: #{mask_guide_attention.1} parent=11 // pred_fallthru
          _
        // Predicated region
        $region25: #{mask_guide_attention.1} parent=11 // pred_check
          %p377 = pneg %p159
        $region26: #{mask_guide_attention.1} parent=11 // pred_check_branch
          %379 = sbr.rel (%p377) target = $region28
        $region27: #{mask_guide_attention.1} parent=11 // pred_region
          _
        $region28: #{mask_guide_attention.1} parent=11 // pred_fallthru
          _
        // Predicated region
        $region29: #{mask_guide_attention.1} parent=11 // pred_check
          %p380 = pneg %p180
        $region30: #{mask_guide_attention.1} parent=11 // pred_check_branch
          %382 = sbr.rel (%p380) target = $region32
        $region31: #{mask_guide_attention.1} parent=11 // pred_region
          _
        $region32: #{mask_guide_attention.1} parent=11 // pred_fallthru
          _
        // Predicated region
        $region33: #{mask_guide_attention.1} parent=11 // pred_check
          %p383 = pneg %p201
        $region34: #{mask_guide_attention.1} parent=11 // pred_check_branch
          %385 = sbr.rel (%p383) target = $region36
        $region35: #{mask_guide_attention.1} parent=11 // pred_region
          _
        $region36: #{mask_guide_attention.1} parent=11 // pred_fallthru
          _
        // Predicated region
        $region37: #{mask_guide_attention.1} parent=11 // pred_check
          %p386 = pneg %p222
        $region38: #{mask_guide_attention.1} parent=11 // pred_check_branch
          %388 = sbr.rel (%p386) target = $region40
        $region39: #{mask_guide_attention.1} parent=11 // pred_region
          _
        $region40: #{mask_guide_attention.1} parent=11 // pred_fallthru
          _
        // Predicated region
        $region41: #{mask_guide_attention.1} parent=11 // pred_check
          %p389 = pneg %p243
        $region42: #{mask_guide_attention.1} parent=11 // pred_check_branch
          %391 = sbr.rel (%p389) target = $region44
        $region43: #{mask_guide_attention.1} parent=11 // pred_region
          _
        $region44: #{mask_guide_attention.1} parent=11 // pred_fallthru
          _
        // Predicated region
        $region45: #{mask_guide_attention.1} parent=11 // pred_check
          %p392 = pneg %p264
        $region46: #{mask_guide_attention.1} parent=11 // pred_check_branch
          %394 = sbr.rel (%p392) target = $region48
        $region47: #{mask_guide_attention.1} parent=11 // pred_region
          _
        $region48: #{mask_guide_attention.1} parent=11 // pred_fallthru
          _
        // Predicated region
        $region49: #{mask_guide_attention.1} parent=11 // pred_check
          %p395 = pneg %p285
        $region50: #{mask_guide_attention.1} parent=11 // pred_check_branch
          %397 = sbr.rel (%p395) target = $region52
        $region51: #{mask_guide_attention.1} parent=11 // pred_region
          _
        $region52: #{mask_guide_attention.1} parent=11 // pred_fallthru
          _
        // Predicated region
        $region53: #{mask_guide_attention.1} parent=11 // pred_check
          %p398 = pneg %p306
        $region54: #{mask_guide_attention.1} parent=11 // pred_check_branch
          %400 = sbr.rel (%p398) target = $region56
        $region55: #{mask_guide_attention.1} parent=11 // pred_region
          _
        $region56: #{mask_guide_attention.1} parent=11 // pred_fallthru
          _
        // Predicated region
        $region57: #{mask_guide_attention.1} parent=11 // pred_check
          %p401 = pneg %p327
        $region58: #{mask_guide_attention.1} parent=11 // pred_check_branch
          %403 = sbr.rel (%p401) target = $region60
        $region59: #{mask_guide_attention.1} parent=11 // pred_region
          _
        $region60: #{mask_guide_attention.1} parent=11 // pred_fallthru
          _
      $region12: #{mask_guide_attention.1} parent=5 // pred_fallthru
        _
      %p404 = scmp.lt.s32.totalorder %s23, 2
      // Predicated region
      $region61: #{mask_guide_attention.1} parent=5 // pred_check
        %p405 = pneg %p404
      $region62: #{mask_guide_attention.1} parent=5 // pred_check_branch
        %407 = sbr.rel (%p405) target = $region64
      $region63: #{mask_guide_attention.1} parent=5 // pred_region
        // Predicated region
        $region65: #{mask_guide_attention.1} parent=63 // pred_check
          %p408 = pneg %p43
        $region66: #{mask_guide_attention.1} parent=63 // pred_check_branch
          %410 = sbr.rel (%p408) target = $region68
        $region67: #{mask_guide_attention.1} parent=63 // pred_region
          %s411 = smul.u32 8, %s23
          %p412 = scmp.lt.s32.totalorder %s411, 15
          %s413 = scalar_select %p412, %s411, 15
          %s414 = smul.addr %s413, 8
          %s415 = scalar_lea.vmem %s0, %s414
          %s416 = smul.u32 8, %s23
        $region68: #{mask_guide_attention.1} parent=63 // pred_fallthru
          _
        // Predicated region
        $region69: #{mask_guide_attention.1} parent=63 // pred_check
          %p417 = pneg %p69
        $region70: #{mask_guide_attention.1} parent=63 // pred_check_branch
          %419 = sbr.rel (%p417) target = $region72
        $region71: #{mask_guide_attention.1} parent=63 // pred_region
          %s420 = smul.u32 8, %s23
          %p421 = scmp.lt.s32.totalorder %s420, 15
          %s422 = scalar_select %p421, %s420, 15
          %s423 = smul.addr %s422, 8
          %s424 = scalar_lea.vmem %s1, %s423
          %s425 = smul.u32 8, %s23
        $region72: #{mask_guide_attention.1} parent=63 // pred_fallthru
          _
      $region64: #{mask_guide_attention.1} parent=5 // pred_fallthru
        _
      %p426 = scmp.le.s32.totalorder 1, %s23
      %p427 = scmp.lt.s32.totalorder %s23, 3
      %p428 = pnand %p426, %p427
      %p429 = pneg %p428
      // Predicated region
      $region73: #{mask_guide_attention.1} parent=5 // pred_check
        _
      $region74: #{mask_guide_attention.1} parent=5 // pred_check_branch
        %431 = sbr.rel (%p428) target = $region76
      $region75: #{mask_guide_attention.1} parent=5 // pred_region
        %s432 = ssub.s32 %s23, 1
        %s433 = smul.u32 8, %s28
        %p434 = scmp.lt.s32.totalorder %s433, 15
        %s435 = scalar_select %p434, %s433, 15
        %s436 = smul.addr %s435, 8
        %s437 = scalar_lea.vmem %s0, %s436
        %p438 = pneg %p49
        %p439 = pneg %p46
        %s440 = smul.u32 8, %s28
        %p441 = scmp.lt.s32.totalorder %s440, 15
        %s442 = scalar_select %p441, %s440, 15
        %s443 = smul.addr %s442, 8
        %s444 = scalar_lea.vmem %s1, %s443
        %p445 = pneg %p75
        %p446 = pneg %p72
        %p447 = pneg %p96
        %p448 = pneg %p93
        %p449 = pneg %p117
        %p450 = pneg %p114
        %p451 = pneg %p138
        %p452 = pneg %p135
        %p453 = pneg %p159
        %p454 = pneg %p156
        %p455 = pneg %p180
        %p456 = pneg %p177
        %p457 = pneg %p201
        %p458 = pneg %p198
        %p459 = pneg %p222
        %p460 = pneg %p219
        %p461 = pneg %p243
        %p462 = pneg %p240
        %p463 = pneg %p264
        %p464 = pneg %p261
        %p465 = pneg %p285
        %p466 = pneg %p282
        %p467 = pneg %p306
        %p468 = pneg %p303
        %p469 = pneg %p327
        %p470 = pneg %p324
        %p471 = pneg %p353
        %p472 = pneg %p350
        %s473 = sand.u32 %s340, 1
        %s474 = scalar_lea.sflag [#allocation3], %s473
        %s475 = sand.u32 %s340, 1
        %s476 = smul.addr %s475, 64
        %s477 = scalar_lea.vmem [#allocation2], %s476
        %s478 = smul.u32 8, %s28
        %p479 = scmp.lt.s32.totalorder %s478, 15
        %s480 = scalar_select %p479, %s478, 15
        %s481 = smul.addr %s480, 8
        %s482 = scalar_lea.vmem %s0, %s481
        %s483 = smul.u32 8, %s28
        %s484 = smul.u32 8, %s28
        %p485 = scmp.lt.s32.totalorder %s484, 15
        %s486 = scalar_select %p485, %s484, 15
        %s487 = smul.addr %s486, 8
        %s488 = scalar_lea.vmem %s1, %s487
        %s489 = smul.u32 8, %s28
        %s490 = smul.u32 8, %s28
        %v491 = vld [vmem:[%s482] sm:$0xff]
        %v492 = vld [vmem:[%s482 + $0x8] sm:$0xff]
        %v493 = vld [vmem:[%s482 + $0x10] sm:$0xff]
        %v494 = vld [vmem:[%s482 + $0x18] sm:$0xff]
        %v495 = vld [vmem:[%s482 + $0x20] sm:$0xff]
        %v496 = vld [vmem:[%s482 + $0x28] sm:$0xff]
        %v497 = vld [vmem:[%s482 + $0x30] sm:$0xff]
        %v498 = vld [vmem:[%s482 + $0x38] sm:$0xff]
        %v499 = vld [vmem:[%s488] sm:$0xff]
        %v500 = vld [vmem:[%s488 + $0x8] sm:$0xff]
        %v501 = vld [vmem:[%s488 + $0x10] sm:$0xff]
        %v502 = vld [vmem:[%s488 + $0x18] sm:$0xff]
        %v503 = vld [vmem:[%s488 + $0x20] sm:$0xff]
        %v504 = vld [vmem:[%s488 + $0x28] sm:$0xff]
        %v505 = vld [vmem:[%s488 + $0x30] sm:$0xff]
        %v506 = vld [vmem:[%s488 + $0x38] sm:$0xff]
        %v507 = vld [vmem:[%s2] sm:$0xff]
        %v508 = vld [vmem:[%s2 + $0x8] sm:$0xff]
        %v509 = vld [vmem:[%s2 + $0x10] sm:$0xff]
        %v510 = vld [vmem:[%s2 + $0x18] sm:$0xff]
        %v511 = vld [vmem:[%s3] sm:$0x1]
        %v513 = vlaneseq
        %v514 = vshrl.u32 %v513, 7
        %v515 = vsub.s32 0, %v514
        %v516 = vrot.slane %v511, %v515
        %vm518 = vcmask 261120
        %v520 = vsel %vm518, %v491, 0
        %v523 = vsel %vm518, %v492, 0
        %v526 = vsel %vm518, %v493, 0
        %v529 = vsel %vm518, %v494, 0
        %v532 = vsel %vm518, %v495, 0
        %v535 = vsel %vm518, %v496, 0
        %v538 = vsel %vm518, %v497, 0
        %v541 = vsel %vm518, %v498, 0
        %543 = vmatprep.subr.mxu0 0.0
        %544 = vmatpush1.msra.mxu0 0.0
        %545 = vmatprep.subr.mxu0 0.0
        %546 = vmatpush1.msra.mxu0 0.0
        %547 = vmatprep.subr.mxu0 0.0
        %548 = vmatpush1.msra.mxu0 0.0
        %549 = vmatprep.subr.mxu0 0.0
        %550 = vmatpush1.msra.mxu0 0.0
        %551 = vmatprep.subr.mxu0 0.0
        %552 = vmatpush1.msra.mxu0 0.0
        %553 = vmatprep.subr.mxu0 0.0
        %554 = vmatpush1.msra.mxu0 0.0
        %555 = vmatprep.subr.mxu0 0.0
        %556 = vmatpush1.msra.mxu0 0.0
        %557 = vmatprep.subr.mxu0 0.0
        %558 = vmatpush1.msra.mxu0 0.0
        %559 = vmatprep.subr.mxu0 0.0
        %560 = vmatpush1.msra.mxu0 0.0
        %561 = vmatprep.subr.mxu0 0.0
        %562 = vmatpush1.msra.mxu0 0.0
        %563 = vmatprep.subr.mxu0 0.0
        %564 = vmatpush1.msra.mxu0 0.0
        %565 = vmatprep.subr.mxu0 0.0
        %566 = vmatpush1.msra.mxu0 0.0
        %567 = vmatprep.subr.mxu0 0.0
        %568 = vmatpush1.msra.mxu0 %v510
        %569 = vmatprep.subr.mxu0 0.0
        %570 = vmatpush1.msra.mxu0 %v509
        %571 = vmatprep.subr.mxu0 0.0
        %572 = vmatpush1.msra.mxu0 %v508
        %573 = vmatprep.subr.mxu0 0.0
        %574 = vmatpush1.msra.mxu0 %v507
        %575 = vmatprep.subr.mxu0 0.0
        %576 = vmatpush2.msra.mxu0 0.0
        %577 = vmatprep.subr.mxu0 0.0
        %578 = vmatpush2.msra.mxu0 0.0
        %579 = vmatprep.subr.mxu0 0.0
        %580 = vmatpush2.msra.mxu0 0.0
        %581 = vmatprep.subr.mxu0 0.0
        %582 = vmatpush2.msra.mxu0 0.0
        %583 = vmatprep.subr.mxu0 0.0
        %584 = vmatpush2.msra.mxu0 0.0
        %585 = vmatprep.subr.mxu0 0.0
        %586 = vmatpush2.msra.mxu0 0.0
        %587 = vmatprep.subr.mxu0 0.0
        %588 = vmatpush2.msra.mxu0 0.0
        %589 = vmatprep.subr.mxu0 0.0
        %590 = vmatpush2.msra.mxu0 0.0
        %591 = vmatprep.subr.mxu0 0.0
        %592 = vmatpush2.msra.mxu0 0.0
        %593 = vmatprep.subr.mxu0 0.0
        %594 = vmatpush2.msra.mxu0 0.0
        %595 = vmatprep.subr.mxu0 0.0
        %596 = vmatpush2.msra.mxu0 0.0
        %597 = vmatprep.subr.mxu0 0.0
        %598 = vmatpush2.msra.mxu0 0.0
        %599 = vmatprep.subr.mxu0 0.0
        %600 = vmatpush2.msra.mxu0 0.0
        %601 = vmatprep.subr.mxu0 0.0
        %602 = vmatpush2.msra.mxu0 0.0
        %603 = vmatprep.subr.mxu0 0.0
        %604 = vmatpush2.msra.mxu0 0.0
        %605 = vmatprep.subr.mxu0 0.0
        %606 = vmatpush2.msra.mxu0 0.0
        %607 = vmatprep.mubr.f32.mxu0 0.0
        %608 = vmatmul.mubr.f32.gmra.mxu0 %v520
        %v609 = vpop.f32.mrf.mxu0
        %v610 = vadd.f32 %v516, %v609
        %v611 = vpop.f32.mrf.mxu0
        %612 = vmatprep.mubr.f32.mxu0 0.0
        %613 = vmatmul.mubr.f32.gmra.mxu0 %v523
        %v614 = vpop.f32.mrf.mxu0
        %v615 = vadd.f32 %v516, %v614
        %v616 = vpop.f32.mrf.mxu0
        %617 = vmatprep.mubr.f32.mxu0 0.0
        %618 = vmatmul.mubr.f32.gmra.mxu0 %v526
        %v619 = vpop.f32.mrf.mxu0
        %v620 = vadd.f32 %v516, %v619
        %v621 = vpop.f32.mrf.mxu0
        %622 = vmatprep.mubr.f32.mxu0 0.0
        %623 = vmatmul.mubr.f32.gmra.mxu0 %v529
        %v624 = vpop.f32.mrf.mxu0
        %v625 = vadd.f32 %v516, %v624
        %v626 = vpop.f32.mrf.mxu0
        %627 = vmatprep.mubr.f32.mxu0 0.0
        %628 = vmatmul.mubr.f32.gmra.mxu0 %v532
        %v629 = vpop.f32.mrf.mxu0
        %v630 = vadd.f32 %v516, %v629
        %v631 = vpop.f32.mrf.mxu0
        %632 = vmatprep.mubr.f32.mxu0 0.0
        %633 = vmatmul.mubr.f32.gmra.mxu0 %v535
        %v634 = vpop.f32.mrf.mxu0
        %v635 = vadd.f32 %v516, %v634
        %v636 = vpop.f32.mrf.mxu0
        %637 = vmatprep.mubr.f32.mxu0 0.0
        %638 = vmatmul.mubr.f32.gmra.mxu0 %v538
        %v639 = vpop.f32.mrf.mxu0
        %v640 = vadd.f32 %v516, %v639
        %v641 = vpop.f32.mrf.mxu0
        %642 = vmatprep.mubr.f32.mxu0 0.0
        %643 = vmatmul.mubr.f32.gmra.mxu0 %v541
        %v644 = vpop.f32.mrf.mxu0
        %v645 = vadd.f32 %v516, %v644
        %v646 = vpop.f32.mrf.mxu0
        %647 = vdwg.mxu0
        %s648 = scalar_lea.vmem %s2, 128
        %v649 = vld [vmem:[%s648] sm:$0xff]
        %v650 = vld [vmem:[%s648 + $0x8] sm:$0xff]
        %v651 = vld [vmem:[%s648 + $0x10] sm:$0xff]
        %v652 = vld [vmem:[%s648 + $0x18] sm:$0xff]
        %s653 = scalar_lea.vmem %s3, 4
        %v654 = vld [vmem:[%s653] sm:$0x1]
        %v656 = vlaneseq
        %v657 = vshrl.u32 %v656, 7
        %v658 = vsub.s32 0, %v657
        %v659 = vrot.slane %v654, %v658
        %661 = vmatprep.subr.mxu0 0.0
        %662 = vmatpush1.msra.mxu0 0.0
        %663 = vmatprep.subr.mxu0 0.0
        %664 = vmatpush1.msra.mxu0 0.0
        %665 = vmatprep.subr.mxu0 0.0
        %666 = vmatpush1.msra.mxu0 0.0
        %667 = vmatprep.subr.mxu0 0.0
        %668 = vmatpush1.msra.mxu0 0.0
        %669 = vmatprep.subr.mxu0 0.0
        %670 = vmatpush1.msra.mxu0 0.0
        %671 = vmatprep.subr.mxu0 0.0
        %672 = vmatpush1.msra.mxu0 0.0
        %673 = vmatprep.subr.mxu0 0.0
        %674 = vmatpush1.msra.mxu0 0.0
        %675 = vmatprep.subr.mxu0 0.0
        %676 = vmatpush1.msra.mxu0 0.0
        %677 = vmatprep.subr.mxu0 0.0
        %678 = vmatpush1.msra.mxu0 0.0
        %679 = vmatprep.subr.mxu0 0.0
        %680 = vmatpush1.msra.mxu0 0.0
        %681 = vmatprep.subr.mxu0 0.0
        %682 = vmatpush1.msra.mxu0 0.0
        %683 = vmatprep.subr.mxu0 0.0
        %684 = vmatpush1.msra.mxu0 0.0
        %685 = vmatprep.subr.mxu0 0.0
        %686 = vmatpush1.msra.mxu0 %v652
        %687 = vmatprep.subr.mxu0 0.0
        %688 = vmatpush1.msra.mxu0 %v651
        %689 = vmatprep.subr.mxu0 0.0
        %690 = vmatpush1.msra.mxu0 %v650
        %691 = vmatprep.subr.mxu0 0.0
        %692 = vmatpush1.msra.mxu0 %v649
        %693 = vmatprep.subr.mxu0 0.0
        %694 = vmatpush2.msra.mxu0 0.0
        %695 = vmatprep.subr.mxu0 0.0
        %696 = vmatpush2.msra.mxu0 0.0
        %697 = vmatprep.subr.mxu0 0.0
        %698 = vmatpush2.msra.mxu0 0.0
        %699 = vmatprep.subr.mxu0 0.0
        %700 = vmatpush2.msra.mxu0 0.0
        %701 = vmatprep.subr.mxu0 0.0
        %702 = vmatpush2.msra.mxu0 0.0
        %703 = vmatprep.subr.mxu0 0.0
        %704 = vmatpush2.msra.mxu0 0.0
        %705 = vmatprep.subr.mxu0 0.0
        %706 = vmatpush2.msra.mxu0 0.0
        %707 = vmatprep.subr.mxu0 0.0
        %708 = vmatpush2.msra.mxu0 0.0
        %709 = vmatprep.subr.mxu0 0.0
        %710 = vmatpush2.msra.mxu0 0.0
        %711 = vmatprep.subr.mxu0 0.0
        %712 = vmatpush2.msra.mxu0 0.0
        %713 = vmatprep.subr.mxu0 0.0
        %714 = vmatpush2.msra.mxu0 0.0
        %715 = vmatprep.subr.mxu0 0.0
        %716 = vmatpush2.msra.mxu0 0.0
        %717 = vmatprep.subr.mxu0 0.0
        %718 = vmatpush2.msra.mxu0 0.0
        %719 = vmatprep.subr.mxu0 0.0
        %720 = vmatpush2.msra.mxu0 0.0
        %721 = vmatprep.subr.mxu0 0.0
        %722 = vmatpush2.msra.mxu0 0.0
        %723 = vmatprep.subr.mxu0 0.0
        %724 = vmatpush2.msra.mxu0 0.0
        %725 = vmatprep.mubr.f32.mxu0 0.0
        %726 = vmatmul.mubr.f32.gmra.mxu0 %v520
        %v727 = vpop.f32.mrf.mxu0
        %v728 = vadd.f32 %v659, %v727
        %v729 = vpop.f32.mrf.mxu0
        %730 = vmatprep.mubr.f32.mxu0 0.0
        %731 = vmatmul.mubr.f32.gmra.mxu0 %v523
        %v732 = vpop.f32.mrf.mxu0
        %v733 = vadd.f32 %v659, %v732
        %v734 = vpop.f32.mrf.mxu0
        %735 = vmatprep.mubr.f32.mxu0 0.0
        %736 = vmatmul.mubr.f32.gmra.mxu0 %v526
        %v737 = vpop.f32.mrf.mxu0
        %v738 = vadd.f32 %v659, %v737
        %v739 = vpop.f32.mrf.mxu0
        %740 = vmatprep.mubr.f32.mxu0 0.0
        %741 = vmatmul.mubr.f32.gmra.mxu0 %v529
        %v742 = vpop.f32.mrf.mxu0
        %v743 = vadd.f32 %v659, %v742
        %v744 = vpop.f32.mrf.mxu0
        %745 = vmatprep.mubr.f32.mxu0 0.0
        %746 = vmatmul.mubr.f32.gmra.mxu0 %v532
        %v747 = vpop.f32.mrf.mxu0
        %v748 = vadd.f32 %v659, %v747
        %v749 = vpop.f32.mrf.mxu0
        %750 = vmatprep.mubr.f32.mxu0 0.0
        %751 = vmatmul.mubr.f32.gmra.mxu0 %v535
        %v752 = vpop.f32.mrf.mxu0
        %v753 = vadd.f32 %v659, %v752
        %v754 = vpop.f32.mrf.mxu0
        %755 = vmatprep.mubr.f32.mxu0 0.0
        %756 = vmatmul.mubr.f32.gmra.mxu0 %v538
        %v757 = vpop.f32.mrf.mxu0
        %v758 = vadd.f32 %v659, %v757
        %v759 = vpop.f32.mrf.mxu0
        %760 = vmatprep.mubr.f32.mxu0 0.0
        %761 = vmatmul.mubr.f32.gmra.mxu0 %v541
        %v762 = vpop.f32.mrf.mxu0
        %v763 = vadd.f32 %v659, %v762
        %v764 = vpop.f32.mrf.mxu0
        %765 = vdwg.mxu0
        %s766 = scalar_lea.vmem %s2, 256
        %v767 = vld [vmem:[%s766] sm:$0xff]
        %v768 = vld [vmem:[%s766 + $0x8] sm:$0xff]
        %v769 = vld [vmem:[%s766 + $0x10] sm:$0xff]
        %v770 = vld [vmem:[%s766 + $0x18] sm:$0xff]
        %s771 = scalar_lea.vmem %s3, 8
        %v772 = vld [vmem:[%s771] sm:$0x1]
        %v774 = vlaneseq
        %v775 = vshrl.u32 %v774, 7
        %v776 = vsub.s32 0, %v775
        %v777 = vrot.slane %v772, %v776
        %779 = vmatprep.subr.mxu0 0.0
        %780 = vmatpush1.msra.mxu0 0.0
        %781 = vmatprep.subr.mxu0 0.0
        %782 = vmatpush1.msra.mxu0 0.0
        %783 = vmatprep.subr.mxu0 0.0
        %784 = vmatpush1.msra.mxu0 0.0
        %785 = vmatprep.subr.mxu0 0.0
        %786 = vmatpush1.msra.mxu0 0.0
        %787 = vmatprep.subr.mxu0 0.0
        %788 = vmatpush1.msra.mxu0 0.0
        %789 = vmatprep.subr.mxu0 0.0
        %790 = vmatpush1.msra.mxu0 0.0
        %791 = vmatprep.subr.mxu0 0.0
        %792 = vmatpush1.msra.mxu0 0.0
        %793 = vmatprep.subr.mxu0 0.0
        %794 = vmatpush1.msra.mxu0 0.0
        %795 = vmatprep.subr.mxu0 0.0
        %796 = vmatpush1.msra.mxu0 0.0
        %797 = vmatprep.subr.mxu0 0.0
        %798 = vmatpush1.msra.mxu0 0.0
        %799 = vmatprep.subr.mxu0 0.0
        %800 = vmatpush1.msra.mxu0 0.0
        %801 = vmatprep.subr.mxu0 0.0
        %802 = vmatpush1.msra.mxu0 0.0
        %803 = vmatprep.subr.mxu0 0.0
        %804 = vmatpush1.msra.mxu0 %v770
        %805 = vmatprep.subr.mxu0 0.0
        %806 = vmatpush1.msra.mxu0 %v769
        %807 = vmatprep.subr.mxu0 0.0
        %808 = vmatpush1.msra.mxu0 %v768
        %809 = vmatprep.subr.mxu0 0.0
        %810 = vmatpush1.msra.mxu0 %v767
        %811 = vmatprep.subr.mxu0 0.0
        %812 = vmatpush2.msra.mxu0 0.0
        %813 = vmatprep.subr.mxu0 0.0
        %814 = vmatpush2.msra.mxu0 0.0
        %815 = vmatprep.subr.mxu0 0.0
        %816 = vmatpush2.msra.mxu0 0.0
        %817 = vmatprep.subr.mxu0 0.0
        %818 = vmatpush2.msra.mxu0 0.0
        %819 = vmatprep.subr.mxu0 0.0
        %820 = vmatpush2.msra.mxu0 0.0
        %821 = vmatprep.subr.mxu0 0.0
        %822 = vmatpush2.msra.mxu0 0.0
        %823 = vmatprep.subr.mxu0 0.0
        %824 = vmatpush2.msra.mxu0 0.0
        %825 = vmatprep.subr.mxu0 0.0
        %826 = vmatpush2.msra.mxu0 0.0
        %827 = vmatprep.subr.mxu0 0.0
        %828 = vmatpush2.msra.mxu0 0.0
        %829 = vmatprep.subr.mxu0 0.0
        %830 = vmatpush2.msra.mxu0 0.0
        %831 = vmatprep.subr.mxu0 0.0
        %832 = vmatpush2.msra.mxu0 0.0
        %833 = vmatprep.subr.mxu0 0.0
        %834 = vmatpush2.msra.mxu0 0.0
        %835 = vmatprep.subr.mxu0 0.0
        %836 = vmatpush2.msra.mxu0 0.0
        %837 = vmatprep.subr.mxu0 0.0
        %838 = vmatpush2.msra.mxu0 0.0
        %839 = vmatprep.subr.mxu0 0.0
        %840 = vmatpush2.msra.mxu0 0.0
        %841 = vmatprep.subr.mxu0 0.0
        %842 = vmatpush2.msra.mxu0 0.0
        %843 = vmatprep.mubr.f32.mxu0 0.0
        %844 = vmatmul.mubr.f32.gmra.mxu0 %v520
        %v845 = vpop.f32.mrf.mxu0
        %v846 = vadd.f32 %v777, %v845
        %v847 = vpop.f32.mrf.mxu0
        %848 = vmatprep.mubr.f32.mxu0 0.0
        %849 = vmatmul.mubr.f32.gmra.mxu0 %v523
        %v850 = vpop.f32.mrf.mxu0
        %v851 = vadd.f32 %v777, %v850
        %v852 = vpop.f32.mrf.mxu0
        %853 = vmatprep.mubr.f32.mxu0 0.0
        %854 = vmatmul.mubr.f32.gmra.mxu0 %v526
        %v855 = vpop.f32.mrf.mxu0
        %v856 = vadd.f32 %v777, %v855
        %v857 = vpop.f32.mrf.mxu0
        %858 = vmatprep.mubr.f32.mxu0 0.0
        %859 = vmatmul.mubr.f32.gmra.mxu0 %v529
        %v860 = vpop.f32.mrf.mxu0
        %v861 = vadd.f32 %v777, %v860
        %v862 = vpop.f32.mrf.mxu0
        %863 = vmatprep.mubr.f32.mxu0 0.0
        %864 = vmatmul.mubr.f32.gmra.mxu0 %v532
        %v865 = vpop.f32.mrf.mxu0
        %v866 = vadd.f32 %v777, %v865
        %v867 = vpop.f32.mrf.mxu0
        %868 = vmatprep.mubr.f32.mxu0 0.0
        %869 = vmatmul.mubr.f32.gmra.mxu0 %v535
        %v870 = vpop.f32.mrf.mxu0
        %v871 = vadd.f32 %v777, %v870
        %v872 = vpop.f32.mrf.mxu0
        %873 = vmatprep.mubr.f32.mxu0 0.0
        %874 = vmatmul.mubr.f32.gmra.mxu0 %v538
        %v875 = vpop.f32.mrf.mxu0
        %v876 = vadd.f32 %v777, %v875
        %v877 = vpop.f32.mrf.mxu0
        %878 = vmatprep.mubr.f32.mxu0 0.0
        %879 = vmatmul.mubr.f32.gmra.mxu0 %v541
        %v880 = vpop.f32.mrf.mxu0
        %v881 = vadd.f32 %v777, %v880
        %v882 = vpop.f32.mrf.mxu0
        %883 = vdwg.mxu0
        %vm884 = vcmask 64512
        %v886 = vsel %vm884, %v610, 0
        %v889 = vsel %vm884, %v615, 0
        %v892 = vsel %vm884, %v620, 0
        %v895 = vsel %vm884, %v625, 0
        %v898 = vsel %vm884, %v630, 0
        %v901 = vsel %vm884, %v635, 0
        %v904 = vsel %vm884, %v640, 0
        %v907 = vsel %vm884, %v645, 0
        %v910 = vsel %vm884, %v728, 0
        %v913 = vsel %vm884, %v733, 0
        %v916 = vsel %vm884, %v738, 0
        %v919 = vsel %vm884, %v743, 0
        %v922 = vsel %vm884, %v748, 0
        %v925 = vsel %vm884, %v753, 0
        %v928 = vsel %vm884, %v758, 0
        %v931 = vsel %vm884, %v763, 0
        %933 = vmatprep.subr.mxu0 0.0
        %934 = vmatpush1.xpose.msra.mxu0 0.0
        %935 = vmatprep.subr.mxu0 0.0
        %936 = vmatpush1.xpose.msra.mxu0 0.0
        %937 = vmatprep.subr.mxu0 0.0
        %938 = vmatpush1.xpose.msra.mxu0 0.0
        %939 = vmatprep.subr.mxu0 0.0
        %940 = vmatpush1.xpose.msra.mxu0 0.0
        %941 = vmatprep.subr.mxu0 0.0
        %942 = vmatpush1.xpose.msra.mxu0 0.0
        %943 = vmatprep.subr.mxu0 0.0
        %944 = vmatpush1.xpose.msra.mxu0 0.0
        %945 = vmatprep.subr.mxu0 0.0
        %946 = vmatpush1.xpose.msra.mxu0 0.0
        %947 = vmatprep.subr.mxu0 0.0
        %948 = vmatpush1.xpose.msra.mxu0 0.0
        %949 = vmatprep.subr.mxu0 0.0
        %950 = vmatpush1.xpose.msra.mxu0 %v931
        %951 = vmatprep.subr.mxu0 0.0
        %952 = vmatpush1.xpose.msra.mxu0 %v928
        %953 = vmatprep.subr.mxu0 0.0
        %954 = vmatpush1.xpose.msra.mxu0 %v925
        %955 = vmatprep.subr.mxu0 0.0
        %956 = vmatpush1.xpose.msra.mxu0 %v922
        %957 = vmatprep.subr.mxu0 0.0
        %958 = vmatpush1.xpose.msra.mxu0 %v919
        %959 = vmatprep.subr.mxu0 0.0
        %960 = vmatpush1.xpose.msra.mxu0 %v916
        %961 = vmatprep.subr.mxu0 0.0
        %962 = vmatpush1.xpose.msra.mxu0 %v913
        %963 = vmatprep.subr.mxu0 0.0
        %964 = vmatpush1.xpose.msra.mxu0 %v910
        %965 = vmatprep.subr.mxu0 0.0
        %966 = vmatpush2.xpose.msra.mxu0 0.0
        %967 = vmatprep.subr.mxu0 0.0
        %968 = vmatpush2.xpose.msra.mxu0 0.0
        %969 = vmatprep.subr.mxu0 0.0
        %970 = vmatpush2.xpose.msra.mxu0 0.0
        %971 = vmatprep.subr.mxu0 0.0
        %972 = vmatpush2.xpose.msra.mxu0 0.0
        %973 = vmatprep.subr.mxu0 0.0
        %974 = vmatpush2.xpose.msra.mxu0 0.0
        %975 = vmatprep.subr.mxu0 0.0
        %976 = vmatpush2.xpose.msra.mxu0 0.0
        %977 = vmatprep.subr.mxu0 0.0
        %978 = vmatpush2.xpose.msra.mxu0 0.0
        %979 = vmatprep.subr.mxu0 0.0
        %980 = vmatpush2.xpose.msra.mxu0 0.0
        %981 = vmatprep.subr.mxu0 0.0
        %982 = vmatpush2.xpose.msra.mxu0 0.0
        %983 = vmatprep.subr.mxu0 0.0
        %984 = vmatpush2.xpose.msra.mxu0 0.0
        %985 = vmatprep.subr.mxu0 0.0
        %986 = vmatpush2.xpose.msra.mxu0 0.0
        %987 = vmatprep.subr.mxu0 0.0
        %988 = vmatpush2.xpose.msra.mxu0 0.0
        %989 = vmatprep.subr.mxu0 0.0
        %990 = vmatpush2.xpose.msra.mxu0 0.0
        %991 = vmatprep.subr.mxu0 0.0
        %992 = vmatpush2.xpose.msra.mxu0 0.0
        %993 = vmatprep.subr.mxu0 0.0
        %994 = vmatpush2.xpose.msra.mxu0 0.0
        %995 = vmatprep.subr.mxu0 0.0
        %996 = vmatpush2.xpose.msra.mxu0 0.0
        %997 = vmatprep.mubr.f32.mxu0 0.0
        %998 = vmatmul.mubr.f32.gmra.mxu0 %v886
        %v999 = vpop.f32.mrf.mxu0
        %v1000 = vadd.f32 0.0, %v999
        %v1001 = vpop.f32.mrf.mxu0
        %1002 = vmatprep.mubr.f32.mxu0 0.0
        %1003 = vmatmul.mubr.f32.gmra.mxu0 %v889
        %v1004 = vpop.f32.mrf.mxu0
        %v1005 = vadd.f32 0.0, %v1004
        %v1006 = vpop.f32.mrf.mxu0
        %1007 = vmatprep.mubr.f32.mxu0 0.0
        %1008 = vmatmul.mubr.f32.gmra.mxu0 %v892
        %v1009 = vpop.f32.mrf.mxu0
        %v1010 = vadd.f32 0.0, %v1009
        %v1011 = vpop.f32.mrf.mxu0
        %1012 = vmatprep.mubr.f32.mxu0 0.0
        %1013 = vmatmul.mubr.f32.gmra.mxu0 %v895
        %v1014 = vpop.f32.mrf.mxu0
        %v1015 = vadd.f32 0.0, %v1014
        %v1016 = vpop.f32.mrf.mxu0
        %1017 = vmatprep.mubr.f32.mxu0 0.0
        %1018 = vmatmul.mubr.f32.gmra.mxu0 %v898
        %v1019 = vpop.f32.mrf.mxu0
        %v1020 = vadd.f32 0.0, %v1019
        %v1021 = vpop.f32.mrf.mxu0
        %1022 = vmatprep.mubr.f32.mxu0 0.0
        %1023 = vmatmul.mubr.f32.gmra.mxu0 %v901
        %v1024 = vpop.f32.mrf.mxu0
        %v1025 = vadd.f32 0.0, %v1024
        %v1026 = vpop.f32.mrf.mxu0
        %1027 = vmatprep.mubr.f32.mxu0 0.0
        %1028 = vmatmul.mubr.f32.gmra.mxu0 %v904
        %v1029 = vpop.f32.mrf.mxu0
        %v1030 = vadd.f32 0.0, %v1029
        %v1031 = vpop.f32.mrf.mxu0
        %1032 = vmatprep.mubr.f32.mxu0 0.0
        %1033 = vmatmul.mubr.f32.gmra.mxu0 %v907
        %v1034 = vpop.f32.mrf.mxu0
        %v1035 = vadd.f32 0.0, %v1034
        %v1036 = vpop.f32.mrf.mxu0
        %1037 = vdwg.mxu0
        %vm1038 = vcmask 523264
        %v1039 = vsel %vm1038, %v1000, -inf
        %1040 = vmax.xlane.f32.xlu0 %v1039
        %v1041 = vpop.xlane.xlu0 %1040
        %v1042 = vsel %vm1038, %v1005, -inf
        %1043 = vmax.xlane.f32.xlu0 %v1042
        %v1044 = vpop.xlane.xlu0 %1043
        %v1045 = vsel %vm1038, %v1010, -inf
        %1046 = vmax.xlane.f32.xlu0 %v1045
        %v1047 = vpop.xlane.xlu0 %1046
        %v1048 = vsel %vm1038, %v1015, -inf
        %1049 = vmax.xlane.f32.xlu0 %v1048
        %v1050 = vpop.xlane.xlu0 %1049
        %v1051 = vsel %vm1038, %v1020, -inf
        %1052 = vmax.xlane.f32.xlu0 %v1051
        %v1053 = vpop.xlane.xlu0 %1052
        %v1054 = vsel %vm1038, %v1025, -inf
        %1055 = vmax.xlane.f32.xlu0 %v1054
        %v1056 = vpop.xlane.xlu0 %1055
        %v1057 = vsel %vm1038, %v1030, -inf
        %1058 = vmax.xlane.f32.xlu0 %v1057
        %v1059 = vpop.xlane.xlu0 %1058
        %v1060 = vsel %vm1038, %v1035, -inf
        %1061 = vmax.xlane.f32.xlu0 %v1060
        %v1062 = vpop.xlane.xlu0 %1061
        %v1063 = vsub.f32 %v1000, %v1041
        %v1064 = vsub.f32 %v1005, %v1044
        %v1065 = vsub.f32 %v1010, %v1047
        %v1066 = vsub.f32 %v1015, %v1050
        %v1067 = vsub.f32 %v1020, %v1053
        %v1068 = vsub.f32 %v1025, %v1056
        %v1069 = vsub.f32 %v1030, %v1059
        %v1070 = vsub.f32 %v1035, %v1062
        %v1071 = vmul.f32 %v1063, 1.442695
        %v1072 = vpow.pop %v1071
        %v1073 = vmul.f32 %v1064, 1.442695
        %v1074 = vpow.pop %v1073
        %v1075 = vmul.f32 %v1065, 1.442695
        %v1076 = vpow.pop %v1075
        %v1077 = vmul.f32 %v1066, 1.442695
        %v1078 = vpow.pop %v1077
        %v1079 = vmul.f32 %v1067, 1.442695
        %v1080 = vpow.pop %v1079
        %v1081 = vmul.f32 %v1068, 1.442695
        %v1082 = vpow.pop %v1081
        %v1083 = vmul.f32 %v1069, 1.442695
        %v1084 = vpow.pop %v1083
        %v1085 = vmul.f32 %v1070, 1.442695
        %v1086 = vpow.pop %v1085
        %v1087 = vsel %vm1038, %v1072, 0.0
        %1088 = vadd.xlane.f32.xlu0 %v1087
        %v1089 = vpop.xlane.xlu0 %1088
        %v1090 = vsel %vm1038, %v1074, 0.0
        %1091 = vadd.xlane.f32.xlu0 %v1090
        %v1092 = vpop.xlane.xlu0 %1091
        %v1093 = vsel %vm1038, %v1076, 0.0
        %1094 = vadd.xlane.f32.xlu0 %v1093
        %v1095 = vpop.xlane.xlu0 %1094
        %v1096 = vsel %vm1038, %v1078, 0.0
        %1097 = vadd.xlane.f32.xlu0 %v1096
        %v1098 = vpop.xlane.xlu0 %1097
        %v1099 = vsel %vm1038, %v1080, 0.0
        %1100 = vadd.xlane.f32.xlu0 %v1099
        %v1101 = vpop.xlane.xlu0 %1100
        %v1102 = vsel %vm1038, %v1082, 0.0
        %1103 = vadd.xlane.f32.xlu0 %v1102
        %v1104 = vpop.xlane.xlu0 %1103
        %v1105 = vsel %vm1038, %v1084, 0.0
        %1106 = vadd.xlane.f32.xlu0 %v1105
        %v1107 = vpop.xlane.xlu0 %1106
        %v1108 = vsel %vm1038, %v1086, 0.0
        %1109 = vadd.xlane.f32.xlu0 %v1108
        %v1110 = vpop.xlane.xlu0 %1109
        %v1111 = vrcp.pop %v1089
        %v1112 = vrcp.pop %v1092
        %v1113 = vrcp.pop %v1095
        %v1114 = vrcp.pop %v1098
        %v1115 = vrcp.pop %v1101
        %v1116 = vrcp.pop %v1104
        %v1117 = vrcp.pop %v1107
        %v1118 = vrcp.pop %v1110
        %v1119 = vmul.f32 %v1072, %v1111
        %v1120 = vmul.f32 %v1074, %v1112
        %v1121 = vmul.f32 %v1076, %v1113
        %v1122 = vmul.f32 %v1078, %v1114
        %v1123 = vmul.f32 %v1080, %v1115
        %v1124 = vmul.f32 %v1082, %v1116
        %v1125 = vmul.f32 %v1084, %v1117
        %v1126 = vmul.f32 %v1086, %v1118
        %v1128 = vsel %vm1038, %v1119, 0
        %v1131 = vsel %vm1038, %v1120, 0
        %v1134 = vsel %vm1038, %v1121, 0
        %v1137 = vsel %vm1038, %v1122, 0
        %v1140 = vsel %vm1038, %v1123, 0
        %v1143 = vsel %vm1038, %v1124, 0
        %v1146 = vsel %vm1038, %v1125, 0
        %v1149 = vsel %vm1038, %v1126, 0
        %1151 = vmatprep.subr.mxu0 0.0
        %1152 = vmatpush1.msra.mxu0 0.0
        %1153 = vmatprep.subr.mxu0 0.0
        %1154 = vmatpush1.msra.mxu0 0.0
        %1155 = vmatprep.subr.mxu0 0.0
        %1156 = vmatpush1.msra.mxu0 0.0
        %1157 = vmatprep.subr.mxu0 0.0
        %1158 = vmatpush1.msra.mxu0 0.0
        %1159 = vmatprep.subr.mxu0 0.0
        %1160 = vmatpush1.msra.mxu0 0.0
        %1161 = vmatprep.subr.mxu0 0.0
        %1162 = vmatpush1.msra.mxu0 0.0
        %1163 = vmatprep.subr.mxu0 0.0
        %1164 = vmatpush1.msra.mxu0 0.0
        %1165 = vmatprep.subr.mxu0 0.0
        %1166 = vmatpush1.msra.mxu0 0.0
        %1167 = vmatprep.subr.mxu0 0.0
        %1168 = vmatpush1.msra.mxu0 %v881
        %1169 = vmatprep.subr.mxu0 0.0
        %1170 = vmatpush1.msra.mxu0 %v876
        %1171 = vmatprep.subr.mxu0 0.0
        %1172 = vmatpush1.msra.mxu0 %v871
        %1173 = vmatprep.subr.mxu0 0.0
        %1174 = vmatpush1.msra.mxu0 %v866
        %1175 = vmatprep.subr.mxu0 0.0
        %1176 = vmatpush1.msra.mxu0 %v861
        %1177 = vmatprep.subr.mxu0 0.0
        %1178 = vmatpush1.msra.mxu0 %v856
        %1179 = vmatprep.subr.mxu0 0.0
        %1180 = vmatpush1.msra.mxu0 %v851
        %1181 = vmatprep.subr.mxu0 0.0
        %1182 = vmatpush1.msra.mxu0 %v846
        %1183 = vmatprep.subr.mxu0 0.0
        %1184 = vmatpush2.msra.mxu0 0.0
        %1185 = vmatprep.subr.mxu0 0.0
        %1186 = vmatpush2.msra.mxu0 0.0
        %1187 = vmatprep.subr.mxu0 0.0
        %1188 = vmatpush2.msra.mxu0 0.0
        %1189 = vmatprep.subr.mxu0 0.0
        %1190 = vmatpush2.msra.mxu0 0.0
        %1191 = vmatprep.subr.mxu0 0.0
        %1192 = vmatpush2.msra.mxu0 0.0
        %1193 = vmatprep.subr.mxu0 0.0
        %1194 = vmatpush2.msra.mxu0 0.0
        %1195 = vmatprep.subr.mxu0 0.0
        %1196 = vmatpush2.msra.mxu0 0.0
        %1197 = vmatprep.subr.mxu0 0.0
        %1198 = vmatpush2.msra.mxu0 0.0
        %1199 = vmatprep.subr.mxu0 0.0
        %1200 = vmatpush2.msra.mxu0 0.0
        %1201 = vmatprep.subr.mxu0 0.0
        %1202 = vmatpush2.msra.mxu0 0.0
        %1203 = vmatprep.subr.mxu0 0.0
        %1204 = vmatpush2.msra.mxu0 0.0
        %1205 = vmatprep.subr.mxu0 0.0
        %1206 = vmatpush2.msra.mxu0 0.0
        %1207 = vmatprep.subr.mxu0 0.0
        %1208 = vmatpush2.msra.mxu0 0.0
        %1209 = vmatprep.subr.mxu0 0.0
        %1210 = vmatpush2.msra.mxu0 0.0
        %1211 = vmatprep.subr.mxu0 0.0
        %1212 = vmatpush2.msra.mxu0 0.0
        %1213 = vmatprep.subr.mxu0 0.0
        %1214 = vmatpush2.msra.mxu0 0.0
        %1215 = vmatprep.mubr.f32.mxu0 0.0
        %1216 = vmatmul.mubr.f32.gmra.mxu0 %v1128
        %v1217 = vpop.f32.mrf.mxu0
        %v1218 = vadd.f32 0.0, %v1217
        %v1219 = vpop.f32.mrf.mxu0
        %1220 = vmatprep.mubr.f32.mxu0 0.0
        %1221 = vmatmul.mubr.f32.gmra.mxu0 %v1131
        %v1222 = vpop.f32.mrf.mxu0
        %v1223 = vadd.f32 0.0, %v1222
        %v1224 = vpop.f32.mrf.mxu0
        %1225 = vmatprep.mubr.f32.mxu0 0.0
        %1226 = vmatmul.mubr.f32.gmra.mxu0 %v1134
        %v1227 = vpop.f32.mrf.mxu0
        %v1228 = vadd.f32 0.0, %v1227
        %v1229 = vpop.f32.mrf.mxu0
        %1230 = vmatprep.mubr.f32.mxu0 0.0
        %1231 = vmatmul.mubr.f32.gmra.mxu0 %v1137
        %v1232 = vpop.f32.mrf.mxu0
        %v1233 = vadd.f32 0.0, %v1232
        %v1234 = vpop.f32.mrf.mxu0
        %1235 = vmatprep.mubr.f32.mxu0 0.0
        %1236 = vmatmul.mubr.f32.gmra.mxu0 %v1140
        %v1237 = vpop.f32.mrf.mxu0
        %v1238 = vadd.f32 0.0, %v1237
        %v1239 = vpop.f32.mrf.mxu0
        %1240 = vmatprep.mubr.f32.mxu0 0.0
        %1241 = vmatmul.mubr.f32.gmra.mxu0 %v1143
        %v1242 = vpop.f32.mrf.mxu0
        %v1243 = vadd.f32 0.0, %v1242
        %v1244 = vpop.f32.mrf.mxu0
        %1245 = vmatprep.mubr.f32.mxu0 0.0
        %1246 = vmatmul.mubr.f32.gmra.mxu0 %v1146
        %v1247 = vpop.f32.mrf.mxu0
        %v1248 = vadd.f32 0.0, %v1247
        %v1249 = vpop.f32.mrf.mxu0
        %1250 = vmatprep.mubr.f32.mxu0 0.0
        %1251 = vmatmul.mubr.f32.gmra.mxu0 %v1149
        %v1252 = vpop.f32.mrf.mxu0
        %v1253 = vadd.f32 0.0, %v1252
        %v1254 = vpop.f32.mrf.mxu0
        %1255 = vdwg.mxu0
        %v1256 = vld [vmem:[%s4] sm:$0xff]
        %s1257 = scalar_lea.vmem %s2, 32
        %v1258 = vld [vmem:[%s1257] sm:$0xff]
        %v1259 = vld [vmem:[%s1257 + $0x8] sm:$0xff]
        %v1260 = vld [vmem:[%s1257 + $0x10] sm:$0xff]
        %v1261 = vld [vmem:[%s1257 + $0x18] sm:$0xff]
        %s1262 = scalar_lea.vmem %s3, 1
        %v1263 = vld [vmem:[%s1262] sm:$0x1]
        %v1265 = vlaneseq
        %v1266 = vshrl.u32 %v1265, 7
        %v1267 = vsub.s32 0, %v1266
        %v1268 = vrot.slane %v1263, %v1267
        %1270 = vmatprep.subr.mxu0 0.0
        %1271 = vmatpush1.msra.mxu0 0.0
        %1272 = vmatprep.subr.mxu0 0.0
        %1273 = vmatpush1.msra.mxu0 0.0
        %1274 = vmatprep.subr.mxu0 0.0
        %1275 = vmatpush1.msra.mxu0 0.0
        %1276 = vmatprep.subr.mxu0 0.0
        %1277 = vmatpush1.msra.mxu0 0.0
        %1278 = vmatprep.subr.mxu0 0.0
        %1279 = vmatpush1.msra.mxu0 0.0
        %1280 = vmatprep.subr.mxu0 0.0
        %1281 = vmatpush1.msra.mxu0 0.0
        %1282 = vmatprep.subr.mxu0 0.0
        %1283 = vmatpush1.msra.mxu0 0.0
        %1284 = vmatprep.subr.mxu0 0.0
        %1285 = vmatpush1.msra.mxu0 0.0
        %1286 = vmatprep.subr.mxu0 0.0
        %1287 = vmatpush1.msra.mxu0 0.0
        %1288 = vmatprep.subr.mxu0 0.0
        %1289 = vmatpush1.msra.mxu0 0.0
        %1290 = vmatprep.subr.mxu0 0.0
        %1291 = vmatpush1.msra.mxu0 0.0
        %1292 = vmatprep.subr.mxu0 0.0
        %1293 = vmatpush1.msra.mxu0 0.0
        %1294 = vmatprep.subr.mxu0 0.0
        %1295 = vmatpush1.msra.mxu0 %v1261
        %1296 = vmatprep.subr.mxu0 0.0
        %1297 = vmatpush1.msra.mxu0 %v1260
        %1298 = vmatprep.subr.mxu0 0.0
        %1299 = vmatpush1.msra.mxu0 %v1259
        %1300 = vmatprep.subr.mxu0 0.0
        %1301 = vmatpush1.msra.mxu0 %v1258
        %1302 = vmatprep.subr.mxu0 0.0
        %1303 = vmatpush2.msra.mxu0 0.0
        %1304 = vmatprep.subr.mxu0 0.0
        %1305 = vmatpush2.msra.mxu0 0.0
        %1306 = vmatprep.subr.mxu0 0.0
        %1307 = vmatpush2.msra.mxu0 0.0
        %1308 = vmatprep.subr.mxu0 0.0
        %1309 = vmatpush2.msra.mxu0 0.0
        %1310 = vmatprep.subr.mxu0 0.0
        %1311 = vmatpush2.msra.mxu0 0.0
        %1312 = vmatprep.subr.mxu0 0.0
        %1313 = vmatpush2.msra.mxu0 0.0
        %1314 = vmatprep.subr.mxu0 0.0
        %1315 = vmatpush2.msra.mxu0 0.0
        %1316 = vmatprep.subr.mxu0 0.0
        %1317 = vmatpush2.msra.mxu0 0.0
        %1318 = vmatprep.subr.mxu0 0.0
        %1319 = vmatpush2.msra.mxu0 0.0
        %1320 = vmatprep.subr.mxu0 0.0
        %1321 = vmatpush2.msra.mxu0 0.0
        %1322 = vmatprep.subr.mxu0 0.0
        %1323 = vmatpush2.msra.mxu0 0.0
        %1324 = vmatprep.subr.mxu0 0.0
        %1325 = vmatpush2.msra.mxu0 0.0
        %1326 = vmatprep.subr.mxu0 0.0
        %1327 = vmatpush2.msra.mxu0 0.0
        %1328 = vmatprep.subr.mxu0 0.0
        %1329 = vmatpush2.msra.mxu0 0.0
        %1330 = vmatprep.subr.mxu0 0.0
        %1331 = vmatpush2.msra.mxu0 0.0
        %1332 = vmatprep.subr.mxu0 0.0
        %1333 = vmatpush2.msra.mxu0 0.0
        %1334 = vmatprep.mubr.f32.mxu0 0.0
        %1335 = vmatmul.mubr.f32.gmra.mxu0 %v520
        %v1336 = vpop.f32.mrf.mxu0
        %v1337 = vadd.f32 %v1268, %v1336
        %v1338 = vpop.f32.mrf.mxu0
        %1339 = vmatprep.mubr.f32.mxu0 0.0
        %1340 = vmatmul.mubr.f32.gmra.mxu0 %v523
        %v1341 = vpop.f32.mrf.mxu0
        %v1342 = vadd.f32 %v1268, %v1341
        %v1343 = vpop.f32.mrf.mxu0
        %1344 = vmatprep.mubr.f32.mxu0 0.0
        %1345 = vmatmul.mubr.f32.gmra.mxu0 %v526
        %v1346 = vpop.f32.mrf.mxu0
        %v1347 = vadd.f32 %v1268, %v1346
        %v1348 = vpop.f32.mrf.mxu0
        %1349 = vmatprep.mubr.f32.mxu0 0.0
        %1350 = vmatmul.mubr.f32.gmra.mxu0 %v529
        %v1351 = vpop.f32.mrf.mxu0
        %v1352 = vadd.f32 %v1268, %v1351
        %v1353 = vpop.f32.mrf.mxu0
        %1354 = vmatprep.mubr.f32.mxu0 0.0
        %1355 = vmatmul.mubr.f32.gmra.mxu0 %v532
        %v1356 = vpop.f32.mrf.mxu0
        %v1357 = vadd.f32 %v1268, %v1356
        %v1358 = vpop.f32.mrf.mxu0
        %1359 = vmatprep.mubr.f32.mxu0 0.0
        %1360 = vmatmul.mubr.f32.gmra.mxu0 %v535
        %v1361 = vpop.f32.mrf.mxu0
        %v1362 = vadd.f32 %v1268, %v1361
        %v1363 = vpop.f32.mrf.mxu0
        %1364 = vmatprep.mubr.f32.mxu0 0.0
        %1365 = vmatmul.mubr.f32.gmra.mxu0 %v538
        %v1366 = vpop.f32.mrf.mxu0
        %v1367 = vadd.f32 %v1268, %v1366
        %v1368 = vpop.f32.mrf.mxu0
        %1369 = vmatprep.mubr.f32.mxu0 0.0
        %1370 = vmatmul.mubr.f32.gmra.mxu0 %v541
        %v1371 = vpop.f32.mrf.mxu0
        %v1372 = vadd.f32 %v1268, %v1371
        %v1373 = vpop.f32.mrf.mxu0
        %1374 = vdwg.mxu0
        %s1375 = scalar_lea.vmem %s2, 160
        %v1376 = vld [vmem:[%s1375] sm:$0xff]
        %v1377 = vld [vmem:[%s1375 + $0x8] sm:$0xff]
        %v1378 = vld [vmem:[%s1375 + $0x10] sm:$0xff]
        %v1379 = vld [vmem:[%s1375 + $0x18] sm:$0xff]
        %s1380 = scalar_lea.vmem %s3, 5
        %v1381 = vld [vmem:[%s1380] sm:$0x1]
        %v1383 = vlaneseq
        %v1384 = vshrl.u32 %v1383, 7
        %v1385 = vsub.s32 0, %v1384
        %v1386 = vrot.slane %v1381, %v1385
        %1388 = vmatprep.subr.mxu0 0.0
        %1389 = vmatpush1.msra.mxu0 0.0
        %1390 = vmatprep.subr.mxu0 0.0
        %1391 = vmatpush1.msra.mxu0 0.0
        %1392 = vmatprep.subr.mxu0 0.0
        %1393 = vmatpush1.msra.mxu0 0.0
        %1394 = vmatprep.subr.mxu0 0.0
        %1395 = vmatpush1.msra.mxu0 0.0
        %1396 = vmatprep.subr.mxu0 0.0
        %1397 = vmatpush1.msra.mxu0 0.0
        %1398 = vmatprep.subr.mxu0 0.0
        %1399 = vmatpush1.msra.mxu0 0.0
        %1400 = vmatprep.subr.mxu0 0.0
        %1401 = vmatpush1.msra.mxu0 0.0
        %1402 = vmatprep.subr.mxu0 0.0
        %1403 = vmatpush1.msra.mxu0 0.0
        %1404 = vmatprep.subr.mxu0 0.0
        %1405 = vmatpush1.msra.mxu0 0.0
        %1406 = vmatprep.subr.mxu0 0.0
        %1407 = vmatpush1.msra.mxu0 0.0
        %1408 = vmatprep.subr.mxu0 0.0
        %1409 = vmatpush1.msra.mxu0 0.0
        %1410 = vmatprep.subr.mxu0 0.0
        %1411 = vmatpush1.msra.mxu0 0.0
        %1412 = vmatprep.subr.mxu0 0.0
        %1413 = vmatpush1.msra.mxu0 %v1379
        %1414 = vmatprep.subr.mxu0 0.0
        %1415 = vmatpush1.msra.mxu0 %v1378
        %1416 = vmatprep.subr.mxu0 0.0
        %1417 = vmatpush1.msra.mxu0 %v1377
        %1418 = vmatprep.subr.mxu0 0.0
        %1419 = vmatpush1.msra.mxu0 %v1376
        %1420 = vmatprep.subr.mxu0 0.0
        %1421 = vmatpush2.msra.mxu0 0.0
        %1422 = vmatprep.subr.mxu0 0.0
        %1423 = vmatpush2.msra.mxu0 0.0
        %1424 = vmatprep.subr.mxu0 0.0
        %1425 = vmatpush2.msra.mxu0 0.0
        %1426 = vmatprep.subr.mxu0 0.0
        %1427 = vmatpush2.msra.mxu0 0.0
        %1428 = vmatprep.subr.mxu0 0.0
        %1429 = vmatpush2.msra.mxu0 0.0
        %1430 = vmatprep.subr.mxu0 0.0
        %1431 = vmatpush2.msra.mxu0 0.0
        %1432 = vmatprep.subr.mxu0 0.0
        %1433 = vmatpush2.msra.mxu0 0.0
        %1434 = vmatprep.subr.mxu0 0.0
        %1435 = vmatpush2.msra.mxu0 0.0
        %1436 = vmatprep.subr.mxu0 0.0
        %1437 = vmatpush2.msra.mxu0 0.0
        %1438 = vmatprep.subr.mxu0 0.0
        %1439 = vmatpush2.msra.mxu0 0.0
        %1440 = vmatprep.subr.mxu0 0.0
        %1441 = vmatpush2.msra.mxu0 0.0
        %1442 = vmatprep.subr.mxu0 0.0
        %1443 = vmatpush2.msra.mxu0 0.0
        %1444 = vmatprep.subr.mxu0 0.0
        %1445 = vmatpush2.msra.mxu0 0.0
        %1446 = vmatprep.subr.mxu0 0.0
        %1447 = vmatpush2.msra.mxu0 0.0
        %1448 = vmatprep.subr.mxu0 0.0
        %1449 = vmatpush2.msra.mxu0 0.0
        %1450 = vmatprep.subr.mxu0 0.0
        %1451 = vmatpush2.msra.mxu0 0.0
        %1452 = vmatprep.mubr.f32.mxu0 0.0
        %1453 = vmatmul.mubr.f32.gmra.mxu0 %v520
        %v1454 = vpop.f32.mrf.mxu0
        %v1455 = vadd.f32 %v1386, %v1454
        %v1456 = vpop.f32.mrf.mxu0
        %1457 = vmatprep.mubr.f32.mxu0 0.0
        %1458 = vmatmul.mubr.f32.gmra.mxu0 %v523
        %v1459 = vpop.f32.mrf.mxu0
        %v1460 = vadd.f32 %v1386, %v1459
        %v1461 = vpop.f32.mrf.mxu0
        %1462 = vmatprep.mubr.f32.mxu0 0.0
        %1463 = vmatmul.mubr.f32.gmra.mxu0 %v526
        %v1464 = vpop.f32.mrf.mxu0
        %v1465 = vadd.f32 %v1386, %v1464
        %v1466 = vpop.f32.mrf.mxu0
        %1467 = vmatprep.mubr.f32.mxu0 0.0
        %1468 = vmatmul.mubr.f32.gmra.mxu0 %v529
        %v1469 = vpop.f32.mrf.mxu0
        %v1470 = vadd.f32 %v1386, %v1469
        %v1471 = vpop.f32.mrf.mxu0
        %1472 = vmatprep.mubr.f32.mxu0 0.0
        %1473 = vmatmul.mubr.f32.gmra.mxu0 %v532
        %v1474 = vpop.f32.mrf.mxu0
        %v1475 = vadd.f32 %v1386, %v1474
        %v1476 = vpop.f32.mrf.mxu0
        %1477 = vmatprep.mubr.f32.mxu0 0.0
        %1478 = vmatmul.mubr.f32.gmra.mxu0 %v535
        %v1479 = vpop.f32.mrf.mxu0
        %v1480 = vadd.f32 %v1386, %v1479
        %v1481 = vpop.f32.mrf.mxu0
        %1482 = vmatprep.mubr.f32.mxu0 0.0
        %1483 = vmatmul.mubr.f32.gmra.mxu0 %v538
        %v1484 = vpop.f32.mrf.mxu0
        %v1485 = vadd.f32 %v1386, %v1484
        %v1486 = vpop.f32.mrf.mxu0
        %1487 = vmatprep.mubr.f32.mxu0 0.0
        %1488 = vmatmul.mubr.f32.gmra.mxu0 %v541
        %v1489 = vpop.f32.mrf.mxu0
        %v1490 = vadd.f32 %v1386, %v1489
        %v1491 = vpop.f32.mrf.mxu0
        %1492 = vdwg.mxu0
        %s1493 = scalar_lea.vmem %s2, 288
        %v1494 = vld [vmem:[%s1493] sm:$0xff]
        %v1495 = vld [vmem:[%s1493 + $0x8] sm:$0xff]
        %v1496 = vld [vmem:[%s1493 + $0x10] sm:$0xff]
        %v1497 = vld [vmem:[%s1493 + $0x18] sm:$0xff]
        %s1498 = scalar_lea.vmem %s3, 9
        %v1499 = vld [vmem:[%s1498] sm:$0x1]
        %v1501 = vlaneseq
        %v1502 = vshrl.u32 %v1501, 7
        %v1503 = vsub.s32 0, %v1502
        %v1504 = vrot.slane %v1499, %v1503
        %1506 = vmatprep.subr.mxu0 0.0
        %1507 = vmatpush1.msra.mxu0 0.0
        %1508 = vmatprep.subr.mxu0 0.0
        %1509 = vmatpush1.msra.mxu0 0.0
        %1510 = vmatprep.subr.mxu0 0.0
        %1511 = vmatpush1.msra.mxu0 0.0
        %1512 = vmatprep.subr.mxu0 0.0
        %1513 = vmatpush1.msra.mxu0 0.0
        %1514 = vmatprep.subr.mxu0 0.0
        %1515 = vmatpush1.msra.mxu0 0.0
        %1516 = vmatprep.subr.mxu0 0.0
        %1517 = vmatpush1.msra.mxu0 0.0
        %1518 = vmatprep.subr.mxu0 0.0
        %1519 = vmatpush1.msra.mxu0 0.0
        %1520 = vmatprep.subr.mxu0 0.0
        %1521 = vmatpush1.msra.mxu0 0.0
        %1522 = vmatprep.subr.mxu0 0.0
        %1523 = vmatpush1.msra.mxu0 0.0
        %1524 = vmatprep.subr.mxu0 0.0
        %1525 = vmatpush1.msra.mxu0 0.0
        %1526 = vmatprep.subr.mxu0 0.0
        %1527 = vmatpush1.msra.mxu0 0.0
        %1528 = vmatprep.subr.mxu0 0.0
        %1529 = vmatpush1.msra.mxu0 0.0
        %1530 = vmatprep.subr.mxu0 0.0
        %1531 = vmatpush1.msra.mxu0 %v1497
        %1532 = vmatprep.subr.mxu0 0.0
        %1533 = vmatpush1.msra.mxu0 %v1496
        %1534 = vmatprep.subr.mxu0 0.0
        %1535 = vmatpush1.msra.mxu0 %v1495
        %1536 = vmatprep.subr.mxu0 0.0
        %1537 = vmatpush1.msra.mxu0 %v1494
        %1538 = vmatprep.subr.mxu0 0.0
        %1539 = vmatpush2.msra.mxu0 0.0
        %1540 = vmatprep.subr.mxu0 0.0
        %1541 = vmatpush2.msra.mxu0 0.0
        %1542 = vmatprep.subr.mxu0 0.0
        %1543 = vmatpush2.msra.mxu0 0.0
        %1544 = vmatprep.subr.mxu0 0.0
        %1545 = vmatpush2.msra.mxu0 0.0
        %1546 = vmatprep.subr.mxu0 0.0
        %1547 = vmatpush2.msra.mxu0 0.0
        %1548 = vmatprep.subr.mxu0 0.0
        %1549 = vmatpush2.msra.mxu0 0.0
        %1550 = vmatprep.subr.mxu0 0.0
        %1551 = vmatpush2.msra.mxu0 0.0
        %1552 = vmatprep.subr.mxu0 0.0
        %1553 = vmatpush2.msra.mxu0 0.0
        %1554 = vmatprep.subr.mxu0 0.0
        %1555 = vmatpush2.msra.mxu0 0.0
        %1556 = vmatprep.subr.mxu0 0.0
        %1557 = vmatpush2.msra.mxu0 0.0
        %1558 = vmatprep.subr.mxu0 0.0
        %1559 = vmatpush2.msra.mxu0 0.0
        %1560 = vmatprep.subr.mxu0 0.0
        %1561 = vmatpush2.msra.mxu0 0.0
        %1562 = vmatprep.subr.mxu0 0.0
        %1563 = vmatpush2.msra.mxu0 0.0
        %1564 = vmatprep.subr.mxu0 0.0
        %1565 = vmatpush2.msra.mxu0 0.0
        %1566 = vmatprep.subr.mxu0 0.0
        %1567 = vmatpush2.msra.mxu0 0.0
        %1568 = vmatprep.subr.mxu0 0.0
        %1569 = vmatpush2.msra.mxu0 0.0
        %1570 = vmatprep.mubr.f32.mxu0 0.0
        %1571 = vmatmul.mubr.f32.gmra.mxu0 %v520
        %v1572 = vpop.f32.mrf.mxu0
        %v1573 = vadd.f32 %v1504, %v1572
        %v1574 = vpop.f32.mrf.mxu0
        %1575 = vmatprep.mubr.f32.mxu0 0.0
        %1576 = vmatmul.mubr.f32.gmra.mxu0 %v523
        %v1577 = vpop.f32.mrf.mxu0
        %v1578 = vadd.f32 %v1504, %v1577
        %v1579 = vpop.f32.mrf.mxu0
        %1580 = vmatprep.mubr.f32.mxu0 0.0
        %1581 = vmatmul.mubr.f32.gmra.mxu0 %v526
        %v1582 = vpop.f32.mrf.mxu0
        %v1583 = vadd.f32 %v1504, %v1582
        %v1584 = vpop.f32.mrf.mxu0
        %1585 = vmatprep.mubr.f32.mxu0 0.0
        %1586 = vmatmul.mubr.f32.gmra.mxu0 %v529
        %v1587 = vpop.f32.mrf.mxu0
        %v1588 = vadd.f32 %v1504, %v1587
        %v1589 = vpop.f32.mrf.mxu0
        %1590 = vmatprep.mubr.f32.mxu0 0.0
        %1591 = vmatmul.mubr.f32.gmra.mxu0 %v532
        %v1592 = vpop.f32.mrf.mxu0
        %v1593 = vadd.f32 %v1504, %v1592
        %v1594 = vpop.f32.mrf.mxu0
        %1595 = vmatprep.mubr.f32.mxu0 0.0
        %1596 = vmatmul.mubr.f32.gmra.mxu0 %v535
        %v1597 = vpop.f32.mrf.mxu0
        %v1598 = vadd.f32 %v1504, %v1597
        %v1599 = vpop.f32.mrf.mxu0
        %1600 = vmatprep.mubr.f32.mxu0 0.0
        %1601 = vmatmul.mubr.f32.gmra.mxu0 %v538
        %v1602 = vpop.f32.mrf.mxu0
        %v1603 = vadd.f32 %v1504, %v1602
        %v1604 = vpop.f32.mrf.mxu0
        %1605 = vmatprep.mubr.f32.mxu0 0.0
        %1606 = vmatmul.mubr.f32.gmra.mxu0 %v541
        %v1607 = vpop.f32.mrf.mxu0
        %v1608 = vadd.f32 %v1504, %v1607
        %v1609 = vpop.f32.mrf.mxu0
        %1610 = vdwg.mxu0
        %v1612 = vsel %vm884, %v1337, 0
        %v1615 = vsel %vm884, %v1342, 0
        %v1618 = vsel %vm884, %v1347, 0
        %v1621 = vsel %vm884, %v1352, 0
        %v1624 = vsel %vm884, %v1357, 0
        %v1627 = vsel %vm884, %v1362, 0
        %v1630 = vsel %vm884, %v1367, 0
        %v1633 = vsel %vm884, %v1372, 0
        %v1636 = vsel %vm884, %v1455, 0
        %v1639 = vsel %vm884, %v1460, 0
        %v1642 = vsel %vm884, %v1465, 0
        %v1645 = vsel %vm884, %v1470, 0
        %v1648 = vsel %vm884, %v1475, 0
        %v1651 = vsel %vm884, %v1480, 0
        %v1654 = vsel %vm884, %v1485, 0
        %v1657 = vsel %vm884, %v1490, 0
        %1659 = vmatprep.subr.mxu0 0.0
        %1660 = vmatpush1.xpose.msra.mxu0 0.0
        %1661 = vmatprep.subr.mxu0 0.0
        %1662 = vmatpush1.xpose.msra.mxu0 0.0
        %1663 = vmatprep.subr.mxu0 0.0
        %1664 = vmatpush1.xpose.msra.mxu0 0.0
        %1665 = vmatprep.subr.mxu0 0.0
        %1666 = vmatpush1.xpose.msra.mxu0 0.0
        %1667 = vmatprep.subr.mxu0 0.0
        %1668 = vmatpush1.xpose.msra.mxu0 0.0
        %1669 = vmatprep.subr.mxu0 0.0
        %1670 = vmatpush1.xpose.msra.mxu0 0.0
        %1671 = vmatprep.subr.mxu0 0.0
        %1672 = vmatpush1.xpose.msra.mxu0 0.0
        %1673 = vmatprep.subr.mxu0 0.0
        %1674 = vmatpush1.xpose.msra.mxu0 0.0
        %1675 = vmatprep.subr.mxu0 0.0
        %1676 = vmatpush1.xpose.msra.mxu0 %v1657
        %1677 = vmatprep.subr.mxu0 0.0
        %1678 = vmatpush1.xpose.msra.mxu0 %v1654
        %1679 = vmatprep.subr.mxu0 0.0
        %1680 = vmatpush1.xpose.msra.mxu0 %v1651
        %1681 = vmatprep.subr.mxu0 0.0
        %1682 = vmatpush1.xpose.msra.mxu0 %v1648
        %1683 = vmatprep.subr.mxu0 0.0
        %1684 = vmatpush1.xpose.msra.mxu0 %v1645
        %1685 = vmatprep.subr.mxu0 0.0
        %1686 = vmatpush1.xpose.msra.mxu0 %v1642
        %1687 = vmatprep.subr.mxu0 0.0
        %1688 = vmatpush1.xpose.msra.mxu0 %v1639
        %1689 = vmatprep.subr.mxu0 0.0
        %1690 = vmatpush1.xpose.msra.mxu0 %v1636
        %1691 = vmatprep.subr.mxu0 0.0
        %1692 = vmatpush2.xpose.msra.mxu0 0.0
        %1693 = vmatprep.subr.mxu0 0.0
        %1694 = vmatpush2.xpose.msra.mxu0 0.0
        %1695 = vmatprep.subr.mxu0 0.0
        %1696 = vmatpush2.xpose.msra.mxu0 0.0
        %1697 = vmatprep.subr.mxu0 0.0
        %1698 = vmatpush2.xpose.msra.mxu0 0.0
        %1699 = vmatprep.subr.mxu0 0.0
        %1700 = vmatpush2.xpose.msra.mxu0 0.0
        %1701 = vmatprep.subr.mxu0 0.0
        %1702 = vmatpush2.xpose.msra.mxu0 0.0
        %1703 = vmatprep.subr.mxu0 0.0
        %1704 = vmatpush2.xpose.msra.mxu0 0.0
        %1705 = vmatprep.subr.mxu0 0.0
        %1706 = vmatpush2.xpose.msra.mxu0 0.0
        %1707 = vmatprep.subr.mxu0 0.0
        %1708 = vmatpush2.xpose.msra.mxu0 0.0
        %1709 = vmatprep.subr.mxu0 0.0
        %1710 = vmatpush2.xpose.msra.mxu0 0.0
        %1711 = vmatprep.subr.mxu0 0.0
        %1712 = vmatpush2.xpose.msra.mxu0 0.0
        %1713 = vmatprep.subr.mxu0 0.0
        %1714 = vmatpush2.xpose.msra.mxu0 0.0
        %1715 = vmatprep.subr.mxu0 0.0
        %1716 = vmatpush2.xpose.msra.mxu0 0.0
        %1717 = vmatprep.subr.mxu0 0.0
        %1718 = vmatpush2.xpose.msra.mxu0 0.0
        %1719 = vmatprep.subr.mxu0 0.0
        %1720 = vmatpush2.xpose.msra.mxu0 0.0
        %1721 = vmatprep.subr.mxu0 0.0
        %1722 = vmatpush2.xpose.msra.mxu0 0.0
        %1723 = vmatprep.mubr.f32.mxu0 0.0
        %1724 = vmatmul.mubr.f32.gmra.mxu0 %v1612
        %v1725 = vpop.f32.mrf.mxu0
        %v1726 = vadd.f32 0.0, %v1725
        %v1727 = vpop.f32.mrf.mxu0
        %1728 = vmatprep.mubr.f32.mxu0 0.0
        %1729 = vmatmul.mubr.f32.gmra.mxu0 %v1615
        %v1730 = vpop.f32.mrf.mxu0
        %v1731 = vadd.f32 0.0, %v1730
        %v1732 = vpop.f32.mrf.mxu0
        %1733 = vmatprep.mubr.f32.mxu0 0.0
        %1734 = vmatmul.mubr.f32.gmra.mxu0 %v1618
        %v1735 = vpop.f32.mrf.mxu0
        %v1736 = vadd.f32 0.0, %v1735
        %v1737 = vpop.f32.mrf.mxu0
        %1738 = vmatprep.mubr.f32.mxu0 0.0
        %1739 = vmatmul.mubr.f32.gmra.mxu0 %v1621
        %v1740 = vpop.f32.mrf.mxu0
        %v1741 = vadd.f32 0.0, %v1740
        %v1742 = vpop.f32.mrf.mxu0
        %1743 = vmatprep.mubr.f32.mxu0 0.0
        %1744 = vmatmul.mubr.f32.gmra.mxu0 %v1624
        %v1745 = vpop.f32.mrf.mxu0
        %v1746 = vadd.f32 0.0, %v1745
        %v1747 = vpop.f32.mrf.mxu0
        %1748 = vmatprep.mubr.f32.mxu0 0.0
        %1749 = vmatmul.mubr.f32.gmra.mxu0 %v1627
        %v1750 = vpop.f32.mrf.mxu0
        %v1751 = vadd.f32 0.0, %v1750
        %v1752 = vpop.f32.mrf.mxu0
        %1753 = vmatprep.mubr.f32.mxu0 0.0
        %1754 = vmatmul.mubr.f32.gmra.mxu0 %v1630
        %v1755 = vpop.f32.mrf.mxu0
        %v1756 = vadd.f32 0.0, %v1755
        %v1757 = vpop.f32.mrf.mxu0
        %1758 = vmatprep.mubr.f32.mxu0 0.0
        %1759 = vmatmul.mubr.f32.gmra.mxu0 %v1633
        %v1760 = vpop.f32.mrf.mxu0
        %v1761 = vadd.f32 0.0, %v1760
        %v1762 = vpop.f32.mrf.mxu0
        %1763 = vdwg.mxu0
        %v1764 = vsel %vm1038, %v1726, -inf
        %1765 = vmax.xlane.f32.xlu0 %v1764
        %v1766 = vpop.xlane.xlu0 %1765
        %v1767 = vsel %vm1038, %v1731, -inf
        %1768 = vmax.xlane.f32.xlu0 %v1767
        %v1769 = vpop.xlane.xlu0 %1768
        %v1770 = vsel %vm1038, %v1736, -inf
        %1771 = vmax.xlane.f32.xlu0 %v1770
        %v1772 = vpop.xlane.xlu0 %1771
        %v1773 = vsel %vm1038, %v1741, -inf
        %1774 = vmax.xlane.f32.xlu0 %v1773
        %v1775 = vpop.xlane.xlu0 %1774
        %v1776 = vsel %vm1038, %v1746, -inf
        %1777 = vmax.xlane.f32.xlu0 %v1776
        %v1778 = vpop.xlane.xlu0 %1777
        %v1779 = vsel %vm1038, %v1751, -inf
        %1780 = vmax.xlane.f32.xlu0 %v1779
        %v1781 = vpop.xlane.xlu0 %1780
        %v1782 = vsel %vm1038, %v1756, -inf
        %1783 = vmax.xlane.f32.xlu0 %v1782
        %v1784 = vpop.xlane.xlu0 %1783
        %v1785 = vsel %vm1038, %v1761, -inf
        %1786 = vmax.xlane.f32.xlu0 %v1785
        %v1787 = vpop.xlane.xlu0 %1786
        %v1788 = vsub.f32 %v1726, %v1766
        %v1789 = vsub.f32 %v1731, %v1769
        %v1790 = vsub.f32 %v1736, %v1772
        %v1791 = vsub.f32 %v1741, %v1775
        %v1792 = vsub.f32 %v1746, %v1778
        %v1793 = vsub.f32 %v1751, %v1781
        %v1794 = vsub.f32 %v1756, %v1784
        %v1795 = vsub.f32 %v1761, %v1787
        %v1796 = vmul.f32 %v1788, 1.442695
        %v1797 = vpow.pop %v1796
        %v1798 = vmul.f32 %v1789, 1.442695
        %v1799 = vpow.pop %v1798
        %v1800 = vmul.f32 %v1790, 1.442695
        %v1801 = vpow.pop %v1800
        %v1802 = vmul.f32 %v1791, 1.442695
        %v1803 = vpow.pop %v1802
        %v1804 = vmul.f32 %v1792, 1.442695
        %v1805 = vpow.pop %v1804
        %v1806 = vmul.f32 %v1793, 1.442695
        %v1807 = vpow.pop %v1806
        %v1808 = vmul.f32 %v1794, 1.442695
        %v1809 = vpow.pop %v1808
        %v1810 = vmul.f32 %v1795, 1.442695
        %v1811 = vpow.pop %v1810
        %v1812 = vsel %vm1038, %v1797, 0.0
        %1813 = vadd.xlane.f32.xlu0 %v1812
        %v1814 = vpop.xlane.xlu0 %1813
        %v1815 = vsel %vm1038, %v1799, 0.0
        %1816 = vadd.xlane.f32.xlu0 %v1815
        %v1817 = vpop.xlane.xlu0 %1816
        %v1818 = vsel %vm1038, %v1801, 0.0
        %1819 = vadd.xlane.f32.xlu0 %v1818
        %v1820 = vpop.xlane.xlu0 %1819
        %v1821 = vsel %vm1038, %v1803, 0.0
        %1822 = vadd.xlane.f32.xlu0 %v1821
        %v1823 = vpop.xlane.xlu0 %1822
        %v1824 = vsel %vm1038, %v1805, 0.0
        %1825 = vadd.xlane.f32.xlu0 %v1824
        %v1826 = vpop.xlane.xlu0 %1825
        %v1827 = vsel %vm1038, %v1807, 0.0
        %1828 = vadd.xlane.f32.xlu0 %v1827
        %v1829 = vpop.xlane.xlu0 %1828
        %v1830 = vsel %vm1038, %v1809, 0.0
        %1831 = vadd.xlane.f32.xlu0 %v1830
        %v1832 = vpop.xlane.xlu0 %1831
        %v1833 = vsel %vm1038, %v1811, 0.0
        %1834 = vadd.xlane.f32.xlu0 %v1833
        %v1835 = vpop.xlane.xlu0 %1834
        %v1836 = vrcp.pop %v1814
        %v1837 = vrcp.pop %v1817
        %v1838 = vrcp.pop %v1820
        %v1839 = vrcp.pop %v1823
        %v1840 = vrcp.pop %v1826
        %v1841 = vrcp.pop %v1829
        %v1842 = vrcp.pop %v1832
        %v1843 = vrcp.pop %v1835
        %v1844 = vmul.f32 %v1797, %v1836
        %v1845 = vmul.f32 %v1799, %v1837
        %v1846 = vmul.f32 %v1801, %v1838
        %v1847 = vmul.f32 %v1803, %v1839
        %v1848 = vmul.f32 %v1805, %v1840
        %v1849 = vmul.f32 %v1807, %v1841
        %v1850 = vmul.f32 %v1809, %v1842
        %v1851 = vmul.f32 %v1811, %v1843
        %v1853 = vsel %vm1038, %v1844, 0
        %v1856 = vsel %vm1038, %v1845, 0
        %v1859 = vsel %vm1038, %v1846, 0
        %v1862 = vsel %vm1038, %v1847, 0
        %v1865 = vsel %vm1038, %v1848, 0
        %v1868 = vsel %vm1038, %v1849, 0
        %v1871 = vsel %vm1038, %v1850, 0
        %v1874 = vsel %vm1038, %v1851, 0
        %1876 = vmatprep.subr.mxu0 0.0
        %1877 = vmatpush1.msra.mxu0 0.0
        %1878 = vmatprep.subr.mxu0 0.0
        %1879 = vmatpush1.msra.mxu0 0.0
        %1880 = vmatprep.subr.mxu0 0.0
        %1881 = vmatpush1.msra.mxu0 0.0
        %1882 = vmatprep.subr.mxu0 0.0
        %1883 = vmatpush1.msra.mxu0 0.0
        %1884 = vmatprep.subr.mxu0 0.0
        %1885 = vmatpush1.msra.mxu0 0.0
        %1886 = vmatprep.subr.mxu0 0.0
        %1887 = vmatpush1.msra.mxu0 0.0
        %1888 = vmatprep.subr.mxu0 0.0
        %1889 = vmatpush1.msra.mxu0 0.0
        %1890 = vmatprep.subr.mxu0 0.0
        %1891 = vmatpush1.msra.mxu0 0.0
        %1892 = vmatprep.subr.mxu0 0.0
        %1893 = vmatpush1.msra.mxu0 %v1608
        %1894 = vmatprep.subr.mxu0 0.0
        %1895 = vmatpush1.msra.mxu0 %v1603
        %1896 = vmatprep.subr.mxu0 0.0
        %1897 = vmatpush1.msra.mxu0 %v1598
        %1898 = vmatprep.subr.mxu0 0.0
        %1899 = vmatpush1.msra.mxu0 %v1593
        %1900 = vmatprep.subr.mxu0 0.0
        %1901 = vmatpush1.msra.mxu0 %v1588
        %1902 = vmatprep.subr.mxu0 0.0
        %1903 = vmatpush1.msra.mxu0 %v1583
        %1904 = vmatprep.subr.mxu0 0.0
        %1905 = vmatpush1.msra.mxu0 %v1578
        %1906 = vmatprep.subr.mxu0 0.0
        %1907 = vmatpush1.msra.mxu0 %v1573
        %1908 = vmatprep.subr.mxu0 0.0
        %1909 = vmatpush2.msra.mxu0 0.0
        %1910 = vmatprep.subr.mxu0 0.0
        %1911 = vmatpush2.msra.mxu0 0.0
        %1912 = vmatprep.subr.mxu0 0.0
        %1913 = vmatpush2.msra.mxu0 0.0
        %1914 = vmatprep.subr.mxu0 0.0
        %1915 = vmatpush2.msra.mxu0 0.0
        %1916 = vmatprep.subr.mxu0 0.0
        %1917 = vmatpush2.msra.mxu0 0.0
        %1918 = vmatprep.subr.mxu0 0.0
        %1919 = vmatpush2.msra.mxu0 0.0
        %1920 = vmatprep.subr.mxu0 0.0
        %1921 = vmatpush2.msra.mxu0 0.0
        %1922 = vmatprep.subr.mxu0 0.0
        %1923 = vmatpush2.msra.mxu0 0.0
        %1924 = vmatprep.subr.mxu0 0.0
        %1925 = vmatpush2.msra.mxu0 0.0
        %1926 = vmatprep.subr.mxu0 0.0
        %1927 = vmatpush2.msra.mxu0 0.0
        %1928 = vmatprep.subr.mxu0 0.0
        %1929 = vmatpush2.msra.mxu0 0.0
        %1930 = vmatprep.subr.mxu0 0.0
        %1931 = vmatpush2.msra.mxu0 0.0
        %1932 = vmatprep.subr.mxu0 0.0
        %1933 = vmatpush2.msra.mxu0 0.0
        %1934 = vmatprep.subr.mxu0 0.0
        %1935 = vmatpush2.msra.mxu0 0.0
        %1936 = vmatprep.subr.mxu0 0.0
        %1937 = vmatpush2.msra.mxu0 0.0
        %1938 = vmatprep.subr.mxu0 0.0
        %1939 = vmatpush2.msra.mxu0 0.0
        %1940 = vmatprep.mubr.f32.mxu0 0.0
        %1941 = vmatmul.mubr.f32.gmra.mxu0 %v1853
        %v1942 = vpop.f32.mrf.mxu0
        %v1943 = vadd.f32 0.0, %v1942
        %v1944 = vpop.f32.mrf.mxu0
        %1945 = vmatprep.mubr.f32.mxu0 0.0
        %1946 = vmatmul.mubr.f32.gmra.mxu0 %v1856
        %v1947 = vpop.f32.mrf.mxu0
        %v1948 = vadd.f32 0.0, %v1947
        %v1949 = vpop.f32.mrf.mxu0
        %1950 = vmatprep.mubr.f32.mxu0 0.0
        %1951 = vmatmul.mubr.f32.gmra.mxu0 %v1859
        %v1952 = vpop.f32.mrf.mxu0
        %v1953 = vadd.f32 0.0, %v1952
        %v1954 = vpop.f32.mrf.mxu0
        %1955 = vmatprep.mubr.f32.mxu0 0.0
        %1956 = vmatmul.mubr.f32.gmra.mxu0 %v1862
        %v1957 = vpop.f32.mrf.mxu0
        %v1958 = vadd.f32 0.0, %v1957
        %v1959 = vpop.f32.mrf.mxu0
        %1960 = vmatprep.mubr.f32.mxu0 0.0
        %1961 = vmatmul.mubr.f32.gmra.mxu0 %v1865
        %v1962 = vpop.f32.mrf.mxu0
        %v1963 = vadd.f32 0.0, %v1962
        %v1964 = vpop.f32.mrf.mxu0
        %1965 = vmatprep.mubr.f32.mxu0 0.0
        %1966 = vmatmul.mubr.f32.gmra.mxu0 %v1868
        %v1967 = vpop.f32.mrf.mxu0
        %v1968 = vadd.f32 0.0, %v1967
        %v1969 = vpop.f32.mrf.mxu0
        %1970 = vmatprep.mubr.f32.mxu0 0.0
        %1971 = vmatmul.mubr.f32.gmra.mxu0 %v1871
        %v1972 = vpop.f32.mrf.mxu0
        %v1973 = vadd.f32 0.0, %v1972
        %v1974 = vpop.f32.mrf.mxu0
        %1975 = vmatprep.mubr.f32.mxu0 0.0
        %1976 = vmatmul.mubr.f32.gmra.mxu0 %v1874
        %v1977 = vpop.f32.mrf.mxu0
        %v1978 = vadd.f32 0.0, %v1977
        %v1979 = vpop.f32.mrf.mxu0
        %1980 = vdwg.mxu0
        %s1981 = scalar_lea.vmem %s4, 8
        %v1982 = vld [vmem:[%s1981] sm:$0xff]
        %v1984 = vsel %vm884, %v1943, 0
        %v1987 = vsel %vm884, %v1948, 0
        %v1990 = vsel %vm884, %v1953, 0
        %v1993 = vsel %vm884, %v1958, 0
        %v1996 = vsel %vm884, %v1963, 0
        %v1999 = vsel %vm884, %v1968, 0
        %v2002 = vsel %vm884, %v1973, 0
        %v2005 = vsel %vm884, %v1978, 0
        %2007 = vmatprep.subr.mxu0 0.0
        %2008 = vmatpush1.msra.mxu0 0.0
        %2009 = vmatprep.subr.mxu0 0.0
        %2010 = vmatpush1.msra.mxu0 0.0
        %2011 = vmatprep.subr.mxu0 0.0
        %2012 = vmatpush1.msra.mxu0 0.0
        %2013 = vmatprep.subr.mxu0 0.0
        %2014 = vmatpush1.msra.mxu0 0.0
        %2015 = vmatprep.subr.mxu0 0.0
        %2016 = vmatpush1.msra.mxu0 0.0
        %2017 = vmatprep.subr.mxu0 0.0
        %2018 = vmatpush1.msra.mxu0 0.0
        %2019 = vmatprep.subr.mxu0 0.0
        %2020 = vmatpush1.msra.mxu0 0.0
        %2021 = vmatprep.subr.mxu0 0.0
        %2022 = vmatpush1.msra.mxu0 0.0
        %2023 = vmatprep.subr.mxu0 0.0
        %2024 = vmatpush1.msra.mxu0 0.0
        %2025 = vmatprep.subr.mxu0 0.0
        %2026 = vmatpush1.msra.mxu0 0.0
        %2027 = vmatprep.subr.mxu0 0.0
        %2028 = vmatpush1.msra.mxu0 0.0
        %2029 = vmatprep.subr.mxu0 0.0
        %2030 = vmatpush1.msra.mxu0 0.0
        %2031 = vmatprep.subr.mxu0 0.0
        %2032 = vmatpush1.msra.mxu0 0.0
        %2033 = vmatprep.subr.mxu0 0.0
        %2034 = vmatpush1.msra.mxu0 0.0
        %2035 = vmatprep.subr.mxu0 0.0
        %2036 = vmatpush1.msra.mxu0 0.0
        %2037 = vmatprep.subr.mxu0 0.0
        %2038 = vmatpush1.msra.mxu0 %v1982
        %2039 = vmatprep.subr.mxu0 0.0
        %2040 = vmatpush2.msra.mxu0 0.0
        %2041 = vmatprep.subr.mxu0 0.0
        %2042 = vmatpush2.msra.mxu0 0.0
        %2043 = vmatprep.subr.mxu0 0.0
        %2044 = vmatpush2.msra.mxu0 0.0
        %2045 = vmatprep.subr.mxu0 0.0
        %2046 = vmatpush2.msra.mxu0 0.0
        %2047 = vmatprep.subr.mxu0 0.0
        %2048 = vmatpush2.msra.mxu0 0.0
        %2049 = vmatprep.subr.mxu0 0.0
        %2050 = vmatpush2.msra.mxu0 0.0
        %2051 = vmatprep.subr.mxu0 0.0
        %2052 = vmatpush2.msra.mxu0 0.0
        %2053 = vmatprep.subr.mxu0 0.0
        %2054 = vmatpush2.msra.mxu0 0.0
        %2055 = vmatprep.subr.mxu0 0.0
        %2056 = vmatpush2.msra.mxu0 0.0
        %2057 = vmatprep.subr.mxu0 0.0
        %2058 = vmatpush2.msra.mxu0 0.0
        %2059 = vmatprep.subr.mxu0 0.0
        %2060 = vmatpush2.msra.mxu0 0.0
        %2061 = vmatprep.subr.mxu0 0.0
        %2062 = vmatpush2.msra.mxu0 0.0
        %2063 = vmatprep.subr.mxu0 0.0
        %2064 = vmatpush2.msra.mxu0 0.0
        %2065 = vmatprep.subr.mxu0 0.0
        %2066 = vmatpush2.msra.mxu0 0.0
        %2067 = vmatprep.subr.mxu0 0.0
        %2068 = vmatpush2.msra.mxu0 0.0
        %2069 = vmatprep.subr.mxu0 0.0
        %2070 = vmatpush2.msra.mxu0 0.0
        %2071 = vmatprep.mubr.f32.mxu0 0.0
        %2072 = vmatmul.mubr.f32.gmra.mxu0 %v1984
        %v2073 = vpop.f32.mrf.mxu0
        %v2074 = vadd.f32 0.0, %v2073
        %v2075 = vpop.f32.mrf.mxu0
        %2076 = vmatprep.mubr.f32.mxu0 0.0
        %2077 = vmatmul.mubr.f32.gmra.mxu0 %v1987
        %v2078 = vpop.f32.mrf.mxu0
        %v2079 = vadd.f32 0.0, %v2078
        %v2080 = vpop.f32.mrf.mxu0
        %2081 = vmatprep.mubr.f32.mxu0 0.0
        %2082 = vmatmul.mubr.f32.gmra.mxu0 %v1990
        %v2083 = vpop.f32.mrf.mxu0
        %v2084 = vadd.f32 0.0, %v2083
        %v2085 = vpop.f32.mrf.mxu0
        %2086 = vmatprep.mubr.f32.mxu0 0.0
        %2087 = vmatmul.mubr.f32.gmra.mxu0 %v1993
        %v2088 = vpop.f32.mrf.mxu0
        %v2089 = vadd.f32 0.0, %v2088
        %v2090 = vpop.f32.mrf.mxu0
        %2091 = vmatprep.mubr.f32.mxu0 0.0
        %2092 = vmatmul.mubr.f32.gmra.mxu0 %v1996
        %v2093 = vpop.f32.mrf.mxu0
        %v2094 = vadd.f32 0.0, %v2093
        %v2095 = vpop.f32.mrf.mxu0
        %2096 = vmatprep.mubr.f32.mxu0 0.0
        %2097 = vmatmul.mubr.f32.gmra.mxu0 %v1999
        %v2098 = vpop.f32.mrf.mxu0
        %v2099 = vadd.f32 0.0, %v2098
        %v2100 = vpop.f32.mrf.mxu0
        %2101 = vmatprep.mubr.f32.mxu0 0.0
        %2102 = vmatmul.mubr.f32.gmra.mxu0 %v2002
        %v2103 = vpop.f32.mrf.mxu0
        %v2104 = vadd.f32 0.0, %v2103
        %v2105 = vpop.f32.mrf.mxu0
        %2106 = vmatprep.mubr.f32.mxu0 0.0
        %2107 = vmatmul.mubr.f32.gmra.mxu0 %v2005
        %v2108 = vpop.f32.mrf.mxu0
        %v2109 = vadd.f32 0.0, %v2108
        %v2110 = vpop.f32.mrf.mxu0
        %2111 = vdwg.mxu0
        %s2112 = scalar_lea.vmem %s2, 64
        %v2113 = vld [vmem:[%s2112] sm:$0xff]
        %v2114 = vld [vmem:[%s2112 + $0x8] sm:$0xff]
        %v2115 = vld [vmem:[%s2112 + $0x10] sm:$0xff]
        %v2116 = vld [vmem:[%s2112 + $0x18] sm:$0xff]
        %s2117 = scalar_lea.vmem %s3, 2
        %v2118 = vld [vmem:[%s2117] sm:$0x1]
        %v2120 = vlaneseq
        %v2121 = vshrl.u32 %v2120, 7
        %v2122 = vsub.s32 0, %v2121
        %v2123 = vrot.slane %v2118, %v2122
        %2125 = vmatprep.subr.mxu0 0.0
        %2126 = vmatpush1.msra.mxu0 0.0
        %2127 = vmatprep.subr.mxu0 0.0
        %2128 = vmatpush1.msra.mxu0 0.0
        %2129 = vmatprep.subr.mxu0 0.0
        %2130 = vmatpush1.msra.mxu0 0.0
        %2131 = vmatprep.subr.mxu0 0.0
        %2132 = vmatpush1.msra.mxu0 0.0
        %2133 = vmatprep.subr.mxu0 0.0
        %2134 = vmatpush1.msra.mxu0 0.0
        %2135 = vmatprep.subr.mxu0 0.0
        %2136 = vmatpush1.msra.mxu0 0.0
        %2137 = vmatprep.subr.mxu0 0.0
        %2138 = vmatpush1.msra.mxu0 0.0
        %2139 = vmatprep.subr.mxu0 0.0
        %2140 = vmatpush1.msra.mxu0 0.0
        %2141 = vmatprep.subr.mxu0 0.0
        %2142 = vmatpush1.msra.mxu0 0.0
        %2143 = vmatprep.subr.mxu0 0.0
        %2144 = vmatpush1.msra.mxu0 0.0
        %2145 = vmatprep.subr.mxu0 0.0
        %2146 = vmatpush1.msra.mxu0 0.0
        %2147 = vmatprep.subr.mxu0 0.0
        %2148 = vmatpush1.msra.mxu0 0.0
        %2149 = vmatprep.subr.mxu0 0.0
        %2150 = vmatpush1.msra.mxu0 %v2116
        %2151 = vmatprep.subr.mxu0 0.0
        %2152 = vmatpush1.msra.mxu0 %v2115
        %2153 = vmatprep.subr.mxu0 0.0
        %2154 = vmatpush1.msra.mxu0 %v2114
        %2155 = vmatprep.subr.mxu0 0.0
        %2156 = vmatpush1.msra.mxu0 %v2113
        %2157 = vmatprep.subr.mxu0 0.0
        %2158 = vmatpush2.msra.mxu0 0.0
        %2159 = vmatprep.subr.mxu0 0.0
        %2160 = vmatpush2.msra.mxu0 0.0
        %2161 = vmatprep.subr.mxu0 0.0
        %2162 = vmatpush2.msra.mxu0 0.0
        %2163 = vmatprep.subr.mxu0 0.0
        %2164 = vmatpush2.msra.mxu0 0.0
        %2165 = vmatprep.subr.mxu0 0.0
        %2166 = vmatpush2.msra.mxu0 0.0
        %2167 = vmatprep.subr.mxu0 0.0
        %2168 = vmatpush2.msra.mxu0 0.0
        %2169 = vmatprep.subr.mxu0 0.0
        %2170 = vmatpush2.msra.mxu0 0.0
        %2171 = vmatprep.subr.mxu0 0.0
        %2172 = vmatpush2.msra.mxu0 0.0
        %2173 = vmatprep.subr.mxu0 0.0
        %2174 = vmatpush2.msra.mxu0 0.0
        %2175 = vmatprep.subr.mxu0 0.0
        %2176 = vmatpush2.msra.mxu0 0.0
        %2177 = vmatprep.subr.mxu0 0.0
        %2178 = vmatpush2.msra.mxu0 0.0
        %2179 = vmatprep.subr.mxu0 0.0
        %2180 = vmatpush2.msra.mxu0 0.0
        %2181 = vmatprep.subr.mxu0 0.0
        %2182 = vmatpush2.msra.mxu0 0.0
        %2183 = vmatprep.subr.mxu0 0.0
        %2184 = vmatpush2.msra.mxu0 0.0
        %2185 = vmatprep.subr.mxu0 0.0
        %2186 = vmatpush2.msra.mxu0 0.0
        %2187 = vmatprep.subr.mxu0 0.0
        %2188 = vmatpush2.msra.mxu0 0.0
        %2189 = vmatprep.mubr.f32.mxu0 0.0
        %2190 = vmatmul.mubr.f32.gmra.mxu0 %v520
        %v2191 = vpop.f32.mrf.mxu0
        %v2192 = vadd.f32 %v2123, %v2191
        %v2193 = vpop.f32.mrf.mxu0
        %2194 = vmatprep.mubr.f32.mxu0 0.0
        %2195 = vmatmul.mubr.f32.gmra.mxu0 %v523
        %v2196 = vpop.f32.mrf.mxu0
        %v2197 = vadd.f32 %v2123, %v2196
        %v2198 = vpop.f32.mrf.mxu0
        %2199 = vmatprep.mubr.f32.mxu0 0.0
        %2200 = vmatmul.mubr.f32.gmra.mxu0 %v526
        %v2201 = vpop.f32.mrf.mxu0
        %v2202 = vadd.f32 %v2123, %v2201
        %v2203 = vpop.f32.mrf.mxu0
        %2204 = vmatprep.mubr.f32.mxu0 0.0
        %2205 = vmatmul.mubr.f32.gmra.mxu0 %v529
        %v2206 = vpop.f32.mrf.mxu0
        %v2207 = vadd.f32 %v2123, %v2206
        %v2208 = vpop.f32.mrf.mxu0
        %2209 = vmatprep.mubr.f32.mxu0 0.0
        %2210 = vmatmul.mubr.f32.gmra.mxu0 %v532
        %v2211 = vpop.f32.mrf.mxu0
        %v2212 = vadd.f32 %v2123, %v2211
        %v2213 = vpop.f32.mrf.mxu0
        %2214 = vmatprep.mubr.f32.mxu0 0.0
        %2215 = vmatmul.mubr.f32.gmra.mxu0 %v535
        %v2216 = vpop.f32.mrf.mxu0
        %v2217 = vadd.f32 %v2123, %v2216
        %v2218 = vpop.f32.mrf.mxu0
        %2219 = vmatprep.mubr.f32.mxu0 0.0
        %2220 = vmatmul.mubr.f32.gmra.mxu0 %v538
        %v2221 = vpop.f32.mrf.mxu0
        %v2222 = vadd.f32 %v2123, %v2221
        %v2223 = vpop.f32.mrf.mxu0
        %2224 = vmatprep.mubr.f32.mxu0 0.0
        %2225 = vmatmul.mubr.f32.gmra.mxu0 %v541
        %v2226 = vpop.f32.mrf.mxu0
        %v2227 = vadd.f32 %v2123, %v2226
        %v2228 = vpop.f32.mrf.mxu0
        %2229 = vdwg.mxu0
        %s2230 = scalar_lea.vmem %s2, 192
        %v2231 = vld [vmem:[%s2230] sm:$0xff]
        %v2232 = vld [vmem:[%s2230 + $0x8] sm:$0xff]
        %v2233 = vld [vmem:[%s2230 + $0x10] sm:$0xff]
        %v2234 = vld [vmem:[%s2230 + $0x18] sm:$0xff]
        %s2235 = scalar_lea.vmem %s3, 6
        %v2236 = vld [vmem:[%s2235] sm:$0x1]
        %v2238 = vlaneseq
        %v2239 = vshrl.u32 %v2238, 7
        %v2240 = vsub.s32 0, %v2239
        %v2241 = vrot.slane %v2236, %v2240
        %2243 = vmatprep.subr.mxu0 0.0
        %2244 = vmatpush1.msra.mxu0 0.0
        %2245 = vmatprep.subr.mxu0 0.0
        %2246 = vmatpush1.msra.mxu0 0.0
        %2247 = vmatprep.subr.mxu0 0.0
        %2248 = vmatpush1.msra.mxu0 0.0
        %2249 = vmatprep.subr.mxu0 0.0
        %2250 = vmatpush1.msra.mxu0 0.0
        %2251 = vmatprep.subr.mxu0 0.0
        %2252 = vmatpush1.msra.mxu0 0.0
        %2253 = vmatprep.subr.mxu0 0.0
        %2254 = vmatpush1.msra.mxu0 0.0
        %2255 = vmatprep.subr.mxu0 0.0
        %2256 = vmatpush1.msra.mxu0 0.0
        %2257 = vmatprep.subr.mxu0 0.0
        %2258 = vmatpush1.msra.mxu0 0.0
        %2259 = vmatprep.subr.mxu0 0.0
        %2260 = vmatpush1.msra.mxu0 0.0
        %2261 = vmatprep.subr.mxu0 0.0
        %2262 = vmatpush1.msra.mxu0 0.0
        %2263 = vmatprep.subr.mxu0 0.0
        %2264 = vmatpush1.msra.mxu0 0.0
        %2265 = vmatprep.subr.mxu0 0.0
        %2266 = vmatpush1.msra.mxu0 0.0
        %2267 = vmatprep.subr.mxu0 0.0
        %2268 = vmatpush1.msra.mxu0 %v2234
        %2269 = vmatprep.subr.mxu0 0.0
        %2270 = vmatpush1.msra.mxu0 %v2233
        %2271 = vmatprep.subr.mxu0 0.0
        %2272 = vmatpush1.msra.mxu0 %v2232
        %2273 = vmatprep.subr.mxu0 0.0
        %2274 = vmatpush1.msra.mxu0 %v2231
        %2275 = vmatprep.subr.mxu0 0.0
        %2276 = vmatpush2.msra.mxu0 0.0
        %2277 = vmatprep.subr.mxu0 0.0
        %2278 = vmatpush2.msra.mxu0 0.0
        %2279 = vmatprep.subr.mxu0 0.0
        %2280 = vmatpush2.msra.mxu0 0.0
        %2281 = vmatprep.subr.mxu0 0.0
        %2282 = vmatpush2.msra.mxu0 0.0
        %2283 = vmatprep.subr.mxu0 0.0
        %2284 = vmatpush2.msra.mxu0 0.0
        %2285 = vmatprep.subr.mxu0 0.0
        %2286 = vmatpush2.msra.mxu0 0.0
        %2287 = vmatprep.subr.mxu0 0.0
        %2288 = vmatpush2.msra.mxu0 0.0
        %2289 = vmatprep.subr.mxu0 0.0
        %2290 = vmatpush2.msra.mxu0 0.0
        %2291 = vmatprep.subr.mxu0 0.0
        %2292 = vmatpush2.msra.mxu0 0.0
        %2293 = vmatprep.subr.mxu0 0.0
        %2294 = vmatpush2.msra.mxu0 0.0
        %2295 = vmatprep.subr.mxu0 0.0
        %2296 = vmatpush2.msra.mxu0 0.0
        %2297 = vmatprep.subr.mxu0 0.0
        %2298 = vmatpush2.msra.mxu0 0.0
        %2299 = vmatprep.subr.mxu0 0.0
        %2300 = vmatpush2.msra.mxu0 0.0
        %2301 = vmatprep.subr.mxu0 0.0
        %2302 = vmatpush2.msra.mxu0 0.0
        %2303 = vmatprep.subr.mxu0 0.0
        %2304 = vmatpush2.msra.mxu0 0.0
        %2305 = vmatprep.subr.mxu0 0.0
        %2306 = vmatpush2.msra.mxu0 0.0
        %2307 = vmatprep.mubr.f32.mxu0 0.0
        %2308 = vmatmul.mubr.f32.gmra.mxu0 %v520
        %v2309 = vpop.f32.mrf.mxu0
        %v2310 = vadd.f32 %v2241, %v2309
        %v2311 = vpop.f32.mrf.mxu0
        %2312 = vmatprep.mubr.f32.mxu0 0.0
        %2313 = vmatmul.mubr.f32.gmra.mxu0 %v523
        %v2314 = vpop.f32.mrf.mxu0
        %v2315 = vadd.f32 %v2241, %v2314
        %v2316 = vpop.f32.mrf.mxu0
        %2317 = vmatprep.mubr.f32.mxu0 0.0
        %2318 = vmatmul.mubr.f32.gmra.mxu0 %v526
        %v2319 = vpop.f32.mrf.mxu0
        %v2320 = vadd.f32 %v2241, %v2319
        %v2321 = vpop.f32.mrf.mxu0
        %2322 = vmatprep.mubr.f32.mxu0 0.0
        %2323 = vmatmul.mubr.f32.gmra.mxu0 %v529
        %v2324 = vpop.f32.mrf.mxu0
        %v2325 = vadd.f32 %v2241, %v2324
        %v2326 = vpop.f32.mrf.mxu0
        %2327 = vmatprep.mubr.f32.mxu0 0.0
        %2328 = vmatmul.mubr.f32.gmra.mxu0 %v532
        %v2329 = vpop.f32.mrf.mxu0
        %v2330 = vadd.f32 %v2241, %v2329
        %v2331 = vpop.f32.mrf.mxu0
        %2332 = vmatprep.mubr.f32.mxu0 0.0
        %2333 = vmatmul.mubr.f32.gmra.mxu0 %v535
        %v2334 = vpop.f32.mrf.mxu0
        %v2335 = vadd.f32 %v2241, %v2334
        %v2336 = vpop.f32.mrf.mxu0
        %2337 = vmatprep.mubr.f32.mxu0 0.0
        %2338 = vmatmul.mubr.f32.gmra.mxu0 %v538
        %v2339 = vpop.f32.mrf.mxu0
        %v2340 = vadd.f32 %v2241, %v2339
        %v2341 = vpop.f32.mrf.mxu0
        %2342 = vmatprep.mubr.f32.mxu0 0.0
        %2343 = vmatmul.mubr.f32.gmra.mxu0 %v541
        %v2344 = vpop.f32.mrf.mxu0
        %v2345 = vadd.f32 %v2241, %v2344
        %v2346 = vpop.f32.mrf.mxu0
        %2347 = vdwg.mxu0
        %s2348 = scalar_lea.vmem %s2, 320
        %v2349 = vld [vmem:[%s2348] sm:$0xff]
        %v2350 = vld [vmem:[%s2348 + $0x8] sm:$0xff]
        %v2351 = vld [vmem:[%s2348 + $0x10] sm:$0xff]
        %v2352 = vld [vmem:[%s2348 + $0x18] sm:$0xff]
        %s2353 = scalar_lea.vmem %s3, 10
        %v2354 = vld [vmem:[%s2353] sm:$0x1]
        %v2356 = vlaneseq
        %v2357 = vshrl.u32 %v2356, 7
        %v2358 = vsub.s32 0, %v2357
        %v2359 = vrot.slane %v2354, %v2358
        %2361 = vmatprep.subr.mxu0 0.0
        %2362 = vmatpush1.msra.mxu0 0.0
        %2363 = vmatprep.subr.mxu0 0.0
        %2364 = vmatpush1.msra.mxu0 0.0
        %2365 = vmatprep.subr.mxu0 0.0
        %2366 = vmatpush1.msra.mxu0 0.0
        %2367 = vmatprep.subr.mxu0 0.0
        %2368 = vmatpush1.msra.mxu0 0.0
        %2369 = vmatprep.subr.mxu0 0.0
        %2370 = vmatpush1.msra.mxu0 0.0
        %2371 = vmatprep.subr.mxu0 0.0
        %2372 = vmatpush1.msra.mxu0 0.0
        %2373 = vmatprep.subr.mxu0 0.0
        %2374 = vmatpush1.msra.mxu0 0.0
        %2375 = vmatprep.subr.mxu0 0.0
        %2376 = vmatpush1.msra.mxu0 0.0
        %2377 = vmatprep.subr.mxu0 0.0
        %2378 = vmatpush1.msra.mxu0 0.0
        %2379 = vmatprep.subr.mxu0 0.0
        %2380 = vmatpush1.msra.mxu0 0.0
        %2381 = vmatprep.subr.mxu0 0.0
        %2382 = vmatpush1.msra.mxu0 0.0
        %2383 = vmatprep.subr.mxu0 0.0
        %2384 = vmatpush1.msra.mxu0 0.0
        %2385 = vmatprep.subr.mxu0 0.0
        %2386 = vmatpush1.msra.mxu0 %v2352
        %2387 = vmatprep.subr.mxu0 0.0
        %2388 = vmatpush1.msra.mxu0 %v2351
        %2389 = vmatprep.subr.mxu0 0.0
        %2390 = vmatpush1.msra.mxu0 %v2350
        %2391 = vmatprep.subr.mxu0 0.0
        %2392 = vmatpush1.msra.mxu0 %v2349
        %2393 = vmatprep.subr.mxu0 0.0
        %2394 = vmatpush2.msra.mxu0 0.0
        %2395 = vmatprep.subr.mxu0 0.0
        %2396 = vmatpush2.msra.mxu0 0.0
        %2397 = vmatprep.subr.mxu0 0.0
        %2398 = vmatpush2.msra.mxu0 0.0
        %2399 = vmatprep.subr.mxu0 0.0
        %2400 = vmatpush2.msra.mxu0 0.0
        %2401 = vmatprep.subr.mxu0 0.0
        %2402 = vmatpush2.msra.mxu0 0.0
        %2403 = vmatprep.subr.mxu0 0.0
        %2404 = vmatpush2.msra.mxu0 0.0
        %2405 = vmatprep.subr.mxu0 0.0
        %2406 = vmatpush2.msra.mxu0 0.0
        %2407 = vmatprep.subr.mxu0 0.0
        %2408 = vmatpush2.msra.mxu0 0.0
        %2409 = vmatprep.subr.mxu0 0.0
        %2410 = vmatpush2.msra.mxu0 0.0
        %2411 = vmatprep.subr.mxu0 0.0
        %2412 = vmatpush2.msra.mxu0 0.0
        %2413 = vmatprep.subr.mxu0 0.0
        %2414 = vmatpush2.msra.mxu0 0.0
        %2415 = vmatprep.subr.mxu0 0.0
        %2416 = vmatpush2.msra.mxu0 0.0
        %2417 = vmatprep.subr.mxu0 0.0
        %2418 = vmatpush2.msra.mxu0 0.0
        %2419 = vmatprep.subr.mxu0 0.0
        %2420 = vmatpush2.msra.mxu0 0.0
        %2421 = vmatprep.subr.mxu0 0.0
        %2422 = vmatpush2.msra.mxu0 0.0
        %2423 = vmatprep.subr.mxu0 0.0
        %2424 = vmatpush2.msra.mxu0 0.0
        %2425 = vmatprep.mubr.f32.mxu0 0.0
        %2426 = vmatmul.mubr.f32.gmra.mxu0 %v520
        %v2427 = vpop.f32.mrf.mxu0
        %v2428 = vadd.f32 %v2359, %v2427
        %v2429 = vpop.f32.mrf.mxu0
        %2430 = vmatprep.mubr.f32.mxu0 0.0
        %2431 = vmatmul.mubr.f32.gmra.mxu0 %v523
        %v2432 = vpop.f32.mrf.mxu0
        %v2433 = vadd.f32 %v2359, %v2432
        %v2434 = vpop.f32.mrf.mxu0
        %2435 = vmatprep.mubr.f32.mxu0 0.0
        %2436 = vmatmul.mubr.f32.gmra.mxu0 %v526
        %v2437 = vpop.f32.mrf.mxu0
        %v2438 = vadd.f32 %v2359, %v2437
        %v2439 = vpop.f32.mrf.mxu0
        %2440 = vmatprep.mubr.f32.mxu0 0.0
        %2441 = vmatmul.mubr.f32.gmra.mxu0 %v529
        %v2442 = vpop.f32.mrf.mxu0
        %v2443 = vadd.f32 %v2359, %v2442
        %v2444 = vpop.f32.mrf.mxu0
        %2445 = vmatprep.mubr.f32.mxu0 0.0
        %2446 = vmatmul.mubr.f32.gmra.mxu0 %v532
        %v2447 = vpop.f32.mrf.mxu0
        %v2448 = vadd.f32 %v2359, %v2447
        %v2449 = vpop.f32.mrf.mxu0
        %2450 = vmatprep.mubr.f32.mxu0 0.0
        %2451 = vmatmul.mubr.f32.gmra.mxu0 %v535
        %v2452 = vpop.f32.mrf.mxu0
        %v2453 = vadd.f32 %v2359, %v2452
        %v2454 = vpop.f32.mrf.mxu0
        %2455 = vmatprep.mubr.f32.mxu0 0.0
        %2456 = vmatmul.mubr.f32.gmra.mxu0 %v538
        %v2457 = vpop.f32.mrf.mxu0
        %v2458 = vadd.f32 %v2359, %v2457
        %v2459 = vpop.f32.mrf.mxu0
        %2460 = vmatprep.mubr.f32.mxu0 0.0
        %2461 = vmatmul.mubr.f32.gmra.mxu0 %v541
        %v2462 = vpop.f32.mrf.mxu0
        %v2463 = vadd.f32 %v2359, %v2462
        %v2464 = vpop.f32.mrf.mxu0
        %2465 = vdwg.mxu0
        %v2467 = vsel %vm884, %v2192, 0
        %v2470 = vsel %vm884, %v2197, 0
        %v2473 = vsel %vm884, %v2202, 0
        %v2476 = vsel %vm884, %v2207, 0
        %v2479 = vsel %vm884, %v2212, 0
        %v2482 = vsel %vm884, %v2217, 0
        %v2485 = vsel %vm884, %v2222, 0
        %v2488 = vsel %vm884, %v2227, 0
        %v2491 = vsel %vm884, %v2310, 0
        %v2494 = vsel %vm884, %v2315, 0
        %v2497 = vsel %vm884, %v2320, 0
        %v2500 = vsel %vm884, %v2325, 0
        %v2503 = vsel %vm884, %v2330, 0
        %v2506 = vsel %vm884, %v2335, 0
        %v2509 = vsel %vm884, %v2340, 0
        %v2512 = vsel %vm884, %v2345, 0
        %2514 = vmatprep.subr.mxu0 0.0
        %2515 = vmatpush1.xpose.msra.mxu0 0.0
        %2516 = vmatprep.subr.mxu0 0.0
        %2517 = vmatpush1.xpose.msra.mxu0 0.0
        %2518 = vmatprep.subr.mxu0 0.0
        %2519 = vmatpush1.xpose.msra.mxu0 0.0
        %2520 = vmatprep.subr.mxu0 0.0
        %2521 = vmatpush1.xpose.msra.mxu0 0.0
        %2522 = vmatprep.subr.mxu0 0.0
        %2523 = vmatpush1.xpose.msra.mxu0 0.0
        %2524 = vmatprep.subr.mxu0 0.0
        %2525 = vmatpush1.xpose.msra.mxu0 0.0
        %2526 = vmatprep.subr.mxu0 0.0
        %2527 = vmatpush1.xpose.msra.mxu0 0.0
        %2528 = vmatprep.subr.mxu0 0.0
        %2529 = vmatpush1.xpose.msra.mxu0 0.0
        %2530 = vmatprep.subr.mxu0 0.0
        %2531 = vmatpush1.xpose.msra.mxu0 %v2512
        %2532 = vmatprep.subr.mxu0 0.0
        %2533 = vmatpush1.xpose.msra.mxu0 %v2509
        %2534 = vmatprep.subr.mxu0 0.0
        %2535 = vmatpush1.xpose.msra.mxu0 %v2506
        %2536 = vmatprep.subr.mxu0 0.0
        %2537 = vmatpush1.xpose.msra.mxu0 %v2503
        %2538 = vmatprep.subr.mxu0 0.0
        %2539 = vmatpush1.xpose.msra.mxu0 %v2500
        %2540 = vmatprep.subr.mxu0 0.0
        %2541 = vmatpush1.xpose.msra.mxu0 %v2497
        %2542 = vmatprep.subr.mxu0 0.0
        %2543 = vmatpush1.xpose.msra.mxu0 %v2494
        %2544 = vmatprep.subr.mxu0 0.0
        %2545 = vmatpush1.xpose.msra.mxu0 %v2491
        %2546 = vmatprep.subr.mxu0 0.0
        %2547 = vmatpush2.xpose.msra.mxu0 0.0
        %2548 = vmatprep.subr.mxu0 0.0
        %2549 = vmatpush2.xpose.msra.mxu0 0.0
        %2550 = vmatprep.subr.mxu0 0.0
        %2551 = vmatpush2.xpose.msra.mxu0 0.0
        %2552 = vmatprep.subr.mxu0 0.0
        %2553 = vmatpush2.xpose.msra.mxu0 0.0
        %2554 = vmatprep.subr.mxu0 0.0
        %2555 = vmatpush2.xpose.msra.mxu0 0.0
        %2556 = vmatprep.subr.mxu0 0.0
        %2557 = vmatpush2.xpose.msra.mxu0 0.0
        %2558 = vmatprep.subr.mxu0 0.0
        %2559 = vmatpush2.xpose.msra.mxu0 0.0
        %2560 = vmatprep.subr.mxu0 0.0
        %2561 = vmatpush2.xpose.msra.mxu0 0.0
        %2562 = vmatprep.subr.mxu0 0.0
        %2563 = vmatpush2.xpose.msra.mxu0 0.0
        %2564 = vmatprep.subr.mxu0 0.0
        %2565 = vmatpush2.xpose.msra.mxu0 0.0
        %2566 = vmatprep.subr.mxu0 0.0
        %2567 = vmatpush2.xpose.msra.mxu0 0.0
        %2568 = vmatprep.subr.mxu0 0.0
        %2569 = vmatpush2.xpose.msra.mxu0 0.0
        %2570 = vmatprep.subr.mxu0 0.0
        %2571 = vmatpush2.xpose.msra.mxu0 0.0
        %2572 = vmatprep.subr.mxu0 0.0
        %2573 = vmatpush2.xpose.msra.mxu0 0.0
        %2574 = vmatprep.subr.mxu0 0.0
        %2575 = vmatpush2.xpose.msra.mxu0 0.0
        %2576 = vmatprep.subr.mxu0 0.0
        %2577 = vmatpush2.xpose.msra.mxu0 0.0
        %2578 = vmatprep.mubr.f32.mxu0 0.0
        %2579 = vmatmul.mubr.f32.gmra.mxu0 %v2467
        %v2580 = vpop.f32.mrf.mxu0
        %v2581 = vadd.f32 0.0, %v2580
        %v2582 = vpop.f32.mrf.mxu0
        %2583 = vmatprep.mubr.f32.mxu0 0.0
        %2584 = vmatmul.mubr.f32.gmra.mxu0 %v2470
        %v2585 = vpop.f32.mrf.mxu0
        %v2586 = vadd.f32 0.0, %v2585
        %v2587 = vpop.f32.mrf.mxu0
        %2588 = vmatprep.mubr.f32.mxu0 0.0
        %2589 = vmatmul.mubr.f32.gmra.mxu0 %v2473
        %v2590 = vpop.f32.mrf.mxu0
        %v2591 = vadd.f32 0.0, %v2590
        %v2592 = vpop.f32.mrf.mxu0
        %2593 = vmatprep.mubr.f32.mxu0 0.0
        %2594 = vmatmul.mubr.f32.gmra.mxu0 %v2476
        %v2595 = vpop.f32.mrf.mxu0
        %v2596 = vadd.f32 0.0, %v2595
        %v2597 = vpop.f32.mrf.mxu0
        %2598 = vmatprep.mubr.f32.mxu0 0.0
        %2599 = vmatmul.mubr.f32.gmra.mxu0 %v2479
        %v2600 = vpop.f32.mrf.mxu0
        %v2601 = vadd.f32 0.0, %v2600
        %v2602 = vpop.f32.mrf.mxu0
        %2603 = vmatprep.mubr.f32.mxu0 0.0
        %2604 = vmatmul.mubr.f32.gmra.mxu0 %v2482
        %v2605 = vpop.f32.mrf.mxu0
        %v2606 = vadd.f32 0.0, %v2605
        %v2607 = vpop.f32.mrf.mxu0
        %2608 = vmatprep.mubr.f32.mxu0 0.0
        %2609 = vmatmul.mubr.f32.gmra.mxu0 %v2485
        %v2610 = vpop.f32.mrf.mxu0
        %v2611 = vadd.f32 0.0, %v2610
        %v2612 = vpop.f32.mrf.mxu0
        %2613 = vmatprep.mubr.f32.mxu0 0.0
        %2614 = vmatmul.mubr.f32.gmra.mxu0 %v2488
        %v2615 = vpop.f32.mrf.mxu0
        %v2616 = vadd.f32 0.0, %v2615
        %v2617 = vpop.f32.mrf.mxu0
        %2618 = vdwg.mxu0
        %v2619 = vsel %vm1038, %v2581, -inf
        %2620 = vmax.xlane.f32.xlu0 %v2619
        %v2621 = vpop.xlane.xlu0 %2620
        %v2622 = vsel %vm1038, %v2586, -inf
        %2623 = vmax.xlane.f32.xlu0 %v2622
        %v2624 = vpop.xlane.xlu0 %2623
        %v2625 = vsel %vm1038, %v2591, -inf
        %2626 = vmax.xlane.f32.xlu0 %v2625
        %v2627 = vpop.xlane.xlu0 %2626
        %v2628 = vsel %vm1038, %v2596, -inf
        %2629 = vmax.xlane.f32.xlu0 %v2628
        %v2630 = vpop.xlane.xlu0 %2629
        %v2631 = vsel %vm1038, %v2601, -inf
        %2632 = vmax.xlane.f32.xlu0 %v2631
        %v2633 = vpop.xlane.xlu0 %2632
        %v2634 = vsel %vm1038, %v2606, -inf
        %2635 = vmax.xlane.f32.xlu0 %v2634
        %v2636 = vpop.xlane.xlu0 %2635
        %v2637 = vsel %vm1038, %v2611, -inf
        %2638 = vmax.xlane.f32.xlu0 %v2637
        %v2639 = vpop.xlane.xlu0 %2638
        %v2640 = vsel %vm1038, %v2616, -inf
        %2641 = vmax.xlane.f32.xlu0 %v2640
        %v2642 = vpop.xlane.xlu0 %2641
        %v2643 = vsub.f32 %v2581, %v2621
        %v2644 = vsub.f32 %v2586, %v2624
        %v2645 = vsub.f32 %v2591, %v2627
        %v2646 = vsub.f32 %v2596, %v2630
        %v2647 = vsub.f32 %v2601, %v2633
        %v2648 = vsub.f32 %v2606, %v2636
        %v2649 = vsub.f32 %v2611, %v2639
        %v2650 = vsub.f32 %v2616, %v2642
        %v2651 = vmul.f32 %v2643, 1.442695
        %v2652 = vpow.pop %v2651
        %v2653 = vmul.f32 %v2644, 1.442695
        %v2654 = vpow.pop %v2653
        %v2655 = vmul.f32 %v2645, 1.442695
        %v2656 = vpow.pop %v2655
        %v2657 = vmul.f32 %v2646, 1.442695
        %v2658 = vpow.pop %v2657
        %v2659 = vmul.f32 %v2647, 1.442695
        %v2660 = vpow.pop %v2659
        %v2661 = vmul.f32 %v2648, 1.442695
        %v2662 = vpow.pop %v2661
        %v2663 = vmul.f32 %v2649, 1.442695
        %v2664 = vpow.pop %v2663
        %v2665 = vmul.f32 %v2650, 1.442695
        %v2666 = vpow.pop %v2665
        %v2667 = vsel %vm1038, %v2652, 0.0
        %2668 = vadd.xlane.f32.xlu0 %v2667
        %v2669 = vpop.xlane.xlu0 %2668
        %v2670 = vsel %vm1038, %v2654, 0.0
        %2671 = vadd.xlane.f32.xlu0 %v2670
        %v2672 = vpop.xlane.xlu0 %2671
        %v2673 = vsel %vm1038, %v2656, 0.0
        %2674 = vadd.xlane.f32.xlu0 %v2673
        %v2675 = vpop.xlane.xlu0 %2674
        %v2676 = vsel %vm1038, %v2658, 0.0
        %2677 = vadd.xlane.f32.xlu0 %v2676
        %v2678 = vpop.xlane.xlu0 %2677
        %v2679 = vsel %vm1038, %v2660, 0.0
        %2680 = vadd.xlane.f32.xlu0 %v2679
        %v2681 = vpop.xlane.xlu0 %2680
        %v2682 = vsel %vm1038, %v2662, 0.0
        %2683 = vadd.xlane.f32.xlu0 %v2682
        %v2684 = vpop.xlane.xlu0 %2683
        %v2685 = vsel %vm1038, %v2664, 0.0
        %2686 = vadd.xlane.f32.xlu0 %v2685
        %v2687 = vpop.xlane.xlu0 %2686
        %v2688 = vsel %vm1038, %v2666, 0.0
        %2689 = vadd.xlane.f32.xlu0 %v2688
        %v2690 = vpop.xlane.xlu0 %2689
        %v2691 = vrcp.pop %v2669
        %v2692 = vrcp.pop %v2672
        %v2693 = vrcp.pop %v2675
        %v2694 = vrcp.pop %v2678
        %v2695 = vrcp.pop %v2681
        %v2696 = vrcp.pop %v2684
        %v2697 = vrcp.pop %v2687
        %v2698 = vrcp.pop %v2690
        %v2699 = vmul.f32 %v2652, %v2691
        %v2700 = vmul.f32 %v2654, %v2692
        %v2701 = vmul.f32 %v2656, %v2693
        %v2702 = vmul.f32 %v2658, %v2694
        %v2703 = vmul.f32 %v2660, %v2695
        %v2704 = vmul.f32 %v2662, %v2696
        %v2705 = vmul.f32 %v2664, %v2697
        %v2706 = vmul.f32 %v2666, %v2698
        %v2708 = vsel %vm1038, %v2699, 0
        %v2711 = vsel %vm1038, %v2700, 0
        %v2714 = vsel %vm1038, %v2701, 0
        %v2717 = vsel %vm1038, %v2702, 0
        %v2720 = vsel %vm1038, %v2703, 0
        %v2723 = vsel %vm1038, %v2704, 0
        %v2726 = vsel %vm1038, %v2705, 0
        %v2729 = vsel %vm1038, %v2706, 0
        %2731 = vmatprep.subr.mxu0 0.0
        %2732 = vmatpush1.msra.mxu0 0.0
        %2733 = vmatprep.subr.mxu0 0.0
        %2734 = vmatpush1.msra.mxu0 0.0
        %2735 = vmatprep.subr.mxu0 0.0
        %2736 = vmatpush1.msra.mxu0 0.0
        %2737 = vmatprep.subr.mxu0 0.0
        %2738 = vmatpush1.msra.mxu0 0.0
        %2739 = vmatprep.subr.mxu0 0.0
        %2740 = vmatpush1.msra.mxu0 0.0
        %2741 = vmatprep.subr.mxu0 0.0
        %2742 = vmatpush1.msra.mxu0 0.0
        %2743 = vmatprep.subr.mxu0 0.0
        %2744 = vmatpush1.msra.mxu0 0.0
        %2745 = vmatprep.subr.mxu0 0.0
        %2746 = vmatpush1.msra.mxu0 0.0
        %2747 = vmatprep.subr.mxu0 0.0
        %2748 = vmatpush1.msra.mxu0 %v2463
        %2749 = vmatprep.subr.mxu0 0.0
        %2750 = vmatpush1.msra.mxu0 %v2458
        %2751 = vmatprep.subr.mxu0 0.0
        %2752 = vmatpush1.msra.mxu0 %v2453
        %2753 = vmatprep.subr.mxu0 0.0
        %2754 = vmatpush1.msra.mxu0 %v2448
        %2755 = vmatprep.subr.mxu0 0.0
        %2756 = vmatpush1.msra.mxu0 %v2443
        %2757 = vmatprep.subr.mxu0 0.0
        %2758 = vmatpush1.msra.mxu0 %v2438
        %2759 = vmatprep.subr.mxu0 0.0
        %2760 = vmatpush1.msra.mxu0 %v2433
        %2761 = vmatprep.subr.mxu0 0.0
        %2762 = vmatpush1.msra.mxu0 %v2428
        %2763 = vmatprep.subr.mxu0 0.0
        %2764 = vmatpush2.msra.mxu0 0.0
        %2765 = vmatprep.subr.mxu0 0.0
        %2766 = vmatpush2.msra.mxu0 0.0
        %2767 = vmatprep.subr.mxu0 0.0
        %2768 = vmatpush2.msra.mxu0 0.0
        %2769 = vmatprep.subr.mxu0 0.0
        %2770 = vmatpush2.msra.mxu0 0.0
        %2771 = vmatprep.subr.mxu0 0.0
        %2772 = vmatpush2.msra.mxu0 0.0
        %2773 = vmatprep.subr.mxu0 0.0
        %2774 = vmatpush2.msra.mxu0 0.0
        %2775 = vmatprep.subr.mxu0 0.0
        %2776 = vmatpush2.msra.mxu0 0.0
        %2777 = vmatprep.subr.mxu0 0.0
        %2778 = vmatpush2.msra.mxu0 0.0
        %2779 = vmatprep.subr.mxu0 0.0
        %2780 = vmatpush2.msra.mxu0 0.0
        %2781 = vmatprep.subr.mxu0 0.0
        %2782 = vmatpush2.msra.mxu0 0.0
        %2783 = vmatprep.subr.mxu0 0.0
        %2784 = vmatpush2.msra.mxu0 0.0
        %2785 = vmatprep.subr.mxu0 0.0
        %2786 = vmatpush2.msra.mxu0 0.0
        %2787 = vmatprep.subr.mxu0 0.0
        %2788 = vmatpush2.msra.mxu0 0.0
        %2789 = vmatprep.subr.mxu0 0.0
        %2790 = vmatpush2.msra.mxu0 0.0
        %2791 = vmatprep.subr.mxu0 0.0
        %2792 = vmatpush2.msra.mxu0 0.0
        %2793 = vmatprep.subr.mxu0 0.0
        %2794 = vmatpush2.msra.mxu0 0.0
        %2795 = vmatprep.mubr.f32.mxu0 0.0
        %2796 = vmatmul.mubr.f32.gmra.mxu0 %v2708
        %v2797 = vpop.f32.mrf.mxu0
        %v2798 = vadd.f32 0.0, %v2797
        %v2799 = vpop.f32.mrf.mxu0
        %2800 = vmatprep.mubr.f32.mxu0 0.0
        %2801 = vmatmul.mubr.f32.gmra.mxu0 %v2711
        %v2802 = vpop.f32.mrf.mxu0
        %v2803 = vadd.f32 0.0, %v2802
        %v2804 = vpop.f32.mrf.mxu0
        %2805 = vmatprep.mubr.f32.mxu0 0.0
        %2806 = vmatmul.mubr.f32.gmra.mxu0 %v2714
        %v2807 = vpop.f32.mrf.mxu0
        %v2808 = vadd.f32 0.0, %v2807
        %v2809 = vpop.f32.mrf.mxu0
        %2810 = vmatprep.mubr.f32.mxu0 0.0
        %2811 = vmatmul.mubr.f32.gmra.mxu0 %v2717
        %v2812 = vpop.f32.mrf.mxu0
        %v2813 = vadd.f32 0.0, %v2812
        %v2814 = vpop.f32.mrf.mxu0
        %2815 = vmatprep.mubr.f32.mxu0 0.0
        %2816 = vmatmul.mubr.f32.gmra.mxu0 %v2720
        %v2817 = vpop.f32.mrf.mxu0
        %v2818 = vadd.f32 0.0, %v2817
        %v2819 = vpop.f32.mrf.mxu0
        %2820 = vmatprep.mubr.f32.mxu0 0.0
        %2821 = vmatmul.mubr.f32.gmra.mxu0 %v2723
        %v2822 = vpop.f32.mrf.mxu0
        %v2823 = vadd.f32 0.0, %v2822
        %v2824 = vpop.f32.mrf.mxu0
        %2825 = vmatprep.mubr.f32.mxu0 0.0
        %2826 = vmatmul.mubr.f32.gmra.mxu0 %v2726
        %v2827 = vpop.f32.mrf.mxu0
        %v2828 = vadd.f32 0.0, %v2827
        %v2829 = vpop.f32.mrf.mxu0
        %2830 = vmatprep.mubr.f32.mxu0 0.0
        %2831 = vmatmul.mubr.f32.gmra.mxu0 %v2729
        %v2832 = vpop.f32.mrf.mxu0
        %v2833 = vadd.f32 0.0, %v2832
        %v2834 = vpop.f32.mrf.mxu0
        %2835 = vdwg.mxu0
        %s2836 = scalar_lea.vmem %s4, 16
        %v2837 = vld [vmem:[%s2836] sm:$0xff]
        %s2838 = scalar_lea.vmem %s2, 96
        %v2839 = vld [vmem:[%s2838] sm:$0xff]
        %v2840 = vld [vmem:[%s2838 + $0x8] sm:$0xff]
        %v2841 = vld [vmem:[%s2838 + $0x10] sm:$0xff]
        %v2842 = vld [vmem:[%s2838 + $0x18] sm:$0xff]
        %s2843 = scalar_lea.vmem %s3, 3
        %v2844 = vld [vmem:[%s2843] sm:$0x1]
        %v2846 = vlaneseq
        %v2847 = vshrl.u32 %v2846, 7
        %v2848 = vsub.s32 0, %v2847
        %v2849 = vrot.slane %v2844, %v2848
        %2851 = vmatprep.subr.mxu0 0.0
        %2852 = vmatpush1.msra.mxu0 0.0
        %2853 = vmatprep.subr.mxu0 0.0
        %2854 = vmatpush1.msra.mxu0 0.0
        %2855 = vmatprep.subr.mxu0 0.0
        %2856 = vmatpush1.msra.mxu0 0.0
        %2857 = vmatprep.subr.mxu0 0.0
        %2858 = vmatpush1.msra.mxu0 0.0
        %2859 = vmatprep.subr.mxu0 0.0
        %2860 = vmatpush1.msra.mxu0 0.0
        %2861 = vmatprep.subr.mxu0 0.0
        %2862 = vmatpush1.msra.mxu0 0.0
        %2863 = vmatprep.subr.mxu0 0.0
        %2864 = vmatpush1.msra.mxu0 0.0
        %2865 = vmatprep.subr.mxu0 0.0
        %2866 = vmatpush1.msra.mxu0 0.0
        %2867 = vmatprep.subr.mxu0 0.0
        %2868 = vmatpush1.msra.mxu0 0.0
        %2869 = vmatprep.subr.mxu0 0.0
        %2870 = vmatpush1.msra.mxu0 0.0
        %2871 = vmatprep.subr.mxu0 0.0
        %2872 = vmatpush1.msra.mxu0 0.0
        %2873 = vmatprep.subr.mxu0 0.0
        %2874 = vmatpush1.msra.mxu0 0.0
        %2875 = vmatprep.subr.mxu0 0.0
        %2876 = vmatpush1.msra.mxu0 %v2842
        %2877 = vmatprep.subr.mxu0 0.0
        %2878 = vmatpush1.msra.mxu0 %v2841
        %2879 = vmatprep.subr.mxu0 0.0
        %2880 = vmatpush1.msra.mxu0 %v2840
        %2881 = vmatprep.subr.mxu0 0.0
        %2882 = vmatpush1.msra.mxu0 %v2839
        %2883 = vmatprep.subr.mxu0 0.0
        %2884 = vmatpush2.msra.mxu0 0.0
        %2885 = vmatprep.subr.mxu0 0.0
        %2886 = vmatpush2.msra.mxu0 0.0
        %2887 = vmatprep.subr.mxu0 0.0
        %2888 = vmatpush2.msra.mxu0 0.0
        %2889 = vmatprep.subr.mxu0 0.0
        %2890 = vmatpush2.msra.mxu0 0.0
        %2891 = vmatprep.subr.mxu0 0.0
        %2892 = vmatpush2.msra.mxu0 0.0
        %2893 = vmatprep.subr.mxu0 0.0
        %2894 = vmatpush2.msra.mxu0 0.0
        %2895 = vmatprep.subr.mxu0 0.0
        %2896 = vmatpush2.msra.mxu0 0.0
        %2897 = vmatprep.subr.mxu0 0.0
        %2898 = vmatpush2.msra.mxu0 0.0
        %2899 = vmatprep.subr.mxu0 0.0
        %2900 = vmatpush2.msra.mxu0 0.0
        %2901 = vmatprep.subr.mxu0 0.0
        %2902 = vmatpush2.msra.mxu0 0.0
        %2903 = vmatprep.subr.mxu0 0.0
        %2904 = vmatpush2.msra.mxu0 0.0
        %2905 = vmatprep.subr.mxu0 0.0
        %2906 = vmatpush2.msra.mxu0 0.0
        %2907 = vmatprep.subr.mxu0 0.0
        %2908 = vmatpush2.msra.mxu0 0.0
        %2909 = vmatprep.subr.mxu0 0.0
        %2910 = vmatpush2.msra.mxu0 0.0
        %2911 = vmatprep.subr.mxu0 0.0
        %2912 = vmatpush2.msra.mxu0 0.0
        %2913 = vmatprep.subr.mxu0 0.0
        %2914 = vmatpush2.msra.mxu0 0.0
        %2915 = vmatprep.mubr.f32.mxu0 0.0
        %2916 = vmatmul.mubr.f32.gmra.mxu0 %v520
        %v2917 = vpop.f32.mrf.mxu0
        %v2918 = vadd.f32 %v2849, %v2917
        %v2919 = vpop.f32.mrf.mxu0
        %2920 = vmatprep.mubr.f32.mxu0 0.0
        %2921 = vmatmul.mubr.f32.gmra.mxu0 %v523
        %v2922 = vpop.f32.mrf.mxu0
        %v2923 = vadd.f32 %v2849, %v2922
        %v2924 = vpop.f32.mrf.mxu0
        %2925 = vmatprep.mubr.f32.mxu0 0.0
        %2926 = vmatmul.mubr.f32.gmra.mxu0 %v526
        %v2927 = vpop.f32.mrf.mxu0
        %v2928 = vadd.f32 %v2849, %v2927
        %v2929 = vpop.f32.mrf.mxu0
        %2930 = vmatprep.mubr.f32.mxu0 0.0
        %2931 = vmatmul.mubr.f32.gmra.mxu0 %v529
        %v2932 = vpop.f32.mrf.mxu0
        %v2933 = vadd.f32 %v2849, %v2932
        %v2934 = vpop.f32.mrf.mxu0
        %2935 = vmatprep.mubr.f32.mxu0 0.0
        %2936 = vmatmul.mubr.f32.gmra.mxu0 %v532
        %v2937 = vpop.f32.mrf.mxu0
        %v2938 = vadd.f32 %v2849, %v2937
        %v2939 = vpop.f32.mrf.mxu0
        %2940 = vmatprep.mubr.f32.mxu0 0.0
        %2941 = vmatmul.mubr.f32.gmra.mxu0 %v535
        %v2942 = vpop.f32.mrf.mxu0
        %v2943 = vadd.f32 %v2849, %v2942
        %v2944 = vpop.f32.mrf.mxu0
        %2945 = vmatprep.mubr.f32.mxu0 0.0
        %2946 = vmatmul.mubr.f32.gmra.mxu0 %v538
        %v2947 = vpop.f32.mrf.mxu0
        %v2948 = vadd.f32 %v2849, %v2947
        %v2949 = vpop.f32.mrf.mxu0
        %2950 = vmatprep.mubr.f32.mxu0 0.0
        %2951 = vmatmul.mubr.f32.gmra.mxu0 %v541
        %v2952 = vpop.f32.mrf.mxu0
        %v2953 = vadd.f32 %v2849, %v2952
        %v2954 = vpop.f32.mrf.mxu0
        %2955 = vdwg.mxu0
        %s2956 = scalar_lea.vmem %s2, 224
        %v2957 = vld [vmem:[%s2956] sm:$0xff]
        %v2958 = vld [vmem:[%s2956 + $0x8] sm:$0xff]
        %v2959 = vld [vmem:[%s2956 + $0x10] sm:$0xff]
        %v2960 = vld [vmem:[%s2956 + $0x18] sm:$0xff]
        %s2961 = scalar_lea.vmem %s3, 7
        %v2962 = vld [vmem:[%s2961] sm:$0x1]
        %v2964 = vlaneseq
        %v2965 = vshrl.u32 %v2964, 7
        %v2966 = vsub.s32 0, %v2965
        %v2967 = vrot.slane %v2962, %v2966
        %2969 = vmatprep.subr.mxu0 0.0
        %2970 = vmatpush1.msra.mxu0 0.0
        %2971 = vmatprep.subr.mxu0 0.0
        %2972 = vmatpush1.msra.mxu0 0.0
        %2973 = vmatprep.subr.mxu0 0.0
        %2974 = vmatpush1.msra.mxu0 0.0
        %2975 = vmatprep.subr.mxu0 0.0
        %2976 = vmatpush1.msra.mxu0 0.0
        %2977 = vmatprep.subr.mxu0 0.0
        %2978 = vmatpush1.msra.mxu0 0.0
        %2979 = vmatprep.subr.mxu0 0.0
        %2980 = vmatpush1.msra.mxu0 0.0
        %2981 = vmatprep.subr.mxu0 0.0
        %2982 = vmatpush1.msra.mxu0 0.0
        %2983 = vmatprep.subr.mxu0 0.0
        %2984 = vmatpush1.msra.mxu0 0.0
        %2985 = vmatprep.subr.mxu0 0.0
        %2986 = vmatpush1.msra.mxu0 0.0
        %2987 = vmatprep.subr.mxu0 0.0
        %2988 = vmatpush1.msra.mxu0 0.0
        %2989 = vmatprep.subr.mxu0 0.0
        %2990 = vmatpush1.msra.mxu0 0.0
        %2991 = vmatprep.subr.mxu0 0.0
        %2992 = vmatpush1.msra.mxu0 0.0
        %2993 = vmatprep.subr.mxu0 0.0
        %2994 = vmatpush1.msra.mxu0 %v2960
        %2995 = vmatprep.subr.mxu0 0.0
        %2996 = vmatpush1.msra.mxu0 %v2959
        %2997 = vmatprep.subr.mxu0 0.0
        %2998 = vmatpush1.msra.mxu0 %v2958
        %2999 = vmatprep.subr.mxu0 0.0
        %3000 = vmatpush1.msra.mxu0 %v2957
        %3001 = vmatprep.subr.mxu0 0.0
        %3002 = vmatpush2.msra.mxu0 0.0
        %3003 = vmatprep.subr.mxu0 0.0
        %3004 = vmatpush2.msra.mxu0 0.0
        %3005 = vmatprep.subr.mxu0 0.0
        %3006 = vmatpush2.msra.mxu0 0.0
        %3007 = vmatprep.subr.mxu0 0.0
        %3008 = vmatpush2.msra.mxu0 0.0
        %3009 = vmatprep.subr.mxu0 0.0
        %3010 = vmatpush2.msra.mxu0 0.0
        %3011 = vmatprep.subr.mxu0 0.0
        %3012 = vmatpush2.msra.mxu0 0.0
        %3013 = vmatprep.subr.mxu0 0.0
        %3014 = vmatpush2.msra.mxu0 0.0
        %3015 = vmatprep.subr.mxu0 0.0
        %3016 = vmatpush2.msra.mxu0 0.0
        %3017 = vmatprep.subr.mxu0 0.0
        %3018 = vmatpush2.msra.mxu0 0.0
        %3019 = vmatprep.subr.mxu0 0.0
        %3020 = vmatpush2.msra.mxu0 0.0
        %3021 = vmatprep.subr.mxu0 0.0
        %3022 = vmatpush2.msra.mxu0 0.0
        %3023 = vmatprep.subr.mxu0 0.0
        %3024 = vmatpush2.msra.mxu0 0.0
        %3025 = vmatprep.subr.mxu0 0.0
        %3026 = vmatpush2.msra.mxu0 0.0
        %3027 = vmatprep.subr.mxu0 0.0
        %3028 = vmatpush2.msra.mxu0 0.0
        %3029 = vmatprep.subr.mxu0 0.0
        %3030 = vmatpush2.msra.mxu0 0.0
        %3031 = vmatprep.subr.mxu0 0.0
        %3032 = vmatpush2.msra.mxu0 0.0
        %3033 = vmatprep.mubr.f32.mxu0 0.0
        %3034 = vmatmul.mubr.f32.gmra.mxu0 %v520
        %v3035 = vpop.f32.mrf.mxu0
        %v3036 = vadd.f32 %v2967, %v3035
        %v3037 = vpop.f32.mrf.mxu0
        %3038 = vmatprep.mubr.f32.mxu0 0.0
        %3039 = vmatmul.mubr.f32.gmra.mxu0 %v523
        %v3040 = vpop.f32.mrf.mxu0
        %v3041 = vadd.f32 %v2967, %v3040
        %v3042 = vpop.f32.mrf.mxu0
        %3043 = vmatprep.mubr.f32.mxu0 0.0
        %3044 = vmatmul.mubr.f32.gmra.mxu0 %v526
        %v3045 = vpop.f32.mrf.mxu0
        %v3046 = vadd.f32 %v2967, %v3045
        %v3047 = vpop.f32.mrf.mxu0
        %3048 = vmatprep.mubr.f32.mxu0 0.0
        %3049 = vmatmul.mubr.f32.gmra.mxu0 %v529
        %v3050 = vpop.f32.mrf.mxu0
        %v3051 = vadd.f32 %v2967, %v3050
        %v3052 = vpop.f32.mrf.mxu0
        %3053 = vmatprep.mubr.f32.mxu0 0.0
        %3054 = vmatmul.mubr.f32.gmra.mxu0 %v532
        %v3055 = vpop.f32.mrf.mxu0
        %v3056 = vadd.f32 %v2967, %v3055
        %v3057 = vpop.f32.mrf.mxu0
        %3058 = vmatprep.mubr.f32.mxu0 0.0
        %3059 = vmatmul.mubr.f32.gmra.mxu0 %v535
        %v3060 = vpop.f32.mrf.mxu0
        %v3061 = vadd.f32 %v2967, %v3060
        %v3062 = vpop.f32.mrf.mxu0
        %3063 = vmatprep.mubr.f32.mxu0 0.0
        %3064 = vmatmul.mubr.f32.gmra.mxu0 %v538
        %v3065 = vpop.f32.mrf.mxu0
        %v3066 = vadd.f32 %v2967, %v3065
        %v3067 = vpop.f32.mrf.mxu0
        %3068 = vmatprep.mubr.f32.mxu0 0.0
        %3069 = vmatmul.mubr.f32.gmra.mxu0 %v541
        %v3070 = vpop.f32.mrf.mxu0
        %v3071 = vadd.f32 %v2967, %v3070
        %v3072 = vpop.f32.mrf.mxu0
        %3073 = vdwg.mxu0
        %s3074 = scalar_lea.vmem %s2, 352
        %v3075 = vld [vmem:[%s3074] sm:$0xff]
        %v3076 = vld [vmem:[%s3074 + $0x8] sm:$0xff]
        %v3077 = vld [vmem:[%s3074 + $0x10] sm:$0xff]
        %v3078 = vld [vmem:[%s3074 + $0x18] sm:$0xff]
        %s3079 = scalar_lea.vmem %s3, 11
        %v3080 = vld [vmem:[%s3079] sm:$0x1]
        %v3082 = vlaneseq
        %v3083 = vshrl.u32 %v3082, 7
        %v3084 = vsub.s32 0, %v3083
        %v3085 = vrot.slane %v3080, %v3084
        %3087 = vmatprep.subr.mxu0 0.0
        %3088 = vmatpush1.msra.mxu0 0.0
        %3089 = vmatprep.subr.mxu0 0.0
        %3090 = vmatpush1.msra.mxu0 0.0
        %3091 = vmatprep.subr.mxu0 0.0
        %3092 = vmatpush1.msra.mxu0 0.0
        %3093 = vmatprep.subr.mxu0 0.0
        %3094 = vmatpush1.msra.mxu0 0.0
        %3095 = vmatprep.subr.mxu0 0.0
        %3096 = vmatpush1.msra.mxu0 0.0
        %3097 = vmatprep.subr.mxu0 0.0
        %3098 = vmatpush1.msra.mxu0 0.0
        %3099 = vmatprep.subr.mxu0 0.0
        %3100 = vmatpush1.msra.mxu0 0.0
        %3101 = vmatprep.subr.mxu0 0.0
        %3102 = vmatpush1.msra.mxu0 0.0
        %3103 = vmatprep.subr.mxu0 0.0
        %3104 = vmatpush1.msra.mxu0 0.0
        %3105 = vmatprep.subr.mxu0 0.0
        %3106 = vmatpush1.msra.mxu0 0.0
        %3107 = vmatprep.subr.mxu0 0.0
        %3108 = vmatpush1.msra.mxu0 0.0
        %3109 = vmatprep.subr.mxu0 0.0
        %3110 = vmatpush1.msra.mxu0 0.0
        %3111 = vmatprep.subr.mxu0 0.0
        %3112 = vmatpush1.msra.mxu0 %v3078
        %3113 = vmatprep.subr.mxu0 0.0
        %3114 = vmatpush1.msra.mxu0 %v3077
        %3115 = vmatprep.subr.mxu0 0.0
        %3116 = vmatpush1.msra.mxu0 %v3076
        %3117 = vmatprep.subr.mxu0 0.0
        %3118 = vmatpush1.msra.mxu0 %v3075
        %3119 = vmatprep.subr.mxu0 0.0
        %3120 = vmatpush2.msra.mxu0 0.0
        %3121 = vmatprep.subr.mxu0 0.0
        %3122 = vmatpush2.msra.mxu0 0.0
        %3123 = vmatprep.subr.mxu0 0.0
        %3124 = vmatpush2.msra.mxu0 0.0
        %3125 = vmatprep.subr.mxu0 0.0
        %3126 = vmatpush2.msra.mxu0 0.0
        %3127 = vmatprep.subr.mxu0 0.0
        %3128 = vmatpush2.msra.mxu0 0.0
        %3129 = vmatprep.subr.mxu0 0.0
        %3130 = vmatpush2.msra.mxu0 0.0
        %3131 = vmatprep.subr.mxu0 0.0
        %3132 = vmatpush2.msra.mxu0 0.0
        %3133 = vmatprep.subr.mxu0 0.0
        %3134 = vmatpush2.msra.mxu0 0.0
        %3135 = vmatprep.subr.mxu0 0.0
        %3136 = vmatpush2.msra.mxu0 0.0
        %3137 = vmatprep.subr.mxu0 0.0
        %3138 = vmatpush2.msra.mxu0 0.0
        %3139 = vmatprep.subr.mxu0 0.0
        %3140 = vmatpush2.msra.mxu0 0.0
        %3141 = vmatprep.subr.mxu0 0.0
        %3142 = vmatpush2.msra.mxu0 0.0
        %3143 = vmatprep.subr.mxu0 0.0
        %3144 = vmatpush2.msra.mxu0 0.0
        %3145 = vmatprep.subr.mxu0 0.0
        %3146 = vmatpush2.msra.mxu0 0.0
        %3147 = vmatprep.subr.mxu0 0.0
        %3148 = vmatpush2.msra.mxu0 0.0
        %3149 = vmatprep.subr.mxu0 0.0
        %3150 = vmatpush2.msra.mxu0 0.0
        %3151 = vmatprep.mubr.f32.mxu0 0.0
        %3152 = vmatmul.mubr.f32.gmra.mxu0 %v520
        %v3153 = vpop.f32.mrf.mxu0
        %v3154 = vadd.f32 %v3085, %v3153
        %v3155 = vpop.f32.mrf.mxu0
        %3156 = vmatprep.mubr.f32.mxu0 0.0
        %3157 = vmatmul.mubr.f32.gmra.mxu0 %v523
        %v3158 = vpop.f32.mrf.mxu0
        %v3159 = vadd.f32 %v3085, %v3158
        %v3160 = vpop.f32.mrf.mxu0
        %3161 = vmatprep.mubr.f32.mxu0 0.0
        %3162 = vmatmul.mubr.f32.gmra.mxu0 %v526
        %v3163 = vpop.f32.mrf.mxu0
        %v3164 = vadd.f32 %v3085, %v3163
        %v3165 = vpop.f32.mrf.mxu0
        %3166 = vmatprep.mubr.f32.mxu0 0.0
        %3167 = vmatmul.mubr.f32.gmra.mxu0 %v529
        %v3168 = vpop.f32.mrf.mxu0
        %v3169 = vadd.f32 %v3085, %v3168
        %v3170 = vpop.f32.mrf.mxu0
        %3171 = vmatprep.mubr.f32.mxu0 0.0
        %3172 = vmatmul.mubr.f32.gmra.mxu0 %v532
        %v3173 = vpop.f32.mrf.mxu0
        %v3174 = vadd.f32 %v3085, %v3173
        %v3175 = vpop.f32.mrf.mxu0
        %3176 = vmatprep.mubr.f32.mxu0 0.0
        %3177 = vmatmul.mubr.f32.gmra.mxu0 %v535
        %v3178 = vpop.f32.mrf.mxu0
        %v3179 = vadd.f32 %v3085, %v3178
        %v3180 = vpop.f32.mrf.mxu0
        %3181 = vmatprep.mubr.f32.mxu0 0.0
        %3182 = vmatmul.mubr.f32.gmra.mxu0 %v538
        %v3183 = vpop.f32.mrf.mxu0
        %v3184 = vadd.f32 %v3085, %v3183
        %v3185 = vpop.f32.mrf.mxu0
        %3186 = vmatprep.mubr.f32.mxu0 0.0
        %3187 = vmatmul.mubr.f32.gmra.mxu0 %v541
        %v3188 = vpop.f32.mrf.mxu0
        %v3189 = vadd.f32 %v3085, %v3188
        %v3190 = vpop.f32.mrf.mxu0
        %3191 = vdwg.mxu0
        %v3193 = vsel %vm884, %v2918, 0
        %v3196 = vsel %vm884, %v2923, 0
        %v3199 = vsel %vm884, %v2928, 0
        %v3202 = vsel %vm884, %v2933, 0
        %v3205 = vsel %vm884, %v2938, 0
        %v3208 = vsel %vm884, %v2943, 0
        %v3211 = vsel %vm884, %v2948, 0
        %v3214 = vsel %vm884, %v2953, 0
        %v3217 = vsel %vm884, %v3036, 0
        %v3220 = vsel %vm884, %v3041, 0
        %v3223 = vsel %vm884, %v3046, 0
        %v3226 = vsel %vm884, %v3051, 0
        %v3229 = vsel %vm884, %v3056, 0
        %v3232 = vsel %vm884, %v3061, 0
        %v3235 = vsel %vm884, %v3066, 0
        %v3238 = vsel %vm884, %v3071, 0
        %3240 = vmatprep.subr.mxu0 0.0
        %3241 = vmatpush1.xpose.msra.mxu0 0.0
        %3242 = vmatprep.subr.mxu0 0.0
        %3243 = vmatpush1.xpose.msra.mxu0 0.0
        %3244 = vmatprep.subr.mxu0 0.0
        %3245 = vmatpush1.xpose.msra.mxu0 0.0
        %3246 = vmatprep.subr.mxu0 0.0
        %3247 = vmatpush1.xpose.msra.mxu0 0.0
        %3248 = vmatprep.subr.mxu0 0.0
        %3249 = vmatpush1.xpose.msra.mxu0 0.0
        %3250 = vmatprep.subr.mxu0 0.0
        %3251 = vmatpush1.xpose.msra.mxu0 0.0
        %3252 = vmatprep.subr.mxu0 0.0
        %3253 = vmatpush1.xpose.msra.mxu0 0.0
        %3254 = vmatprep.subr.mxu0 0.0
        %3255 = vmatpush1.xpose.msra.mxu0 0.0
        %3256 = vmatprep.subr.mxu0 0.0
        %3257 = vmatpush1.xpose.msra.mxu0 %v3238
        %3258 = vmatprep.subr.mxu0 0.0
        %3259 = vmatpush1.xpose.msra.mxu0 %v3235
        %3260 = vmatprep.subr.mxu0 0.0
        %3261 = vmatpush1.xpose.msra.mxu0 %v3232
        %3262 = vmatprep.subr.mxu0 0.0
        %3263 = vmatpush1.xpose.msra.mxu0 %v3229
        %3264 = vmatprep.subr.mxu0 0.0
        %3265 = vmatpush1.xpose.msra.mxu0 %v3226
        %3266 = vmatprep.subr.mxu0 0.0
        %3267 = vmatpush1.xpose.msra.mxu0 %v3223
        %3268 = vmatprep.subr.mxu0 0.0
        %3269 = vmatpush1.xpose.msra.mxu0 %v3220
        %3270 = vmatprep.subr.mxu0 0.0
        %3271 = vmatpush1.xpose.msra.mxu0 %v3217
        %3272 = vmatprep.subr.mxu0 0.0
        %3273 = vmatpush2.xpose.msra.mxu0 0.0
        %3274 = vmatprep.subr.mxu0 0.0
        %3275 = vmatpush2.xpose.msra.mxu0 0.0
        %3276 = vmatprep.subr.mxu0 0.0
        %3277 = vmatpush2.xpose.msra.mxu0 0.0
        %3278 = vmatprep.subr.mxu0 0.0
        %3279 = vmatpush2.xpose.msra.mxu0 0.0
        %3280 = vmatprep.subr.mxu0 0.0
        %3281 = vmatpush2.xpose.msra.mxu0 0.0
        %3282 = vmatprep.subr.mxu0 0.0
        %3283 = vmatpush2.xpose.msra.mxu0 0.0
        %3284 = vmatprep.subr.mxu0 0.0
        %3285 = vmatpush2.xpose.msra.mxu0 0.0
        %3286 = vmatprep.subr.mxu0 0.0
        %3287 = vmatpush2.xpose.msra.mxu0 0.0
        %3288 = vmatprep.subr.mxu0 0.0
        %3289 = vmatpush2.xpose.msra.mxu0 0.0
        %3290 = vmatprep.subr.mxu0 0.0
        %3291 = vmatpush2.xpose.msra.mxu0 0.0
        %3292 = vmatprep.subr.mxu0 0.0
        %3293 = vmatpush2.xpose.msra.mxu0 0.0
        %3294 = vmatprep.subr.mxu0 0.0
        %3295 = vmatpush2.xpose.msra.mxu0 0.0
        %3296 = vmatprep.subr.mxu0 0.0
        %3297 = vmatpush2.xpose.msra.mxu0 0.0
        %3298 = vmatprep.subr.mxu0 0.0
        %3299 = vmatpush2.xpose.msra.mxu0 0.0
        %3300 = vmatprep.subr.mxu0 0.0
        %3301 = vmatpush2.xpose.msra.mxu0 0.0
        %3302 = vmatprep.subr.mxu0 0.0
        %3303 = vmatpush2.xpose.msra.mxu0 0.0
        %3304 = vmatprep.mubr.f32.mxu0 0.0
        %3305 = vmatmul.mubr.f32.gmra.mxu0 %v3193
        %v3306 = vpop.f32.mrf.mxu0
        %v3307 = vadd.f32 0.0, %v3306
        %v3308 = vpop.f32.mrf.mxu0
        %3309 = vmatprep.mubr.f32.mxu0 0.0
        %3310 = vmatmul.mubr.f32.gmra.mxu0 %v3196
        %v3311 = vpop.f32.mrf.mxu0
        %v3312 = vadd.f32 0.0, %v3311
        %v3313 = vpop.f32.mrf.mxu0
        %3314 = vmatprep.mubr.f32.mxu0 0.0
        %3315 = vmatmul.mubr.f32.gmra.mxu0 %v3199
        %v3316 = vpop.f32.mrf.mxu0
        %v3317 = vadd.f32 0.0, %v3316
        %v3318 = vpop.f32.mrf.mxu0
        %3319 = vmatprep.mubr.f32.mxu0 0.0
        %3320 = vmatmul.mubr.f32.gmra.mxu0 %v3202
        %v3321 = vpop.f32.mrf.mxu0
        %v3322 = vadd.f32 0.0, %v3321
        %v3323 = vpop.f32.mrf.mxu0
        %3324 = vmatprep.mubr.f32.mxu0 0.0
        %3325 = vmatmul.mubr.f32.gmra.mxu0 %v3205
        %v3326 = vpop.f32.mrf.mxu0
        %v3327 = vadd.f32 0.0, %v3326
        %v3328 = vpop.f32.mrf.mxu0
        %3329 = vmatprep.mubr.f32.mxu0 0.0
        %3330 = vmatmul.mubr.f32.gmra.mxu0 %v3208
        %v3331 = vpop.f32.mrf.mxu0
        %v3332 = vadd.f32 0.0, %v3331
        %v3333 = vpop.f32.mrf.mxu0
        %3334 = vmatprep.mubr.f32.mxu0 0.0
        %3335 = vmatmul.mubr.f32.gmra.mxu0 %v3211
        %v3336 = vpop.f32.mrf.mxu0
        %v3337 = vadd.f32 0.0, %v3336
        %v3338 = vpop.f32.mrf.mxu0
        %3339 = vmatprep.mubr.f32.mxu0 0.0
        %3340 = vmatmul.mubr.f32.gmra.mxu0 %v3214
        %v3341 = vpop.f32.mrf.mxu0
        %v3342 = vadd.f32 0.0, %v3341
        %v3343 = vpop.f32.mrf.mxu0
        %3344 = vdwg.mxu0
        %v3345 = vsel %vm1038, %v3307, -inf
        %3346 = vmax.xlane.f32.xlu0 %v3345
        %v3347 = vpop.xlane.xlu0 %3346
        %v3348 = vsel %vm1038, %v3312, -inf
        %3349 = vmax.xlane.f32.xlu0 %v3348
        %v3350 = vpop.xlane.xlu0 %3349
        %v3351 = vsel %vm1038, %v3317, -inf
        %3352 = vmax.xlane.f32.xlu0 %v3351
        %v3353 = vpop.xlane.xlu0 %3352
        %v3354 = vsel %vm1038, %v3322, -inf
        %3355 = vmax.xlane.f32.xlu0 %v3354
        %v3356 = vpop.xlane.xlu0 %3355
        %v3357 = vsel %vm1038, %v3327, -inf
        %3358 = vmax.xlane.f32.xlu0 %v3357
        %v3359 = vpop.xlane.xlu0 %3358
        %v3360 = vsel %vm1038, %v3332, -inf
        %3361 = vmax.xlane.f32.xlu0 %v3360
        %v3362 = vpop.xlane.xlu0 %3361
        %v3363 = vsel %vm1038, %v3337, -inf
        %3364 = vmax.xlane.f32.xlu0 %v3363
        %v3365 = vpop.xlane.xlu0 %3364
        %v3366 = vsel %vm1038, %v3342, -inf
        %3367 = vmax.xlane.f32.xlu0 %v3366
        %v3368 = vpop.xlane.xlu0 %3367
        %v3369 = vsub.f32 %v3307, %v3347
        %v3370 = vsub.f32 %v3312, %v3350
        %v3371 = vsub.f32 %v3317, %v3353
        %v3372 = vsub.f32 %v3322, %v3356
        %v3373 = vsub.f32 %v3327, %v3359
        %v3374 = vsub.f32 %v3332, %v3362
        %v3375 = vsub.f32 %v3337, %v3365
        %v3376 = vsub.f32 %v3342, %v3368
        %v3377 = vmul.f32 %v3369, 1.442695
        %v3378 = vpow.pop %v3377
        %v3379 = vmul.f32 %v3370, 1.442695
        %v3380 = vpow.pop %v3379
        %v3381 = vmul.f32 %v3371, 1.442695
        %v3382 = vpow.pop %v3381
        %v3383 = vmul.f32 %v3372, 1.442695
        %v3384 = vpow.pop %v3383
        %v3385 = vmul.f32 %v3373, 1.442695
        %v3386 = vpow.pop %v3385
        %v3387 = vmul.f32 %v3374, 1.442695
        %v3388 = vpow.pop %v3387
        %v3389 = vmul.f32 %v3375, 1.442695
        %v3390 = vpow.pop %v3389
        %v3391 = vmul.f32 %v3376, 1.442695
        %v3392 = vpow.pop %v3391
        %v3393 = vsel %vm1038, %v3378, 0.0
        %3394 = vadd.xlane.f32.xlu0 %v3393
        %v3395 = vpop.xlane.xlu0 %3394
        %v3396 = vsel %vm1038, %v3380, 0.0
        %3397 = vadd.xlane.f32.xlu0 %v3396
        %v3398 = vpop.xlane.xlu0 %3397
        %v3399 = vsel %vm1038, %v3382, 0.0
        %3400 = vadd.xlane.f32.xlu0 %v3399
        %v3401 = vpop.xlane.xlu0 %3400
        %v3402 = vsel %vm1038, %v3384, 0.0
        %3403 = vadd.xlane.f32.xlu0 %v3402
        %v3404 = vpop.xlane.xlu0 %3403
        %v3405 = vsel %vm1038, %v3386, 0.0
        %3406 = vadd.xlane.f32.xlu0 %v3405
        %v3407 = vpop.xlane.xlu0 %3406
        %v3408 = vsel %vm1038, %v3388, 0.0
        %3409 = vadd.xlane.f32.xlu0 %v3408
        %v3410 = vpop.xlane.xlu0 %3409
        %v3411 = vsel %vm1038, %v3390, 0.0
        %3412 = vadd.xlane.f32.xlu0 %v3411
        %v3413 = vpop.xlane.xlu0 %3412
        %v3414 = vsel %vm1038, %v3392, 0.0
        %3415 = vadd.xlane.f32.xlu0 %v3414
        %v3416 = vpop.xlane.xlu0 %3415
        %v3417 = vrcp.pop %v3395
        %v3418 = vrcp.pop %v3398
        %v3419 = vrcp.pop %v3401
        %v3420 = vrcp.pop %v3404
        %v3421 = vrcp.pop %v3407
        %v3422 = vrcp.pop %v3410
        %v3423 = vrcp.pop %v3413
        %v3424 = vrcp.pop %v3416
        %v3425 = vmul.f32 %v3378, %v3417
        %v3426 = vmul.f32 %v3380, %v3418
        %v3427 = vmul.f32 %v3382, %v3419
        %v3428 = vmul.f32 %v3384, %v3420
        %v3429 = vmul.f32 %v3386, %v3421
        %v3430 = vmul.f32 %v3388, %v3422
        %v3431 = vmul.f32 %v3390, %v3423
        %v3432 = vmul.f32 %v3392, %v3424
        %v3434 = vsel %vm1038, %v3425, 0
        %v3437 = vsel %vm1038, %v3426, 0
        %v3440 = vsel %vm1038, %v3427, 0
        %v3443 = vsel %vm1038, %v3428, 0
        %v3446 = vsel %vm1038, %v3429, 0
        %v3449 = vsel %vm1038, %v3430, 0
        %v3452 = vsel %vm1038, %v3431, 0
        %v3455 = vsel %vm1038, %v3432, 0
        %3457 = vmatprep.subr.mxu0 0.0
        %3458 = vmatpush1.msra.mxu0 0.0
        %3459 = vmatprep.subr.mxu0 0.0
        %3460 = vmatpush1.msra.mxu0 0.0
        %3461 = vmatprep.subr.mxu0 0.0
        %3462 = vmatpush1.msra.mxu0 0.0
        %3463 = vmatprep.subr.mxu0 0.0
        %3464 = vmatpush1.msra.mxu0 0.0
        %3465 = vmatprep.subr.mxu0 0.0
        %3466 = vmatpush1.msra.mxu0 0.0
        %3467 = vmatprep.subr.mxu0 0.0
        %3468 = vmatpush1.msra.mxu0 0.0
        %3469 = vmatprep.subr.mxu0 0.0
        %3470 = vmatpush1.msra.mxu0 0.0
        %3471 = vmatprep.subr.mxu0 0.0
        %3472 = vmatpush1.msra.mxu0 0.0
        %3473 = vmatprep.subr.mxu0 0.0
        %3474 = vmatpush1.msra.mxu0 %v3189
        %3475 = vmatprep.subr.mxu0 0.0
        %3476 = vmatpush1.msra.mxu0 %v3184
        %3477 = vmatprep.subr.mxu0 0.0
        %3478 = vmatpush1.msra.mxu0 %v3179
        %3479 = vmatprep.subr.mxu0 0.0
        %3480 = vmatpush1.msra.mxu0 %v3174
        %3481 = vmatprep.subr.mxu0 0.0
        %3482 = vmatpush1.msra.mxu0 %v3169
        %3483 = vmatprep.subr.mxu0 0.0
        %3484 = vmatpush1.msra.mxu0 %v3164
        %3485 = vmatprep.subr.mxu0 0.0
        %3486 = vmatpush1.msra.mxu0 %v3159
        %3487 = vmatprep.subr.mxu0 0.0
        %3488 = vmatpush1.msra.mxu0 %v3154
        %3489 = vmatprep.subr.mxu0 0.0
        %3490 = vmatpush2.msra.mxu0 0.0
        %3491 = vmatprep.subr.mxu0 0.0
        %3492 = vmatpush2.msra.mxu0 0.0
        %3493 = vmatprep.subr.mxu0 0.0
        %3494 = vmatpush2.msra.mxu0 0.0
        %3495 = vmatprep.subr.mxu0 0.0
        %3496 = vmatpush2.msra.mxu0 0.0
        %3497 = vmatprep.subr.mxu0 0.0
        %3498 = vmatpush2.msra.mxu0 0.0
        %3499 = vmatprep.subr.mxu0 0.0
        %3500 = vmatpush2.msra.mxu0 0.0
        %3501 = vmatprep.subr.mxu0 0.0
        %3502 = vmatpush2.msra.mxu0 0.0
        %3503 = vmatprep.subr.mxu0 0.0
        %3504 = vmatpush2.msra.mxu0 0.0
        %3505 = vmatprep.subr.mxu0 0.0
        %3506 = vmatpush2.msra.mxu0 0.0
        %3507 = vmatprep.subr.mxu0 0.0
        %3508 = vmatpush2.msra.mxu0 0.0
        %3509 = vmatprep.subr.mxu0 0.0
        %3510 = vmatpush2.msra.mxu0 0.0
        %3511 = vmatprep.subr.mxu0 0.0
        %3512 = vmatpush2.msra.mxu0 0.0
        %3513 = vmatprep.subr.mxu0 0.0
        %3514 = vmatpush2.msra.mxu0 0.0
        %3515 = vmatprep.subr.mxu0 0.0
        %3516 = vmatpush2.msra.mxu0 0.0
        %3517 = vmatprep.subr.mxu0 0.0
        %3518 = vmatpush2.msra.mxu0 0.0
        %3519 = vmatprep.subr.mxu0 0.0
        %3520 = vmatpush2.msra.mxu0 0.0
        %3521 = vmatprep.mubr.f32.mxu0 0.0
        %3522 = vmatmul.mubr.f32.gmra.mxu0 %v3434
        %v3523 = vpop.f32.mrf.mxu0
        %v3524 = vadd.f32 0.0, %v3523
        %v3525 = vpop.f32.mrf.mxu0
        %3526 = vmatprep.mubr.f32.mxu0 0.0
        %3527 = vmatmul.mubr.f32.gmra.mxu0 %v3437
        %v3528 = vpop.f32.mrf.mxu0
        %v3529 = vadd.f32 0.0, %v3528
        %v3530 = vpop.f32.mrf.mxu0
        %3531 = vmatprep.mubr.f32.mxu0 0.0
        %3532 = vmatmul.mubr.f32.gmra.mxu0 %v3440
        %v3533 = vpop.f32.mrf.mxu0
        %v3534 = vadd.f32 0.0, %v3533
        %v3535 = vpop.f32.mrf.mxu0
        %3536 = vmatprep.mubr.f32.mxu0 0.0
        %3537 = vmatmul.mubr.f32.gmra.mxu0 %v3443
        %v3538 = vpop.f32.mrf.mxu0
        %v3539 = vadd.f32 0.0, %v3538
        %v3540 = vpop.f32.mrf.mxu0
        %3541 = vmatprep.mubr.f32.mxu0 0.0
        %3542 = vmatmul.mubr.f32.gmra.mxu0 %v3446
        %v3543 = vpop.f32.mrf.mxu0
        %v3544 = vadd.f32 0.0, %v3543
        %v3545 = vpop.f32.mrf.mxu0
        %3546 = vmatprep.mubr.f32.mxu0 0.0
        %3547 = vmatmul.mubr.f32.gmra.mxu0 %v3449
        %v3548 = vpop.f32.mrf.mxu0
        %v3549 = vadd.f32 0.0, %v3548
        %v3550 = vpop.f32.mrf.mxu0
        %3551 = vmatprep.mubr.f32.mxu0 0.0
        %3552 = vmatmul.mubr.f32.gmra.mxu0 %v3452
        %v3553 = vpop.f32.mrf.mxu0
        %v3554 = vadd.f32 0.0, %v3553
        %v3555 = vpop.f32.mrf.mxu0
        %3556 = vmatprep.mubr.f32.mxu0 0.0
        %3557 = vmatmul.mubr.f32.gmra.mxu0 %v3455
        %v3558 = vpop.f32.mrf.mxu0
        %v3559 = vadd.f32 0.0, %v3558
        %v3560 = vpop.f32.mrf.mxu0
        %3561 = vdwg.mxu0
        %s3562 = scalar_lea.vmem %s4, 24
        %v3563 = vld [vmem:[%s3562] sm:$0xff]
        %v3565 = vsel %vm884, %v3524, 0
        %v3568 = vsel %vm884, %v3529, 0
        %v3571 = vsel %vm884, %v3534, 0
        %v3574 = vsel %vm884, %v3539, 0
        %v3577 = vsel %vm884, %v3544, 0
        %v3580 = vsel %vm884, %v3549, 0
        %v3583 = vsel %vm884, %v3554, 0
        %v3586 = vsel %vm884, %v3559, 0
        %3588 = vmatprep.subr.mxu0 0.0
        %3589 = vmatpush1.msra.mxu0 0.0
        %3590 = vmatprep.subr.mxu0 0.0
        %3591 = vmatpush1.msra.mxu0 0.0
        %3592 = vmatprep.subr.mxu0 0.0
        %3593 = vmatpush1.msra.mxu0 0.0
        %3594 = vmatprep.subr.mxu0 0.0
        %3595 = vmatpush1.msra.mxu0 0.0
        %3596 = vmatprep.subr.mxu0 0.0
        %3597 = vmatpush1.msra.mxu0 0.0
        %3598 = vmatprep.subr.mxu0 0.0
        %3599 = vmatpush1.msra.mxu0 0.0
        %3600 = vmatprep.subr.mxu0 0.0
        %3601 = vmatpush1.msra.mxu0 0.0
        %3602 = vmatprep.subr.mxu0 0.0
        %3603 = vmatpush1.msra.mxu0 0.0
        %3604 = vmatprep.subr.mxu0 0.0
        %3605 = vmatpush1.msra.mxu0 0.0
        %3606 = vmatprep.subr.mxu0 0.0
        %3607 = vmatpush1.msra.mxu0 0.0
        %3608 = vmatprep.subr.mxu0 0.0
        %3609 = vmatpush1.msra.mxu0 0.0
        %3610 = vmatprep.subr.mxu0 0.0
        %3611 = vmatpush1.msra.mxu0 0.0
        %3612 = vmatprep.subr.mxu0 0.0
        %3613 = vmatpush1.msra.mxu0 0.0
        %3614 = vmatprep.subr.mxu0 0.0
        %3615 = vmatpush1.msra.mxu0 0.0
        %3616 = vmatprep.subr.mxu0 0.0
        %3617 = vmatpush1.msra.mxu0 0.0
        %3618 = vmatprep.subr.mxu0 0.0
        %3619 = vmatpush1.msra.mxu0 %v3563
        %3620 = vmatprep.subr.mxu0 0.0
        %3621 = vmatpush2.msra.mxu0 0.0
        %3622 = vmatprep.subr.mxu0 0.0
        %3623 = vmatpush2.msra.mxu0 0.0
        %3624 = vmatprep.subr.mxu0 0.0
        %3625 = vmatpush2.msra.mxu0 0.0
        %3626 = vmatprep.subr.mxu0 0.0
        %3627 = vmatpush2.msra.mxu0 0.0
        %3628 = vmatprep.subr.mxu0 0.0
        %3629 = vmatpush2.msra.mxu0 0.0
        %3630 = vmatprep.subr.mxu0 0.0
        %3631 = vmatpush2.msra.mxu0 0.0
        %3632 = vmatprep.subr.mxu0 0.0
        %3633 = vmatpush2.msra.mxu0 0.0
        %3634 = vmatprep.subr.mxu0 0.0
        %3635 = vmatpush2.msra.mxu0 0.0
        %3636 = vmatprep.subr.mxu0 0.0
        %3637 = vmatpush2.msra.mxu0 0.0
        %3638 = vmatprep.subr.mxu0 0.0
        %3639 = vmatpush2.msra.mxu0 0.0
        %3640 = vmatprep.subr.mxu0 0.0
        %3641 = vmatpush2.msra.mxu0 0.0
        %3642 = vmatprep.subr.mxu0 0.0
        %3643 = vmatpush2.msra.mxu0 0.0
        %3644 = vmatprep.subr.mxu0 0.0
        %3645 = vmatpush2.msra.mxu0 0.0
        %3646 = vmatprep.subr.mxu0 0.0
        %3647 = vmatpush2.msra.mxu0 0.0
        %3648 = vmatprep.subr.mxu0 0.0
        %3649 = vmatpush2.msra.mxu0 0.0
        %3650 = vmatprep.subr.mxu0 0.0
        %3651 = vmatpush2.msra.mxu0 0.0
        %3652 = vmatprep.mubr.f32.mxu0 0.0
        %3653 = vmatmul.mubr.f32.gmra.mxu0 %v3565
        %v3654 = vpop.f32.mrf.mxu0
        %v3655 = vadd.f32 0.0, %v3654
        %v3656 = vpop.f32.mrf.mxu0
        %3657 = vmatprep.mubr.f32.mxu0 0.0
        %3658 = vmatmul.mubr.f32.gmra.mxu0 %v3568
        %v3659 = vpop.f32.mrf.mxu0
        %v3660 = vadd.f32 0.0, %v3659
        %v3661 = vpop.f32.mrf.mxu0
        %3662 = vmatprep.mubr.f32.mxu0 0.0
        %3663 = vmatmul.mubr.f32.gmra.mxu0 %v3571
        %v3664 = vpop.f32.mrf.mxu0
        %v3665 = vadd.f32 0.0, %v3664
        %v3666 = vpop.f32.mrf.mxu0
        %3667 = vmatprep.mubr.f32.mxu0 0.0
        %3668 = vmatmul.mubr.f32.gmra.mxu0 %v3574
        %v3669 = vpop.f32.mrf.mxu0
        %v3670 = vadd.f32 0.0, %v3669
        %v3671 = vpop.f32.mrf.mxu0
        %3672 = vmatprep.mubr.f32.mxu0 0.0
        %3673 = vmatmul.mubr.f32.gmra.mxu0 %v3577
        %v3674 = vpop.f32.mrf.mxu0
        %v3675 = vadd.f32 0.0, %v3674
        %v3676 = vpop.f32.mrf.mxu0
        %3677 = vmatprep.mubr.f32.mxu0 0.0
        %3678 = vmatmul.mubr.f32.gmra.mxu0 %v3580
        %v3679 = vpop.f32.mrf.mxu0
        %v3680 = vadd.f32 0.0, %v3679
        %v3681 = vpop.f32.mrf.mxu0
        %3682 = vmatprep.mubr.f32.mxu0 0.0
        %3683 = vmatmul.mubr.f32.gmra.mxu0 %v3583
        %v3684 = vpop.f32.mrf.mxu0
        %v3685 = vadd.f32 0.0, %v3684
        %v3686 = vpop.f32.mrf.mxu0
        %3687 = vmatprep.mubr.f32.mxu0 0.0
        %3688 = vmatmul.mubr.f32.gmra.mxu0 %v3586
        %v3689 = vpop.f32.mrf.mxu0
        %v3690 = vadd.f32 0.0, %v3689
        %v3691 = vpop.f32.mrf.mxu0
        %3692 = vdwg.mxu0
        %v3694 = vsel %vm884, %v1218, 0
        %v3697 = vsel %vm884, %v1223, 0
        %v3700 = vsel %vm884, %v1228, 0
        %v3703 = vsel %vm884, %v1233, 0
        %v3706 = vsel %vm884, %v1238, 0
        %v3709 = vsel %vm884, %v1243, 0
        %v3712 = vsel %vm884, %v1248, 0
        %v3715 = vsel %vm884, %v1253, 0
        %3717 = vmatprep.subr.mxu0 0.0
        %3718 = vmatpush1.msra.mxu0 0.0
        %3719 = vmatprep.subr.mxu0 0.0
        %3720 = vmatpush1.msra.mxu0 0.0
        %3721 = vmatprep.subr.mxu0 0.0
        %3722 = vmatpush1.msra.mxu0 0.0
        %3723 = vmatprep.subr.mxu0 0.0
        %3724 = vmatpush1.msra.mxu0 0.0
        %3725 = vmatprep.subr.mxu0 0.0
        %3726 = vmatpush1.msra.mxu0 0.0
        %3727 = vmatprep.subr.mxu0 0.0
        %3728 = vmatpush1.msra.mxu0 0.0
        %3729 = vmatprep.subr.mxu0 0.0
        %3730 = vmatpush1.msra.mxu0 0.0
        %3731 = vmatprep.subr.mxu0 0.0
        %3732 = vmatpush1.msra.mxu0 0.0
        %3733 = vmatprep.subr.mxu0 0.0
        %3734 = vmatpush1.msra.mxu0 0.0
        %3735 = vmatprep.subr.mxu0 0.0
        %3736 = vmatpush1.msra.mxu0 0.0
        %3737 = vmatprep.subr.mxu0 0.0
        %3738 = vmatpush1.msra.mxu0 0.0
        %3739 = vmatprep.subr.mxu0 0.0
        %3740 = vmatpush1.msra.mxu0 0.0
        %3741 = vmatprep.subr.mxu0 0.0
        %3742 = vmatpush1.msra.mxu0 0.0
        %3743 = vmatprep.subr.mxu0 0.0
        %3744 = vmatpush1.msra.mxu0 0.0
        %3745 = vmatprep.subr.mxu0 0.0
        %3746 = vmatpush1.msra.mxu0 0.0
        %3747 = vmatprep.subr.mxu0 0.0
        %3748 = vmatpush1.msra.mxu0 %v1256
        %3749 = vmatprep.subr.mxu0 0.0
        %3750 = vmatpush2.msra.mxu0 0.0
        %3751 = vmatprep.subr.mxu0 0.0
        %3752 = vmatpush2.msra.mxu0 0.0
        %3753 = vmatprep.subr.mxu0 0.0
        %3754 = vmatpush2.msra.mxu0 0.0
        %3755 = vmatprep.subr.mxu0 0.0
        %3756 = vmatpush2.msra.mxu0 0.0
        %3757 = vmatprep.subr.mxu0 0.0
        %3758 = vmatpush2.msra.mxu0 0.0
        %3759 = vmatprep.subr.mxu0 0.0
        %3760 = vmatpush2.msra.mxu0 0.0
        %3761 = vmatprep.subr.mxu0 0.0
        %3762 = vmatpush2.msra.mxu0 0.0
        %3763 = vmatprep.subr.mxu0 0.0
        %3764 = vmatpush2.msra.mxu0 0.0
        %3765 = vmatprep.subr.mxu0 0.0
        %3766 = vmatpush2.msra.mxu0 0.0
        %3767 = vmatprep.subr.mxu0 0.0
        %3768 = vmatpush2.msra.mxu0 0.0
        %3769 = vmatprep.subr.mxu0 0.0
        %3770 = vmatpush2.msra.mxu0 0.0
        %3771 = vmatprep.subr.mxu0 0.0
        %3772 = vmatpush2.msra.mxu0 0.0
        %3773 = vmatprep.subr.mxu0 0.0
        %3774 = vmatpush2.msra.mxu0 0.0
        %3775 = vmatprep.subr.mxu0 0.0
        %3776 = vmatpush2.msra.mxu0 0.0
        %3777 = vmatprep.subr.mxu0 0.0
        %3778 = vmatpush2.msra.mxu0 0.0
        %3779 = vmatprep.subr.mxu0 0.0
        %3780 = vmatpush2.msra.mxu0 0.0
        %3781 = vmatprep.mubr.f32.mxu0 0.0
        %3782 = vmatmul.mubr.f32.gmra.mxu0 %v3694
        %v3783 = vpop.f32.mrf.mxu0
        %v3784 = vadd.f32 %v2074, %v3783
        %v3785 = vpop.f32.mrf.mxu0
        %3786 = vmatprep.mubr.f32.mxu0 0.0
        %3787 = vmatmul.mubr.f32.gmra.mxu0 %v3697
        %v3788 = vpop.f32.mrf.mxu0
        %v3789 = vadd.f32 %v2079, %v3788
        %v3790 = vpop.f32.mrf.mxu0
        %3791 = vmatprep.mubr.f32.mxu0 0.0
        %3792 = vmatmul.mubr.f32.gmra.mxu0 %v3700
        %v3793 = vpop.f32.mrf.mxu0
        %v3794 = vadd.f32 %v2084, %v3793
        %v3795 = vpop.f32.mrf.mxu0
        %3796 = vmatprep.mubr.f32.mxu0 0.0
        %3797 = vmatmul.mubr.f32.gmra.mxu0 %v3703
        %v3798 = vpop.f32.mrf.mxu0
        %v3799 = vadd.f32 %v2089, %v3798
        %v3800 = vpop.f32.mrf.mxu0
        %3801 = vmatprep.mubr.f32.mxu0 0.0
        %3802 = vmatmul.mubr.f32.gmra.mxu0 %v3706
        %v3803 = vpop.f32.mrf.mxu0
        %v3804 = vadd.f32 %v2094, %v3803
        %v3805 = vpop.f32.mrf.mxu0
        %3806 = vmatprep.mubr.f32.mxu0 0.0
        %3807 = vmatmul.mubr.f32.gmra.mxu0 %v3709
        %v3808 = vpop.f32.mrf.mxu0
        %v3809 = vadd.f32 %v2099, %v3808
        %v3810 = vpop.f32.mrf.mxu0
        %3811 = vmatprep.mubr.f32.mxu0 0.0
        %3812 = vmatmul.mubr.f32.gmra.mxu0 %v3712
        %v3813 = vpop.f32.mrf.mxu0
        %v3814 = vadd.f32 %v2104, %v3813
        %v3815 = vpop.f32.mrf.mxu0
        %3816 = vmatprep.mubr.f32.mxu0 0.0
        %3817 = vmatmul.mubr.f32.gmra.mxu0 %v3715
        %v3818 = vpop.f32.mrf.mxu0
        %v3819 = vadd.f32 %v2109, %v3818
        %v3820 = vpop.f32.mrf.mxu0
        %3821 = vdwg.mxu0
        %v3823 = vsel %vm884, %v2798, 0
        %v3826 = vsel %vm884, %v2803, 0
        %v3829 = vsel %vm884, %v2808, 0
        %v3832 = vsel %vm884, %v2813, 0
        %v3835 = vsel %vm884, %v2818, 0
        %v3838 = vsel %vm884, %v2823, 0
        %v3841 = vsel %vm884, %v2828, 0
        %v3844 = vsel %vm884, %v2833, 0
        %3846 = vmatprep.subr.mxu0 0.0
        %3847 = vmatpush1.msra.mxu0 0.0
        %3848 = vmatprep.subr.mxu0 0.0
        %3849 = vmatpush1.msra.mxu0 0.0
        %3850 = vmatprep.subr.mxu0 0.0
        %3851 = vmatpush1.msra.mxu0 0.0
        %3852 = vmatprep.subr.mxu0 0.0
        %3853 = vmatpush1.msra.mxu0 0.0
        %3854 = vmatprep.subr.mxu0 0.0
        %3855 = vmatpush1.msra.mxu0 0.0
        %3856 = vmatprep.subr.mxu0 0.0
        %3857 = vmatpush1.msra.mxu0 0.0
        %3858 = vmatprep.subr.mxu0 0.0
        %3859 = vmatpush1.msra.mxu0 0.0
        %3860 = vmatprep.subr.mxu0 0.0
        %3861 = vmatpush1.msra.mxu0 0.0
        %3862 = vmatprep.subr.mxu0 0.0
        %3863 = vmatpush1.msra.mxu0 0.0
        %3864 = vmatprep.subr.mxu0 0.0
        %3865 = vmatpush1.msra.mxu0 0.0
        %3866 = vmatprep.subr.mxu0 0.0
        %3867 = vmatpush1.msra.mxu0 0.0
        %3868 = vmatprep.subr.mxu0 0.0
        %3869 = vmatpush1.msra.mxu0 0.0
        %3870 = vmatprep.subr.mxu0 0.0
        %3871 = vmatpush1.msra.mxu0 0.0
        %3872 = vmatprep.subr.mxu0 0.0
        %3873 = vmatpush1.msra.mxu0 0.0
        %3874 = vmatprep.subr.mxu0 0.0
        %3875 = vmatpush1.msra.mxu0 0.0
        %3876 = vmatprep.subr.mxu0 0.0
        %3877 = vmatpush1.msra.mxu0 %v2837
        %3878 = vmatprep.subr.mxu0 0.0
        %3879 = vmatpush2.msra.mxu0 0.0
        %3880 = vmatprep.subr.mxu0 0.0
        %3881 = vmatpush2.msra.mxu0 0.0
        %3882 = vmatprep.subr.mxu0 0.0
        %3883 = vmatpush2.msra.mxu0 0.0
        %3884 = vmatprep.subr.mxu0 0.0
        %3885 = vmatpush2.msra.mxu0 0.0
        %3886 = vmatprep.subr.mxu0 0.0
        %3887 = vmatpush2.msra.mxu0 0.0
        %3888 = vmatprep.subr.mxu0 0.0
        %3889 = vmatpush2.msra.mxu0 0.0
        %3890 = vmatprep.subr.mxu0 0.0
        %3891 = vmatpush2.msra.mxu0 0.0
        %3892 = vmatprep.subr.mxu0 0.0
        %3893 = vmatpush2.msra.mxu0 0.0
        %3894 = vmatprep.subr.mxu0 0.0
        %3895 = vmatpush2.msra.mxu0 0.0
        %3896 = vmatprep.subr.mxu0 0.0
        %3897 = vmatpush2.msra.mxu0 0.0
        %3898 = vmatprep.subr.mxu0 0.0
        %3899 = vmatpush2.msra.mxu0 0.0
        %3900 = vmatprep.subr.mxu0 0.0
        %3901 = vmatpush2.msra.mxu0 0.0
        %3902 = vmatprep.subr.mxu0 0.0
        %3903 = vmatpush2.msra.mxu0 0.0
        %3904 = vmatprep.subr.mxu0 0.0
        %3905 = vmatpush2.msra.mxu0 0.0
        %3906 = vmatprep.subr.mxu0 0.0
        %3907 = vmatpush2.msra.mxu0 0.0
        %3908 = vmatprep.subr.mxu0 0.0
        %3909 = vmatpush2.msra.mxu0 0.0
        %3910 = vmatprep.mubr.f32.mxu0 0.0
        %3911 = vmatmul.mubr.f32.gmra.mxu0 %v3823
        %v3912 = vpop.f32.mrf.mxu0
        %v3913 = vadd.f32 %v3655, %v3912
        %v3914 = vpop.f32.mrf.mxu0
        %3915 = vmatprep.mubr.f32.mxu0 0.0
        %3916 = vmatmul.mubr.f32.gmra.mxu0 %v3826
        %v3917 = vpop.f32.mrf.mxu0
        %v3918 = vadd.f32 %v3660, %v3917
        %v3919 = vpop.f32.mrf.mxu0
        %3920 = vmatprep.mubr.f32.mxu0 0.0
        %3921 = vmatmul.mubr.f32.gmra.mxu0 %v3829
        %v3922 = vpop.f32.mrf.mxu0
        %v3923 = vadd.f32 %v3665, %v3922
        %v3924 = vpop.f32.mrf.mxu0
        %3925 = vmatprep.mubr.f32.mxu0 0.0
        %3926 = vmatmul.mubr.f32.gmra.mxu0 %v3832
        %v3927 = vpop.f32.mrf.mxu0
        %v3928 = vadd.f32 %v3670, %v3927
        %v3929 = vpop.f32.mrf.mxu0
        %3930 = vmatprep.mubr.f32.mxu0 0.0
        %3931 = vmatmul.mubr.f32.gmra.mxu0 %v3835
        %v3932 = vpop.f32.mrf.mxu0
        %v3933 = vadd.f32 %v3675, %v3932
        %v3934 = vpop.f32.mrf.mxu0
        %3935 = vmatprep.mubr.f32.mxu0 0.0
        %3936 = vmatmul.mubr.f32.gmra.mxu0 %v3838
        %v3937 = vpop.f32.mrf.mxu0
        %v3938 = vadd.f32 %v3680, %v3937
        %v3939 = vpop.f32.mrf.mxu0
        %3940 = vmatprep.mubr.f32.mxu0 0.0
        %3941 = vmatmul.mubr.f32.gmra.mxu0 %v3841
        %v3942 = vpop.f32.mrf.mxu0
        %v3943 = vadd.f32 %v3685, %v3942
        %v3944 = vpop.f32.mrf.mxu0
        %3945 = vmatprep.mubr.f32.mxu0 0.0
        %3946 = vmatmul.mubr.f32.gmra.mxu0 %v3844
        %v3947 = vpop.f32.mrf.mxu0
        %v3948 = vadd.f32 %v3690, %v3947
        %v3949 = vpop.f32.mrf.mxu0
        %3950 = vdwg.mxu0
        %v3951 = vadd.f32 %v3784, %v3913
        %v3952 = vadd.f32 %v3789, %v3918
        %v3953 = vadd.f32 %v3794, %v3923
        %v3954 = vadd.f32 %v3799, %v3928
        %v3955 = vadd.f32 %v3804, %v3933
        %v3956 = vadd.f32 %v3809, %v3938
        %v3957 = vadd.f32 %v3814, %v3943
        %v3958 = vadd.f32 %v3819, %v3948
        %v3959 = vld [vmem:[%s5] sm:$0x7]
        %v3960 = vadd.f32 %v491, %v3951
        %v3961 = vadd.f32 %v492, %v3952
        %v3962 = vadd.f32 %v493, %v3953
        %v3963 = vadd.f32 %v494, %v3954
        %v3964 = vadd.f32 %v495, %v3955
        %v3965 = vadd.f32 %v496, %v3956
        %v3966 = vadd.f32 %v497, %v3957
        %v3967 = vadd.f32 %v498, %v3958
        %v3968 = vlaneseq
        %v3969 = vshrl.u32 %v3968, 7
        %v3970 = vsub.s32 0, %v3969
        %v3971 = vrot.slane %v3959, %v3970
        %v3972 = vadd.f32 %v3960, %v3971
        %v3973 = vadd.f32 %v3961, %v3971
        %v3974 = vadd.f32 %v3962, %v3971
        %v3975 = vadd.f32 %v3963, %v3971
        %v3976 = vadd.f32 %v3964, %v3971
        %v3977 = vadd.f32 %v3965, %v3971
        %v3978 = vadd.f32 %v3966, %v3971
        %v3979 = vadd.f32 %v3967, %v3971
        %v3980 = vsel %vm518, %v3972, 0.0
        %3981 = vadd.xlane.f32.xlu0 %v3980
        %v3982 = vpop.xlane.xlu0 %3981
        %v3983 = vsel %vm518, %v3973, 0.0
        %3984 = vadd.xlane.f32.xlu0 %v3983
        %v3985 = vpop.xlane.xlu0 %3984
        %v3986 = vsel %vm518, %v3974, 0.0
        %3987 = vadd.xlane.f32.xlu0 %v3986
        %v3988 = vpop.xlane.xlu0 %3987
        %v3989 = vsel %vm518, %v3975, 0.0
        %3990 = vadd.xlane.f32.xlu0 %v3989
        %v3991 = vpop.xlane.xlu0 %3990
        %v3992 = vsel %vm518, %v3976, 0.0
        %3993 = vadd.xlane.f32.xlu0 %v3992
        %v3994 = vpop.xlane.xlu0 %3993
        %v3995 = vsel %vm518, %v3977, 0.0
        %3996 = vadd.xlane.f32.xlu0 %v3995
        %v3997 = vpop.xlane.xlu0 %3996
        %v3998 = vsel %vm518, %v3978, 0.0
        %3999 = vadd.xlane.f32.xlu0 %v3998
        %v4000 = vpop.xlane.xlu0 %3999
        %v4001 = vsel %vm518, %v3979, 0.0
        %4002 = vadd.xlane.f32.xlu0 %v4001
        %v4003 = vpop.xlane.xlu0 %4002
        %v4004 = vrcp.pop 32.0
        %v4005 = vmul.f32 %v3982, %v4004
        %v4006 = vmul.f32 %v3985, %v4004
        %v4007 = vmul.f32 %v3988, %v4004
        %v4008 = vmul.f32 %v3991, %v4004
        %v4009 = vmul.f32 %v3994, %v4004
        %v4010 = vmul.f32 %v3997, %v4004
        %v4011 = vmul.f32 %v4000, %v4004
        %v4012 = vmul.f32 %v4003, %v4004
        %v4013 = vsub.f32 %v3972, %v4005
        %v4014 = vsub.f32 %v3973, %v4006
        %v4015 = vsub.f32 %v3974, %v4007
        %v4016 = vsub.f32 %v3975, %v4008
        %v4017 = vsub.f32 %v3976, %v4009
        %v4018 = vsub.f32 %v3977, %v4010
        %v4019 = vsub.f32 %v3978, %v4011
        %v4020 = vsub.f32 %v3979, %v4012
        %v4021 = vmul.f32 %v4013, %v4013
        %v4022 = vmul.f32 %v4014, %v4014
        %v4023 = vmul.f32 %v4015, %v4015
        %v4024 = vmul.f32 %v4016, %v4016
        %v4025 = vmul.f32 %v4017, %v4017
        %v4026 = vmul.f32 %v4018, %v4018
        %v4027 = vmul.f32 %v4019, %v4019
        %v4028 = vmul.f32 %v4020, %v4020
        %v4029 = vsel %vm518, %v4021, 0.0
        %4030 = vadd.xlane.f32.xlu0 %v4029
        %v4031 = vpop.xlane.xlu0 %4030
        %v4032 = vsel %vm518, %v4022, 0.0
        %4033 = vadd.xlane.f32.xlu0 %v4032
        %v4034 = vpop.xlane.xlu0 %4033
        %v4035 = vsel %vm518, %v4023, 0.0
        %4036 = vadd.xlane.f32.xlu0 %v4035
        %v4037 = vpop.xlane.xlu0 %4036
        %v4038 = vsel %vm518, %v4024, 0.0
        %4039 = vadd.xlane.f32.xlu0 %v4038
        %v4040 = vpop.xlane.xlu0 %4039
        %v4041 = vsel %vm518, %v4025, 0.0
        %4042 = vadd.xlane.f32.xlu0 %v4041
        %v4043 = vpop.xlane.xlu0 %4042
        %v4044 = vsel %vm518, %v4026, 0.0
        %4045 = vadd.xlane.f32.xlu0 %v4044
        %v4046 = vpop.xlane.xlu0 %4045
        %v4047 = vsel %vm518, %v4027, 0.0
        %4048 = vadd.xlane.f32.xlu0 %v4047
        %v4049 = vpop.xlane.xlu0 %4048
        %v4050 = vsel %vm518, %v4028, 0.0
        %4051 = vadd.xlane.f32.xlu0 %v4050
        %v4052 = vpop.xlane.xlu0 %4051
        %v4053 = vmul.f32 %v4031, %v4004
        %v4054 = vmul.f32 %v4034, %v4004
        %v4055 = vmul.f32 %v4037, %v4004
        %v4056 = vmul.f32 %v4040, %v4004
        %v4057 = vmul.f32 %v4043, %v4004
        %v4058 = vmul.f32 %v4046, %v4004
        %v4059 = vmul.f32 %v4049, %v4004
        %v4060 = vmul.f32 %v4052, %v4004
        %v4061 = vadd.f32 %v4053, 1e-05
        %v4062 = vadd.f32 %v4054, 1e-05
        %v4063 = vadd.f32 %v4055, 1e-05
        %v4064 = vadd.f32 %v4056, 1e-05
        %v4065 = vadd.f32 %v4057, 1e-05
        %v4066 = vadd.f32 %v4058, 1e-05
        %v4067 = vadd.f32 %v4059, 1e-05
        %v4068 = vadd.f32 %v4060, 1e-05
        %v4069 = vrsqrt.pop %v4061
        %v4070 = vrsqrt.pop %v4062
        %v4071 = vrsqrt.pop %v4063
        %v4072 = vrsqrt.pop %v4064
        %v4073 = vrsqrt.pop %v4065
        %v4074 = vrsqrt.pop %v4066
        %v4075 = vrsqrt.pop %v4067
        %v4076 = vrsqrt.pop %v4068
        %v4077 = vmul.f32 %v4013, %v4069
        %v4078 = vmul.f32 %v4014, %v4070
        %v4079 = vmul.f32 %v4015, %v4071
        %v4080 = vmul.f32 %v4016, %v4072
        %v4081 = vmul.f32 %v4017, %v4073
        %v4082 = vmul.f32 %v4018, %v4074
        %v4083 = vmul.f32 %v4019, %v4075
        %v4084 = vmul.f32 %v4020, %v4076
        %v4085 = vlaneseq
        %v4086 = vshrl.u32 %v4085, 7
        %v4087 = vsub.s32 1, %v4086
        %v4088 = vrot.slane %v3959, %v4087
        %v4089 = vmul.f32 %v4077, %v4088
        %v4090 = vmul.f32 %v4078, %v4088
        %v4091 = vmul.f32 %v4079, %v4088
        %v4092 = vmul.f32 %v4080, %v4088
        %v4093 = vmul.f32 %v4081, %v4088
        %v4094 = vmul.f32 %v4082, %v4088
        %v4095 = vmul.f32 %v4083, %v4088
        %v4096 = vmul.f32 %v4084, %v4088
        %v4097 = vlaneseq
        %v4098 = vshrl.u32 %v4097, 7
        %v4099 = vsub.s32 2, %v4098
        %v4100 = vrot.slane %v3959, %v4099
        %v4101 = vadd.f32 %v4089, %v4100
        %v4102 = vadd.f32 %v4090, %v4100
        %v4103 = vadd.f32 %v4091, %v4100
        %v4104 = vadd.f32 %v4092, %v4100
        %v4105 = vadd.f32 %v4093, %v4100
        %v4106 = vadd.f32 %v4094, %v4100
        %v4107 = vadd.f32 %v4095, %v4100
        %v4108 = vadd.f32 %v4096, %v4100
        %v4109 = vld [vmem:[%s6] sm:$0xff]
        %v4110 = vld [vmem:[%s6 + $0x8] sm:$0xff]
        %v4111 = vld [vmem:[%s6 + $0x10] sm:$0xff]
        %v4112 = vld [vmem:[%s6 + $0x18] sm:$0xff]
        %v4113 = vld [vmem:[%s7] sm:$0x1]
        %v4115 = vlaneseq
        %v4116 = vshrl.u32 %v4115, 7
        %v4117 = vsub.s32 0, %v4116
        %v4118 = vrot.slane %v4113, %v4117
        %v4121 = vsel %vm518, %v4101, 0
        %v4124 = vsel %vm518, %v4102, 0
        %v4127 = vsel %vm518, %v4103, 0
        %v4130 = vsel %vm518, %v4104, 0
        %v4133 = vsel %vm518, %v4105, 0
        %v4136 = vsel %vm518, %v4106, 0
        %v4139 = vsel %vm518, %v4107, 0
        %v4142 = vsel %vm518, %v4108, 0
        %4144 = vmatprep.subr.mxu0 0.0
        %4145 = vmatpush1.msra.mxu0 0.0
        %4146 = vmatprep.subr.mxu0 0.0
        %4147 = vmatpush1.msra.mxu0 0.0
        %4148 = vmatprep.subr.mxu0 0.0
        %4149 = vmatpush1.msra.mxu0 0.0
        %4150 = vmatprep.subr.mxu0 0.0
        %4151 = vmatpush1.msra.mxu0 0.0
        %4152 = vmatprep.subr.mxu0 0.0
        %4153 = vmatpush1.msra.mxu0 0.0
        %4154 = vmatprep.subr.mxu0 0.0
        %4155 = vmatpush1.msra.mxu0 0.0
        %4156 = vmatprep.subr.mxu0 0.0
        %4157 = vmatpush1.msra.mxu0 0.0
        %4158 = vmatprep.subr.mxu0 0.0
        %4159 = vmatpush1.msra.mxu0 0.0
        %4160 = vmatprep.subr.mxu0 0.0
        %4161 = vmatpush1.msra.mxu0 0.0
        %4162 = vmatprep.subr.mxu0 0.0
        %4163 = vmatpush1.msra.mxu0 0.0
        %4164 = vmatprep.subr.mxu0 0.0
        %4165 = vmatpush1.msra.mxu0 0.0
        %4166 = vmatprep.subr.mxu0 0.0
        %4167 = vmatpush1.msra.mxu0 0.0
        %4168 = vmatprep.subr.mxu0 0.0
        %4169 = vmatpush1.msra.mxu0 %v4112
        %4170 = vmatprep.subr.mxu0 0.0
        %4171 = vmatpush1.msra.mxu0 %v4111
        %4172 = vmatprep.subr.mxu0 0.0
        %4173 = vmatpush1.msra.mxu0 %v4110
        %4174 = vmatprep.subr.mxu0 0.0
        %4175 = vmatpush1.msra.mxu0 %v4109
        %4176 = vmatprep.subr.mxu0 0.0
        %4177 = vmatpush2.msra.mxu0 0.0
        %4178 = vmatprep.subr.mxu0 0.0
        %4179 = vmatpush2.msra.mxu0 0.0
        %4180 = vmatprep.subr.mxu0 0.0
        %4181 = vmatpush2.msra.mxu0 0.0
        %4182 = vmatprep.subr.mxu0 0.0
        %4183 = vmatpush2.msra.mxu0 0.0
        %4184 = vmatprep.subr.mxu0 0.0
        %4185 = vmatpush2.msra.mxu0 0.0
        %4186 = vmatprep.subr.mxu0 0.0
        %4187 = vmatpush2.msra.mxu0 0.0
        %4188 = vmatprep.subr.mxu0 0.0
        %4189 = vmatpush2.msra.mxu0 0.0
        %4190 = vmatprep.subr.mxu0 0.0
        %4191 = vmatpush2.msra.mxu0 0.0
        %4192 = vmatprep.subr.mxu0 0.0
        %4193 = vmatpush2.msra.mxu0 0.0
        %4194 = vmatprep.subr.mxu0 0.0
        %4195 = vmatpush2.msra.mxu0 0.0
        %4196 = vmatprep.subr.mxu0 0.0
        %4197 = vmatpush2.msra.mxu0 0.0
        %4198 = vmatprep.subr.mxu0 0.0
        %4199 = vmatpush2.msra.mxu0 0.0
        %4200 = vmatprep.subr.mxu0 0.0
        %4201 = vmatpush2.msra.mxu0 0.0
        %4202 = vmatprep.subr.mxu0 0.0
        %4203 = vmatpush2.msra.mxu0 0.0
        %4204 = vmatprep.subr.mxu0 0.0
        %4205 = vmatpush2.msra.mxu0 0.0
        %4206 = vmatprep.subr.mxu0 0.0
        %4207 = vmatpush2.msra.mxu0 0.0
        %4208 = vmatprep.mubr.f32.mxu0 0.0
        %4209 = vmatmul.mubr.f32.gmra.mxu0 %v4121
        %v4210 = vpop.f32.mrf.mxu0
        %v4211 = vadd.f32 %v4118, %v4210
        %v4212 = vpop.f32.mrf.mxu0
        %4213 = vmatprep.mubr.f32.mxu0 0.0
        %4214 = vmatmul.mubr.f32.gmra.mxu0 %v4124
        %v4215 = vpop.f32.mrf.mxu0
        %v4216 = vadd.f32 %v4118, %v4215
        %v4217 = vpop.f32.mrf.mxu0
        %4218 = vmatprep.mubr.f32.mxu0 0.0
        %4219 = vmatmul.mubr.f32.gmra.mxu0 %v4127
        %v4220 = vpop.f32.mrf.mxu0
        %v4221 = vadd.f32 %v4118, %v4220
        %v4222 = vpop.f32.mrf.mxu0
        %4223 = vmatprep.mubr.f32.mxu0 0.0
        %4224 = vmatmul.mubr.f32.gmra.mxu0 %v4130
        %v4225 = vpop.f32.mrf.mxu0
        %v4226 = vadd.f32 %v4118, %v4225
        %v4227 = vpop.f32.mrf.mxu0
        %4228 = vmatprep.mubr.f32.mxu0 0.0
        %4229 = vmatmul.mubr.f32.gmra.mxu0 %v4133
        %v4230 = vpop.f32.mrf.mxu0
        %v4231 = vadd.f32 %v4118, %v4230
        %v4232 = vpop.f32.mrf.mxu0
        %4233 = vmatprep.mubr.f32.mxu0 0.0
        %4234 = vmatmul.mubr.f32.gmra.mxu0 %v4136
        %v4235 = vpop.f32.mrf.mxu0
        %v4236 = vadd.f32 %v4118, %v4235
        %v4237 = vpop.f32.mrf.mxu0
        %4238 = vmatprep.mubr.f32.mxu0 0.0
        %4239 = vmatmul.mubr.f32.gmra.mxu0 %v4139
        %v4240 = vpop.f32.mrf.mxu0
        %v4241 = vadd.f32 %v4118, %v4240
        %v4242 = vpop.f32.mrf.mxu0
        %4243 = vmatprep.mubr.f32.mxu0 0.0
        %4244 = vmatmul.mubr.f32.gmra.mxu0 %v4142
        %v4245 = vpop.f32.mrf.mxu0
        %v4246 = vadd.f32 %v4118, %v4245
        %v4247 = vpop.f32.mrf.mxu0
        %4248 = vdwg.mxu0
        %s4249 = scalar_lea.vmem %s6, 128
        %v4250 = vld [vmem:[%s4249] sm:$0xff]
        %v4251 = vld [vmem:[%s4249 + $0x8] sm:$0xff]
        %v4252 = vld [vmem:[%s4249 + $0x10] sm:$0xff]
        %v4253 = vld [vmem:[%s4249 + $0x18] sm:$0xff]
        %s4254 = scalar_lea.vmem %s7, 4
        %v4255 = vld [vmem:[%s4254] sm:$0x1]
        %v4257 = vlaneseq
        %v4258 = vshrl.u32 %v4257, 7
        %v4259 = vsub.s32 0, %v4258
        %v4260 = vrot.slane %v4255, %v4259
        %v4263 = vsel %vm518, %v499, 0
        %v4266 = vsel %vm518, %v500, 0
        %v4269 = vsel %vm518, %v501, 0
        %v4272 = vsel %vm518, %v502, 0
        %v4275 = vsel %vm518, %v503, 0
        %v4278 = vsel %vm518, %v504, 0
        %v4281 = vsel %vm518, %v505, 0
        %v4284 = vsel %vm518, %v506, 0
        %4286 = vmatprep.subr.mxu0 0.0
        %4287 = vmatpush1.msra.mxu0 0.0
        %4288 = vmatprep.subr.mxu0 0.0
        %4289 = vmatpush1.msra.mxu0 0.0
        %4290 = vmatprep.subr.mxu0 0.0
        %4291 = vmatpush1.msra.mxu0 0.0
        %4292 = vmatprep.subr.mxu0 0.0
        %4293 = vmatpush1.msra.mxu0 0.0
        %4294 = vmatprep.subr.mxu0 0.0
        %4295 = vmatpush1.msra.mxu0 0.0
        %4296 = vmatprep.subr.mxu0 0.0
        %4297 = vmatpush1.msra.mxu0 0.0
        %4298 = vmatprep.subr.mxu0 0.0
        %4299 = vmatpush1.msra.mxu0 0.0
        %4300 = vmatprep.subr.mxu0 0.0
        %4301 = vmatpush1.msra.mxu0 0.0
        %4302 = vmatprep.subr.mxu0 0.0
        %4303 = vmatpush1.msra.mxu0 0.0
        %4304 = vmatprep.subr.mxu0 0.0
        %4305 = vmatpush1.msra.mxu0 0.0
        %4306 = vmatprep.subr.mxu0 0.0
        %4307 = vmatpush1.msra.mxu0 0.0
        %4308 = vmatprep.subr.mxu0 0.0
        %4309 = vmatpush1.msra.mxu0 0.0
        %4310 = vmatprep.subr.mxu0 0.0
        %4311 = vmatpush1.msra.mxu0 %v4253
        %4312 = vmatprep.subr.mxu0 0.0
        %4313 = vmatpush1.msra.mxu0 %v4252
        %4314 = vmatprep.subr.mxu0 0.0
        %4315 = vmatpush1.msra.mxu0 %v4251
        %4316 = vmatprep.subr.mxu0 0.0
        %4317 = vmatpush1.msra.mxu0 %v4250
        %4318 = vmatprep.subr.mxu0 0.0
        %4319 = vmatpush2.msra.mxu0 0.0
        %4320 = vmatprep.subr.mxu0 0.0
        %4321 = vmatpush2.msra.mxu0 0.0
        %4322 = vmatprep.subr.mxu0 0.0
        %4323 = vmatpush2.msra.mxu0 0.0
        %4324 = vmatprep.subr.mxu0 0.0
        %4325 = vmatpush2.msra.mxu0 0.0
        %4326 = vmatprep.subr.mxu0 0.0
        %4327 = vmatpush2.msra.mxu0 0.0
        %4328 = vmatprep.subr.mxu0 0.0
        %4329 = vmatpush2.msra.mxu0 0.0
        %4330 = vmatprep.subr.mxu0 0.0
        %4331 = vmatpush2.msra.mxu0 0.0
        %4332 = vmatprep.subr.mxu0 0.0
        %4333 = vmatpush2.msra.mxu0 0.0
        %4334 = vmatprep.subr.mxu0 0.0
        %4335 = vmatpush2.msra.mxu0 0.0
        %4336 = vmatprep.subr.mxu0 0.0
        %4337 = vmatpush2.msra.mxu0 0.0
        %4338 = vmatprep.subr.mxu0 0.0
        %4339 = vmatpush2.msra.mxu0 0.0
        %4340 = vmatprep.subr.mxu0 0.0
        %4341 = vmatpush2.msra.mxu0 0.0
        %4342 = vmatprep.subr.mxu0 0.0
        %4343 = vmatpush2.msra.mxu0 0.0
        %4344 = vmatprep.subr.mxu0 0.0
        %4345 = vmatpush2.msra.mxu0 0.0
        %4346 = vmatprep.subr.mxu0 0.0
        %4347 = vmatpush2.msra.mxu0 0.0
        %4348 = vmatprep.subr.mxu0 0.0
        %4349 = vmatpush2.msra.mxu0 0.0
        %4350 = vmatprep.mubr.f32.mxu0 0.0
        %4351 = vmatmul.mubr.f32.gmra.mxu0 %v4263
        %v4352 = vpop.f32.mrf.mxu0
        %v4353 = vadd.f32 %v4260, %v4352
        %v4354 = vpop.f32.mrf.mxu0
        %4355 = vmatprep.mubr.f32.mxu0 0.0
        %4356 = vmatmul.mubr.f32.gmra.mxu0 %v4266
        %v4357 = vpop.f32.mrf.mxu0
        %v4358 = vadd.f32 %v4260, %v4357
        %v4359 = vpop.f32.mrf.mxu0
        %4360 = vmatprep.mubr.f32.mxu0 0.0
        %4361 = vmatmul.mubr.f32.gmra.mxu0 %v4269
        %v4362 = vpop.f32.mrf.mxu0
        %v4363 = vadd.f32 %v4260, %v4362
        %v4364 = vpop.f32.mrf.mxu0
        %4365 = vmatprep.mubr.f32.mxu0 0.0
        %4366 = vmatmul.mubr.f32.gmra.mxu0 %v4272
        %v4367 = vpop.f32.mrf.mxu0
        %v4368 = vadd.f32 %v4260, %v4367
        %v4369 = vpop.f32.mrf.mxu0
        %4370 = vmatprep.mubr.f32.mxu0 0.0
        %4371 = vmatmul.mubr.f32.gmra.mxu0 %v4275
        %v4372 = vpop.f32.mrf.mxu0
        %v4373 = vadd.f32 %v4260, %v4372
        %v4374 = vpop.f32.mrf.mxu0
        %4375 = vmatprep.mubr.f32.mxu0 0.0
        %4376 = vmatmul.mubr.f32.gmra.mxu0 %v4278
        %v4377 = vpop.f32.mrf.mxu0
        %v4378 = vadd.f32 %v4260, %v4377
        %v4379 = vpop.f32.mrf.mxu0
        %4380 = vmatprep.mubr.f32.mxu0 0.0
        %4381 = vmatmul.mubr.f32.gmra.mxu0 %v4281
        %v4382 = vpop.f32.mrf.mxu0
        %v4383 = vadd.f32 %v4260, %v4382
        %v4384 = vpop.f32.mrf.mxu0
        %4385 = vmatprep.mubr.f32.mxu0 0.0
        %4386 = vmatmul.mubr.f32.gmra.mxu0 %v4284
        %v4387 = vpop.f32.mrf.mxu0
        %v4388 = vadd.f32 %v4260, %v4387
        %v4389 = vpop.f32.mrf.mxu0
        %4390 = vdwg.mxu0
        %s4391 = scalar_lea.vmem %s6, 256
        %v4392 = vld [vmem:[%s4391] sm:$0xff]
        %v4393 = vld [vmem:[%s4391 + $0x8] sm:$0xff]
        %v4394 = vld [vmem:[%s4391 + $0x10] sm:$0xff]
        %v4395 = vld [vmem:[%s4391 + $0x18] sm:$0xff]
        %s4396 = scalar_lea.vmem %s7, 8
        %v4397 = vld [vmem:[%s4396] sm:$0x1]
        %v4399 = vlaneseq
        %v4400 = vshrl.u32 %v4399, 7
        %v4401 = vsub.s32 0, %v4400
        %v4402 = vrot.slane %v4397, %v4401
        %4404 = vmatprep.subr.mxu0 0.0
        %4405 = vmatpush1.msra.mxu0 0.0
        %4406 = vmatprep.subr.mxu0 0.0
        %4407 = vmatpush1.msra.mxu0 0.0
        %4408 = vmatprep.subr.mxu0 0.0
        %4409 = vmatpush1.msra.mxu0 0.0
        %4410 = vmatprep.subr.mxu0 0.0
        %4411 = vmatpush1.msra.mxu0 0.0
        %4412 = vmatprep.subr.mxu0 0.0
        %4413 = vmatpush1.msra.mxu0 0.0
        %4414 = vmatprep.subr.mxu0 0.0
        %4415 = vmatpush1.msra.mxu0 0.0
        %4416 = vmatprep.subr.mxu0 0.0
        %4417 = vmatpush1.msra.mxu0 0.0
        %4418 = vmatprep.subr.mxu0 0.0
        %4419 = vmatpush1.msra.mxu0 0.0
        %4420 = vmatprep.subr.mxu0 0.0
        %4421 = vmatpush1.msra.mxu0 0.0
        %4422 = vmatprep.subr.mxu0 0.0
        %4423 = vmatpush1.msra.mxu0 0.0
        %4424 = vmatprep.subr.mxu0 0.0
        %4425 = vmatpush1.msra.mxu0 0.0
        %4426 = vmatprep.subr.mxu0 0.0
        %4427 = vmatpush1.msra.mxu0 0.0
        %4428 = vmatprep.subr.mxu0 0.0
        %4429 = vmatpush1.msra.mxu0 %v4395
        %4430 = vmatprep.subr.mxu0 0.0
        %4431 = vmatpush1.msra.mxu0 %v4394
        %4432 = vmatprep.subr.mxu0 0.0
        %4433 = vmatpush1.msra.mxu0 %v4393
        %4434 = vmatprep.subr.mxu0 0.0
        %4435 = vmatpush1.msra.mxu0 %v4392
        %4436 = vmatprep.subr.mxu0 0.0
        %4437 = vmatpush2.msra.mxu0 0.0
        %4438 = vmatprep.subr.mxu0 0.0
        %4439 = vmatpush2.msra.mxu0 0.0
        %4440 = vmatprep.subr.mxu0 0.0
        %4441 = vmatpush2.msra.mxu0 0.0
        %4442 = vmatprep.subr.mxu0 0.0
        %4443 = vmatpush2.msra.mxu0 0.0
        %4444 = vmatprep.subr.mxu0 0.0
        %4445 = vmatpush2.msra.mxu0 0.0
        %4446 = vmatprep.subr.mxu0 0.0
        %4447 = vmatpush2.msra.mxu0 0.0
        %4448 = vmatprep.subr.mxu0 0.0
        %4449 = vmatpush2.msra.mxu0 0.0
        %4450 = vmatprep.subr.mxu0 0.0
        %4451 = vmatpush2.msra.mxu0 0.0
        %4452 = vmatprep.subr.mxu0 0.0
        %4453 = vmatpush2.msra.mxu0 0.0
        %4454 = vmatprep.subr.mxu0 0.0
        %4455 = vmatpush2.msra.mxu0 0.0
        %4456 = vmatprep.subr.mxu0 0.0
        %4457 = vmatpush2.msra.mxu0 0.0
        %4458 = vmatprep.subr.mxu0 0.0
        %4459 = vmatpush2.msra.mxu0 0.0
        %4460 = vmatprep.subr.mxu0 0.0
        %4461 = vmatpush2.msra.mxu0 0.0
        %4462 = vmatprep.subr.mxu0 0.0
        %4463 = vmatpush2.msra.mxu0 0.0
        %4464 = vmatprep.subr.mxu0 0.0
        %4465 = vmatpush2.msra.mxu0 0.0
        %4466 = vmatprep.subr.mxu0 0.0
        %4467 = vmatpush2.msra.mxu0 0.0
        %4468 = vmatprep.mubr.f32.mxu0 0.0
        %4469 = vmatmul.mubr.f32.gmra.mxu0 %v4263
        %v4470 = vpop.f32.mrf.mxu0
        %v4471 = vadd.f32 %v4402, %v4470
        %v4472 = vpop.f32.mrf.mxu0
        %4473 = vmatprep.mubr.f32.mxu0 0.0
        %4474 = vmatmul.mubr.f32.gmra.mxu0 %v4266
        %v4475 = vpop.f32.mrf.mxu0
        %v4476 = vadd.f32 %v4402, %v4475
        %v4477 = vpop.f32.mrf.mxu0
        %4478 = vmatprep.mubr.f32.mxu0 0.0
        %4479 = vmatmul.mubr.f32.gmra.mxu0 %v4269
        %v4480 = vpop.f32.mrf.mxu0
        %v4481 = vadd.f32 %v4402, %v4480
        %v4482 = vpop.f32.mrf.mxu0
        %4483 = vmatprep.mubr.f32.mxu0 0.0
        %4484 = vmatmul.mubr.f32.gmra.mxu0 %v4272
        %v4485 = vpop.f32.mrf.mxu0
        %v4486 = vadd.f32 %v4402, %v4485
        %v4487 = vpop.f32.mrf.mxu0
        %4488 = vmatprep.mubr.f32.mxu0 0.0
        %4489 = vmatmul.mubr.f32.gmra.mxu0 %v4275
        %v4490 = vpop.f32.mrf.mxu0
        %v4491 = vadd.f32 %v4402, %v4490
        %v4492 = vpop.f32.mrf.mxu0
        %4493 = vmatprep.mubr.f32.mxu0 0.0
        %4494 = vmatmul.mubr.f32.gmra.mxu0 %v4278
        %v4495 = vpop.f32.mrf.mxu0
        %v4496 = vadd.f32 %v4402, %v4495
        %v4497 = vpop.f32.mrf.mxu0
        %4498 = vmatprep.mubr.f32.mxu0 0.0
        %4499 = vmatmul.mubr.f32.gmra.mxu0 %v4281
        %v4500 = vpop.f32.mrf.mxu0
        %v4501 = vadd.f32 %v4402, %v4500
        %v4502 = vpop.f32.mrf.mxu0
        %4503 = vmatprep.mubr.f32.mxu0 0.0
        %4504 = vmatmul.mubr.f32.gmra.mxu0 %v4284
        %v4505 = vpop.f32.mrf.mxu0
        %v4506 = vadd.f32 %v4402, %v4505
        %v4507 = vpop.f32.mrf.mxu0
        %4508 = vdwg.mxu0
        %v4510 = vsel %vm884, %v4211, 0
        %v4513 = vsel %vm884, %v4216, 0
        %v4516 = vsel %vm884, %v4221, 0
        %v4519 = vsel %vm884, %v4226, 0
        %v4522 = vsel %vm884, %v4231, 0
        %v4525 = vsel %vm884, %v4236, 0
        %v4528 = vsel %vm884, %v4241, 0
        %v4531 = vsel %vm884, %v4246, 0
        %v4534 = vsel %vm884, %v4353, 0
        %v4537 = vsel %vm884, %v4358, 0
        %v4540 = vsel %vm884, %v4363, 0
        %v4543 = vsel %vm884, %v4368, 0
        %v4546 = vsel %vm884, %v4373, 0
        %v4549 = vsel %vm884, %v4378, 0
        %v4552 = vsel %vm884, %v4383, 0
        %v4555 = vsel %vm884, %v4388, 0
        %4557 = vmatprep.subr.mxu0 0.0
        %4558 = vmatpush1.xpose.msra.mxu0 0.0
        %4559 = vmatprep.subr.mxu0 0.0
        %4560 = vmatpush1.xpose.msra.mxu0 0.0
        %4561 = vmatprep.subr.mxu0 0.0
        %4562 = vmatpush1.xpose.msra.mxu0 0.0
        %4563 = vmatprep.subr.mxu0 0.0
        %4564 = vmatpush1.xpose.msra.mxu0 0.0
        %4565 = vmatprep.subr.mxu0 0.0
        %4566 = vmatpush1.xpose.msra.mxu0 0.0
        %4567 = vmatprep.subr.mxu0 0.0
        %4568 = vmatpush1.xpose.msra.mxu0 0.0
        %4569 = vmatprep.subr.mxu0 0.0
        %4570 = vmatpush1.xpose.msra.mxu0 0.0
        %4571 = vmatprep.subr.mxu0 0.0
        %4572 = vmatpush1.xpose.msra.mxu0 0.0
        %4573 = vmatprep.subr.mxu0 0.0
        %4574 = vmatpush1.xpose.msra.mxu0 %v4555
        %4575 = vmatprep.subr.mxu0 0.0
        %4576 = vmatpush1.xpose.msra.mxu0 %v4552
        %4577 = vmatprep.subr.mxu0 0.0
        %4578 = vmatpush1.xpose.msra.mxu0 %v4549
        %4579 = vmatprep.subr.mxu0 0.0
        %4580 = vmatpush1.xpose.msra.mxu0 %v4546
        %4581 = vmatprep.subr.mxu0 0.0
        %4582 = vmatpush1.xpose.msra.mxu0 %v4543
        %4583 = vmatprep.subr.mxu0 0.0
        %4584 = vmatpush1.xpose.msra.mxu0 %v4540
        %4585 = vmatprep.subr.mxu0 0.0
        %4586 = vmatpush1.xpose.msra.mxu0 %v4537
        %4587 = vmatprep.subr.mxu0 0.0
        %4588 = vmatpush1.xpose.msra.mxu0 %v4534
        %4589 = vmatprep.subr.mxu0 0.0
        %4590 = vmatpush2.xpose.msra.mxu0 0.0
        %4591 = vmatprep.subr.mxu0 0.0
        %4592 = vmatpush2.xpose.msra.mxu0 0.0
        %4593 = vmatprep.subr.mxu0 0.0
        %4594 = vmatpush2.xpose.msra.mxu0 0.0
        %4595 = vmatprep.subr.mxu0 0.0
        %4596 = vmatpush2.xpose.msra.mxu0 0.0
        %4597 = vmatprep.subr.mxu0 0.0
        %4598 = vmatpush2.xpose.msra.mxu0 0.0
        %4599 = vmatprep.subr.mxu0 0.0
        %4600 = vmatpush2.xpose.msra.mxu0 0.0
        %4601 = vmatprep.subr.mxu0 0.0
        %4602 = vmatpush2.xpose.msra.mxu0 0.0
        %4603 = vmatprep.subr.mxu0 0.0
        %4604 = vmatpush2.xpose.msra.mxu0 0.0
        %4605 = vmatprep.subr.mxu0 0.0
        %4606 = vmatpush2.xpose.msra.mxu0 0.0
        %4607 = vmatprep.subr.mxu0 0.0
        %4608 = vmatpush2.xpose.msra.mxu0 0.0
        %4609 = vmatprep.subr.mxu0 0.0
        %4610 = vmatpush2.xpose.msra.mxu0 0.0
        %4611 = vmatprep.subr.mxu0 0.0
        %4612 = vmatpush2.xpose.msra.mxu0 0.0
        %4613 = vmatprep.subr.mxu0 0.0
        %4614 = vmatpush2.xpose.msra.mxu0 0.0
        %4615 = vmatprep.subr.mxu0 0.0
        %4616 = vmatpush2.xpose.msra.mxu0 0.0
        %4617 = vmatprep.subr.mxu0 0.0
        %4618 = vmatpush2.xpose.msra.mxu0 0.0
        %4619 = vmatprep.subr.mxu0 0.0
        %4620 = vmatpush2.xpose.msra.mxu0 0.0
        %4621 = vmatprep.mubr.f32.mxu0 0.0
        %4622 = vmatmul.mubr.f32.gmra.mxu0 %v4510
        %v4623 = vpop.f32.mrf.mxu0
        %v4624 = vadd.f32 0.0, %v4623
        %v4625 = vpop.f32.mrf.mxu0
        %4626 = vmatprep.mubr.f32.mxu0 0.0
        %4627 = vmatmul.mubr.f32.gmra.mxu0 %v4513
        %v4628 = vpop.f32.mrf.mxu0
        %v4629 = vadd.f32 0.0, %v4628
        %v4630 = vpop.f32.mrf.mxu0
        %4631 = vmatprep.mubr.f32.mxu0 0.0
        %4632 = vmatmul.mubr.f32.gmra.mxu0 %v4516
        %v4633 = vpop.f32.mrf.mxu0
        %v4634 = vadd.f32 0.0, %v4633
        %v4635 = vpop.f32.mrf.mxu0
        %4636 = vmatprep.mubr.f32.mxu0 0.0
        %4637 = vmatmul.mubr.f32.gmra.mxu0 %v4519
        %v4638 = vpop.f32.mrf.mxu0
        %v4639 = vadd.f32 0.0, %v4638
        %v4640 = vpop.f32.mrf.mxu0
        %4641 = vmatprep.mubr.f32.mxu0 0.0
        %4642 = vmatmul.mubr.f32.gmra.mxu0 %v4522
        %v4643 = vpop.f32.mrf.mxu0
        %v4644 = vadd.f32 0.0, %v4643
        %v4645 = vpop.f32.mrf.mxu0
        %4646 = vmatprep.mubr.f32.mxu0 0.0
        %4647 = vmatmul.mubr.f32.gmra.mxu0 %v4525
        %v4648 = vpop.f32.mrf.mxu0
        %v4649 = vadd.f32 0.0, %v4648
        %v4650 = vpop.f32.mrf.mxu0
        %4651 = vmatprep.mubr.f32.mxu0 0.0
        %4652 = vmatmul.mubr.f32.gmra.mxu0 %v4528
        %v4653 = vpop.f32.mrf.mxu0
        %v4654 = vadd.f32 0.0, %v4653
        %v4655 = vpop.f32.mrf.mxu0
        %4656 = vmatprep.mubr.f32.mxu0 0.0
        %4657 = vmatmul.mubr.f32.gmra.mxu0 %v4531
        %v4658 = vpop.f32.mrf.mxu0
        %v4659 = vadd.f32 0.0, %v4658
        %v4660 = vpop.f32.mrf.mxu0
        %4661 = vdwg.mxu0
        %v4662 = vsel %vm1038, %v4624, -inf
        %4663 = vmax.xlane.f32.xlu0 %v4662
        %v4664 = vpop.xlane.xlu0 %4663
        %v4665 = vsel %vm1038, %v4629, -inf
        %4666 = vmax.xlane.f32.xlu0 %v4665
        %v4667 = vpop.xlane.xlu0 %4666
        %v4668 = vsel %vm1038, %v4634, -inf
        %4669 = vmax.xlane.f32.xlu0 %v4668
        %v4670 = vpop.xlane.xlu0 %4669
        %v4671 = vsel %vm1038, %v4639, -inf
        %4672 = vmax.xlane.f32.xlu0 %v4671
        %v4673 = vpop.xlane.xlu0 %4672
        %v4674 = vsel %vm1038, %v4644, -inf
        %4675 = vmax.xlane.f32.xlu0 %v4674
        %v4676 = vpop.xlane.xlu0 %4675
        %v4677 = vsel %vm1038, %v4649, -inf
        %4678 = vmax.xlane.f32.xlu0 %v4677
        %v4679 = vpop.xlane.xlu0 %4678
        %v4680 = vsel %vm1038, %v4654, -inf
        %4681 = vmax.xlane.f32.xlu0 %v4680
        %v4682 = vpop.xlane.xlu0 %4681
        %v4683 = vsel %vm1038, %v4659, -inf
        %4684 = vmax.xlane.f32.xlu0 %v4683
        %v4685 = vpop.xlane.xlu0 %4684
        %v4686 = vsub.f32 %v4624, %v4664
        %v4687 = vsub.f32 %v4629, %v4667
        %v4688 = vsub.f32 %v4634, %v4670
        %v4689 = vsub.f32 %v4639, %v4673
        %v4690 = vsub.f32 %v4644, %v4676
        %v4691 = vsub.f32 %v4649, %v4679
        %v4692 = vsub.f32 %v4654, %v4682
        %v4693 = vsub.f32 %v4659, %v4685
        %v4694 = vmul.f32 %v4686, 1.442695
        %v4695 = vpow.pop %v4694
        %v4696 = vmul.f32 %v4687, 1.442695
        %v4697 = vpow.pop %v4696
        %v4698 = vmul.f32 %v4688, 1.442695
        %v4699 = vpow.pop %v4698
        %v4700 = vmul.f32 %v4689, 1.442695
        %v4701 = vpow.pop %v4700
        %v4702 = vmul.f32 %v4690, 1.442695
        %v4703 = vpow.pop %v4702
        %v4704 = vmul.f32 %v4691, 1.442695
        %v4705 = vpow.pop %v4704
        %v4706 = vmul.f32 %v4692, 1.442695
        %v4707 = vpow.pop %v4706
        %v4708 = vmul.f32 %v4693, 1.442695
        %v4709 = vpow.pop %v4708
        %v4710 = vsel %vm1038, %v4695, 0.0
        %4711 = vadd.xlane.f32.xlu0 %v4710
        %v4712 = vpop.xlane.xlu0 %4711
        %v4713 = vsel %vm1038, %v4697, 0.0
        %4714 = vadd.xlane.f32.xlu0 %v4713
        %v4715 = vpop.xlane.xlu0 %4714
        %v4716 = vsel %vm1038, %v4699, 0.0
        %4717 = vadd.xlane.f32.xlu0 %v4716
        %v4718 = vpop.xlane.xlu0 %4717
        %v4719 = vsel %vm1038, %v4701, 0.0
        %4720 = vadd.xlane.f32.xlu0 %v4719
        %v4721 = vpop.xlane.xlu0 %4720
        %v4722 = vsel %vm1038, %v4703, 0.0
        %4723 = vadd.xlane.f32.xlu0 %v4722
        %v4724 = vpop.xlane.xlu0 %4723
        %v4725 = vsel %vm1038, %v4705, 0.0
        %4726 = vadd.xlane.f32.xlu0 %v4725
        %v4727 = vpop.xlane.xlu0 %4726
        %v4728 = vsel %vm1038, %v4707, 0.0
        %4729 = vadd.xlane.f32.xlu0 %v4728
        %v4730 = vpop.xlane.xlu0 %4729
        %v4731 = vsel %vm1038, %v4709, 0.0
        %4732 = vadd.xlane.f32.xlu0 %v4731
        %v4733 = vpop.xlane.xlu0 %4732
        %v4734 = vrcp.pop %v4712
        %v4735 = vrcp.pop %v4715
        %v4736 = vrcp.pop %v4718
        %v4737 = vrcp.pop %v4721
        %v4738 = vrcp.pop %v4724
        %v4739 = vrcp.pop %v4727
        %v4740 = vrcp.pop %v4730
        %v4741 = vrcp.pop %v4733
        %v4742 = vmul.f32 %v4695, %v4734
        %v4743 = vmul.f32 %v4697, %v4735
        %v4744 = vmul.f32 %v4699, %v4736
        %v4745 = vmul.f32 %v4701, %v4737
        %v4746 = vmul.f32 %v4703, %v4738
        %v4747 = vmul.f32 %v4705, %v4739
        %v4748 = vmul.f32 %v4707, %v4740
        %v4749 = vmul.f32 %v4709, %v4741
        %v4751 = vsel %vm1038, %v4742, 0
        %v4754 = vsel %vm1038, %v4743, 0
        %v4757 = vsel %vm1038, %v4744, 0
        %v4760 = vsel %vm1038, %v4745, 0
        %v4763 = vsel %vm1038, %v4746, 0
        %v4766 = vsel %vm1038, %v4747, 0
        %v4769 = vsel %vm1038, %v4748, 0
        %v4772 = vsel %vm1038, %v4749, 0
        %4774 = vmatprep.subr.mxu0 0.0
        %4775 = vmatpush1.msra.mxu0 0.0
        %4776 = vmatprep.subr.mxu0 0.0
        %4777 = vmatpush1.msra.mxu0 0.0
        %4778 = vmatprep.subr.mxu0 0.0
        %4779 = vmatpush1.msra.mxu0 0.0
        %4780 = vmatprep.subr.mxu0 0.0
        %4781 = vmatpush1.msra.mxu0 0.0
        %4782 = vmatprep.subr.mxu0 0.0
        %4783 = vmatpush1.msra.mxu0 0.0
        %4784 = vmatprep.subr.mxu0 0.0
        %4785 = vmatpush1.msra.mxu0 0.0
        %4786 = vmatprep.subr.mxu0 0.0
        %4787 = vmatpush1.msra.mxu0 0.0
        %4788 = vmatprep.subr.mxu0 0.0
        %4789 = vmatpush1.msra.mxu0 0.0
        %4790 = vmatprep.subr.mxu0 0.0
        %4791 = vmatpush1.msra.mxu0 %v4506
        %4792 = vmatprep.subr.mxu0 0.0
        %4793 = vmatpush1.msra.mxu0 %v4501
        %4794 = vmatprep.subr.mxu0 0.0
        %4795 = vmatpush1.msra.mxu0 %v4496
        %4796 = vmatprep.subr.mxu0 0.0
        %4797 = vmatpush1.msra.mxu0 %v4491
        %4798 = vmatprep.subr.mxu0 0.0
        %4799 = vmatpush1.msra.mxu0 %v4486
        %4800 = vmatprep.subr.mxu0 0.0
        %4801 = vmatpush1.msra.mxu0 %v4481
        %4802 = vmatprep.subr.mxu0 0.0
        %4803 = vmatpush1.msra.mxu0 %v4476
        %4804 = vmatprep.subr.mxu0 0.0
        %4805 = vmatpush1.msra.mxu0 %v4471
        %4806 = vmatprep.subr.mxu0 0.0
        %4807 = vmatpush2.msra.mxu0 0.0
        %4808 = vmatprep.subr.mxu0 0.0
        %4809 = vmatpush2.msra.mxu0 0.0
        %4810 = vmatprep.subr.mxu0 0.0
        %4811 = vmatpush2.msra.mxu0 0.0
        %4812 = vmatprep.subr.mxu0 0.0
        %4813 = vmatpush2.msra.mxu0 0.0
        %4814 = vmatprep.subr.mxu0 0.0
        %4815 = vmatpush2.msra.mxu0 0.0
        %4816 = vmatprep.subr.mxu0 0.0
        %4817 = vmatpush2.msra.mxu0 0.0
        %4818 = vmatprep.subr.mxu0 0.0
        %4819 = vmatpush2.msra.mxu0 0.0
        %4820 = vmatprep.subr.mxu0 0.0
        %4821 = vmatpush2.msra.mxu0 0.0
        %4822 = vmatprep.subr.mxu0 0.0
        %4823 = vmatpush2.msra.mxu0 0.0
        %4824 = vmatprep.subr.mxu0 0.0
        %4825 = vmatpush2.msra.mxu0 0.0
        %4826 = vmatprep.subr.mxu0 0.0
        %4827 = vmatpush2.msra.mxu0 0.0
        %4828 = vmatprep.subr.mxu0 0.0
        %4829 = vmatpush2.msra.mxu0 0.0
        %4830 = vmatprep.subr.mxu0 0.0
        %4831 = vmatpush2.msra.mxu0 0.0
        %4832 = vmatprep.subr.mxu0 0.0
        %4833 = vmatpush2.msra.mxu0 0.0
        %4834 = vmatprep.subr.mxu0 0.0
        %4835 = vmatpush2.msra.mxu0 0.0
        %4836 = vmatprep.subr.mxu0 0.0
        %4837 = vmatpush2.msra.mxu0 0.0
        %4838 = vmatprep.mubr.f32.mxu0 0.0
        %4839 = vmatmul.mubr.f32.gmra.mxu0 %v4751
        %v4840 = vpop.f32.mrf.mxu0
        %v4841 = vadd.f32 0.0, %v4840
        %v4842 = vpop.f32.mrf.mxu0
        %4843 = vmatprep.mubr.f32.mxu0 0.0
        %4844 = vmatmul.mubr.f32.gmra.mxu0 %v4754
        %v4845 = vpop.f32.mrf.mxu0
        %v4846 = vadd.f32 0.0, %v4845
        %v4847 = vpop.f32.mrf.mxu0
        %4848 = vmatprep.mubr.f32.mxu0 0.0
        %4849 = vmatmul.mubr.f32.gmra.mxu0 %v4757
        %v4850 = vpop.f32.mrf.mxu0
        %v4851 = vadd.f32 0.0, %v4850
        %v4852 = vpop.f32.mrf.mxu0
        %4853 = vmatprep.mubr.f32.mxu0 0.0
        %4854 = vmatmul.mubr.f32.gmra.mxu0 %v4760
        %v4855 = vpop.f32.mrf.mxu0
        %v4856 = vadd.f32 0.0, %v4855
        %v4857 = vpop.f32.mrf.mxu0
        %4858 = vmatprep.mubr.f32.mxu0 0.0
        %4859 = vmatmul.mubr.f32.gmra.mxu0 %v4763
        %v4860 = vpop.f32.mrf.mxu0
        %v4861 = vadd.f32 0.0, %v4860
        %v4862 = vpop.f32.mrf.mxu0
        %4863 = vmatprep.mubr.f32.mxu0 0.0
        %4864 = vmatmul.mubr.f32.gmra.mxu0 %v4766
        %v4865 = vpop.f32.mrf.mxu0
        %v4866 = vadd.f32 0.0, %v4865
        %v4867 = vpop.f32.mrf.mxu0
        %4868 = vmatprep.mubr.f32.mxu0 0.0
        %4869 = vmatmul.mubr.f32.gmra.mxu0 %v4769
        %v4870 = vpop.f32.mrf.mxu0
        %v4871 = vadd.f32 0.0, %v4870
        %v4872 = vpop.f32.mrf.mxu0
        %4873 = vmatprep.mubr.f32.mxu0 0.0
        %4874 = vmatmul.mubr.f32.gmra.mxu0 %v4772
        %v4875 = vpop.f32.mrf.mxu0
        %v4876 = vadd.f32 0.0, %v4875
        %v4877 = vpop.f32.mrf.mxu0
        %4878 = vdwg.mxu0
        %v4879 = vld [vmem:[%s8] sm:$0xff]
        %s4880 = scalar_lea.vmem %s6, 32
        %v4881 = vld [vmem:[%s4880] sm:$0xff]
        %v4882 = vld [vmem:[%s4880 + $0x8] sm:$0xff]
        %v4883 = vld [vmem:[%s4880 + $0x10] sm:$0xff]
        %v4884 = vld [vmem:[%s4880 + $0x18] sm:$0xff]
        %s4885 = scalar_lea.vmem %s7, 1
        %v4886 = vld [vmem:[%s4885] sm:$0x1]
        %v4888 = vlaneseq
        %v4889 = vshrl.u32 %v4888, 7
        %v4890 = vsub.s32 0, %v4889
        %v4891 = vrot.slane %v4886, %v4890
        %4893 = vmatprep.subr.mxu0 0.0
        %4894 = vmatpush1.msra.mxu0 0.0
        %4895 = vmatprep.subr.mxu0 0.0
        %4896 = vmatpush1.msra.mxu0 0.0
        %4897 = vmatprep.subr.mxu0 0.0
        %4898 = vmatpush1.msra.mxu0 0.0
        %4899 = vmatprep.subr.mxu0 0.0
        %4900 = vmatpush1.msra.mxu0 0.0
        %4901 = vmatprep.subr.mxu0 0.0
        %4902 = vmatpush1.msra.mxu0 0.0
        %4903 = vmatprep.subr.mxu0 0.0
        %4904 = vmatpush1.msra.mxu0 0.0
        %4905 = vmatprep.subr.mxu0 0.0
        %4906 = vmatpush1.msra.mxu0 0.0
        %4907 = vmatprep.subr.mxu0 0.0
        %4908 = vmatpush1.msra.mxu0 0.0
        %4909 = vmatprep.subr.mxu0 0.0
        %4910 = vmatpush1.msra.mxu0 0.0
        %4911 = vmatprep.subr.mxu0 0.0
        %4912 = vmatpush1.msra.mxu0 0.0
        %4913 = vmatprep.subr.mxu0 0.0
        %4914 = vmatpush1.msra.mxu0 0.0
        %4915 = vmatprep.subr.mxu0 0.0
        %4916 = vmatpush1.msra.mxu0 0.0
        %4917 = vmatprep.subr.mxu0 0.0
        %4918 = vmatpush1.msra.mxu0 %v4884
        %4919 = vmatprep.subr.mxu0 0.0
        %4920 = vmatpush1.msra.mxu0 %v4883
        %4921 = vmatprep.subr.mxu0 0.0
        %4922 = vmatpush1.msra.mxu0 %v4882
        %4923 = vmatprep.subr.mxu0 0.0
        %4924 = vmatpush1.msra.mxu0 %v4881
        %4925 = vmatprep.subr.mxu0 0.0
        %4926 = vmatpush2.msra.mxu0 0.0
        %4927 = vmatprep.subr.mxu0 0.0
        %4928 = vmatpush2.msra.mxu0 0.0
        %4929 = vmatprep.subr.mxu0 0.0
        %4930 = vmatpush2.msra.mxu0 0.0
        %4931 = vmatprep.subr.mxu0 0.0
        %4932 = vmatpush2.msra.mxu0 0.0
        %4933 = vmatprep.subr.mxu0 0.0
        %4934 = vmatpush2.msra.mxu0 0.0
        %4935 = vmatprep.subr.mxu0 0.0
        %4936 = vmatpush2.msra.mxu0 0.0
        %4937 = vmatprep.subr.mxu0 0.0
        %4938 = vmatpush2.msra.mxu0 0.0
        %4939 = vmatprep.subr.mxu0 0.0
        %4940 = vmatpush2.msra.mxu0 0.0
        %4941 = vmatprep.subr.mxu0 0.0
        %4942 = vmatpush2.msra.mxu0 0.0
        %4943 = vmatprep.subr.mxu0 0.0
        %4944 = vmatpush2.msra.mxu0 0.0
        %4945 = vmatprep.subr.mxu0 0.0
        %4946 = vmatpush2.msra.mxu0 0.0
        %4947 = vmatprep.subr.mxu0 0.0
        %4948 = vmatpush2.msra.mxu0 0.0
        %4949 = vmatprep.subr.mxu0 0.0
        %4950 = vmatpush2.msra.mxu0 0.0
        %4951 = vmatprep.subr.mxu0 0.0
        %4952 = vmatpush2.msra.mxu0 0.0
        %4953 = vmatprep.subr.mxu0 0.0
        %4954 = vmatpush2.msra.mxu0 0.0
        %4955 = vmatprep.subr.mxu0 0.0
        %4956 = vmatpush2.msra.mxu0 0.0
        %4957 = vmatprep.mubr.f32.mxu0 0.0
        %4958 = vmatmul.mubr.f32.gmra.mxu0 %v4121
        %v4959 = vpop.f32.mrf.mxu0
        %v4960 = vadd.f32 %v4891, %v4959
        %v4961 = vpop.f32.mrf.mxu0
        %4962 = vmatprep.mubr.f32.mxu0 0.0
        %4963 = vmatmul.mubr.f32.gmra.mxu0 %v4124
        %v4964 = vpop.f32.mrf.mxu0
        %v4965 = vadd.f32 %v4891, %v4964
        %v4966 = vpop.f32.mrf.mxu0
        %4967 = vmatprep.mubr.f32.mxu0 0.0
        %4968 = vmatmul.mubr.f32.gmra.mxu0 %v4127
        %v4969 = vpop.f32.mrf.mxu0
        %v4970 = vadd.f32 %v4891, %v4969
        %v4971 = vpop.f32.mrf.mxu0
        %4972 = vmatprep.mubr.f32.mxu0 0.0
        %4973 = vmatmul.mubr.f32.gmra.mxu0 %v4130
        %v4974 = vpop.f32.mrf.mxu0
        %v4975 = vadd.f32 %v4891, %v4974
        %v4976 = vpop.f32.mrf.mxu0
        %4977 = vmatprep.mubr.f32.mxu0 0.0
        %4978 = vmatmul.mubr.f32.gmra.mxu0 %v4133
        %v4979 = vpop.f32.mrf.mxu0
        %v4980 = vadd.f32 %v4891, %v4979
        %v4981 = vpop.f32.mrf.mxu0
        %4982 = vmatprep.mubr.f32.mxu0 0.0
        %4983 = vmatmul.mubr.f32.gmra.mxu0 %v4136
        %v4984 = vpop.f32.mrf.mxu0
        %v4985 = vadd.f32 %v4891, %v4984
        %v4986 = vpop.f32.mrf.mxu0
        %4987 = vmatprep.mubr.f32.mxu0 0.0
        %4988 = vmatmul.mubr.f32.gmra.mxu0 %v4139
        %v4989 = vpop.f32.mrf.mxu0
        %v4990 = vadd.f32 %v4891, %v4989
        %v4991 = vpop.f32.mrf.mxu0
        %4992 = vmatprep.mubr.f32.mxu0 0.0
        %4993 = vmatmul.mubr.f32.gmra.mxu0 %v4142
        %v4994 = vpop.f32.mrf.mxu0
        %v4995 = vadd.f32 %v4891, %v4994
        %v4996 = vpop.f32.mrf.mxu0
        %4997 = vdwg.mxu0
        %s4998 = scalar_lea.vmem %s6, 160
        %v4999 = vld [vmem:[%s4998] sm:$0xff]
        %v5000 = vld [vmem:[%s4998 + $0x8] sm:$0xff]
        %v5001 = vld [vmem:[%s4998 + $0x10] sm:$0xff]
        %v5002 = vld [vmem:[%s4998 + $0x18] sm:$0xff]
        %s5003 = scalar_lea.vmem %s7, 5
        %v5004 = vld [vmem:[%s5003] sm:$0x1]
        %v5006 = vlaneseq
        %v5007 = vshrl.u32 %v5006, 7
        %v5008 = vsub.s32 0, %v5007
        %v5009 = vrot.slane %v5004, %v5008
        %5011 = vmatprep.subr.mxu0 0.0
        %5012 = vmatpush1.msra.mxu0 0.0
        %5013 = vmatprep.subr.mxu0 0.0
        %5014 = vmatpush1.msra.mxu0 0.0
        %5015 = vmatprep.subr.mxu0 0.0
        %5016 = vmatpush1.msra.mxu0 0.0
        %5017 = vmatprep.subr.mxu0 0.0
        %5018 = vmatpush1.msra.mxu0 0.0
        %5019 = vmatprep.subr.mxu0 0.0
        %5020 = vmatpush1.msra.mxu0 0.0
        %5021 = vmatprep.subr.mxu0 0.0
        %5022 = vmatpush1.msra.mxu0 0.0
        %5023 = vmatprep.subr.mxu0 0.0
        %5024 = vmatpush1.msra.mxu0 0.0
        %5025 = vmatprep.subr.mxu0 0.0
        %5026 = vmatpush1.msra.mxu0 0.0
        %5027 = vmatprep.subr.mxu0 0.0
        %5028 = vmatpush1.msra.mxu0 0.0
        %5029 = vmatprep.subr.mxu0 0.0
        %5030 = vmatpush1.msra.mxu0 0.0
        %5031 = vmatprep.subr.mxu0 0.0
        %5032 = vmatpush1.msra.mxu0 0.0
        %5033 = vmatprep.subr.mxu0 0.0
        %5034 = vmatpush1.msra.mxu0 0.0
        %5035 = vmatprep.subr.mxu0 0.0
        %5036 = vmatpush1.msra.mxu0 %v5002
        %5037 = vmatprep.subr.mxu0 0.0
        %5038 = vmatpush1.msra.mxu0 %v5001
        %5039 = vmatprep.subr.mxu0 0.0
        %5040 = vmatpush1.msra.mxu0 %v5000
        %5041 = vmatprep.subr.mxu0 0.0
        %5042 = vmatpush1.msra.mxu0 %v4999
        %5043 = vmatprep.subr.mxu0 0.0
        %5044 = vmatpush2.msra.mxu0 0.0
        %5045 = vmatprep.subr.mxu0 0.0
        %5046 = vmatpush2.msra.mxu0 0.0
        %5047 = vmatprep.subr.mxu0 0.0
        %5048 = vmatpush2.msra.mxu0 0.0
        %5049 = vmatprep.subr.mxu0 0.0
        %5050 = vmatpush2.msra.mxu0 0.0
        %5051 = vmatprep.subr.mxu0 0.0
        %5052 = vmatpush2.msra.mxu0 0.0
        %5053 = vmatprep.subr.mxu0 0.0
        %5054 = vmatpush2.msra.mxu0 0.0
        %5055 = vmatprep.subr.mxu0 0.0
        %5056 = vmatpush2.msra.mxu0 0.0
        %5057 = vmatprep.subr.mxu0 0.0
        %5058 = vmatpush2.msra.mxu0 0.0
        %5059 = vmatprep.subr.mxu0 0.0
        %5060 = vmatpush2.msra.mxu0 0.0
        %5061 = vmatprep.subr.mxu0 0.0
        %5062 = vmatpush2.msra.mxu0 0.0
        %5063 = vmatprep.subr.mxu0 0.0
        %5064 = vmatpush2.msra.mxu0 0.0
        %5065 = vmatprep.subr.mxu0 0.0
        %5066 = vmatpush2.msra.mxu0 0.0
        %5067 = vmatprep.subr.mxu0 0.0
        %5068 = vmatpush2.msra.mxu0 0.0
        %5069 = vmatprep.subr.mxu0 0.0
        %5070 = vmatpush2.msra.mxu0 0.0
        %5071 = vmatprep.subr.mxu0 0.0
        %5072 = vmatpush2.msra.mxu0 0.0
        %5073 = vmatprep.subr.mxu0 0.0
        %5074 = vmatpush2.msra.mxu0 0.0
        %5075 = vmatprep.mubr.f32.mxu0 0.0
        %5076 = vmatmul.mubr.f32.gmra.mxu0 %v4263
        %v5077 = vpop.f32.mrf.mxu0
        %v5078 = vadd.f32 %v5009, %v5077
        %v5079 = vpop.f32.mrf.mxu0
        %5080 = vmatprep.mubr.f32.mxu0 0.0
        %5081 = vmatmul.mubr.f32.gmra.mxu0 %v4266
        %v5082 = vpop.f32.mrf.mxu0
        %v5083 = vadd.f32 %v5009, %v5082
        %v5084 = vpop.f32.mrf.mxu0
        %5085 = vmatprep.mubr.f32.mxu0 0.0
        %5086 = vmatmul.mubr.f32.gmra.mxu0 %v4269
        %v5087 = vpop.f32.mrf.mxu0
        %v5088 = vadd.f32 %v5009, %v5087
        %v5089 = vpop.f32.mrf.mxu0
        %5090 = vmatprep.mubr.f32.mxu0 0.0
        %5091 = vmatmul.mubr.f32.gmra.mxu0 %v4272
        %v5092 = vpop.f32.mrf.mxu0
        %v5093 = vadd.f32 %v5009, %v5092
        %v5094 = vpop.f32.mrf.mxu0
        %5095 = vmatprep.mubr.f32.mxu0 0.0
        %5096 = vmatmul.mubr.f32.gmra.mxu0 %v4275
        %v5097 = vpop.f32.mrf.mxu0
        %v5098 = vadd.f32 %v5009, %v5097
        %v5099 = vpop.f32.mrf.mxu0
        %5100 = vmatprep.mubr.f32.mxu0 0.0
        %5101 = vmatmul.mubr.f32.gmra.mxu0 %v4278
        %v5102 = vpop.f32.mrf.mxu0
        %v5103 = vadd.f32 %v5009, %v5102
        %v5104 = vpop.f32.mrf.mxu0
        %5105 = vmatprep.mubr.f32.mxu0 0.0
        %5106 = vmatmul.mubr.f32.gmra.mxu0 %v4281
        %v5107 = vpop.f32.mrf.mxu0
        %v5108 = vadd.f32 %v5009, %v5107
        %v5109 = vpop.f32.mrf.mxu0
        %5110 = vmatprep.mubr.f32.mxu0 0.0
        %5111 = vmatmul.mubr.f32.gmra.mxu0 %v4284
        %v5112 = vpop.f32.mrf.mxu0
        %v5113 = vadd.f32 %v5009, %v5112
        %v5114 = vpop.f32.mrf.mxu0
        %5115 = vdwg.mxu0
        %s5116 = scalar_lea.vmem %s6, 288
        %v5117 = vld [vmem:[%s5116] sm:$0xff]
        %v5118 = vld [vmem:[%s5116 + $0x8] sm:$0xff]
        %v5119 = vld [vmem:[%s5116 + $0x10] sm:$0xff]
        %v5120 = vld [vmem:[%s5116 + $0x18] sm:$0xff]
        %s5121 = scalar_lea.vmem %s7, 9
        %v5122 = vld [vmem:[%s5121] sm:$0x1]
        %v5124 = vlaneseq
        %v5125 = vshrl.u32 %v5124, 7
        %v5126 = vsub.s32 0, %v5125
        %v5127 = vrot.slane %v5122, %v5126
        %5129 = vmatprep.subr.mxu0 0.0
        %5130 = vmatpush1.msra.mxu0 0.0
        %5131 = vmatprep.subr.mxu0 0.0
        %5132 = vmatpush1.msra.mxu0 0.0
        %5133 = vmatprep.subr.mxu0 0.0
        %5134 = vmatpush1.msra.mxu0 0.0
        %5135 = vmatprep.subr.mxu0 0.0
        %5136 = vmatpush1.msra.mxu0 0.0
        %5137 = vmatprep.subr.mxu0 0.0
        %5138 = vmatpush1.msra.mxu0 0.0
        %5139 = vmatprep.subr.mxu0 0.0
        %5140 = vmatpush1.msra.mxu0 0.0
        %5141 = vmatprep.subr.mxu0 0.0
        %5142 = vmatpush1.msra.mxu0 0.0
        %5143 = vmatprep.subr.mxu0 0.0
        %5144 = vmatpush1.msra.mxu0 0.0
        %5145 = vmatprep.subr.mxu0 0.0
        %5146 = vmatpush1.msra.mxu0 0.0
        %5147 = vmatprep.subr.mxu0 0.0
        %5148 = vmatpush1.msra.mxu0 0.0
        %5149 = vmatprep.subr.mxu0 0.0
        %5150 = vmatpush1.msra.mxu0 0.0
        %5151 = vmatprep.subr.mxu0 0.0
        %5152 = vmatpush1.msra.mxu0 0.0
        %5153 = vmatprep.subr.mxu0 0.0
        %5154 = vmatpush1.msra.mxu0 %v5120
        %5155 = vmatprep.subr.mxu0 0.0
        %5156 = vmatpush1.msra.mxu0 %v5119
        %5157 = vmatprep.subr.mxu0 0.0
        %5158 = vmatpush1.msra.mxu0 %v5118
        %5159 = vmatprep.subr.mxu0 0.0
        %5160 = vmatpush1.msra.mxu0 %v5117
        %5161 = vmatprep.subr.mxu0 0.0
        %5162 = vmatpush2.msra.mxu0 0.0
        %5163 = vmatprep.subr.mxu0 0.0
        %5164 = vmatpush2.msra.mxu0 0.0
        %5165 = vmatprep.subr.mxu0 0.0
        %5166 = vmatpush2.msra.mxu0 0.0
        %5167 = vmatprep.subr.mxu0 0.0
        %5168 = vmatpush2.msra.mxu0 0.0
        %5169 = vmatprep.subr.mxu0 0.0
        %5170 = vmatpush2.msra.mxu0 0.0
        %5171 = vmatprep.subr.mxu0 0.0
        %5172 = vmatpush2.msra.mxu0 0.0
        %5173 = vmatprep.subr.mxu0 0.0
        %5174 = vmatpush2.msra.mxu0 0.0
        %5175 = vmatprep.subr.mxu0 0.0
        %5176 = vmatpush2.msra.mxu0 0.0
        %5177 = vmatprep.subr.mxu0 0.0
        %5178 = vmatpush2.msra.mxu0 0.0
        %5179 = vmatprep.subr.mxu0 0.0
        %5180 = vmatpush2.msra.mxu0 0.0
        %5181 = vmatprep.subr.mxu0 0.0
        %5182 = vmatpush2.msra.mxu0 0.0
        %5183 = vmatprep.subr.mxu0 0.0
        %5184 = vmatpush2.msra.mxu0 0.0
        %5185 = vmatprep.subr.mxu0 0.0
        %5186 = vmatpush2.msra.mxu0 0.0
        %5187 = vmatprep.subr.mxu0 0.0
        %5188 = vmatpush2.msra.mxu0 0.0
        %5189 = vmatprep.subr.mxu0 0.0
        %5190 = vmatpush2.msra.mxu0 0.0
        %5191 = vmatprep.subr.mxu0 0.0
        %5192 = vmatpush2.msra.mxu0 0.0
        %5193 = vmatprep.mubr.f32.mxu0 0.0
        %5194 = vmatmul.mubr.f32.gmra.mxu0 %v4263
        %v5195 = vpop.f32.mrf.mxu0
        %v5196 = vadd.f32 %v5127, %v5195
        %v5197 = vpop.f32.mrf.mxu0
        %5198 = vmatprep.mubr.f32.mxu0 0.0
        %5199 = vmatmul.mubr.f32.gmra.mxu0 %v4266
        %v5200 = vpop.f32.mrf.mxu0
        %v5201 = vadd.f32 %v5127, %v5200
        %v5202 = vpop.f32.mrf.mxu0
        %5203 = vmatprep.mubr.f32.mxu0 0.0
        %5204 = vmatmul.mubr.f32.gmra.mxu0 %v4269
        %v5205 = vpop.f32.mrf.mxu0
        %v5206 = vadd.f32 %v5127, %v5205
        %v5207 = vpop.f32.mrf.mxu0
        %5208 = vmatprep.mubr.f32.mxu0 0.0
        %5209 = vmatmul.mubr.f32.gmra.mxu0 %v4272
        %v5210 = vpop.f32.mrf.mxu0
        %v5211 = vadd.f32 %v5127, %v5210
        %v5212 = vpop.f32.mrf.mxu0
        %5213 = vmatprep.mubr.f32.mxu0 0.0
        %5214 = vmatmul.mubr.f32.gmra.mxu0 %v4275
        %v5215 = vpop.f32.mrf.mxu0
        %v5216 = vadd.f32 %v5127, %v5215
        %v5217 = vpop.f32.mrf.mxu0
        %5218 = vmatprep.mubr.f32.mxu0 0.0
        %5219 = vmatmul.mubr.f32.gmra.mxu0 %v4278
        %v5220 = vpop.f32.mrf.mxu0
        %v5221 = vadd.f32 %v5127, %v5220
        %v5222 = vpop.f32.mrf.mxu0
        %5223 = vmatprep.mubr.f32.mxu0 0.0
        %5224 = vmatmul.mubr.f32.gmra.mxu0 %v4281
        %v5225 = vpop.f32.mrf.mxu0
        %v5226 = vadd.f32 %v5127, %v5225
        %v5227 = vpop.f32.mrf.mxu0
        %5228 = vmatprep.mubr.f32.mxu0 0.0
        %5229 = vmatmul.mubr.f32.gmra.mxu0 %v4284
        %v5230 = vpop.f32.mrf.mxu0
        %v5231 = vadd.f32 %v5127, %v5230
        %v5232 = vpop.f32.mrf.mxu0
        %5233 = vdwg.mxu0
        %v5235 = vsel %vm884, %v4960, 0
        %v5238 = vsel %vm884, %v4965, 0
        %v5241 = vsel %vm884, %v4970, 0
        %v5244 = vsel %vm884, %v4975, 0
        %v5247 = vsel %vm884, %v4980, 0
        %v5250 = vsel %vm884, %v4985, 0
        %v5253 = vsel %vm884, %v4990, 0
        %v5256 = vsel %vm884, %v4995, 0
        %v5259 = vsel %vm884, %v5078, 0
        %v5262 = vsel %vm884, %v5083, 0
        %v5265 = vsel %vm884, %v5088, 0
        %v5268 = vsel %vm884, %v5093, 0
        %v5271 = vsel %vm884, %v5098, 0
        %v5274 = vsel %vm884, %v5103, 0
        %v5277 = vsel %vm884, %v5108, 0
        %v5280 = vsel %vm884, %v5113, 0
        %5282 = vmatprep.subr.mxu0 0.0
        %5283 = vmatpush1.xpose.msra.mxu0 0.0
        %5284 = vmatprep.subr.mxu0 0.0
        %5285 = vmatpush1.xpose.msra.mxu0 0.0
        %5286 = vmatprep.subr.mxu0 0.0
        %5287 = vmatpush1.xpose.msra.mxu0 0.0
        %5288 = vmatprep.subr.mxu0 0.0
        %5289 = vmatpush1.xpose.msra.mxu0 0.0
        %5290 = vmatprep.subr.mxu0 0.0
        %5291 = vmatpush1.xpose.msra.mxu0 0.0
        %5292 = vmatprep.subr.mxu0 0.0
        %5293 = vmatpush1.xpose.msra.mxu0 0.0
        %5294 = vmatprep.subr.mxu0 0.0
        %5295 = vmatpush1.xpose.msra.mxu0 0.0
        %5296 = vmatprep.subr.mxu0 0.0
        %5297 = vmatpush1.xpose.msra.mxu0 0.0
        %5298 = vmatprep.subr.mxu0 0.0
        %5299 = vmatpush1.xpose.msra.mxu0 %v5280
        %5300 = vmatprep.subr.mxu0 0.0
        %5301 = vmatpush1.xpose.msra.mxu0 %v5277
        %5302 = vmatprep.subr.mxu0 0.0
        %5303 = vmatpush1.xpose.msra.mxu0 %v5274
        %5304 = vmatprep.subr.mxu0 0.0
        %5305 = vmatpush1.xpose.msra.mxu0 %v5271
        %5306 = vmatprep.subr.mxu0 0.0
        %5307 = vmatpush1.xpose.msra.mxu0 %v5268
        %5308 = vmatprep.subr.mxu0 0.0
        %5309 = vmatpush1.xpose.msra.mxu0 %v5265
        %5310 = vmatprep.subr.mxu0 0.0
        %5311 = vmatpush1.xpose.msra.mxu0 %v5262
        %5312 = vmatprep.subr.mxu0 0.0
        %5313 = vmatpush1.xpose.msra.mxu0 %v5259
        %5314 = vmatprep.subr.mxu0 0.0
        %5315 = vmatpush2.xpose.msra.mxu0 0.0
        %5316 = vmatprep.subr.mxu0 0.0
        %5317 = vmatpush2.xpose.msra.mxu0 0.0
        %5318 = vmatprep.subr.mxu0 0.0
        %5319 = vmatpush2.xpose.msra.mxu0 0.0
        %5320 = vmatprep.subr.mxu0 0.0
        %5321 = vmatpush2.xpose.msra.mxu0 0.0
        %5322 = vmatprep.subr.mxu0 0.0
        %5323 = vmatpush2.xpose.msra.mxu0 0.0
        %5324 = vmatprep.subr.mxu0 0.0
        %5325 = vmatpush2.xpose.msra.mxu0 0.0
        %5326 = vmatprep.subr.mxu0 0.0
        %5327 = vmatpush2.xpose.msra.mxu0 0.0
        %5328 = vmatprep.subr.mxu0 0.0
        %5329 = vmatpush2.xpose.msra.mxu0 0.0
        %5330 = vmatprep.subr.mxu0 0.0
        %5331 = vmatpush2.xpose.msra.mxu0 0.0
        %5332 = vmatprep.subr.mxu0 0.0
        %5333 = vmatpush2.xpose.msra.mxu0 0.0
        %5334 = vmatprep.subr.mxu0 0.0
        %5335 = vmatpush2.xpose.msra.mxu0 0.0
        %5336 = vmatprep.subr.mxu0 0.0
        %5337 = vmatpush2.xpose.msra.mxu0 0.0
        %5338 = vmatprep.subr.mxu0 0.0
        %5339 = vmatpush2.xpose.msra.mxu0 0.0
        %5340 = vmatprep.subr.mxu0 0.0
        %5341 = vmatpush2.xpose.msra.mxu0 0.0
        %5342 = vmatprep.subr.mxu0 0.0
        %5343 = vmatpush2.xpose.msra.mxu0 0.0
        %5344 = vmatprep.subr.mxu0 0.0
        %5345 = vmatpush2.xpose.msra.mxu0 0.0
        %5346 = vmatprep.mubr.f32.mxu0 0.0
        %5347 = vmatmul.mubr.f32.gmra.mxu0 %v5235
        %v5348 = vpop.f32.mrf.mxu0
        %v5349 = vadd.f32 0.0, %v5348
        %v5350 = vpop.f32.mrf.mxu0
        %5351 = vmatprep.mubr.f32.mxu0 0.0
        %5352 = vmatmul.mubr.f32.gmra.mxu0 %v5238
        %v5353 = vpop.f32.mrf.mxu0
        %v5354 = vadd.f32 0.0, %v5353
        %v5355 = vpop.f32.mrf.mxu0
        %5356 = vmatprep.mubr.f32.mxu0 0.0
        %5357 = vmatmul.mubr.f32.gmra.mxu0 %v5241
        %v5358 = vpop.f32.mrf.mxu0
        %v5359 = vadd.f32 0.0, %v5358
        %v5360 = vpop.f32.mrf.mxu0
        %5361 = vmatprep.mubr.f32.mxu0 0.0
        %5362 = vmatmul.mubr.f32.gmra.mxu0 %v5244
        %v5363 = vpop.f32.mrf.mxu0
        %v5364 = vadd.f32 0.0, %v5363
        %v5365 = vpop.f32.mrf.mxu0
        %5366 = vmatprep.mubr.f32.mxu0 0.0
        %5367 = vmatmul.mubr.f32.gmra.mxu0 %v5247
        %v5368 = vpop.f32.mrf.mxu0
        %v5369 = vadd.f32 0.0, %v5368
        %v5370 = vpop.f32.mrf.mxu0
        %5371 = vmatprep.mubr.f32.mxu0 0.0
        %5372 = vmatmul.mubr.f32.gmra.mxu0 %v5250
        %v5373 = vpop.f32.mrf.mxu0
        %v5374 = vadd.f32 0.0, %v5373
        %v5375 = vpop.f32.mrf.mxu0
        %5376 = vmatprep.mubr.f32.mxu0 0.0
        %5377 = vmatmul.mubr.f32.gmra.mxu0 %v5253
        %v5378 = vpop.f32.mrf.mxu0
        %v5379 = vadd.f32 0.0, %v5378
        %v5380 = vpop.f32.mrf.mxu0
        %5381 = vmatprep.mubr.f32.mxu0 0.0
        %5382 = vmatmul.mubr.f32.gmra.mxu0 %v5256
        %v5383 = vpop.f32.mrf.mxu0
        %v5384 = vadd.f32 0.0, %v5383
        %v5385 = vpop.f32.mrf.mxu0
        %5386 = vdwg.mxu0
        %v5387 = vsel %vm1038, %v5349, -inf
        %5388 = vmax.xlane.f32.xlu0 %v5387
        %v5389 = vpop.xlane.xlu0 %5388
        %v5390 = vsel %vm1038, %v5354, -inf
        %5391 = vmax.xlane.f32.xlu0 %v5390
        %v5392 = vpop.xlane.xlu0 %5391
        %v5393 = vsel %vm1038, %v5359, -inf
        %5394 = vmax.xlane.f32.xlu0 %v5393
        %v5395 = vpop.xlane.xlu0 %5394
        %v5396 = vsel %vm1038, %v5364, -inf
        %5397 = vmax.xlane.f32.xlu0 %v5396
        %v5398 = vpop.xlane.xlu0 %5397
        %v5399 = vsel %vm1038, %v5369, -inf
        %5400 = vmax.xlane.f32.xlu0 %v5399
        %v5401 = vpop.xlane.xlu0 %5400
        %v5402 = vsel %vm1038, %v5374, -inf
        %5403 = vmax.xlane.f32.xlu0 %v5402
        %v5404 = vpop.xlane.xlu0 %5403
        %v5405 = vsel %vm1038, %v5379, -inf
        %5406 = vmax.xlane.f32.xlu0 %v5405
        %v5407 = vpop.xlane.xlu0 %5406
        %v5408 = vsel %vm1038, %v5384, -inf
        %5409 = vmax.xlane.f32.xlu0 %v5408
        %v5410 = vpop.xlane.xlu0 %5409
        %v5411 = vsub.f32 %v5349, %v5389
        %v5412 = vsub.f32 %v5354, %v5392
        %v5413 = vsub.f32 %v5359, %v5395
        %v5414 = vsub.f32 %v5364, %v5398
        %v5415 = vsub.f32 %v5369, %v5401
        %v5416 = vsub.f32 %v5374, %v5404
        %v5417 = vsub.f32 %v5379, %v5407
        %v5418 = vsub.f32 %v5384, %v5410
        %v5419 = vmul.f32 %v5411, 1.442695
        %v5420 = vpow.pop %v5419
        %v5421 = vmul.f32 %v5412, 1.442695
        %v5422 = vpow.pop %v5421
        %v5423 = vmul.f32 %v5413, 1.442695
        %v5424 = vpow.pop %v5423
        %v5425 = vmul.f32 %v5414, 1.442695
        %v5426 = vpow.pop %v5425
        %v5427 = vmul.f32 %v5415, 1.442695
        %v5428 = vpow.pop %v5427
        %v5429 = vmul.f32 %v5416, 1.442695
        %v5430 = vpow.pop %v5429
        %v5431 = vmul.f32 %v5417, 1.442695
        %v5432 = vpow.pop %v5431
        %v5433 = vmul.f32 %v5418, 1.442695
        %v5434 = vpow.pop %v5433
        %v5435 = vsel %vm1038, %v5420, 0.0
        %5436 = vadd.xlane.f32.xlu0 %v5435
        %v5437 = vpop.xlane.xlu0 %5436
        %v5438 = vsel %vm1038, %v5422, 0.0
        %5439 = vadd.xlane.f32.xlu0 %v5438
        %v5440 = vpop.xlane.xlu0 %5439
        %v5441 = vsel %vm1038, %v5424, 0.0
        %5442 = vadd.xlane.f32.xlu0 %v5441
        %v5443 = vpop.xlane.xlu0 %5442
        %v5444 = vsel %vm1038, %v5426, 0.0
        %5445 = vadd.xlane.f32.xlu0 %v5444
        %v5446 = vpop.xlane.xlu0 %5445
        %v5447 = vsel %vm1038, %v5428, 0.0
        %5448 = vadd.xlane.f32.xlu0 %v5447
        %v5449 = vpop.xlane.xlu0 %5448
        %v5450 = vsel %vm1038, %v5430, 0.0
        %5451 = vadd.xlane.f32.xlu0 %v5450
        %v5452 = vpop.xlane.xlu0 %5451
        %v5453 = vsel %vm1038, %v5432, 0.0
        %5454 = vadd.xlane.f32.xlu0 %v5453
        %v5455 = vpop.xlane.xlu0 %5454
        %v5456 = vsel %vm1038, %v5434, 0.0
        %5457 = vadd.xlane.f32.xlu0 %v5456
        %v5458 = vpop.xlane.xlu0 %5457
        %v5459 = vrcp.pop %v5437
        %v5460 = vrcp.pop %v5440
        %v5461 = vrcp.pop %v5443
        %v5462 = vrcp.pop %v5446
        %v5463 = vrcp.pop %v5449
        %v5464 = vrcp.pop %v5452
        %v5465 = vrcp.pop %v5455
        %v5466 = vrcp.pop %v5458
        %v5467 = vmul.f32 %v5420, %v5459
        %v5468 = vmul.f32 %v5422, %v5460
        %v5469 = vmul.f32 %v5424, %v5461
        %v5470 = vmul.f32 %v5426, %v5462
        %v5471 = vmul.f32 %v5428, %v5463
        %v5472 = vmul.f32 %v5430, %v5464
        %v5473 = vmul.f32 %v5432, %v5465
        %v5474 = vmul.f32 %v5434, %v5466
        %v5476 = vsel %vm1038, %v5467, 0
        %v5479 = vsel %vm1038, %v5468, 0
        %v5482 = vsel %vm1038, %v5469, 0
        %v5485 = vsel %vm1038, %v5470, 0
        %v5488 = vsel %vm1038, %v5471, 0
        %v5491 = vsel %vm1038, %v5472, 0
        %v5494 = vsel %vm1038, %v5473, 0
        %v5497 = vsel %vm1038, %v5474, 0
        %5499 = vmatprep.subr.mxu0 0.0
        %5500 = vmatpush1.msra.mxu0 0.0
        %5501 = vmatprep.subr.mxu0 0.0
        %5502 = vmatpush1.msra.mxu0 0.0
        %5503 = vmatprep.subr.mxu0 0.0
        %5504 = vmatpush1.msra.mxu0 0.0
        %5505 = vmatprep.subr.mxu0 0.0
        %5506 = vmatpush1.msra.mxu0 0.0
        %5507 = vmatprep.subr.mxu0 0.0
        %5508 = vmatpush1.msra.mxu0 0.0
        %5509 = vmatprep.subr.mxu0 0.0
        %5510 = vmatpush1.msra.mxu0 0.0
        %5511 = vmatprep.subr.mxu0 0.0
        %5512 = vmatpush1.msra.mxu0 0.0
        %5513 = vmatprep.subr.mxu0 0.0
        %5514 = vmatpush1.msra.mxu0 0.0
        %5515 = vmatprep.subr.mxu0 0.0
        %5516 = vmatpush1.msra.mxu0 %v5231
        %5517 = vmatprep.subr.mxu0 0.0
        %5518 = vmatpush1.msra.mxu0 %v5226
        %5519 = vmatprep.subr.mxu0 0.0
        %5520 = vmatpush1.msra.mxu0 %v5221
        %5521 = vmatprep.subr.mxu0 0.0
        %5522 = vmatpush1.msra.mxu0 %v5216
        %5523 = vmatprep.subr.mxu0 0.0
        %5524 = vmatpush1.msra.mxu0 %v5211
        %5525 = vmatprep.subr.mxu0 0.0
        %5526 = vmatpush1.msra.mxu0 %v5206
        %5527 = vmatprep.subr.mxu0 0.0
        %5528 = vmatpush1.msra.mxu0 %v5201
        %5529 = vmatprep.subr.mxu0 0.0
        %5530 = vmatpush1.msra.mxu0 %v5196
        %5531 = vmatprep.subr.mxu0 0.0
        %5532 = vmatpush2.msra.mxu0 0.0
        %5533 = vmatprep.subr.mxu0 0.0
        %5534 = vmatpush2.msra.mxu0 0.0
        %5535 = vmatprep.subr.mxu0 0.0
        %5536 = vmatpush2.msra.mxu0 0.0
        %5537 = vmatprep.subr.mxu0 0.0
        %5538 = vmatpush2.msra.mxu0 0.0
        %5539 = vmatprep.subr.mxu0 0.0
        %5540 = vmatpush2.msra.mxu0 0.0
        %5541 = vmatprep.subr.mxu0 0.0
        %5542 = vmatpush2.msra.mxu0 0.0
        %5543 = vmatprep.subr.mxu0 0.0
        %5544 = vmatpush2.msra.mxu0 0.0
        %5545 = vmatprep.subr.mxu0 0.0
        %5546 = vmatpush2.msra.mxu0 0.0
        %5547 = vmatprep.subr.mxu0 0.0
        %5548 = vmatpush2.msra.mxu0 0.0
        %5549 = vmatprep.subr.mxu0 0.0
        %5550 = vmatpush2.msra.mxu0 0.0
        %5551 = vmatprep.subr.mxu0 0.0
        %5552 = vmatpush2.msra.mxu0 0.0
        %5553 = vmatprep.subr.mxu0 0.0
        %5554 = vmatpush2.msra.mxu0 0.0
        %5555 = vmatprep.subr.mxu0 0.0
        %5556 = vmatpush2.msra.mxu0 0.0
        %5557 = vmatprep.subr.mxu0 0.0
        %5558 = vmatpush2.msra.mxu0 0.0
        %5559 = vmatprep.subr.mxu0 0.0
        %5560 = vmatpush2.msra.mxu0 0.0
        %5561 = vmatprep.subr.mxu0 0.0
        %5562 = vmatpush2.msra.mxu0 0.0
        %5563 = vmatprep.mubr.f32.mxu0 0.0
        %5564 = vmatmul.mubr.f32.gmra.mxu0 %v5476
        %v5565 = vpop.f32.mrf.mxu0
        %v5566 = vadd.f32 0.0, %v5565
        %v5567 = vpop.f32.mrf.mxu0
        %5568 = vmatprep.mubr.f32.mxu0 0.0
        %5569 = vmatmul.mubr.f32.gmra.mxu0 %v5479
        %v5570 = vpop.f32.mrf.mxu0
        %v5571 = vadd.f32 0.0, %v5570
        %v5572 = vpop.f32.mrf.mxu0
        %5573 = vmatprep.mubr.f32.mxu0 0.0
        %5574 = vmatmul.mubr.f32.gmra.mxu0 %v5482
        %v5575 = vpop.f32.mrf.mxu0
        %v5576 = vadd.f32 0.0, %v5575
        %v5577 = vpop.f32.mrf.mxu0
        %5578 = vmatprep.mubr.f32.mxu0 0.0
        %5579 = vmatmul.mubr.f32.gmra.mxu0 %v5485
        %v5580 = vpop.f32.mrf.mxu0
        %v5581 = vadd.f32 0.0, %v5580
        %v5582 = vpop.f32.mrf.mxu0
        %5583 = vmatprep.mubr.f32.mxu0 0.0
        %5584 = vmatmul.mubr.f32.gmra.mxu0 %v5488
        %v5585 = vpop.f32.mrf.mxu0
        %v5586 = vadd.f32 0.0, %v5585
        %v5587 = vpop.f32.mrf.mxu0
        %5588 = vmatprep.mubr.f32.mxu0 0.0
        %5589 = vmatmul.mubr.f32.gmra.mxu0 %v5491
        %v5590 = vpop.f32.mrf.mxu0
        %v5591 = vadd.f32 0.0, %v5590
        %v5592 = vpop.f32.mrf.mxu0
        %5593 = vmatprep.mubr.f32.mxu0 0.0
        %5594 = vmatmul.mubr.f32.gmra.mxu0 %v5494
        %v5595 = vpop.f32.mrf.mxu0
        %v5596 = vadd.f32 0.0, %v5595
        %v5597 = vpop.f32.mrf.mxu0
        %5598 = vmatprep.mubr.f32.mxu0 0.0
        %5599 = vmatmul.mubr.f32.gmra.mxu0 %v5497
        %v5600 = vpop.f32.mrf.mxu0
        %v5601 = vadd.f32 0.0, %v5600
        %v5602 = vpop.f32.mrf.mxu0
        %5603 = vdwg.mxu0
        %s5604 = scalar_lea.vmem %s8, 8
        %v5605 = vld [vmem:[%s5604] sm:$0xff]
        %v5607 = vsel %vm884, %v5566, 0
        %v5610 = vsel %vm884, %v5571, 0
        %v5613 = vsel %vm884, %v5576, 0
        %v5616 = vsel %vm884, %v5581, 0
        %v5619 = vsel %vm884, %v5586, 0
        %v5622 = vsel %vm884, %v5591, 0
        %v5625 = vsel %vm884, %v5596, 0
        %v5628 = vsel %vm884, %v5601, 0
        %5630 = vmatprep.subr.mxu0 0.0
        %5631 = vmatpush1.msra.mxu0 0.0
        %5632 = vmatprep.subr.mxu0 0.0
        %5633 = vmatpush1.msra.mxu0 0.0
        %5634 = vmatprep.subr.mxu0 0.0
        %5635 = vmatpush1.msra.mxu0 0.0
        %5636 = vmatprep.subr.mxu0 0.0
        %5637 = vmatpush1.msra.mxu0 0.0
        %5638 = vmatprep.subr.mxu0 0.0
        %5639 = vmatpush1.msra.mxu0 0.0
        %5640 = vmatprep.subr.mxu0 0.0
        %5641 = vmatpush1.msra.mxu0 0.0
        %5642 = vmatprep.subr.mxu0 0.0
        %5643 = vmatpush1.msra.mxu0 0.0
        %5644 = vmatprep.subr.mxu0 0.0
        %5645 = vmatpush1.msra.mxu0 0.0
        %5646 = vmatprep.subr.mxu0 0.0
        %5647 = vmatpush1.msra.mxu0 0.0
        %5648 = vmatprep.subr.mxu0 0.0
        %5649 = vmatpush1.msra.mxu0 0.0
        %5650 = vmatprep.subr.mxu0 0.0
        %5651 = vmatpush1.msra.mxu0 0.0
        %5652 = vmatprep.subr.mxu0 0.0
        %5653 = vmatpush1.msra.mxu0 0.0
        %5654 = vmatprep.subr.mxu0 0.0
        %5655 = vmatpush1.msra.mxu0 0.0
        %5656 = vmatprep.subr.mxu0 0.0
        %5657 = vmatpush1.msra.mxu0 0.0
        %5658 = vmatprep.subr.mxu0 0.0
        %5659 = vmatpush1.msra.mxu0 0.0
        %5660 = vmatprep.subr.mxu0 0.0
        %5661 = vmatpush1.msra.mxu0 %v5605
        %5662 = vmatprep.subr.mxu0 0.0
        %5663 = vmatpush2.msra.mxu0 0.0
        %5664 = vmatprep.subr.mxu0 0.0
        %5665 = vmatpush2.msra.mxu0 0.0
        %5666 = vmatprep.subr.mxu0 0.0
        %5667 = vmatpush2.msra.mxu0 0.0
        %5668 = vmatprep.subr.mxu0 0.0
        %5669 = vmatpush2.msra.mxu0 0.0
        %5670 = vmatprep.subr.mxu0 0.0
        %5671 = vmatpush2.msra.mxu0 0.0
        %5672 = vmatprep.subr.mxu0 0.0
        %5673 = vmatpush2.msra.mxu0 0.0
        %5674 = vmatprep.subr.mxu0 0.0
        %5675 = vmatpush2.msra.mxu0 0.0
        %5676 = vmatprep.subr.mxu0 0.0
        %5677 = vmatpush2.msra.mxu0 0.0
        %5678 = vmatprep.subr.mxu0 0.0
        %5679 = vmatpush2.msra.mxu0 0.0
        %5680 = vmatprep.subr.mxu0 0.0
        %5681 = vmatpush2.msra.mxu0 0.0
        %5682 = vmatprep.subr.mxu0 0.0
        %5683 = vmatpush2.msra.mxu0 0.0
        %5684 = vmatprep.subr.mxu0 0.0
        %5685 = vmatpush2.msra.mxu0 0.0
        %5686 = vmatprep.subr.mxu0 0.0
        %5687 = vmatpush2.msra.mxu0 0.0
        %5688 = vmatprep.subr.mxu0 0.0
        %5689 = vmatpush2.msra.mxu0 0.0
        %5690 = vmatprep.subr.mxu0 0.0
        %5691 = vmatpush2.msra.mxu0 0.0
        %5692 = vmatprep.subr.mxu0 0.0
        %5693 = vmatpush2.msra.mxu0 0.0
        %5694 = vmatprep.mubr.f32.mxu0 0.0
        %5695 = vmatmul.mubr.f32.gmra.mxu0 %v5607
        %v5696 = vpop.f32.mrf.mxu0
        %v5697 = vadd.f32 0.0, %v5696
        %v5698 = vpop.f32.mrf.mxu0
        %5699 = vmatprep.mubr.f32.mxu0 0.0
        %5700 = vmatmul.mubr.f32.gmra.mxu0 %v5610
        %v5701 = vpop.f32.mrf.mxu0
        %v5702 = vadd.f32 0.0, %v5701
        %v5703 = vpop.f32.mrf.mxu0
        %5704 = vmatprep.mubr.f32.mxu0 0.0
        %5705 = vmatmul.mubr.f32.gmra.mxu0 %v5613
        %v5706 = vpop.f32.mrf.mxu0
        %v5707 = vadd.f32 0.0, %v5706
        %v5708 = vpop.f32.mrf.mxu0
        %5709 = vmatprep.mubr.f32.mxu0 0.0
        %5710 = vmatmul.mubr.f32.gmra.mxu0 %v5616
        %v5711 = vpop.f32.mrf.mxu0
        %v5712 = vadd.f32 0.0, %v5711
        %v5713 = vpop.f32.mrf.mxu0
        %5714 = vmatprep.mubr.f32.mxu0 0.0
        %5715 = vmatmul.mubr.f32.gmra.mxu0 %v5619
        %v5716 = vpop.f32.mrf.mxu0
        %v5717 = vadd.f32 0.0, %v5716
        %v5718 = vpop.f32.mrf.mxu0
        %5719 = vmatprep.mubr.f32.mxu0 0.0
        %5720 = vmatmul.mubr.f32.gmra.mxu0 %v5622
        %v5721 = vpop.f32.mrf.mxu0
        %v5722 = vadd.f32 0.0, %v5721
        %v5723 = vpop.f32.mrf.mxu0
        %5724 = vmatprep.mubr.f32.mxu0 0.0
        %5725 = vmatmul.mubr.f32.gmra.mxu0 %v5625
        %v5726 = vpop.f32.mrf.mxu0
        %v5727 = vadd.f32 0.0, %v5726
        %v5728 = vpop.f32.mrf.mxu0
        %5729 = vmatprep.mubr.f32.mxu0 0.0
        %5730 = vmatmul.mubr.f32.gmra.mxu0 %v5628
        %v5731 = vpop.f32.mrf.mxu0
        %v5732 = vadd.f32 0.0, %v5731
        %v5733 = vpop.f32.mrf.mxu0
        %5734 = vdwg.mxu0
        %s5735 = scalar_lea.vmem %s6, 64
        %v5736 = vld [vmem:[%s5735] sm:$0xff]
        %v5737 = vld [vmem:[%s5735 + $0x8] sm:$0xff]
        %v5738 = vld [vmem:[%s5735 + $0x10] sm:$0xff]
        %v5739 = vld [vmem:[%s5735 + $0x18] sm:$0xff]
        %s5740 = scalar_lea.vmem %s7, 2
        %v5741 = vld [vmem:[%s5740] sm:$0x1]
        %v5743 = vlaneseq
        %v5744 = vshrl.u32 %v5743, 7
        %v5745 = vsub.s32 0, %v5744
        %v5746 = vrot.slane %v5741, %v5745
        %5748 = vmatprep.subr.mxu0 0.0
        %5749 = vmatpush1.msra.mxu0 0.0
        %5750 = vmatprep.subr.mxu0 0.0
        %5751 = vmatpush1.msra.mxu0 0.0
        %5752 = vmatprep.subr.mxu0 0.0
        %5753 = vmatpush1.msra.mxu0 0.0
        %5754 = vmatprep.subr.mxu0 0.0
        %5755 = vmatpush1.msra.mxu0 0.0
        %5756 = vmatprep.subr.mxu0 0.0
        %5757 = vmatpush1.msra.mxu0 0.0
        %5758 = vmatprep.subr.mxu0 0.0
        %5759 = vmatpush1.msra.mxu0 0.0
        %5760 = vmatprep.subr.mxu0 0.0
        %5761 = vmatpush1.msra.mxu0 0.0
        %5762 = vmatprep.subr.mxu0 0.0
        %5763 = vmatpush1.msra.mxu0 0.0
        %5764 = vmatprep.subr.mxu0 0.0
        %5765 = vmatpush1.msra.mxu0 0.0
        %5766 = vmatprep.subr.mxu0 0.0
        %5767 = vmatpush1.msra.mxu0 0.0
        %5768 = vmatprep.subr.mxu0 0.0
        %5769 = vmatpush1.msra.mxu0 0.0
        %5770 = vmatprep.subr.mxu0 0.0
        %5771 = vmatpush1.msra.mxu0 0.0
        %5772 = vmatprep.subr.mxu0 0.0
        %5773 = vmatpush1.msra.mxu0 %v5739
        %5774 = vmatprep.subr.mxu0 0.0
        %5775 = vmatpush1.msra.mxu0 %v5738
        %5776 = vmatprep.subr.mxu0 0.0
        %5777 = vmatpush1.msra.mxu0 %v5737
        %5778 = vmatprep.subr.mxu0 0.0
        %5779 = vmatpush1.msra.mxu0 %v5736
        %5780 = vmatprep.subr.mxu0 0.0
        %5781 = vmatpush2.msra.mxu0 0.0
        %5782 = vmatprep.subr.mxu0 0.0
        %5783 = vmatpush2.msra.mxu0 0.0
        %5784 = vmatprep.subr.mxu0 0.0
        %5785 = vmatpush2.msra.mxu0 0.0
        %5786 = vmatprep.subr.mxu0 0.0
        %5787 = vmatpush2.msra.mxu0 0.0
        %5788 = vmatprep.subr.mxu0 0.0
        %5789 = vmatpush2.msra.mxu0 0.0
        %5790 = vmatprep.subr.mxu0 0.0
        %5791 = vmatpush2.msra.mxu0 0.0
        %5792 = vmatprep.subr.mxu0 0.0
        %5793 = vmatpush2.msra.mxu0 0.0
        %5794 = vmatprep.subr.mxu0 0.0
        %5795 = vmatpush2.msra.mxu0 0.0
        %5796 = vmatprep.subr.mxu0 0.0
        %5797 = vmatpush2.msra.mxu0 0.0
        %5798 = vmatprep.subr.mxu0 0.0
        %5799 = vmatpush2.msra.mxu0 0.0
        %5800 = vmatprep.subr.mxu0 0.0
        %5801 = vmatpush2.msra.mxu0 0.0
        %5802 = vmatprep.subr.mxu0 0.0
        %5803 = vmatpush2.msra.mxu0 0.0
        %5804 = vmatprep.subr.mxu0 0.0
        %5805 = vmatpush2.msra.mxu0 0.0
        %5806 = vmatprep.subr.mxu0 0.0
        %5807 = vmatpush2.msra.mxu0 0.0
        %5808 = vmatprep.subr.mxu0 0.0
        %5809 = vmatpush2.msra.mxu0 0.0
        %5810 = vmatprep.subr.mxu0 0.0
        %5811 = vmatpush2.msra.mxu0 0.0
        %5812 = vmatprep.mubr.f32.mxu0 0.0
        %5813 = vmatmul.mubr.f32.gmra.mxu0 %v4121
        %v5814 = vpop.f32.mrf.mxu0
        %v5815 = vadd.f32 %v5746, %v5814
        %v5816 = vpop.f32.mrf.mxu0
        %5817 = vmatprep.mubr.f32.mxu0 0.0
        %5818 = vmatmul.mubr.f32.gmra.mxu0 %v4124
        %v5819 = vpop.f32.mrf.mxu0
        %v5820 = vadd.f32 %v5746, %v5819
        %v5821 = vpop.f32.mrf.mxu0
        %5822 = vmatprep.mubr.f32.mxu0 0.0
        %5823 = vmatmul.mubr.f32.gmra.mxu0 %v4127
        %v5824 = vpop.f32.mrf.mxu0
        %v5825 = vadd.f32 %v5746, %v5824
        %v5826 = vpop.f32.mrf.mxu0
        %5827 = vmatprep.mubr.f32.mxu0 0.0
        %5828 = vmatmul.mubr.f32.gmra.mxu0 %v4130
        %v5829 = vpop.f32.mrf.mxu0
        %v5830 = vadd.f32 %v5746, %v5829
        %v5831 = vpop.f32.mrf.mxu0
        %5832 = vmatprep.mubr.f32.mxu0 0.0
        %5833 = vmatmul.mubr.f32.gmra.mxu0 %v4133
        %v5834 = vpop.f32.mrf.mxu0
        %v5835 = vadd.f32 %v5746, %v5834
        %v5836 = vpop.f32.mrf.mxu0
        %5837 = vmatprep.mubr.f32.mxu0 0.0
        %5838 = vmatmul.mubr.f32.gmra.mxu0 %v4136
        %v5839 = vpop.f32.mrf.mxu0
        %v5840 = vadd.f32 %v5746, %v5839
        %v5841 = vpop.f32.mrf.mxu0
        %5842 = vmatprep.mubr.f32.mxu0 0.0
        %5843 = vmatmul.mubr.f32.gmra.mxu0 %v4139
        %v5844 = vpop.f32.mrf.mxu0
        %v5845 = vadd.f32 %v5746, %v5844
        %v5846 = vpop.f32.mrf.mxu0
        %5847 = vmatprep.mubr.f32.mxu0 0.0
        %5848 = vmatmul.mubr.f32.gmra.mxu0 %v4142
        %v5849 = vpop.f32.mrf.mxu0
        %v5850 = vadd.f32 %v5746, %v5849
        %v5851 = vpop.f32.mrf.mxu0
        %5852 = vdwg.mxu0
        %s5853 = scalar_lea.vmem %s6, 192
        %v5854 = vld [vmem:[%s5853] sm:$0xff]
        %v5855 = vld [vmem:[%s5853 + $0x8] sm:$0xff]
        %v5856 = vld [vmem:[%s5853 + $0x10] sm:$0xff]
        %v5857 = vld [vmem:[%s5853 + $0x18] sm:$0xff]
        %s5858 = scalar_lea.vmem %s7, 6
        %v5859 = vld [vmem:[%s5858] sm:$0x1]
        %v5861 = vlaneseq
        %v5862 = vshrl.u32 %v5861, 7
        %v5863 = vsub.s32 0, %v5862
        %v5864 = vrot.slane %v5859, %v5863
        %5866 = vmatprep.subr.mxu0 0.0
        %5867 = vmatpush1.msra.mxu0 0.0
        %5868 = vmatprep.subr.mxu0 0.0
        %5869 = vmatpush1.msra.mxu0 0.0
        %5870 = vmatprep.subr.mxu0 0.0
        %5871 = vmatpush1.msra.mxu0 0.0
        %5872 = vmatprep.subr.mxu0 0.0
        %5873 = vmatpush1.msra.mxu0 0.0
        %5874 = vmatprep.subr.mxu0 0.0
        %5875 = vmatpush1.msra.mxu0 0.0
        %5876 = vmatprep.subr.mxu0 0.0
        %5877 = vmatpush1.msra.mxu0 0.0
        %5878 = vmatprep.subr.mxu0 0.0
        %5879 = vmatpush1.msra.mxu0 0.0
        %5880 = vmatprep.subr.mxu0 0.0
        %5881 = vmatpush1.msra.mxu0 0.0
        %5882 = vmatprep.subr.mxu0 0.0
        %5883 = vmatpush1.msra.mxu0 0.0
        %5884 = vmatprep.subr.mxu0 0.0
        %5885 = vmatpush1.msra.mxu0 0.0
        %5886 = vmatprep.subr.mxu0 0.0
        %5887 = vmatpush1.msra.mxu0 0.0
        %5888 = vmatprep.subr.mxu0 0.0
        %5889 = vmatpush1.msra.mxu0 0.0
        %5890 = vmatprep.subr.mxu0 0.0
        %5891 = vmatpush1.msra.mxu0 %v5857
        %5892 = vmatprep.subr.mxu0 0.0
        %5893 = vmatpush1.msra.mxu0 %v5856
        %5894 = vmatprep.subr.mxu0 0.0
        %5895 = vmatpush1.msra.mxu0 %v5855
        %5896 = vmatprep.subr.mxu0 0.0
        %5897 = vmatpush1.msra.mxu0 %v5854
        %5898 = vmatprep.subr.mxu0 0.0
        %5899 = vmatpush2.msra.mxu0 0.0
        %5900 = vmatprep.subr.mxu0 0.0
        %5901 = vmatpush2.msra.mxu0 0.0
        %5902 = vmatprep.subr.mxu0 0.0
        %5903 = vmatpush2.msra.mxu0 0.0
        %5904 = vmatprep.subr.mxu0 0.0
        %5905 = vmatpush2.msra.mxu0 0.0
        %5906 = vmatprep.subr.mxu0 0.0
        %5907 = vmatpush2.msra.mxu0 0.0
        %5908 = vmatprep.subr.mxu0 0.0
        %5909 = vmatpush2.msra.mxu0 0.0
        %5910 = vmatprep.subr.mxu0 0.0
        %5911 = vmatpush2.msra.mxu0 0.0
        %5912 = vmatprep.subr.mxu0 0.0
        %5913 = vmatpush2.msra.mxu0 0.0
        %5914 = vmatprep.subr.mxu0 0.0
        %5915 = vmatpush2.msra.mxu0 0.0
        %5916 = vmatprep.subr.mxu0 0.0
        %5917 = vmatpush2.msra.mxu0 0.0
        %5918 = vmatprep.subr.mxu0 0.0
        %5919 = vmatpush2.msra.mxu0 0.0
        %5920 = vmatprep.subr.mxu0 0.0
        %5921 = vmatpush2.msra.mxu0 0.0
        %5922 = vmatprep.subr.mxu0 0.0
        %5923 = vmatpush2.msra.mxu0 0.0
        %5924 = vmatprep.subr.mxu0 0.0
        %5925 = vmatpush2.msra.mxu0 0.0
        %5926 = vmatprep.subr.mxu0 0.0
        %5927 = vmatpush2.msra.mxu0 0.0
        %5928 = vmatprep.subr.mxu0 0.0
        %5929 = vmatpush2.msra.mxu0 0.0
        %5930 = vmatprep.mubr.f32.mxu0 0.0
        %5931 = vmatmul.mubr.f32.gmra.mxu0 %v4263
        %v5932 = vpop.f32.mrf.mxu0
        %v5933 = vadd.f32 %v5864, %v5932
        %v5934 = vpop.f32.mrf.mxu0
        %5935 = vmatprep.mubr.f32.mxu0 0.0
        %5936 = vmatmul.mubr.f32.gmra.mxu0 %v4266
        %v5937 = vpop.f32.mrf.mxu0
        %v5938 = vadd.f32 %v5864, %v5937
        %v5939 = vpop.f32.mrf.mxu0
        %5940 = vmatprep.mubr.f32.mxu0 0.0
        %5941 = vmatmul.mubr.f32.gmra.mxu0 %v4269
        %v5942 = vpop.f32.mrf.mxu0
        %v5943 = vadd.f32 %v5864, %v5942
        %v5944 = vpop.f32.mrf.mxu0
        %5945 = vmatprep.mubr.f32.mxu0 0.0
        %5946 = vmatmul.mubr.f32.gmra.mxu0 %v4272
        %v5947 = vpop.f32.mrf.mxu0
        %v5948 = vadd.f32 %v5864, %v5947
        %v5949 = vpop.f32.mrf.mxu0
        %5950 = vmatprep.mubr.f32.mxu0 0.0
        %5951 = vmatmul.mubr.f32.gmra.mxu0 %v4275
        %v5952 = vpop.f32.mrf.mxu0
        %v5953 = vadd.f32 %v5864, %v5952
        %v5954 = vpop.f32.mrf.mxu0
        %5955 = vmatprep.mubr.f32.mxu0 0.0
        %5956 = vmatmul.mubr.f32.gmra.mxu0 %v4278
        %v5957 = vpop.f32.mrf.mxu0
        %v5958 = vadd.f32 %v5864, %v5957
        %v5959 = vpop.f32.mrf.mxu0
        %5960 = vmatprep.mubr.f32.mxu0 0.0
        %5961 = vmatmul.mubr.f32.gmra.mxu0 %v4281
        %v5962 = vpop.f32.mrf.mxu0
        %v5963 = vadd.f32 %v5864, %v5962
        %v5964 = vpop.f32.mrf.mxu0
        %5965 = vmatprep.mubr.f32.mxu0 0.0
        %5966 = vmatmul.mubr.f32.gmra.mxu0 %v4284
        %v5967 = vpop.f32.mrf.mxu0
        %v5968 = vadd.f32 %v5864, %v5967
        %v5969 = vpop.f32.mrf.mxu0
        %5970 = vdwg.mxu0
        %s5971 = scalar_lea.vmem %s6, 320
        %v5972 = vld [vmem:[%s5971] sm:$0xff]
        %v5973 = vld [vmem:[%s5971 + $0x8] sm:$0xff]
        %v5974 = vld [vmem:[%s5971 + $0x10] sm:$0xff]
        %v5975 = vld [vmem:[%s5971 + $0x18] sm:$0xff]
        %s5976 = scalar_lea.vmem %s7, 10
        %v5977 = vld [vmem:[%s5976] sm:$0x1]
        %v5979 = vlaneseq
        %v5980 = vshrl.u32 %v5979, 7
        %v5981 = vsub.s32 0, %v5980
        %v5982 = vrot.slane %v5977, %v5981
        %5984 = vmatprep.subr.mxu0 0.0
        %5985 = vmatpush1.msra.mxu0 0.0
        %5986 = vmatprep.subr.mxu0 0.0
        %5987 = vmatpush1.msra.mxu0 0.0
        %5988 = vmatprep.subr.mxu0 0.0
        %5989 = vmatpush1.msra.mxu0 0.0
        %5990 = vmatprep.subr.mxu0 0.0
        %5991 = vmatpush1.msra.mxu0 0.0
        %5992 = vmatprep.subr.mxu0 0.0
        %5993 = vmatpush1.msra.mxu0 0.0
        %5994 = vmatprep.subr.mxu0 0.0
        %5995 = vmatpush1.msra.mxu0 0.0
        %5996 = vmatprep.subr.mxu0 0.0
        %5997 = vmatpush1.msra.mxu0 0.0
        %5998 = vmatprep.subr.mxu0 0.0
        %5999 = vmatpush1.msra.mxu0 0.0
        %6000 = vmatprep.subr.mxu0 0.0
        %6001 = vmatpush1.msra.mxu0 0.0
        %6002 = vmatprep.subr.mxu0 0.0
        %6003 = vmatpush1.msra.mxu0 0.0
        %6004 = vmatprep.subr.mxu0 0.0
        %6005 = vmatpush1.msra.mxu0 0.0
        %6006 = vmatprep.subr.mxu0 0.0
        %6007 = vmatpush1.msra.mxu0 0.0
        %6008 = vmatprep.subr.mxu0 0.0
        %6009 = vmatpush1.msra.mxu0 %v5975
        %6010 = vmatprep.subr.mxu0 0.0
        %6011 = vmatpush1.msra.mxu0 %v5974
        %6012 = vmatprep.subr.mxu0 0.0
        %6013 = vmatpush1.msra.mxu0 %v5973
        %6014 = vmatprep.subr.mxu0 0.0
        %6015 = vmatpush1.msra.mxu0 %v5972
        %6016 = vmatprep.subr.mxu0 0.0
        %6017 = vmatpush2.msra.mxu0 0.0
        %6018 = vmatprep.subr.mxu0 0.0
        %6019 = vmatpush2.msra.mxu0 0.0
        %6020 = vmatprep.subr.mxu0 0.0
        %6021 = vmatpush2.msra.mxu0 0.0
        %6022 = vmatprep.subr.mxu0 0.0
        %6023 = vmatpush2.msra.mxu0 0.0
        %6024 = vmatprep.subr.mxu0 0.0
        %6025 = vmatpush2.msra.mxu0 0.0
        %6026 = vmatprep.subr.mxu0 0.0
        %6027 = vmatpush2.msra.mxu0 0.0
        %6028 = vmatprep.subr.mxu0 0.0
        %6029 = vmatpush2.msra.mxu0 0.0
        %6030 = vmatprep.subr.mxu0 0.0
        %6031 = vmatpush2.msra.mxu0 0.0
        %6032 = vmatprep.subr.mxu0 0.0
        %6033 = vmatpush2.msra.mxu0 0.0
        %6034 = vmatprep.subr.mxu0 0.0
        %6035 = vmatpush2.msra.mxu0 0.0
        %6036 = vmatprep.subr.mxu0 0.0
        %6037 = vmatpush2.msra.mxu0 0.0
        %6038 = vmatprep.subr.mxu0 0.0
        %6039 = vmatpush2.msra.mxu0 0.0
        %6040 = vmatprep.subr.mxu0 0.0
        %6041 = vmatpush2.msra.mxu0 0.0
        %6042 = vmatprep.subr.mxu0 0.0
        %6043 = vmatpush2.msra.mxu0 0.0
        %6044 = vmatprep.subr.mxu0 0.0
        %6045 = vmatpush2.msra.mxu0 0.0
        %6046 = vmatprep.subr.mxu0 0.0
        %6047 = vmatpush2.msra.mxu0 0.0
        %6048 = vmatprep.mubr.f32.mxu0 0.0
        %6049 = vmatmul.mubr.f32.gmra.mxu0 %v4263
        %v6050 = vpop.f32.mrf.mxu0
        %v6051 = vadd.f32 %v5982, %v6050
        %v6052 = vpop.f32.mrf.mxu0
        %6053 = vmatprep.mubr.f32.mxu0 0.0
        %6054 = vmatmul.mubr.f32.gmra.mxu0 %v4266
        %v6055 = vpop.f32.mrf.mxu0
        %v6056 = vadd.f32 %v5982, %v6055
        %v6057 = vpop.f32.mrf.mxu0
        %6058 = vmatprep.mubr.f32.mxu0 0.0
        %6059 = vmatmul.mubr.f32.gmra.mxu0 %v4269
        %v6060 = vpop.f32.mrf.mxu0
        %v6061 = vadd.f32 %v5982, %v6060
        %v6062 = vpop.f32.mrf.mxu0
        %6063 = vmatprep.mubr.f32.mxu0 0.0
        %6064 = vmatmul.mubr.f32.gmra.mxu0 %v4272
        %v6065 = vpop.f32.mrf.mxu0
        %v6066 = vadd.f32 %v5982, %v6065
        %v6067 = vpop.f32.mrf.mxu0
        %6068 = vmatprep.mubr.f32.mxu0 0.0
        %6069 = vmatmul.mubr.f32.gmra.mxu0 %v4275
        %v6070 = vpop.f32.mrf.mxu0
        %v6071 = vadd.f32 %v5982, %v6070
        %v6072 = vpop.f32.mrf.mxu0
        %6073 = vmatprep.mubr.f32.mxu0 0.0
        %6074 = vmatmul.mubr.f32.gmra.mxu0 %v4278
        %v6075 = vpop.f32.mrf.mxu0
        %v6076 = vadd.f32 %v5982, %v6075
        %v6077 = vpop.f32.mrf.mxu0
        %6078 = vmatprep.mubr.f32.mxu0 0.0
        %6079 = vmatmul.mubr.f32.gmra.mxu0 %v4281
        %v6080 = vpop.f32.mrf.mxu0
        %v6081 = vadd.f32 %v5982, %v6080
        %v6082 = vpop.f32.mrf.mxu0
        %6083 = vmatprep.mubr.f32.mxu0 0.0
        %6084 = vmatmul.mubr.f32.gmra.mxu0 %v4284
        %v6085 = vpop.f32.mrf.mxu0
        %v6086 = vadd.f32 %v5982, %v6085
        %v6087 = vpop.f32.mrf.mxu0
        %6088 = vdwg.mxu0
        %v6090 = vsel %vm884, %v5815, 0
        %v6093 = vsel %vm884, %v5820, 0
        %v6096 = vsel %vm884, %v5825, 0
        %v6099 = vsel %vm884, %v5830, 0
        %v6102 = vsel %vm884, %v5835, 0
        %v6105 = vsel %vm884, %v5840, 0
        %v6108 = vsel %vm884, %v5845, 0
        %v6111 = vsel %vm884, %v5850, 0
        %v6114 = vsel %vm884, %v5933, 0
        %v6117 = vsel %vm884, %v5938, 0
        %v6120 = vsel %vm884, %v5943, 0
        %v6123 = vsel %vm884, %v5948, 0
        %v6126 = vsel %vm884, %v5953, 0
        %v6129 = vsel %vm884, %v5958, 0
        %v6132 = vsel %vm884, %v5963, 0
        %v6135 = vsel %vm884, %v5968, 0
        %6137 = vmatprep.subr.mxu0 0.0
        %6138 = vmatpush1.xpose.msra.mxu0 0.0
        %6139 = vmatprep.subr.mxu0 0.0
        %6140 = vmatpush1.xpose.msra.mxu0 0.0
        %6141 = vmatprep.subr.mxu0 0.0
        %6142 = vmatpush1.xpose.msra.mxu0 0.0
        %6143 = vmatprep.subr.mxu0 0.0
        %6144 = vmatpush1.xpose.msra.mxu0 0.0
        %6145 = vmatprep.subr.mxu0 0.0
        %6146 = vmatpush1.xpose.msra.mxu0 0.0
        %6147 = vmatprep.subr.mxu0 0.0
        %6148 = vmatpush1.xpose.msra.mxu0 0.0
        %6149 = vmatprep.subr.mxu0 0.0
        %6150 = vmatpush1.xpose.msra.mxu0 0.0
        %6151 = vmatprep.subr.mxu0 0.0
        %6152 = vmatpush1.xpose.msra.mxu0 0.0
        %6153 = vmatprep.subr.mxu0 0.0
        %6154 = vmatpush1.xpose.msra.mxu0 %v6135
        %6155 = vmatprep.subr.mxu0 0.0
        %6156 = vmatpush1.xpose.msra.mxu0 %v6132
        %6157 = vmatprep.subr.mxu0 0.0
        %6158 = vmatpush1.xpose.msra.mxu0 %v6129
        %6159 = vmatprep.subr.mxu0 0.0
        %6160 = vmatpush1.xpose.msra.mxu0 %v6126
        %6161 = vmatprep.subr.mxu0 0.0
        %6162 = vmatpush1.xpose.msra.mxu0 %v6123
        %6163 = vmatprep.subr.mxu0 0.0
        %6164 = vmatpush1.xpose.msra.mxu0 %v6120
        %6165 = vmatprep.subr.mxu0 0.0
        %6166 = vmatpush1.xpose.msra.mxu0 %v6117
        %6167 = vmatprep.subr.mxu0 0.0
        %6168 = vmatpush1.xpose.msra.mxu0 %v6114
        %6169 = vmatprep.subr.mxu0 0.0
        %6170 = vmatpush2.xpose.msra.mxu0 0.0
        %6171 = vmatprep.subr.mxu0 0.0
        %6172 = vmatpush2.xpose.msra.mxu0 0.0
        %6173 = vmatprep.subr.mxu0 0.0
        %6174 = vmatpush2.xpose.msra.mxu0 0.0
        %6175 = vmatprep.subr.mxu0 0.0
        %6176 = vmatpush2.xpose.msra.mxu0 0.0
        %6177 = vmatprep.subr.mxu0 0.0
        %6178 = vmatpush2.xpose.msra.mxu0 0.0
        %6179 = vmatprep.subr.mxu0 0.0
        %6180 = vmatpush2.xpose.msra.mxu0 0.0
        %6181 = vmatprep.subr.mxu0 0.0
        %6182 = vmatpush2.xpose.msra.mxu0 0.0
        %6183 = vmatprep.subr.mxu0 0.0
        %6184 = vmatpush2.xpose.msra.mxu0 0.0
        %6185 = vmatprep.subr.mxu0 0.0
        %6186 = vmatpush2.xpose.msra.mxu0 0.0
        %6187 = vmatprep.subr.mxu0 0.0
        %6188 = vmatpush2.xpose.msra.mxu0 0.0
        %6189 = vmatprep.subr.mxu0 0.0
        %6190 = vmatpush2.xpose.msra.mxu0 0.0
        %6191 = vmatprep.subr.mxu0 0.0
        %6192 = vmatpush2.xpose.msra.mxu0 0.0
        %6193 = vmatprep.subr.mxu0 0.0
        %6194 = vmatpush2.xpose.msra.mxu0 0.0
        %6195 = vmatprep.subr.mxu0 0.0
        %6196 = vmatpush2.xpose.msra.mxu0 0.0
        %6197 = vmatprep.subr.mxu0 0.0
        %6198 = vmatpush2.xpose.msra.mxu0 0.0
        %6199 = vmatprep.subr.mxu0 0.0
        %6200 = vmatpush2.xpose.msra.mxu0 0.0
        %6201 = vmatprep.mubr.f32.mxu0 0.0
        %6202 = vmatmul.mubr.f32.gmra.mxu0 %v6090
        %v6203 = vpop.f32.mrf.mxu0
        %v6204 = vadd.f32 0.0, %v6203
        %v6205 = vpop.f32.mrf.mxu0
        %6206 = vmatprep.mubr.f32.mxu0 0.0
        %6207 = vmatmul.mubr.f32.gmra.mxu0 %v6093
        %v6208 = vpop.f32.mrf.mxu0
        %v6209 = vadd.f32 0.0, %v6208
        %v6210 = vpop.f32.mrf.mxu0
        %6211 = vmatprep.mubr.f32.mxu0 0.0
        %6212 = vmatmul.mubr.f32.gmra.mxu0 %v6096
        %v6213 = vpop.f32.mrf.mxu0
        %v6214 = vadd.f32 0.0, %v6213
        %v6215 = vpop.f32.mrf.mxu0
        %6216 = vmatprep.mubr.f32.mxu0 0.0
        %6217 = vmatmul.mubr.f32.gmra.mxu0 %v6099
        %v6218 = vpop.f32.mrf.mxu0
        %v6219 = vadd.f32 0.0, %v6218
        %v6220 = vpop.f32.mrf.mxu0
        %6221 = vmatprep.mubr.f32.mxu0 0.0
        %6222 = vmatmul.mubr.f32.gmra.mxu0 %v6102
        %v6223 = vpop.f32.mrf.mxu0
        %v6224 = vadd.f32 0.0, %v6223
        %v6225 = vpop.f32.mrf.mxu0
        %6226 = vmatprep.mubr.f32.mxu0 0.0
        %6227 = vmatmul.mubr.f32.gmra.mxu0 %v6105
        %v6228 = vpop.f32.mrf.mxu0
        %v6229 = vadd.f32 0.0, %v6228
        %v6230 = vpop.f32.mrf.mxu0
        %6231 = vmatprep.mubr.f32.mxu0 0.0
        %6232 = vmatmul.mubr.f32.gmra.mxu0 %v6108
        %v6233 = vpop.f32.mrf.mxu0
        %v6234 = vadd.f32 0.0, %v6233
        %v6235 = vpop.f32.mrf.mxu0
        %6236 = vmatprep.mubr.f32.mxu0 0.0
        %6237 = vmatmul.mubr.f32.gmra.mxu0 %v6111
        %v6238 = vpop.f32.mrf.mxu0
        %v6239 = vadd.f32 0.0, %v6238
        %v6240 = vpop.f32.mrf.mxu0
        %6241 = vdwg.mxu0
        %v6242 = vsel %vm1038, %v6204, -inf
        %6243 = vmax.xlane.f32.xlu0 %v6242
        %v6244 = vpop.xlane.xlu0 %6243
        %v6245 = vsel %vm1038, %v6209, -inf
        %6246 = vmax.xlane.f32.xlu0 %v6245
        %v6247 = vpop.xlane.xlu0 %6246
        %v6248 = vsel %vm1038, %v6214, -inf
        %6249 = vmax.xlane.f32.xlu0 %v6248
        %v6250 = vpop.xlane.xlu0 %6249
        %v6251 = vsel %vm1038, %v6219, -inf
        %6252 = vmax.xlane.f32.xlu0 %v6251
        %v6253 = vpop.xlane.xlu0 %6252
        %v6254 = vsel %vm1038, %v6224, -inf
        %6255 = vmax.xlane.f32.xlu0 %v6254
        %v6256 = vpop.xlane.xlu0 %6255
        %v6257 = vsel %vm1038, %v6229, -inf
        %6258 = vmax.xlane.f32.xlu0 %v6257
        %v6259 = vpop.xlane.xlu0 %6258
        %v6260 = vsel %vm1038, %v6234, -inf
        %6261 = vmax.xlane.f32.xlu0 %v6260
        %v6262 = vpop.xlane.xlu0 %6261
        %v6263 = vsel %vm1038, %v6239, -inf
        %6264 = vmax.xlane.f32.xlu0 %v6263
        %v6265 = vpop.xlane.xlu0 %6264
        %v6266 = vsub.f32 %v6204, %v6244
        %v6267 = vsub.f32 %v6209, %v6247
        %v6268 = vsub.f32 %v6214, %v6250
        %v6269 = vsub.f32 %v6219, %v6253
        %v6270 = vsub.f32 %v6224, %v6256
        %v6271 = vsub.f32 %v6229, %v6259
        %v6272 = vsub.f32 %v6234, %v6262
        %v6273 = vsub.f32 %v6239, %v6265
        %v6274 = vmul.f32 %v6266, 1.442695
        %v6275 = vpow.pop %v6274
        %v6276 = vmul.f32 %v6267, 1.442695
        %v6277 = vpow.pop %v6276
        %v6278 = vmul.f32 %v6268, 1.442695
        %v6279 = vpow.pop %v6278
        %v6280 = vmul.f32 %v6269, 1.442695
        %v6281 = vpow.pop %v6280
        %v6282 = vmul.f32 %v6270, 1.442695
        %v6283 = vpow.pop %v6282
        %v6284 = vmul.f32 %v6271, 1.442695
        %v6285 = vpow.pop %v6284
        %v6286 = vmul.f32 %v6272, 1.442695
        %v6287 = vpow.pop %v6286
        %v6288 = vmul.f32 %v6273, 1.442695
        %v6289 = vpow.pop %v6288
        %v6290 = vsel %vm1038, %v6275, 0.0
        %6291 = vadd.xlane.f32.xlu0 %v6290
        %v6292 = vpop.xlane.xlu0 %6291
        %v6293 = vsel %vm1038, %v6277, 0.0
        %6294 = vadd.xlane.f32.xlu0 %v6293
        %v6295 = vpop.xlane.xlu0 %6294
        %v6296 = vsel %vm1038, %v6279, 0.0
        %6297 = vadd.xlane.f32.xlu0 %v6296
        %v6298 = vpop.xlane.xlu0 %6297
        %v6299 = vsel %vm1038, %v6281, 0.0
        %6300 = vadd.xlane.f32.xlu0 %v6299
        %v6301 = vpop.xlane.xlu0 %6300
        %v6302 = vsel %vm1038, %v6283, 0.0
        %6303 = vadd.xlane.f32.xlu0 %v6302
        %v6304 = vpop.xlane.xlu0 %6303
        %v6305 = vsel %vm1038, %v6285, 0.0
        %6306 = vadd.xlane.f32.xlu0 %v6305
        %v6307 = vpop.xlane.xlu0 %6306
        %v6308 = vsel %vm1038, %v6287, 0.0
        %6309 = vadd.xlane.f32.xlu0 %v6308
        %v6310 = vpop.xlane.xlu0 %6309
        %v6311 = vsel %vm1038, %v6289, 0.0
        %6312 = vadd.xlane.f32.xlu0 %v6311
        %v6313 = vpop.xlane.xlu0 %6312
        %v6314 = vrcp.pop %v6292
        %v6315 = vrcp.pop %v6295
        %v6316 = vrcp.pop %v6298
        %v6317 = vrcp.pop %v6301
        %v6318 = vrcp.pop %v6304
        %v6319 = vrcp.pop %v6307
        %v6320 = vrcp.pop %v6310
        %v6321 = vrcp.pop %v6313
        %v6322 = vmul.f32 %v6275, %v6314
        %v6323 = vmul.f32 %v6277, %v6315
        %v6324 = vmul.f32 %v6279, %v6316
        %v6325 = vmul.f32 %v6281, %v6317
        %v6326 = vmul.f32 %v6283, %v6318
        %v6327 = vmul.f32 %v6285, %v6319
        %v6328 = vmul.f32 %v6287, %v6320
        %v6329 = vmul.f32 %v6289, %v6321
        %v6331 = vsel %vm1038, %v6322, 0
        %v6334 = vsel %vm1038, %v6323, 0
        %v6337 = vsel %vm1038, %v6324, 0
        %v6340 = vsel %vm1038, %v6325, 0
        %v6343 = vsel %vm1038, %v6326, 0
        %v6346 = vsel %vm1038, %v6327, 0
        %v6349 = vsel %vm1038, %v6328, 0
        %v6352 = vsel %vm1038, %v6329, 0
        %6354 = vmatprep.subr.mxu0 0.0
        %6355 = vmatpush1.msra.mxu0 0.0
        %6356 = vmatprep.subr.mxu0 0.0
        %6357 = vmatpush1.msra.mxu0 0.0
        %6358 = vmatprep.subr.mxu0 0.0
        %6359 = vmatpush1.msra.mxu0 0.0
        %6360 = vmatprep.subr.mxu0 0.0
        %6361 = vmatpush1.msra.mxu0 0.0
        %6362 = vmatprep.subr.mxu0 0.0
        %6363 = vmatpush1.msra.mxu0 0.0
        %6364 = vmatprep.subr.mxu0 0.0
        %6365 = vmatpush1.msra.mxu0 0.0
        %6366 = vmatprep.subr.mxu0 0.0
        %6367 = vmatpush1.msra.mxu0 0.0
        %6368 = vmatprep.subr.mxu0 0.0
        %6369 = vmatpush1.msra.mxu0 0.0
        %6370 = vmatprep.subr.mxu0 0.0
        %6371 = vmatpush1.msra.mxu0 %v6086
        %6372 = vmatprep.subr.mxu0 0.0
        %6373 = vmatpush1.msra.mxu0 %v6081
        %6374 = vmatprep.subr.mxu0 0.0
        %6375 = vmatpush1.msra.mxu0 %v6076
        %6376 = vmatprep.subr.mxu0 0.0
        %6377 = vmatpush1.msra.mxu0 %v6071
        %6378 = vmatprep.subr.mxu0 0.0
        %6379 = vmatpush1.msra.mxu0 %v6066
        %6380 = vmatprep.subr.mxu0 0.0
        %6381 = vmatpush1.msra.mxu0 %v6061
        %6382 = vmatprep.subr.mxu0 0.0
        %6383 = vmatpush1.msra.mxu0 %v6056
        %6384 = vmatprep.subr.mxu0 0.0
        %6385 = vmatpush1.msra.mxu0 %v6051
        %6386 = vmatprep.subr.mxu0 0.0
        %6387 = vmatpush2.msra.mxu0 0.0
        %6388 = vmatprep.subr.mxu0 0.0
        %6389 = vmatpush2.msra.mxu0 0.0
        %6390 = vmatprep.subr.mxu0 0.0
        %6391 = vmatpush2.msra.mxu0 0.0
        %6392 = vmatprep.subr.mxu0 0.0
        %6393 = vmatpush2.msra.mxu0 0.0
        %6394 = vmatprep.subr.mxu0 0.0
        %6395 = vmatpush2.msra.mxu0 0.0
        %6396 = vmatprep.subr.mxu0 0.0
        %6397 = vmatpush2.msra.mxu0 0.0
        %6398 = vmatprep.subr.mxu0 0.0
        %6399 = vmatpush2.msra.mxu0 0.0
        %6400 = vmatprep.subr.mxu0 0.0
        %6401 = vmatpush2.msra.mxu0 0.0
        %6402 = vmatprep.subr.mxu0 0.0
        %6403 = vmatpush2.msra.mxu0 0.0
        %6404 = vmatprep.subr.mxu0 0.0
        %6405 = vmatpush2.msra.mxu0 0.0
        %6406 = vmatprep.subr.mxu0 0.0
        %6407 = vmatpush2.msra.mxu0 0.0
        %6408 = vmatprep.subr.mxu0 0.0
        %6409 = vmatpush2.msra.mxu0 0.0
        %6410 = vmatprep.subr.mxu0 0.0
        %6411 = vmatpush2.msra.mxu0 0.0
        %6412 = vmatprep.subr.mxu0 0.0
        %6413 = vmatpush2.msra.mxu0 0.0
        %6414 = vmatprep.subr.mxu0 0.0
        %6415 = vmatpush2.msra.mxu0 0.0
        %6416 = vmatprep.subr.mxu0 0.0
        %6417 = vmatpush2.msra.mxu0 0.0
        %6418 = vmatprep.mubr.f32.mxu0 0.0
        %6419 = vmatmul.mubr.f32.gmra.mxu0 %v6331
        %v6420 = vpop.f32.mrf.mxu0
        %v6421 = vadd.f32 0.0, %v6420
        %v6422 = vpop.f32.mrf.mxu0
        %6423 = vmatprep.mubr.f32.mxu0 0.0
        %6424 = vmatmul.mubr.f32.gmra.mxu0 %v6334
        %v6425 = vpop.f32.mrf.mxu0
        %v6426 = vadd.f32 0.0, %v6425
        %v6427 = vpop.f32.mrf.mxu0
        %6428 = vmatprep.mubr.f32.mxu0 0.0
        %6429 = vmatmul.mubr.f32.gmra.mxu0 %v6337
        %v6430 = vpop.f32.mrf.mxu0
        %v6431 = vadd.f32 0.0, %v6430
        %v6432 = vpop.f32.mrf.mxu0
        %6433 = vmatprep.mubr.f32.mxu0 0.0
        %6434 = vmatmul.mubr.f32.gmra.mxu0 %v6340
        %v6435 = vpop.f32.mrf.mxu0
        %v6436 = vadd.f32 0.0, %v6435
        %v6437 = vpop.f32.mrf.mxu0
        %6438 = vmatprep.mubr.f32.mxu0 0.0
        %6439 = vmatmul.mubr.f32.gmra.mxu0 %v6343
        %v6440 = vpop.f32.mrf.mxu0
        %v6441 = vadd.f32 0.0, %v6440
        %v6442 = vpop.f32.mrf.mxu0
        %6443 = vmatprep.mubr.f32.mxu0 0.0
        %6444 = vmatmul.mubr.f32.gmra.mxu0 %v6346
        %v6445 = vpop.f32.mrf.mxu0
        %v6446 = vadd.f32 0.0, %v6445
        %v6447 = vpop.f32.mrf.mxu0
        %6448 = vmatprep.mubr.f32.mxu0 0.0
        %6449 = vmatmul.mubr.f32.gmra.mxu0 %v6349
        %v6450 = vpop.f32.mrf.mxu0
        %v6451 = vadd.f32 0.0, %v6450
        %v6452 = vpop.f32.mrf.mxu0
        %6453 = vmatprep.mubr.f32.mxu0 0.0
        %6454 = vmatmul.mubr.f32.gmra.mxu0 %v6352
        %v6455 = vpop.f32.mrf.mxu0
        %v6456 = vadd.f32 0.0, %v6455
        %v6457 = vpop.f32.mrf.mxu0
        %6458 = vdwg.mxu0
        %s6459 = scalar_lea.vmem %s8, 16
        %v6460 = vld [vmem:[%s6459] sm:$0xff]
        %s6461 = scalar_lea.vmem %s6, 96
        %v6462 = vld [vmem:[%s6461] sm:$0xff]
        %v6463 = vld [vmem:[%s6461 + $0x8] sm:$0xff]
        %v6464 = vld [vmem:[%s6461 + $0x10] sm:$0xff]
        %v6465 = vld [vmem:[%s6461 + $0x18] sm:$0xff]
        %s6466 = scalar_lea.vmem %s7, 3
        %v6467 = vld [vmem:[%s6466] sm:$0x1]
        %v6469 = vlaneseq
        %v6470 = vshrl.u32 %v6469, 7
        %v6471 = vsub.s32 0, %v6470
        %v6472 = vrot.slane %v6467, %v6471
        %6474 = vmatprep.subr.mxu0 0.0
        %6475 = vmatpush1.msra.mxu0 0.0
        %6476 = vmatprep.subr.mxu0 0.0
        %6477 = vmatpush1.msra.mxu0 0.0
        %6478 = vmatprep.subr.mxu0 0.0
        %6479 = vmatpush1.msra.mxu0 0.0
        %6480 = vmatprep.subr.mxu0 0.0
        %6481 = vmatpush1.msra.mxu0 0.0
        %6482 = vmatprep.subr.mxu0 0.0
        %6483 = vmatpush1.msra.mxu0 0.0
        %6484 = vmatprep.subr.mxu0 0.0
        %6485 = vmatpush1.msra.mxu0 0.0
        %6486 = vmatprep.subr.mxu0 0.0
        %6487 = vmatpush1.msra.mxu0 0.0
        %6488 = vmatprep.subr.mxu0 0.0
        %6489 = vmatpush1.msra.mxu0 0.0
        %6490 = vmatprep.subr.mxu0 0.0
        %6491 = vmatpush1.msra.mxu0 0.0
        %6492 = vmatprep.subr.mxu0 0.0
        %6493 = vmatpush1.msra.mxu0 0.0
        %6494 = vmatprep.subr.mxu0 0.0
        %6495 = vmatpush1.msra.mxu0 0.0
        %6496 = vmatprep.subr.mxu0 0.0
        %6497 = vmatpush1.msra.mxu0 0.0
        %6498 = vmatprep.subr.mxu0 0.0
        %6499 = vmatpush1.msra.mxu0 %v6465
        %6500 = vmatprep.subr.mxu0 0.0
        %6501 = vmatpush1.msra.mxu0 %v6464
        %6502 = vmatprep.subr.mxu0 0.0
        %6503 = vmatpush1.msra.mxu0 %v6463
        %6504 = vmatprep.subr.mxu0 0.0
        %6505 = vmatpush1.msra.mxu0 %v6462
        %6506 = vmatprep.subr.mxu0 0.0
        %6507 = vmatpush2.msra.mxu0 0.0
        %6508 = vmatprep.subr.mxu0 0.0
        %6509 = vmatpush2.msra.mxu0 0.0
        %6510 = vmatprep.subr.mxu0 0.0
        %6511 = vmatpush2.msra.mxu0 0.0
        %6512 = vmatprep.subr.mxu0 0.0
        %6513 = vmatpush2.msra.mxu0 0.0
        %6514 = vmatprep.subr.mxu0 0.0
        %6515 = vmatpush2.msra.mxu0 0.0
        %6516 = vmatprep.subr.mxu0 0.0
        %6517 = vmatpush2.msra.mxu0 0.0
        %6518 = vmatprep.subr.mxu0 0.0
        %6519 = vmatpush2.msra.mxu0 0.0
        %6520 = vmatprep.subr.mxu0 0.0
        %6521 = vmatpush2.msra.mxu0 0.0
        %6522 = vmatprep.subr.mxu0 0.0
        %6523 = vmatpush2.msra.mxu0 0.0
        %6524 = vmatprep.subr.mxu0 0.0
        %6525 = vmatpush2.msra.mxu0 0.0
        %6526 = vmatprep.subr.mxu0 0.0
        %6527 = vmatpush2.msra.mxu0 0.0
        %6528 = vmatprep.subr.mxu0 0.0
        %6529 = vmatpush2.msra.mxu0 0.0
        %6530 = vmatprep.subr.mxu0 0.0
        %6531 = vmatpush2.msra.mxu0 0.0
        %6532 = vmatprep.subr.mxu0 0.0
        %6533 = vmatpush2.msra.mxu0 0.0
        %6534 = vmatprep.subr.mxu0 0.0
        %6535 = vmatpush2.msra.mxu0 0.0
        %6536 = vmatprep.subr.mxu0 0.0
        %6537 = vmatpush2.msra.mxu0 0.0
        %6538 = vmatprep.mubr.f32.mxu0 0.0
        %6539 = vmatmul.mubr.f32.gmra.mxu0 %v4121
        %v6540 = vpop.f32.mrf.mxu0
        %v6541 = vadd.f32 %v6472, %v6540
        %v6542 = vpop.f32.mrf.mxu0
        %6543 = vmatprep.mubr.f32.mxu0 0.0
        %6544 = vmatmul.mubr.f32.gmra.mxu0 %v4124
        %v6545 = vpop.f32.mrf.mxu0
        %v6546 = vadd.f32 %v6472, %v6545
        %v6547 = vpop.f32.mrf.mxu0
        %6548 = vmatprep.mubr.f32.mxu0 0.0
        %6549 = vmatmul.mubr.f32.gmra.mxu0 %v4127
        %v6550 = vpop.f32.mrf.mxu0
        %v6551 = vadd.f32 %v6472, %v6550
        %v6552 = vpop.f32.mrf.mxu0
        %6553 = vmatprep.mubr.f32.mxu0 0.0
        %6554 = vmatmul.mubr.f32.gmra.mxu0 %v4130
        %v6555 = vpop.f32.mrf.mxu0
        %v6556 = vadd.f32 %v6472, %v6555
        %v6557 = vpop.f32.mrf.mxu0
        %6558 = vmatprep.mubr.f32.mxu0 0.0
        %6559 = vmatmul.mubr.f32.gmra.mxu0 %v4133
        %v6560 = vpop.f32.mrf.mxu0
        %v6561 = vadd.f32 %v6472, %v6560
        %v6562 = vpop.f32.mrf.mxu0
        %6563 = vmatprep.mubr.f32.mxu0 0.0
        %6564 = vmatmul.mubr.f32.gmra.mxu0 %v4136
        %v6565 = vpop.f32.mrf.mxu0
        %v6566 = vadd.f32 %v6472, %v6565
        %v6567 = vpop.f32.mrf.mxu0
        %6568 = vmatprep.mubr.f32.mxu0 0.0
        %6569 = vmatmul.mubr.f32.gmra.mxu0 %v4139
        %v6570 = vpop.f32.mrf.mxu0
        %v6571 = vadd.f32 %v6472, %v6570
        %v6572 = vpop.f32.mrf.mxu0
        %6573 = vmatprep.mubr.f32.mxu0 0.0
        %6574 = vmatmul.mubr.f32.gmra.mxu0 %v4142
        %v6575 = vpop.f32.mrf.mxu0
        %v6576 = vadd.f32 %v6472, %v6575
        %v6577 = vpop.f32.mrf.mxu0
        %6578 = vdwg.mxu0
        %s6579 = scalar_lea.vmem %s6, 224
        %v6580 = vld [vmem:[%s6579] sm:$0xff]
        %v6581 = vld [vmem:[%s6579 + $0x8] sm:$0xff]
        %v6582 = vld [vmem:[%s6579 + $0x10] sm:$0xff]
        %v6583 = vld [vmem:[%s6579 + $0x18] sm:$0xff]
        %s6584 = scalar_lea.vmem %s7, 7
        %v6585 = vld [vmem:[%s6584] sm:$0x1]
        %v6587 = vlaneseq
        %v6588 = vshrl.u32 %v6587, 7
        %v6589 = vsub.s32 0, %v6588
        %v6590 = vrot.slane %v6585, %v6589
        %6592 = vmatprep.subr.mxu0 0.0
        %6593 = vmatpush1.msra.mxu0 0.0
        %6594 = vmatprep.subr.mxu0 0.0
        %6595 = vmatpush1.msra.mxu0 0.0
        %6596 = vmatprep.subr.mxu0 0.0
        %6597 = vmatpush1.msra.mxu0 0.0
        %6598 = vmatprep.subr.mxu0 0.0
        %6599 = vmatpush1.msra.mxu0 0.0
        %6600 = vmatprep.subr.mxu0 0.0
        %6601 = vmatpush1.msra.mxu0 0.0
        %6602 = vmatprep.subr.mxu0 0.0
        %6603 = vmatpush1.msra.mxu0 0.0
        %6604 = vmatprep.subr.mxu0 0.0
        %6605 = vmatpush1.msra.mxu0 0.0
        %6606 = vmatprep.subr.mxu0 0.0
        %6607 = vmatpush1.msra.mxu0 0.0
        %6608 = vmatprep.subr.mxu0 0.0
        %6609 = vmatpush1.msra.mxu0 0.0
        %6610 = vmatprep.subr.mxu0 0.0
        %6611 = vmatpush1.msra.mxu0 0.0
        %6612 = vmatprep.subr.mxu0 0.0
        %6613 = vmatpush1.msra.mxu0 0.0
        %6614 = vmatprep.subr.mxu0 0.0
        %6615 = vmatpush1.msra.mxu0 0.0
        %6616 = vmatprep.subr.mxu0 0.0
        %6617 = vmatpush1.msra.mxu0 %v6583
        %6618 = vmatprep.subr.mxu0 0.0
        %6619 = vmatpush1.msra.mxu0 %v6582
        %6620 = vmatprep.subr.mxu0 0.0
        %6621 = vmatpush1.msra.mxu0 %v6581
        %6622 = vmatprep.subr.mxu0 0.0
        %6623 = vmatpush1.msra.mxu0 %v6580
        %6624 = vmatprep.subr.mxu0 0.0
        %6625 = vmatpush2.msra.mxu0 0.0
        %6626 = vmatprep.subr.mxu0 0.0
        %6627 = vmatpush2.msra.mxu0 0.0
        %6628 = vmatprep.subr.mxu0 0.0
        %6629 = vmatpush2.msra.mxu0 0.0
        %6630 = vmatprep.subr.mxu0 0.0
        %6631 = vmatpush2.msra.mxu0 0.0
        %6632 = vmatprep.subr.mxu0 0.0
        %6633 = vmatpush2.msra.mxu0 0.0
        %6634 = vmatprep.subr.mxu0 0.0
        %6635 = vmatpush2.msra.mxu0 0.0
        %6636 = vmatprep.subr.mxu0 0.0
        %6637 = vmatpush2.msra.mxu0 0.0
        %6638 = vmatprep.subr.mxu0 0.0
        %6639 = vmatpush2.msra.mxu0 0.0
        %6640 = vmatprep.subr.mxu0 0.0
        %6641 = vmatpush2.msra.mxu0 0.0
        %6642 = vmatprep.subr.mxu0 0.0
        %6643 = vmatpush2.msra.mxu0 0.0
        %6644 = vmatprep.subr.mxu0 0.0
        %6645 = vmatpush2.msra.mxu0 0.0
        %6646 = vmatprep.subr.mxu0 0.0
        %6647 = vmatpush2.msra.mxu0 0.0
        %6648 = vmatprep.subr.mxu0 0.0
        %6649 = vmatpush2.msra.mxu0 0.0
        %6650 = vmatprep.subr.mxu0 0.0
        %6651 = vmatpush2.msra.mxu0 0.0
        %6652 = vmatprep.subr.mxu0 0.0
        %6653 = vmatpush2.msra.mxu0 0.0
        %6654 = vmatprep.subr.mxu0 0.0
        %6655 = vmatpush2.msra.mxu0 0.0
        %6656 = vmatprep.mubr.f32.mxu0 0.0
        %6657 = vmatmul.mubr.f32.gmra.mxu0 %v4263
        %v6658 = vpop.f32.mrf.mxu0
        %v6659 = vadd.f32 %v6590, %v6658
        %v6660 = vpop.f32.mrf.mxu0
        %6661 = vmatprep.mubr.f32.mxu0 0.0
        %6662 = vmatmul.mubr.f32.gmra.mxu0 %v4266
        %v6663 = vpop.f32.mrf.mxu0
        %v6664 = vadd.f32 %v6590, %v6663
        %v6665 = vpop.f32.mrf.mxu0
        %6666 = vmatprep.mubr.f32.mxu0 0.0
        %6667 = vmatmul.mubr.f32.gmra.mxu0 %v4269
        %v6668 = vpop.f32.mrf.mxu0
        %v6669 = vadd.f32 %v6590, %v6668
        %v6670 = vpop.f32.mrf.mxu0
        %6671 = vmatprep.mubr.f32.mxu0 0.0
        %6672 = vmatmul.mubr.f32.gmra.mxu0 %v4272
        %v6673 = vpop.f32.mrf.mxu0
        %v6674 = vadd.f32 %v6590, %v6673
        %v6675 = vpop.f32.mrf.mxu0
        %6676 = vmatprep.mubr.f32.mxu0 0.0
        %6677 = vmatmul.mubr.f32.gmra.mxu0 %v4275
        %v6678 = vpop.f32.mrf.mxu0
        %v6679 = vadd.f32 %v6590, %v6678
        %v6680 = vpop.f32.mrf.mxu0
        %6681 = vmatprep.mubr.f32.mxu0 0.0
        %6682 = vmatmul.mubr.f32.gmra.mxu0 %v4278
        %v6683 = vpop.f32.mrf.mxu0
        %v6684 = vadd.f32 %v6590, %v6683
        %v6685 = vpop.f32.mrf.mxu0
        %6686 = vmatprep.mubr.f32.mxu0 0.0
        %6687 = vmatmul.mubr.f32.gmra.mxu0 %v4281
        %v6688 = vpop.f32.mrf.mxu0
        %v6689 = vadd.f32 %v6590, %v6688
        %v6690 = vpop.f32.mrf.mxu0
        %6691 = vmatprep.mubr.f32.mxu0 0.0
        %6692 = vmatmul.mubr.f32.gmra.mxu0 %v4284
        %v6693 = vpop.f32.mrf.mxu0
        %v6694 = vadd.f32 %v6590, %v6693
        %v6695 = vpop.f32.mrf.mxu0
        %6696 = vdwg.mxu0
        %s6697 = scalar_lea.vmem %s6, 352
        %v6698 = vld [vmem:[%s6697] sm:$0xff]
        %v6699 = vld [vmem:[%s6697 + $0x8] sm:$0xff]
        %v6700 = vld [vmem:[%s6697 + $0x10] sm:$0xff]
        %v6701 = vld [vmem:[%s6697 + $0x18] sm:$0xff]
        %s6702 = scalar_lea.vmem %s7, 11
        %v6703 = vld [vmem:[%s6702] sm:$0x1]
        %v6705 = vlaneseq
        %v6706 = vshrl.u32 %v6705, 7
        %v6707 = vsub.s32 0, %v6706
        %v6708 = vrot.slane %v6703, %v6707
        %6710 = vmatprep.subr.mxu0 0.0
        %6711 = vmatpush1.msra.mxu0 0.0
        %6712 = vmatprep.subr.mxu0 0.0
        %6713 = vmatpush1.msra.mxu0 0.0
        %6714 = vmatprep.subr.mxu0 0.0
        %6715 = vmatpush1.msra.mxu0 0.0
        %6716 = vmatprep.subr.mxu0 0.0
        %6717 = vmatpush1.msra.mxu0 0.0
        %6718 = vmatprep.subr.mxu0 0.0
        %6719 = vmatpush1.msra.mxu0 0.0
        %6720 = vmatprep.subr.mxu0 0.0
        %6721 = vmatpush1.msra.mxu0 0.0
        %6722 = vmatprep.subr.mxu0 0.0
        %6723 = vmatpush1.msra.mxu0 0.0
        %6724 = vmatprep.subr.mxu0 0.0
        %6725 = vmatpush1.msra.mxu0 0.0
        %6726 = vmatprep.subr.mxu0 0.0
        %6727 = vmatpush1.msra.mxu0 0.0
        %6728 = vmatprep.subr.mxu0 0.0
        %6729 = vmatpush1.msra.mxu0 0.0
        %6730 = vmatprep.subr.mxu0 0.0
        %6731 = vmatpush1.msra.mxu0 0.0
        %6732 = vmatprep.subr.mxu0 0.0
        %6733 = vmatpush1.msra.mxu0 0.0
        %6734 = vmatprep.subr.mxu0 0.0
        %6735 = vmatpush1.msra.mxu0 %v6701
        %6736 = vmatprep.subr.mxu0 0.0
        %6737 = vmatpush1.msra.mxu0 %v6700
        %6738 = vmatprep.subr.mxu0 0.0
        %6739 = vmatpush1.msra.mxu0 %v6699
        %6740 = vmatprep.subr.mxu0 0.0
        %6741 = vmatpush1.msra.mxu0 %v6698
        %6742 = vmatprep.subr.mxu0 0.0
        %6743 = vmatpush2.msra.mxu0 0.0
        %6744 = vmatprep.subr.mxu0 0.0
        %6745 = vmatpush2.msra.mxu0 0.0
        %6746 = vmatprep.subr.mxu0 0.0
        %6747 = vmatpush2.msra.mxu0 0.0
        %6748 = vmatprep.subr.mxu0 0.0
        %6749 = vmatpush2.msra.mxu0 0.0
        %6750 = vmatprep.subr.mxu0 0.0
        %6751 = vmatpush2.msra.mxu0 0.0
        %6752 = vmatprep.subr.mxu0 0.0
        %6753 = vmatpush2.msra.mxu0 0.0
        %6754 = vmatprep.subr.mxu0 0.0
        %6755 = vmatpush2.msra.mxu0 0.0
        %6756 = vmatprep.subr.mxu0 0.0
        %6757 = vmatpush2.msra.mxu0 0.0
        %6758 = vmatprep.subr.mxu0 0.0
        %6759 = vmatpush2.msra.mxu0 0.0
        %6760 = vmatprep.subr.mxu0 0.0
        %6761 = vmatpush2.msra.mxu0 0.0
        %6762 = vmatprep.subr.mxu0 0.0
        %6763 = vmatpush2.msra.mxu0 0.0
        %6764 = vmatprep.subr.mxu0 0.0
        %6765 = vmatpush2.msra.mxu0 0.0
        %6766 = vmatprep.subr.mxu0 0.0
        %6767 = vmatpush2.msra.mxu0 0.0
        %6768 = vmatprep.subr.mxu0 0.0
        %6769 = vmatpush2.msra.mxu0 0.0
        %6770 = vmatprep.subr.mxu0 0.0
        %6771 = vmatpush2.msra.mxu0 0.0
        %6772 = vmatprep.subr.mxu0 0.0
        %6773 = vmatpush2.msra.mxu0 0.0
        %6774 = vmatprep.mubr.f32.mxu0 0.0
        %6775 = vmatmul.mubr.f32.gmra.mxu0 %v4263
        %v6776 = vpop.f32.mrf.mxu0
        %v6777 = vadd.f32 %v6708, %v6776
        %v6778 = vpop.f32.mrf.mxu0
        %6779 = vmatprep.mubr.f32.mxu0 0.0
        %6780 = vmatmul.mubr.f32.gmra.mxu0 %v4266
        %v6781 = vpop.f32.mrf.mxu0
        %v6782 = vadd.f32 %v6708, %v6781
        %v6783 = vpop.f32.mrf.mxu0
        %6784 = vmatprep.mubr.f32.mxu0 0.0
        %6785 = vmatmul.mubr.f32.gmra.mxu0 %v4269
        %v6786 = vpop.f32.mrf.mxu0
        %v6787 = vadd.f32 %v6708, %v6786
        %v6788 = vpop.f32.mrf.mxu0
        %6789 = vmatprep.mubr.f32.mxu0 0.0
        %6790 = vmatmul.mubr.f32.gmra.mxu0 %v4272
        %v6791 = vpop.f32.mrf.mxu0
        %v6792 = vadd.f32 %v6708, %v6791
        %v6793 = vpop.f32.mrf.mxu0
        %6794 = vmatprep.mubr.f32.mxu0 0.0
        %6795 = vmatmul.mubr.f32.gmra.mxu0 %v4275
        %v6796 = vpop.f32.mrf.mxu0
        %v6797 = vadd.f32 %v6708, %v6796
        %v6798 = vpop.f32.mrf.mxu0
        %6799 = vmatprep.mubr.f32.mxu0 0.0
        %6800 = vmatmul.mubr.f32.gmra.mxu0 %v4278
        %v6801 = vpop.f32.mrf.mxu0
        %v6802 = vadd.f32 %v6708, %v6801
        %v6803 = vpop.f32.mrf.mxu0
        %6804 = vmatprep.mubr.f32.mxu0 0.0
        %6805 = vmatmul.mubr.f32.gmra.mxu0 %v4281
        %v6806 = vpop.f32.mrf.mxu0
        %v6807 = vadd.f32 %v6708, %v6806
        %v6808 = vpop.f32.mrf.mxu0
        %6809 = vmatprep.mubr.f32.mxu0 0.0
        %6810 = vmatmul.mubr.f32.gmra.mxu0 %v4284
        %v6811 = vpop.f32.mrf.mxu0
        %v6812 = vadd.f32 %v6708, %v6811
        %v6813 = vpop.f32.mrf.mxu0
        %6814 = vdwg.mxu0
        %v6816 = vsel %vm884, %v6541, 0
        %v6819 = vsel %vm884, %v6546, 0
        %v6822 = vsel %vm884, %v6551, 0
        %v6825 = vsel %vm884, %v6556, 0
        %v6828 = vsel %vm884, %v6561, 0
        %v6831 = vsel %vm884, %v6566, 0
        %v6834 = vsel %vm884, %v6571, 0
        %v6837 = vsel %vm884, %v6576, 0
        %v6840 = vsel %vm884, %v6659, 0
        %v6843 = vsel %vm884, %v6664, 0
        %v6846 = vsel %vm884, %v6669, 0
        %v6849 = vsel %vm884, %v6674, 0
        %v6852 = vsel %vm884, %v6679, 0
        %v6855 = vsel %vm884, %v6684, 0
        %v6858 = vsel %vm884, %v6689, 0
        %v6861 = vsel %vm884, %v6694, 0
        %6863 = vmatprep.subr.mxu0 0.0
        %6864 = vmatpush1.xpose.msra.mxu0 0.0
        %6865 = vmatprep.subr.mxu0 0.0
        %6866 = vmatpush1.xpose.msra.mxu0 0.0
        %6867 = vmatprep.subr.mxu0 0.0
        %6868 = vmatpush1.xpose.msra.mxu0 0.0
        %6869 = vmatprep.subr.mxu0 0.0
        %6870 = vmatpush1.xpose.msra.mxu0 0.0
        %6871 = vmatprep.subr.mxu0 0.0
        %6872 = vmatpush1.xpose.msra.mxu0 0.0
        %6873 = vmatprep.subr.mxu0 0.0
        %6874 = vmatpush1.xpose.msra.mxu0 0.0
        %6875 = vmatprep.subr.mxu0 0.0
        %6876 = vmatpush1.xpose.msra.mxu0 0.0
        %6877 = vmatprep.subr.mxu0 0.0
        %6878 = vmatpush1.xpose.msra.mxu0 0.0
        %6879 = vmatprep.subr.mxu0 0.0
        %6880 = vmatpush1.xpose.msra.mxu0 %v6861
        %6881 = vmatprep.subr.mxu0 0.0
        %6882 = vmatpush1.xpose.msra.mxu0 %v6858
        %6883 = vmatprep.subr.mxu0 0.0
        %6884 = vmatpush1.xpose.msra.mxu0 %v6855
        %6885 = vmatprep.subr.mxu0 0.0
        %6886 = vmatpush1.xpose.msra.mxu0 %v6852
        %6887 = vmatprep.subr.mxu0 0.0
        %6888 = vmatpush1.xpose.msra.mxu0 %v6849
        %6889 = vmatprep.subr.mxu0 0.0
        %6890 = vmatpush1.xpose.msra.mxu0 %v6846
        %6891 = vmatprep.subr.mxu0 0.0
        %6892 = vmatpush1.xpose.msra.mxu0 %v6843
        %6893 = vmatprep.subr.mxu0 0.0
        %6894 = vmatpush1.xpose.msra.mxu0 %v6840
        %6895 = vmatprep.subr.mxu0 0.0
        %6896 = vmatpush2.xpose.msra.mxu0 0.0
        %6897 = vmatprep.subr.mxu0 0.0
        %6898 = vmatpush2.xpose.msra.mxu0 0.0
        %6899 = vmatprep.subr.mxu0 0.0
        %6900 = vmatpush2.xpose.msra.mxu0 0.0
        %6901 = vmatprep.subr.mxu0 0.0
        %6902 = vmatpush2.xpose.msra.mxu0 0.0
        %6903 = vmatprep.subr.mxu0 0.0
        %6904 = vmatpush2.xpose.msra.mxu0 0.0
        %6905 = vmatprep.subr.mxu0 0.0
        %6906 = vmatpush2.xpose.msra.mxu0 0.0
        %6907 = vmatprep.subr.mxu0 0.0
        %6908 = vmatpush2.xpose.msra.mxu0 0.0
        %6909 = vmatprep.subr.mxu0 0.0
        %6910 = vmatpush2.xpose.msra.mxu0 0.0
        %6911 = vmatprep.subr.mxu0 0.0
        %6912 = vmatpush2.xpose.msra.mxu0 0.0
        %6913 = vmatprep.subr.mxu0 0.0
        %6914 = vmatpush2.xpose.msra.mxu0 0.0
        %6915 = vmatprep.subr.mxu0 0.0
        %6916 = vmatpush2.xpose.msra.mxu0 0.0
        %6917 = vmatprep.subr.mxu0 0.0
        %6918 = vmatpush2.xpose.msra.mxu0 0.0
        %6919 = vmatprep.subr.mxu0 0.0
        %6920 = vmatpush2.xpose.msra.mxu0 0.0
        %6921 = vmatprep.subr.mxu0 0.0
        %6922 = vmatpush2.xpose.msra.mxu0 0.0
        %6923 = vmatprep.subr.mxu0 0.0
        %6924 = vmatpush2.xpose.msra.mxu0 0.0
        %6925 = vmatprep.subr.mxu0 0.0
        %6926 = vmatpush2.xpose.msra.mxu0 0.0
        %6927 = vmatprep.mubr.f32.mxu0 0.0
        %6928 = vmatmul.mubr.f32.gmra.mxu0 %v6816
        %v6929 = vpop.f32.mrf.mxu0
        %v6930 = vadd.f32 0.0, %v6929
        %v6931 = vpop.f32.mrf.mxu0
        %6932 = vmatprep.mubr.f32.mxu0 0.0
        %6933 = vmatmul.mubr.f32.gmra.mxu0 %v6819
        %v6934 = vpop.f32.mrf.mxu0
        %v6935 = vadd.f32 0.0, %v6934
        %v6936 = vpop.f32.mrf.mxu0
        %6937 = vmatprep.mubr.f32.mxu0 0.0
        %6938 = vmatmul.mubr.f32.gmra.mxu0 %v6822
        %v6939 = vpop.f32.mrf.mxu0
        %v6940 = vadd.f32 0.0, %v6939
        %v6941 = vpop.f32.mrf.mxu0
        %6942 = vmatprep.mubr.f32.mxu0 0.0
        %6943 = vmatmul.mubr.f32.gmra.mxu0 %v6825
        %v6944 = vpop.f32.mrf.mxu0
        %v6945 = vadd.f32 0.0, %v6944
        %v6946 = vpop.f32.mrf.mxu0
        %6947 = vmatprep.mubr.f32.mxu0 0.0
        %6948 = vmatmul.mubr.f32.gmra.mxu0 %v6828
        %v6949 = vpop.f32.mrf.mxu0
        %v6950 = vadd.f32 0.0, %v6949
        %v6951 = vpop.f32.mrf.mxu0
        %6952 = vmatprep.mubr.f32.mxu0 0.0
        %6953 = vmatmul.mubr.f32.gmra.mxu0 %v6831
        %v6954 = vpop.f32.mrf.mxu0
        %v6955 = vadd.f32 0.0, %v6954
        %v6956 = vpop.f32.mrf.mxu0
        %6957 = vmatprep.mubr.f32.mxu0 0.0
        %6958 = vmatmul.mubr.f32.gmra.mxu0 %v6834
        %v6959 = vpop.f32.mrf.mxu0
        %v6960 = vadd.f32 0.0, %v6959
        %v6961 = vpop.f32.mrf.mxu0
        %6962 = vmatprep.mubr.f32.mxu0 0.0
        %6963 = vmatmul.mubr.f32.gmra.mxu0 %v6837
        %v6964 = vpop.f32.mrf.mxu0
        %v6965 = vadd.f32 0.0, %v6964
        %v6966 = vpop.f32.mrf.mxu0
        %6967 = vdwg.mxu0
        %v6968 = vsel %vm1038, %v6930, -inf
        %6969 = vmax.xlane.f32.xlu0 %v6968
        %v6970 = vpop.xlane.xlu0 %6969
        %v6971 = vsel %vm1038, %v6935, -inf
        %6972 = vmax.xlane.f32.xlu0 %v6971
        %v6973 = vpop.xlane.xlu0 %6972
        %v6974 = vsel %vm1038, %v6940, -inf
        %6975 = vmax.xlane.f32.xlu0 %v6974
        %v6976 = vpop.xlane.xlu0 %6975
        %v6977 = vsel %vm1038, %v6945, -inf
        %6978 = vmax.xlane.f32.xlu0 %v6977
        %v6979 = vpop.xlane.xlu0 %6978
        %v6980 = vsel %vm1038, %v6950, -inf
        %6981 = vmax.xlane.f32.xlu0 %v6980
        %v6982 = vpop.xlane.xlu0 %6981
        %v6983 = vsel %vm1038, %v6955, -inf
        %6984 = vmax.xlane.f32.xlu0 %v6983
        %v6985 = vpop.xlane.xlu0 %6984
        %v6986 = vsel %vm1038, %v6960, -inf
        %6987 = vmax.xlane.f32.xlu0 %v6986
        %v6988 = vpop.xlane.xlu0 %6987
        %v6989 = vsel %vm1038, %v6965, -inf
        %6990 = vmax.xlane.f32.xlu0 %v6989
        %v6991 = vpop.xlane.xlu0 %6990
        %v6992 = vsub.f32 %v6930, %v6970
        %v6993 = vsub.f32 %v6935, %v6973
        %v6994 = vsub.f32 %v6940, %v6976
        %v6995 = vsub.f32 %v6945, %v6979
        %v6996 = vsub.f32 %v6950, %v6982
        %v6997 = vsub.f32 %v6955, %v6985
        %v6998 = vsub.f32 %v6960, %v6988
        %v6999 = vsub.f32 %v6965, %v6991
        %v7000 = vmul.f32 %v6992, 1.442695
        %v7001 = vpow.pop %v7000
        %v7002 = vmul.f32 %v6993, 1.442695
        %v7003 = vpow.pop %v7002
        %v7004 = vmul.f32 %v6994, 1.442695
        %v7005 = vpow.pop %v7004
        %v7006 = vmul.f32 %v6995, 1.442695
        %v7007 = vpow.pop %v7006
        %v7008 = vmul.f32 %v6996, 1.442695
        %v7009 = vpow.pop %v7008
        %v7010 = vmul.f32 %v6997, 1.442695
        %v7011 = vpow.pop %v7010
        %v7012 = vmul.f32 %v6998, 1.442695
        %v7013 = vpow.pop %v7012
        %v7014 = vmul.f32 %v6999, 1.442695
        %v7015 = vpow.pop %v7014
        %v7016 = vsel %vm1038, %v7001, 0.0
        %7017 = vadd.xlane.f32.xlu0 %v7016
        %v7018 = vpop.xlane.xlu0 %7017
        %v7019 = vsel %vm1038, %v7003, 0.0
        %7020 = vadd.xlane.f32.xlu0 %v7019
        %v7021 = vpop.xlane.xlu0 %7020
        %v7022 = vsel %vm1038, %v7005, 0.0
        %7023 = vadd.xlane.f32.xlu0 %v7022
        %v7024 = vpop.xlane.xlu0 %7023
        %v7025 = vsel %vm1038, %v7007, 0.0
        %7026 = vadd.xlane.f32.xlu0 %v7025
        %v7027 = vpop.xlane.xlu0 %7026
        %v7028 = vsel %vm1038, %v7009, 0.0
        %7029 = vadd.xlane.f32.xlu0 %v7028
        %v7030 = vpop.xlane.xlu0 %7029
        %v7031 = vsel %vm1038, %v7011, 0.0
        %7032 = vadd.xlane.f32.xlu0 %v7031
        %v7033 = vpop.xlane.xlu0 %7032
        %v7034 = vsel %vm1038, %v7013, 0.0
        %7035 = vadd.xlane.f32.xlu0 %v7034
        %v7036 = vpop.xlane.xlu0 %7035
        %v7037 = vsel %vm1038, %v7015, 0.0
        %7038 = vadd.xlane.f32.xlu0 %v7037
        %v7039 = vpop.xlane.xlu0 %7038
        %v7040 = vrcp.pop %v7018
        %v7041 = vrcp.pop %v7021
        %v7042 = vrcp.pop %v7024
        %v7043 = vrcp.pop %v7027
        %v7044 = vrcp.pop %v7030
        %v7045 = vrcp.pop %v7033
        %v7046 = vrcp.pop %v7036
        %v7047 = vrcp.pop %v7039
        %v7048 = vmul.f32 %v7001, %v7040
        %v7049 = vmul.f32 %v7003, %v7041
        %v7050 = vmul.f32 %v7005, %v7042
        %v7051 = vmul.f32 %v7007, %v7043
        %v7052 = vmul.f32 %v7009, %v7044
        %v7053 = vmul.f32 %v7011, %v7045
        %v7054 = vmul.f32 %v7013, %v7046
        %v7055 = vmul.f32 %v7015, %v7047
        %v7057 = vsel %vm1038, %v7048, 0
        %v7060 = vsel %vm1038, %v7049, 0
        %v7063 = vsel %vm1038, %v7050, 0
        %v7066 = vsel %vm1038, %v7051, 0
        %v7069 = vsel %vm1038, %v7052, 0
        %v7072 = vsel %vm1038, %v7053, 0
        %v7075 = vsel %vm1038, %v7054, 0
        %v7078 = vsel %vm1038, %v7055, 0
        %7080 = vmatprep.subr.mxu0 0.0
        %7081 = vmatpush1.msra.mxu0 0.0
        %7082 = vmatprep.subr.mxu0 0.0
        %7083 = vmatpush1.msra.mxu0 0.0
        %7084 = vmatprep.subr.mxu0 0.0
        %7085 = vmatpush1.msra.mxu0 0.0
        %7086 = vmatprep.subr.mxu0 0.0
        %7087 = vmatpush1.msra.mxu0 0.0
        %7088 = vmatprep.subr.mxu0 0.0
        %7089 = vmatpush1.msra.mxu0 0.0
        %7090 = vmatprep.subr.mxu0 0.0
        %7091 = vmatpush1.msra.mxu0 0.0
        %7092 = vmatprep.subr.mxu0 0.0
        %7093 = vmatpush1.msra.mxu0 0.0
        %7094 = vmatprep.subr.mxu0 0.0
        %7095 = vmatpush1.msra.mxu0 0.0
        %7096 = vmatprep.subr.mxu0 0.0
        %7097 = vmatpush1.msra.mxu0 %v6812
        %7098 = vmatprep.subr.mxu0 0.0
        %7099 = vmatpush1.msra.mxu0 %v6807
        %7100 = vmatprep.subr.mxu0 0.0
        %7101 = vmatpush1.msra.mxu0 %v6802
        %7102 = vmatprep.subr.mxu0 0.0
        %7103 = vmatpush1.msra.mxu0 %v6797
        %7104 = vmatprep.subr.mxu0 0.0
        %7105 = vmatpush1.msra.mxu0 %v6792
        %7106 = vmatprep.subr.mxu0 0.0
        %7107 = vmatpush1.msra.mxu0 %v6787
        %7108 = vmatprep.subr.mxu0 0.0
        %7109 = vmatpush1.msra.mxu0 %v6782
        %7110 = vmatprep.subr.mxu0 0.0
        %7111 = vmatpush1.msra.mxu0 %v6777
        %7112 = vmatprep.subr.mxu0 0.0
        %7113 = vmatpush2.msra.mxu0 0.0
        %7114 = vmatprep.subr.mxu0 0.0
        %7115 = vmatpush2.msra.mxu0 0.0
        %7116 = vmatprep.subr.mxu0 0.0
        %7117 = vmatpush2.msra.mxu0 0.0
        %7118 = vmatprep.subr.mxu0 0.0
        %7119 = vmatpush2.msra.mxu0 0.0
        %7120 = vmatprep.subr.mxu0 0.0
        %7121 = vmatpush2.msra.mxu0 0.0
        %7122 = vmatprep.subr.mxu0 0.0
        %7123 = vmatpush2.msra.mxu0 0.0
        %7124 = vmatprep.subr.mxu0 0.0
        %7125 = vmatpush2.msra.mxu0 0.0
        %7126 = vmatprep.subr.mxu0 0.0
        %7127 = vmatpush2.msra.mxu0 0.0
        %7128 = vmatprep.subr.mxu0 0.0
        %7129 = vmatpush2.msra.mxu0 0.0
        %7130 = vmatprep.subr.mxu0 0.0
        %7131 = vmatpush2.msra.mxu0 0.0
        %7132 = vmatprep.subr.mxu0 0.0
        %7133 = vmatpush2.msra.mxu0 0.0
        %7134 = vmatprep.subr.mxu0 0.0
        %7135 = vmatpush2.msra.mxu0 0.0
        %7136 = vmatprep.subr.mxu0 0.0
        %7137 = vmatpush2.msra.mxu0 0.0
        %7138 = vmatprep.subr.mxu0 0.0
        %7139 = vmatpush2.msra.mxu0 0.0
        %7140 = vmatprep.subr.mxu0 0.0
        %7141 = vmatpush2.msra.mxu0 0.0
        %7142 = vmatprep.subr.mxu0 0.0
        %7143 = vmatpush2.msra.mxu0 0.0
        %7144 = vmatprep.mubr.f32.mxu0 0.0
        %7145 = vmatmul.mubr.f32.gmra.mxu0 %v7057
        %v7146 = vpop.f32.mrf.mxu0
        %v7147 = vadd.f32 0.0, %v7146
        %v7148 = vpop.f32.mrf.mxu0
        %7149 = vmatprep.mubr.f32.mxu0 0.0
        %7150 = vmatmul.mubr.f32.gmra.mxu0 %v7060
        %v7151 = vpop.f32.mrf.mxu0
        %v7152 = vadd.f32 0.0, %v7151
        %v7153 = vpop.f32.mrf.mxu0
        %7154 = vmatprep.mubr.f32.mxu0 0.0
        %7155 = vmatmul.mubr.f32.gmra.mxu0 %v7063
        %v7156 = vpop.f32.mrf.mxu0
        %v7157 = vadd.f32 0.0, %v7156
        %v7158 = vpop.f32.mrf.mxu0
        %7159 = vmatprep.mubr.f32.mxu0 0.0
        %7160 = vmatmul.mubr.f32.gmra.mxu0 %v7066
        %v7161 = vpop.f32.mrf.mxu0
        %v7162 = vadd.f32 0.0, %v7161
        %v7163 = vpop.f32.mrf.mxu0
        %7164 = vmatprep.mubr.f32.mxu0 0.0
        %7165 = vmatmul.mubr.f32.gmra.mxu0 %v7069
        %v7166 = vpop.f32.mrf.mxu0
        %v7167 = vadd.f32 0.0, %v7166
        %v7168 = vpop.f32.mrf.mxu0
        %7169 = vmatprep.mubr.f32.mxu0 0.0
        %7170 = vmatmul.mubr.f32.gmra.mxu0 %v7072
        %v7171 = vpop.f32.mrf.mxu0
        %v7172 = vadd.f32 0.0, %v7171
        %v7173 = vpop.f32.mrf.mxu0
        %7174 = vmatprep.mubr.f32.mxu0 0.0
        %7175 = vmatmul.mubr.f32.gmra.mxu0 %v7075
        %v7176 = vpop.f32.mrf.mxu0
        %v7177 = vadd.f32 0.0, %v7176
        %v7178 = vpop.f32.mrf.mxu0
        %7179 = vmatprep.mubr.f32.mxu0 0.0
        %7180 = vmatmul.mubr.f32.gmra.mxu0 %v7078
        %v7181 = vpop.f32.mrf.mxu0
        %v7182 = vadd.f32 0.0, %v7181
        %v7183 = vpop.f32.mrf.mxu0
        %7184 = vdwg.mxu0
        %s7185 = scalar_lea.vmem %s8, 24
        %v7186 = vld [vmem:[%s7185] sm:$0xff]
        %v7188 = vsel %vm884, %v7147, 0
        %v7191 = vsel %vm884, %v7152, 0
        %v7194 = vsel %vm884, %v7157, 0
        %v7197 = vsel %vm884, %v7162, 0
        %v7200 = vsel %vm884, %v7167, 0
        %v7203 = vsel %vm884, %v7172, 0
        %v7206 = vsel %vm884, %v7177, 0
        %v7209 = vsel %vm884, %v7182, 0
        %7211 = vmatprep.subr.mxu0 0.0
        %7212 = vmatpush1.msra.mxu0 0.0
        %7213 = vmatprep.subr.mxu0 0.0
        %7214 = vmatpush1.msra.mxu0 0.0
        %7215 = vmatprep.subr.mxu0 0.0
        %7216 = vmatpush1.msra.mxu0 0.0
        %7217 = vmatprep.subr.mxu0 0.0
        %7218 = vmatpush1.msra.mxu0 0.0
        %7219 = vmatprep.subr.mxu0 0.0
        %7220 = vmatpush1.msra.mxu0 0.0
        %7221 = vmatprep.subr.mxu0 0.0
        %7222 = vmatpush1.msra.mxu0 0.0
        %7223 = vmatprep.subr.mxu0 0.0
        %7224 = vmatpush1.msra.mxu0 0.0
        %7225 = vmatprep.subr.mxu0 0.0
        %7226 = vmatpush1.msra.mxu0 0.0
        %7227 = vmatprep.subr.mxu0 0.0
        %7228 = vmatpush1.msra.mxu0 0.0
        %7229 = vmatprep.subr.mxu0 0.0
        %7230 = vmatpush1.msra.mxu0 0.0
        %7231 = vmatprep.subr.mxu0 0.0
        %7232 = vmatpush1.msra.mxu0 0.0
        %7233 = vmatprep.subr.mxu0 0.0
        %7234 = vmatpush1.msra.mxu0 0.0
        %7235 = vmatprep.subr.mxu0 0.0
        %7236 = vmatpush1.msra.mxu0 0.0
        %7237 = vmatprep.subr.mxu0 0.0
        %7238 = vmatpush1.msra.mxu0 0.0
        %7239 = vmatprep.subr.mxu0 0.0
        %7240 = vmatpush1.msra.mxu0 0.0
        %7241 = vmatprep.subr.mxu0 0.0
        %7242 = vmatpush1.msra.mxu0 %v7186
        %7243 = vmatprep.subr.mxu0 0.0
        %7244 = vmatpush2.msra.mxu0 0.0
        %7245 = vmatprep.subr.mxu0 0.0
        %7246 = vmatpush2.msra.mxu0 0.0
        %7247 = vmatprep.subr.mxu0 0.0
        %7248 = vmatpush2.msra.mxu0 0.0
        %7249 = vmatprep.subr.mxu0 0.0
        %7250 = vmatpush2.msra.mxu0 0.0
        %7251 = vmatprep.subr.mxu0 0.0
        %7252 = vmatpush2.msra.mxu0 0.0
        %7253 = vmatprep.subr.mxu0 0.0
        %7254 = vmatpush2.msra.mxu0 0.0
        %7255 = vmatprep.subr.mxu0 0.0
        %7256 = vmatpush2.msra.mxu0 0.0
        %7257 = vmatprep.subr.mxu0 0.0
        %7258 = vmatpush2.msra.mxu0 0.0
        %7259 = vmatprep.subr.mxu0 0.0
        %7260 = vmatpush2.msra.mxu0 0.0
        %7261 = vmatprep.subr.mxu0 0.0
        %7262 = vmatpush2.msra.mxu0 0.0
        %7263 = vmatprep.subr.mxu0 0.0
        %7264 = vmatpush2.msra.mxu0 0.0
        %7265 = vmatprep.subr.mxu0 0.0
        %7266 = vmatpush2.msra.mxu0 0.0
        %7267 = vmatprep.subr.mxu0 0.0
        %7268 = vmatpush2.msra.mxu0 0.0
        %7269 = vmatprep.subr.mxu0 0.0
        %7270 = vmatpush2.msra.mxu0 0.0
        %7271 = vmatprep.subr.mxu0 0.0
        %7272 = vmatpush2.msra.mxu0 0.0
        %7273 = vmatprep.subr.mxu0 0.0
        %7274 = vmatpush2.msra.mxu0 0.0
        %7275 = vmatprep.mubr.f32.mxu0 0.0
        %7276 = vmatmul.mubr.f32.gmra.mxu0 %v7188
        %v7277 = vpop.f32.mrf.mxu0
        %v7278 = vadd.f32 0.0, %v7277
        %v7279 = vpop.f32.mrf.mxu0
        %7280 = vmatprep.mubr.f32.mxu0 0.0
        %7281 = vmatmul.mubr.f32.gmra.mxu0 %v7191
        %v7282 = vpop.f32.mrf.mxu0
        %v7283 = vadd.f32 0.0, %v7282
        %v7284 = vpop.f32.mrf.mxu0
        %7285 = vmatprep.mubr.f32.mxu0 0.0
        %7286 = vmatmul.mubr.f32.gmra.mxu0 %v7194
        %v7287 = vpop.f32.mrf.mxu0
        %v7288 = vadd.f32 0.0, %v7287
        %v7289 = vpop.f32.mrf.mxu0
        %7290 = vmatprep.mubr.f32.mxu0 0.0
        %7291 = vmatmul.mubr.f32.gmra.mxu0 %v7197
        %v7292 = vpop.f32.mrf.mxu0
        %v7293 = vadd.f32 0.0, %v7292
        %v7294 = vpop.f32.mrf.mxu0
        %7295 = vmatprep.mubr.f32.mxu0 0.0
        %7296 = vmatmul.mubr.f32.gmra.mxu0 %v7200
        %v7297 = vpop.f32.mrf.mxu0
        %v7298 = vadd.f32 0.0, %v7297
        %v7299 = vpop.f32.mrf.mxu0
        %7300 = vmatprep.mubr.f32.mxu0 0.0
        %7301 = vmatmul.mubr.f32.gmra.mxu0 %v7203
        %v7302 = vpop.f32.mrf.mxu0
        %v7303 = vadd.f32 0.0, %v7302
        %v7304 = vpop.f32.mrf.mxu0
        %7305 = vmatprep.mubr.f32.mxu0 0.0
        %7306 = vmatmul.mubr.f32.gmra.mxu0 %v7206
        %v7307 = vpop.f32.mrf.mxu0
        %v7308 = vadd.f32 0.0, %v7307
        %v7309 = vpop.f32.mrf.mxu0
        %7310 = vmatprep.mubr.f32.mxu0 0.0
        %7311 = vmatmul.mubr.f32.gmra.mxu0 %v7209
        %v7312 = vpop.f32.mrf.mxu0
        %v7313 = vadd.f32 0.0, %v7312
        %v7314 = vpop.f32.mrf.mxu0
        %7315 = vdwg.mxu0
        %v7317 = vsel %vm884, %v4841, 0
        %v7320 = vsel %vm884, %v4846, 0
        %v7323 = vsel %vm884, %v4851, 0
        %v7326 = vsel %vm884, %v4856, 0
        %v7329 = vsel %vm884, %v4861, 0
        %v7332 = vsel %vm884, %v4866, 0
        %v7335 = vsel %vm884, %v4871, 0
        %v7338 = vsel %vm884, %v4876, 0
        %7340 = vmatprep.subr.mxu0 0.0
        %7341 = vmatpush1.msra.mxu0 0.0
        %7342 = vmatprep.subr.mxu0 0.0
        %7343 = vmatpush1.msra.mxu0 0.0
        %7344 = vmatprep.subr.mxu0 0.0
        %7345 = vmatpush1.msra.mxu0 0.0
        %7346 = vmatprep.subr.mxu0 0.0
        %7347 = vmatpush1.msra.mxu0 0.0
        %7348 = vmatprep.subr.mxu0 0.0
        %7349 = vmatpush1.msra.mxu0 0.0
        %7350 = vmatprep.subr.mxu0 0.0
        %7351 = vmatpush1.msra.mxu0 0.0
        %7352 = vmatprep.subr.mxu0 0.0
        %7353 = vmatpush1.msra.mxu0 0.0
        %7354 = vmatprep.subr.mxu0 0.0
        %7355 = vmatpush1.msra.mxu0 0.0
        %7356 = vmatprep.subr.mxu0 0.0
        %7357 = vmatpush1.msra.mxu0 0.0
        %7358 = vmatprep.subr.mxu0 0.0
        %7359 = vmatpush1.msra.mxu0 0.0
        %7360 = vmatprep.subr.mxu0 0.0
        %7361 = vmatpush1.msra.mxu0 0.0
        %7362 = vmatprep.subr.mxu0 0.0
        %7363 = vmatpush1.msra.mxu0 0.0
        %7364 = vmatprep.subr.mxu0 0.0
        %7365 = vmatpush1.msra.mxu0 0.0
        %7366 = vmatprep.subr.mxu0 0.0
        %7367 = vmatpush1.msra.mxu0 0.0
        %7368 = vmatprep.subr.mxu0 0.0
        %7369 = vmatpush1.msra.mxu0 0.0
        %7370 = vmatprep.subr.mxu0 0.0
        %7371 = vmatpush1.msra.mxu0 %v4879
        %7372 = vmatprep.subr.mxu0 0.0
        %7373 = vmatpush2.msra.mxu0 0.0
        %7374 = vmatprep.subr.mxu0 0.0
        %7375 = vmatpush2.msra.mxu0 0.0
        %7376 = vmatprep.subr.mxu0 0.0
        %7377 = vmatpush2.msra.mxu0 0.0
        %7378 = vmatprep.subr.mxu0 0.0
        %7379 = vmatpush2.msra.mxu0 0.0
        %7380 = vmatprep.subr.mxu0 0.0
        %7381 = vmatpush2.msra.mxu0 0.0
        %7382 = vmatprep.subr.mxu0 0.0
        %7383 = vmatpush2.msra.mxu0 0.0
        %7384 = vmatprep.subr.mxu0 0.0
        %7385 = vmatpush2.msra.mxu0 0.0
        %7386 = vmatprep.subr.mxu0 0.0
        %7387 = vmatpush2.msra.mxu0 0.0
        %7388 = vmatprep.subr.mxu0 0.0
        %7389 = vmatpush2.msra.mxu0 0.0
        %7390 = vmatprep.subr.mxu0 0.0
        %7391 = vmatpush2.msra.mxu0 0.0
        %7392 = vmatprep.subr.mxu0 0.0
        %7393 = vmatpush2.msra.mxu0 0.0
        %7394 = vmatprep.subr.mxu0 0.0
        %7395 = vmatpush2.msra.mxu0 0.0
        %7396 = vmatprep.subr.mxu0 0.0
        %7397 = vmatpush2.msra.mxu0 0.0
        %7398 = vmatprep.subr.mxu0 0.0
        %7399 = vmatpush2.msra.mxu0 0.0
        %7400 = vmatprep.subr.mxu0 0.0
        %7401 = vmatpush2.msra.mxu0 0.0
        %7402 = vmatprep.subr.mxu0 0.0
        %7403 = vmatpush2.msra.mxu0 0.0
        %7404 = vmatprep.mubr.f32.mxu0 0.0
        %7405 = vmatmul.mubr.f32.gmra.mxu0 %v7317
        %v7406 = vpop.f32.mrf.mxu0
        %v7407 = vadd.f32 %v5697, %v7406
        %v7408 = vpop.f32.mrf.mxu0
        %7409 = vmatprep.mubr.f32.mxu0 0.0
        %7410 = vmatmul.mubr.f32.gmra.mxu0 %v7320
        %v7411 = vpop.f32.mrf.mxu0
        %v7412 = vadd.f32 %v5702, %v7411
        %v7413 = vpop.f32.mrf.mxu0
        %7414 = vmatprep.mubr.f32.mxu0 0.0
        %7415 = vmatmul.mubr.f32.gmra.mxu0 %v7323
        %v7416 = vpop.f32.mrf.mxu0
        %v7417 = vadd.f32 %v5707, %v7416
        %v7418 = vpop.f32.mrf.mxu0
        %7419 = vmatprep.mubr.f32.mxu0 0.0
        %7420 = vmatmul.mubr.f32.gmra.mxu0 %v7326
        %v7421 = vpop.f32.mrf.mxu0
        %v7422 = vadd.f32 %v5712, %v7421
        %v7423 = vpop.f32.mrf.mxu0
        %7424 = vmatprep.mubr.f32.mxu0 0.0
        %7425 = vmatmul.mubr.f32.gmra.mxu0 %v7329
        %v7426 = vpop.f32.mrf.mxu0
        %v7427 = vadd.f32 %v5717, %v7426
        %v7428 = vpop.f32.mrf.mxu0
        %7429 = vmatprep.mubr.f32.mxu0 0.0
        %7430 = vmatmul.mubr.f32.gmra.mxu0 %v7332
        %v7431 = vpop.f32.mrf.mxu0
        %v7432 = vadd.f32 %v5722, %v7431
        %v7433 = vpop.f32.mrf.mxu0
        %7434 = vmatprep.mubr.f32.mxu0 0.0
        %7435 = vmatmul.mubr.f32.gmra.mxu0 %v7335
        %v7436 = vpop.f32.mrf.mxu0
        %v7437 = vadd.f32 %v5727, %v7436
        %v7438 = vpop.f32.mrf.mxu0
        %7439 = vmatprep.mubr.f32.mxu0 0.0
        %7440 = vmatmul.mubr.f32.gmra.mxu0 %v7338
        %v7441 = vpop.f32.mrf.mxu0
        %v7442 = vadd.f32 %v5732, %v7441
        %v7443 = vpop.f32.mrf.mxu0
        %7444 = vdwg.mxu0
        %v7446 = vsel %vm884, %v6421, 0
        %v7449 = vsel %vm884, %v6426, 0
        %v7452 = vsel %vm884, %v6431, 0
        %v7455 = vsel %vm884, %v6436, 0
        %v7458 = vsel %vm884, %v6441, 0
        %v7461 = vsel %vm884, %v6446, 0
        %v7464 = vsel %vm884, %v6451, 0
        %v7467 = vsel %vm884, %v6456, 0
        %7469 = vmatprep.subr.mxu0 0.0
        %7470 = vmatpush1.msra.mxu0 0.0
        %7471 = vmatprep.subr.mxu0 0.0
        %7472 = vmatpush1.msra.mxu0 0.0
        %7473 = vmatprep.subr.mxu0 0.0
        %7474 = vmatpush1.msra.mxu0 0.0
        %7475 = vmatprep.subr.mxu0 0.0
        %7476 = vmatpush1.msra.mxu0 0.0
        %7477 = vmatprep.subr.mxu0 0.0
        %7478 = vmatpush1.msra.mxu0 0.0
        %7479 = vmatprep.subr.mxu0 0.0
        %7480 = vmatpush1.msra.mxu0 0.0
        %7481 = vmatprep.subr.mxu0 0.0
        %7482 = vmatpush1.msra.mxu0 0.0
        %7483 = vmatprep.subr.mxu0 0.0
        %7484 = vmatpush1.msra.mxu0 0.0
        %7485 = vmatprep.subr.mxu0 0.0
        %7486 = vmatpush1.msra.mxu0 0.0
        %7487 = vmatprep.subr.mxu0 0.0
        %7488 = vmatpush1.msra.mxu0 0.0
        %7489 = vmatprep.subr.mxu0 0.0
        %7490 = vmatpush1.msra.mxu0 0.0
        %7491 = vmatprep.subr.mxu0 0.0
        %7492 = vmatpush1.msra.mxu0 0.0
        %7493 = vmatprep.subr.mxu0 0.0
        %7494 = vmatpush1.msra.mxu0 0.0
        %7495 = vmatprep.subr.mxu0 0.0
        %7496 = vmatpush1.msra.mxu0 0.0
        %7497 = vmatprep.subr.mxu0 0.0
        %7498 = vmatpush1.msra.mxu0 0.0
        %7499 = vmatprep.subr.mxu0 0.0
        %7500 = vmatpush1.msra.mxu0 %v6460
        %7501 = vmatprep.subr.mxu0 0.0
        %7502 = vmatpush2.msra.mxu0 0.0
        %7503 = vmatprep.subr.mxu0 0.0
        %7504 = vmatpush2.msra.mxu0 0.0
        %7505 = vmatprep.subr.mxu0 0.0
        %7506 = vmatpush2.msra.mxu0 0.0
        %7507 = vmatprep.subr.mxu0 0.0
        %7508 = vmatpush2.msra.mxu0 0.0
        %7509 = vmatprep.subr.mxu0 0.0
        %7510 = vmatpush2.msra.mxu0 0.0
        %7511 = vmatprep.subr.mxu0 0.0
        %7512 = vmatpush2.msra.mxu0 0.0
        %7513 = vmatprep.subr.mxu0 0.0
        %7514 = vmatpush2.msra.mxu0 0.0
        %7515 = vmatprep.subr.mxu0 0.0
        %7516 = vmatpush2.msra.mxu0 0.0
        %7517 = vmatprep.subr.mxu0 0.0
        %7518 = vmatpush2.msra.mxu0 0.0
        %7519 = vmatprep.subr.mxu0 0.0
        %7520 = vmatpush2.msra.mxu0 0.0
        %7521 = vmatprep.subr.mxu0 0.0
        %7522 = vmatpush2.msra.mxu0 0.0
        %7523 = vmatprep.subr.mxu0 0.0
        %7524 = vmatpush2.msra.mxu0 0.0
        %7525 = vmatprep.subr.mxu0 0.0
        %7526 = vmatpush2.msra.mxu0 0.0
        %7527 = vmatprep.subr.mxu0 0.0
        %7528 = vmatpush2.msra.mxu0 0.0
        %7529 = vmatprep.subr.mxu0 0.0
        %7530 = vmatpush2.msra.mxu0 0.0
        %7531 = vmatprep.subr.mxu0 0.0
        %7532 = vmatpush2.msra.mxu0 0.0
        %7533 = vmatprep.mubr.f32.mxu0 0.0
        %7534 = vmatmul.mubr.f32.gmra.mxu0 %v7446
        %v7535 = vpop.f32.mrf.mxu0
        %v7536 = vadd.f32 %v7278, %v7535
        %v7537 = vpop.f32.mrf.mxu0
        %7538 = vmatprep.mubr.f32.mxu0 0.0
        %7539 = vmatmul.mubr.f32.gmra.mxu0 %v7449
        %v7540 = vpop.f32.mrf.mxu0
        %v7541 = vadd.f32 %v7283, %v7540
        %v7542 = vpop.f32.mrf.mxu0
        %7543 = vmatprep.mubr.f32.mxu0 0.0
        %7544 = vmatmul.mubr.f32.gmra.mxu0 %v7452
        %v7545 = vpop.f32.mrf.mxu0
        %v7546 = vadd.f32 %v7288, %v7545
        %v7547 = vpop.f32.mrf.mxu0
        %7548 = vmatprep.mubr.f32.mxu0 0.0
        %7549 = vmatmul.mubr.f32.gmra.mxu0 %v7455
        %v7550 = vpop.f32.mrf.mxu0
        %v7551 = vadd.f32 %v7293, %v7550
        %v7552 = vpop.f32.mrf.mxu0
        %7553 = vmatprep.mubr.f32.mxu0 0.0
        %7554 = vmatmul.mubr.f32.gmra.mxu0 %v7458
        %v7555 = vpop.f32.mrf.mxu0
        %v7556 = vadd.f32 %v7298, %v7555
        %v7557 = vpop.f32.mrf.mxu0
        %7558 = vmatprep.mubr.f32.mxu0 0.0
        %7559 = vmatmul.mubr.f32.gmra.mxu0 %v7461
        %v7560 = vpop.f32.mrf.mxu0
        %v7561 = vadd.f32 %v7303, %v7560
        %v7562 = vpop.f32.mrf.mxu0
        %7563 = vmatprep.mubr.f32.mxu0 0.0
        %7564 = vmatmul.mubr.f32.gmra.mxu0 %v7464
        %v7565 = vpop.f32.mrf.mxu0
        %v7566 = vadd.f32 %v7308, %v7565
        %v7567 = vpop.f32.mrf.mxu0
        %7568 = vmatprep.mubr.f32.mxu0 0.0
        %7569 = vmatmul.mubr.f32.gmra.mxu0 %v7467
        %v7570 = vpop.f32.mrf.mxu0
        %v7571 = vadd.f32 %v7313, %v7570
        %v7572 = vpop.f32.mrf.mxu0
        %7573 = vdwg.mxu0
        %v7574 = vadd.f32 %v7407, %v7536
        %v7575 = vadd.f32 %v7412, %v7541
        %v7576 = vadd.f32 %v7417, %v7546
        %v7577 = vadd.f32 %v7422, %v7551
        %v7578 = vadd.f32 %v7427, %v7556
        %v7579 = vadd.f32 %v7432, %v7561
        %v7580 = vadd.f32 %v7437, %v7566
        %v7581 = vadd.f32 %v7442, %v7571
        %v7582 = vld [vmem:[%s9] sm:$0x7]
        %v7583 = vadd.f32 %v4101, %v7574
        %v7584 = vadd.f32 %v4102, %v7575
        %v7585 = vadd.f32 %v4103, %v7576
        %v7586 = vadd.f32 %v4104, %v7577
        %v7587 = vadd.f32 %v4105, %v7578
        %v7588 = vadd.f32 %v4106, %v7579
        %v7589 = vadd.f32 %v4107, %v7580
        %v7590 = vadd.f32 %v4108, %v7581
        %v7591 = vlaneseq
        %v7592 = vshrl.u32 %v7591, 7
        %v7593 = vsub.s32 0, %v7592
        %v7594 = vrot.slane %v7582, %v7593
        %v7595 = vadd.f32 %v7583, %v7594
        %v7596 = vadd.f32 %v7584, %v7594
        %v7597 = vadd.f32 %v7585, %v7594
        %v7598 = vadd.f32 %v7586, %v7594
        %v7599 = vadd.f32 %v7587, %v7594
        %v7600 = vadd.f32 %v7588, %v7594
        %v7601 = vadd.f32 %v7589, %v7594
        %v7602 = vadd.f32 %v7590, %v7594
        %v7603 = vsel %vm518, %v7595, 0.0
        %7604 = vadd.xlane.f32.xlu0 %v7603
        %v7605 = vpop.xlane.xlu0 %7604
        %v7606 = vsel %vm518, %v7596, 0.0
        %7607 = vadd.xlane.f32.xlu0 %v7606
        %v7608 = vpop.xlane.xlu0 %7607
        %v7609 = vsel %vm518, %v7597, 0.0
        %7610 = vadd.xlane.f32.xlu0 %v7609
        %v7611 = vpop.xlane.xlu0 %7610
        %v7612 = vsel %vm518, %v7598, 0.0
        %7613 = vadd.xlane.f32.xlu0 %v7612
        %v7614 = vpop.xlane.xlu0 %7613
        %v7615 = vsel %vm518, %v7599, 0.0
        %7616 = vadd.xlane.f32.xlu0 %v7615
        %v7617 = vpop.xlane.xlu0 %7616
        %v7618 = vsel %vm518, %v7600, 0.0
        %7619 = vadd.xlane.f32.xlu0 %v7618
        %v7620 = vpop.xlane.xlu0 %7619
        %v7621 = vsel %vm518, %v7601, 0.0
        %7622 = vadd.xlane.f32.xlu0 %v7621
        %v7623 = vpop.xlane.xlu0 %7622
        %v7624 = vsel %vm518, %v7602, 0.0
        %7625 = vadd.xlane.f32.xlu0 %v7624
        %v7626 = vpop.xlane.xlu0 %7625
        %v7627 = vmul.f32 %v7605, %v4004
        %v7628 = vmul.f32 %v7608, %v4004
        %v7629 = vmul.f32 %v7611, %v4004
        %v7630 = vmul.f32 %v7614, %v4004
        %v7631 = vmul.f32 %v7617, %v4004
        %v7632 = vmul.f32 %v7620, %v4004
        %v7633 = vmul.f32 %v7623, %v4004
        %v7634 = vmul.f32 %v7626, %v4004
        %v7635 = vsub.f32 %v7595, %v7627
        %v7636 = vsub.f32 %v7596, %v7628
        %v7637 = vsub.f32 %v7597, %v7629
        %v7638 = vsub.f32 %v7598, %v7630
        %v7639 = vsub.f32 %v7599, %v7631
        %v7640 = vsub.f32 %v7600, %v7632
        %v7641 = vsub.f32 %v7601, %v7633
        %v7642 = vsub.f32 %v7602, %v7634
        %v7643 = vmul.f32 %v7635, %v7635
        %v7644 = vmul.f32 %v7636, %v7636
        %v7645 = vmul.f32 %v7637, %v7637
        %v7646 = vmul.f32 %v7638, %v7638
        %v7647 = vmul.f32 %v7639, %v7639
        %v7648 = vmul.f32 %v7640, %v7640
        %v7649 = vmul.f32 %v7641, %v7641
        %v7650 = vmul.f32 %v7642, %v7642
        %v7651 = vsel %vm518, %v7643, 0.0
        %7652 = vadd.xlane.f32.xlu0 %v7651
        %v7653 = vpop.xlane.xlu0 %7652
        %v7654 = vsel %vm518, %v7644, 0.0
        %7655 = vadd.xlane.f32.xlu0 %v7654
        %v7656 = vpop.xlane.xlu0 %7655
        %v7657 = vsel %vm518, %v7645, 0.0
        %7658 = vadd.xlane.f32.xlu0 %v7657
        %v7659 = vpop.xlane.xlu0 %7658
        %v7660 = vsel %vm518, %v7646, 0.0
        %7661 = vadd.xlane.f32.xlu0 %v7660
        %v7662 = vpop.xlane.xlu0 %7661
        %v7663 = vsel %vm518, %v7647, 0.0
        %7664 = vadd.xlane.f32.xlu0 %v7663
        %v7665 = vpop.xlane.xlu0 %7664
        %v7666 = vsel %vm518, %v7648, 0.0
        %7667 = vadd.xlane.f32.xlu0 %v7666
        %v7668 = vpop.xlane.xlu0 %7667
        %v7669 = vsel %vm518, %v7649, 0.0
        %7670 = vadd.xlane.f32.xlu0 %v7669
        %v7671 = vpop.xlane.xlu0 %7670
        %v7672 = vsel %vm518, %v7650, 0.0
        %7673 = vadd.xlane.f32.xlu0 %v7672
        %v7674 = vpop.xlane.xlu0 %7673
        %v7675 = vmul.f32 %v7653, %v4004
        %v7676 = vmul.f32 %v7656, %v4004
        %v7677 = vmul.f32 %v7659, %v4004
        %v7678 = vmul.f32 %v7662, %v4004
        %v7679 = vmul.f32 %v7665, %v4004
        %v7680 = vmul.f32 %v7668, %v4004
        %v7681 = vmul.f32 %v7671, %v4004
        %v7682 = vmul.f32 %v7674, %v4004
        %v7683 = vadd.f32 %v7675, 1e-05
        %v7684 = vadd.f32 %v7676, 1e-05
        %v7685 = vadd.f32 %v7677, 1e-05
        %v7686 = vadd.f32 %v7678, 1e-05
        %v7687 = vadd.f32 %v7679, 1e-05
        %v7688 = vadd.f32 %v7680, 1e-05
        %v7689 = vadd.f32 %v7681, 1e-05
        %v7690 = vadd.f32 %v7682, 1e-05
        %v7691 = vrsqrt.pop %v7683
        %v7692 = vrsqrt.pop %v7684
        %v7693 = vrsqrt.pop %v7685
        %v7694 = vrsqrt.pop %v7686
        %v7695 = vrsqrt.pop %v7687
        %v7696 = vrsqrt.pop %v7688
        %v7697 = vrsqrt.pop %v7689
        %v7698 = vrsqrt.pop %v7690
        %v7699 = vmul.f32 %v7635, %v7691
        %v7700 = vmul.f32 %v7636, %v7692
        %v7701 = vmul.f32 %v7637, %v7693
        %v7702 = vmul.f32 %v7638, %v7694
        %v7703 = vmul.f32 %v7639, %v7695
        %v7704 = vmul.f32 %v7640, %v7696
        %v7705 = vmul.f32 %v7641, %v7697
        %v7706 = vmul.f32 %v7642, %v7698
        %v7707 = vlaneseq
        %v7708 = vshrl.u32 %v7707, 7
        %v7709 = vsub.s32 1, %v7708
        %v7710 = vrot.slane %v7582, %v7709
        %v7711 = vmul.f32 %v7699, %v7710
        %v7712 = vmul.f32 %v7700, %v7710
        %v7713 = vmul.f32 %v7701, %v7710
        %v7714 = vmul.f32 %v7702, %v7710
        %v7715 = vmul.f32 %v7703, %v7710
        %v7716 = vmul.f32 %v7704, %v7710
        %v7717 = vmul.f32 %v7705, %v7710
        %v7718 = vmul.f32 %v7706, %v7710
        %v7719 = vlaneseq
        %v7720 = vshrl.u32 %v7719, 7
        %v7721 = vsub.s32 2, %v7720
        %v7722 = vrot.slane %v7582, %v7721
        %v7723 = vadd.f32 %v7711, %v7722
        %v7724 = vadd.f32 %v7712, %v7722
        %v7725 = vadd.f32 %v7713, %v7722
        %v7726 = vadd.f32 %v7714, %v7722
        %v7727 = vadd.f32 %v7715, %v7722
        %v7728 = vadd.f32 %v7716, %v7722
        %v7729 = vadd.f32 %v7717, %v7722
        %v7730 = vadd.f32 %v7718, %v7722
        %v7731 = vld [vmem:[%s10] sm:$0xff]
        %v7732 = vld [vmem:[%s10 + $0x8] sm:$0xff]
        %v7733 = vld [vmem:[%s10 + $0x10] sm:$0xff]
        %v7734 = vld [vmem:[%s10 + $0x18] sm:$0xff]
        %v7735 = vld [vmem:[%s11] sm:$0x1]
        %v7737 = vlaneseq
        %v7738 = vshrl.u32 %v7737, 7
        %v7739 = vsub.s32 0, %v7738
        %v7740 = vrot.slane %v7735, %v7739
        %v7743 = vsel %vm518, %v7723, 0
        %v7746 = vsel %vm518, %v7724, 0
        %v7749 = vsel %vm518, %v7725, 0
        %v7752 = vsel %vm518, %v7726, 0
        %v7755 = vsel %vm518, %v7727, 0
        %v7758 = vsel %vm518, %v7728, 0
        %v7761 = vsel %vm518, %v7729, 0
        %v7764 = vsel %vm518, %v7730, 0
        %7766 = vmatprep.subr.mxu0 0.0
        %7767 = vmatpush1.msra.mxu0 0.0
        %7768 = vmatprep.subr.mxu0 0.0
        %7769 = vmatpush1.msra.mxu0 0.0
        %7770 = vmatprep.subr.mxu0 0.0
        %7771 = vmatpush1.msra.mxu0 0.0
        %7772 = vmatprep.subr.mxu0 0.0
        %7773 = vmatpush1.msra.mxu0 0.0
        %7774 = vmatprep.subr.mxu0 0.0
        %7775 = vmatpush1.msra.mxu0 0.0
        %7776 = vmatprep.subr.mxu0 0.0
        %7777 = vmatpush1.msra.mxu0 0.0
        %7778 = vmatprep.subr.mxu0 0.0
        %7779 = vmatpush1.msra.mxu0 0.0
        %7780 = vmatprep.subr.mxu0 0.0
        %7781 = vmatpush1.msra.mxu0 0.0
        %7782 = vmatprep.subr.mxu0 0.0
        %7783 = vmatpush1.msra.mxu0 0.0
        %7784 = vmatprep.subr.mxu0 0.0
        %7785 = vmatpush1.msra.mxu0 0.0
        %7786 = vmatprep.subr.mxu0 0.0
        %7787 = vmatpush1.msra.mxu0 0.0
        %7788 = vmatprep.subr.mxu0 0.0
        %7789 = vmatpush1.msra.mxu0 0.0
        %7790 = vmatprep.subr.mxu0 0.0
        %7791 = vmatpush1.msra.mxu0 %v7734
        %7792 = vmatprep.subr.mxu0 0.0
        %7793 = vmatpush1.msra.mxu0 %v7733
        %7794 = vmatprep.subr.mxu0 0.0
        %7795 = vmatpush1.msra.mxu0 %v7732
        %7796 = vmatprep.subr.mxu0 0.0
        %7797 = vmatpush1.msra.mxu0 %v7731
        %7798 = vmatprep.subr.mxu0 0.0
        %7799 = vmatpush2.msra.mxu0 0.0
        %7800 = vmatprep.subr.mxu0 0.0
        %7801 = vmatpush2.msra.mxu0 0.0
        %7802 = vmatprep.subr.mxu0 0.0
        %7803 = vmatpush2.msra.mxu0 0.0
        %7804 = vmatprep.subr.mxu0 0.0
        %7805 = vmatpush2.msra.mxu0 0.0
        %7806 = vmatprep.subr.mxu0 0.0
        %7807 = vmatpush2.msra.mxu0 0.0
        %7808 = vmatprep.subr.mxu0 0.0
        %7809 = vmatpush2.msra.mxu0 0.0
        %7810 = vmatprep.subr.mxu0 0.0
        %7811 = vmatpush2.msra.mxu0 0.0
        %7812 = vmatprep.subr.mxu0 0.0
        %7813 = vmatpush2.msra.mxu0 0.0
        %7814 = vmatprep.subr.mxu0 0.0
        %7815 = vmatpush2.msra.mxu0 0.0
        %7816 = vmatprep.subr.mxu0 0.0
        %7817 = vmatpush2.msra.mxu0 0.0
        %7818 = vmatprep.subr.mxu0 0.0
        %7819 = vmatpush2.msra.mxu0 0.0
        %7820 = vmatprep.subr.mxu0 0.0
        %7821 = vmatpush2.msra.mxu0 0.0
        %7822 = vmatprep.subr.mxu0 0.0
        %7823 = vmatpush2.msra.mxu0 0.0
        %7824 = vmatprep.subr.mxu0 0.0
        %7825 = vmatpush2.msra.mxu0 0.0
        %7826 = vmatprep.subr.mxu0 0.0
        %7827 = vmatpush2.msra.mxu0 0.0
        %7828 = vmatprep.subr.mxu0 0.0
        %7829 = vmatpush2.msra.mxu0 0.0
        %7830 = vmatprep.mubr.f32.mxu0 0.0
        %7831 = vmatmul.mubr.f32.gmra.mxu0 %v7743
        %v7832 = vpop.f32.mrf.mxu0
        %v7833 = vadd.f32 %v7740, %v7832
        %v7834 = vpop.f32.mrf.mxu0
        %7835 = vmatprep.mubr.f32.mxu0 0.0
        %7836 = vmatmul.mubr.f32.gmra.mxu0 %v7746
        %v7837 = vpop.f32.mrf.mxu0
        %v7838 = vadd.f32 %v7740, %v7837
        %v7839 = vpop.f32.mrf.mxu0
        %7840 = vmatprep.mubr.f32.mxu0 0.0
        %7841 = vmatmul.mubr.f32.gmra.mxu0 %v7749
        %v7842 = vpop.f32.mrf.mxu0
        %v7843 = vadd.f32 %v7740, %v7842
        %v7844 = vpop.f32.mrf.mxu0
        %7845 = vmatprep.mubr.f32.mxu0 0.0
        %7846 = vmatmul.mubr.f32.gmra.mxu0 %v7752
        %v7847 = vpop.f32.mrf.mxu0
        %v7848 = vadd.f32 %v7740, %v7847
        %v7849 = vpop.f32.mrf.mxu0
        %7850 = vmatprep.mubr.f32.mxu0 0.0
        %7851 = vmatmul.mubr.f32.gmra.mxu0 %v7755
        %v7852 = vpop.f32.mrf.mxu0
        %v7853 = vadd.f32 %v7740, %v7852
        %v7854 = vpop.f32.mrf.mxu0
        %7855 = vmatprep.mubr.f32.mxu0 0.0
        %7856 = vmatmul.mubr.f32.gmra.mxu0 %v7758
        %v7857 = vpop.f32.mrf.mxu0
        %v7858 = vadd.f32 %v7740, %v7857
        %v7859 = vpop.f32.mrf.mxu0
        %7860 = vmatprep.mubr.f32.mxu0 0.0
        %7861 = vmatmul.mubr.f32.gmra.mxu0 %v7761
        %v7862 = vpop.f32.mrf.mxu0
        %v7863 = vadd.f32 %v7740, %v7862
        %v7864 = vpop.f32.mrf.mxu0
        %7865 = vmatprep.mubr.f32.mxu0 0.0
        %7866 = vmatmul.mubr.f32.gmra.mxu0 %v7764
        %v7867 = vpop.f32.mrf.mxu0
        %v7868 = vadd.f32 %v7740, %v7867
        %v7869 = vpop.f32.mrf.mxu0
        %7870 = vdwg.mxu0
        %v7871 = vmax.f32 %v7833, 0.0
        %v7872 = vmax.f32 %v7838, 0.0
        %v7873 = vmax.f32 %v7843, 0.0
        %v7874 = vmax.f32 %v7848, 0.0
        %v7875 = vmax.f32 %v7853, 0.0
        %v7876 = vmax.f32 %v7858, 0.0
        %v7877 = vmax.f32 %v7863, 0.0
        %v7878 = vmax.f32 %v7868, 0.0
        %v7879 = vld [vmem:[%s13] sm:$0x7]
        %v7880 = vld [vmem:[%s12] sm:$0xff]
        %v7881 = vld [vmem:[%s12 + $0x8] sm:$0xff]
        %v7882 = vld [vmem:[%s12 + $0x10] sm:$0xff]
        %v7883 = vld [vmem:[%s12 + $0x18] sm:$0xff]
        %v7884 = vld [vmem:[%s12 + $0x20] sm:$0xff]
        %v7885 = vld [vmem:[%s12 + $0x28] sm:$0xff]
        %v7886 = vld [vmem:[%s12 + $0x30] sm:$0xff]
        %v7887 = vld [vmem:[%s12 + $0x38] sm:$0xff]
        %v7888 = vlaneseq
        %v7889 = vshrl.u32 %v7888, 7
        %v7890 = vsub.s32 0, %v7889
        %v7891 = vrot.slane %v7879, %v7890
        %v7893 = vsel %vm1038, %v7871, 0
        %v7896 = vsel %vm1038, %v7872, 0
        %v7899 = vsel %vm1038, %v7873, 0
        %v7902 = vsel %vm1038, %v7874, 0
        %v7905 = vsel %vm1038, %v7875, 0
        %v7908 = vsel %vm1038, %v7876, 0
        %v7911 = vsel %vm1038, %v7877, 0
        %v7914 = vsel %vm1038, %v7878, 0
        %7916 = vmatprep.subr.mxu0 0.0
        %7917 = vmatpush1.msra.mxu0 0.0
        %7918 = vmatprep.subr.mxu0 0.0
        %7919 = vmatpush1.msra.mxu0 0.0
        %7920 = vmatprep.subr.mxu0 0.0
        %7921 = vmatpush1.msra.mxu0 0.0
        %7922 = vmatprep.subr.mxu0 0.0
        %7923 = vmatpush1.msra.mxu0 0.0
        %7924 = vmatprep.subr.mxu0 0.0
        %7925 = vmatpush1.msra.mxu0 0.0
        %7926 = vmatprep.subr.mxu0 0.0
        %7927 = vmatpush1.msra.mxu0 0.0
        %7928 = vmatprep.subr.mxu0 0.0
        %7929 = vmatpush1.msra.mxu0 0.0
        %7930 = vmatprep.subr.mxu0 0.0
        %7931 = vmatpush1.msra.mxu0 0.0
        %7932 = vmatprep.subr.mxu0 0.0
        %7933 = vmatpush1.msra.mxu0 %v7887
        %7934 = vmatprep.subr.mxu0 0.0
        %7935 = vmatpush1.msra.mxu0 %v7886
        %7936 = vmatprep.subr.mxu0 0.0
        %7937 = vmatpush1.msra.mxu0 %v7885
        %7938 = vmatprep.subr.mxu0 0.0
        %7939 = vmatpush1.msra.mxu0 %v7884
        %7940 = vmatprep.subr.mxu0 0.0
        %7941 = vmatpush1.msra.mxu0 %v7883
        %7942 = vmatprep.subr.mxu0 0.0
        %7943 = vmatpush1.msra.mxu0 %v7882
        %7944 = vmatprep.subr.mxu0 0.0
        %7945 = vmatpush1.msra.mxu0 %v7881
        %7946 = vmatprep.subr.mxu0 0.0
        %7947 = vmatpush1.msra.mxu0 %v7880
        %7948 = vmatprep.subr.mxu0 0.0
        %7949 = vmatpush2.msra.mxu0 0.0
        %7950 = vmatprep.subr.mxu0 0.0
        %7951 = vmatpush2.msra.mxu0 0.0
        %7952 = vmatprep.subr.mxu0 0.0
        %7953 = vmatpush2.msra.mxu0 0.0
        %7954 = vmatprep.subr.mxu0 0.0
        %7955 = vmatpush2.msra.mxu0 0.0
        %7956 = vmatprep.subr.mxu0 0.0
        %7957 = vmatpush2.msra.mxu0 0.0
        %7958 = vmatprep.subr.mxu0 0.0
        %7959 = vmatpush2.msra.mxu0 0.0
        %7960 = vmatprep.subr.mxu0 0.0
        %7961 = vmatpush2.msra.mxu0 0.0
        %7962 = vmatprep.subr.mxu0 0.0
        %7963 = vmatpush2.msra.mxu0 0.0
        %7964 = vmatprep.subr.mxu0 0.0
        %7965 = vmatpush2.msra.mxu0 0.0
        %7966 = vmatprep.subr.mxu0 0.0
        %7967 = vmatpush2.msra.mxu0 0.0
        %7968 = vmatprep.subr.mxu0 0.0
        %7969 = vmatpush2.msra.mxu0 0.0
        %7970 = vmatprep.subr.mxu0 0.0
        %7971 = vmatpush2.msra.mxu0 0.0
        %7972 = vmatprep.subr.mxu0 0.0
        %7973 = vmatpush2.msra.mxu0 0.0
        %7974 = vmatprep.subr.mxu0 0.0
        %7975 = vmatpush2.msra.mxu0 0.0
        %7976 = vmatprep.subr.mxu0 0.0
        %7977 = vmatpush2.msra.mxu0 0.0
        %7978 = vmatprep.subr.mxu0 0.0
        %7979 = vmatpush2.msra.mxu0 0.0
        %7980 = vmatprep.mubr.f32.mxu0 0.0
        %7981 = vmatmul.mubr.f32.gmra.mxu0 %v7893
        %v7982 = vpop.f32.mrf.mxu0
        %v7983 = vadd.f32 %v7891, %v7982
        %v7984 = vpop.f32.mrf.mxu0
        %7985 = vmatprep.mubr.f32.mxu0 0.0
        %7986 = vmatmul.mubr.f32.gmra.mxu0 %v7896
        %v7987 = vpop.f32.mrf.mxu0
        %v7988 = vadd.f32 %v7891, %v7987
        %v7989 = vpop.f32.mrf.mxu0
        %7990 = vmatprep.mubr.f32.mxu0 0.0
        %7991 = vmatmul.mubr.f32.gmra.mxu0 %v7899
        %v7992 = vpop.f32.mrf.mxu0
        %v7993 = vadd.f32 %v7891, %v7992
        %v7994 = vpop.f32.mrf.mxu0
        %7995 = vmatprep.mubr.f32.mxu0 0.0
        %7996 = vmatmul.mubr.f32.gmra.mxu0 %v7902
        %v7997 = vpop.f32.mrf.mxu0
        %v7998 = vadd.f32 %v7891, %v7997
        %v7999 = vpop.f32.mrf.mxu0
        %8000 = vmatprep.mubr.f32.mxu0 0.0
        %8001 = vmatmul.mubr.f32.gmra.mxu0 %v7905
        %v8002 = vpop.f32.mrf.mxu0
        %v8003 = vadd.f32 %v7891, %v8002
        %v8004 = vpop.f32.mrf.mxu0
        %8005 = vmatprep.mubr.f32.mxu0 0.0
        %8006 = vmatmul.mubr.f32.gmra.mxu0 %v7908
        %v8007 = vpop.f32.mrf.mxu0
        %v8008 = vadd.f32 %v7891, %v8007
        %v8009 = vpop.f32.mrf.mxu0
        %8010 = vmatprep.mubr.f32.mxu0 0.0
        %8011 = vmatmul.mubr.f32.gmra.mxu0 %v7911
        %v8012 = vpop.f32.mrf.mxu0
        %v8013 = vadd.f32 %v7891, %v8012
        %v8014 = vpop.f32.mrf.mxu0
        %8015 = vmatprep.mubr.f32.mxu0 0.0
        %8016 = vmatmul.mubr.f32.gmra.mxu0 %v7914
        %v8017 = vpop.f32.mrf.mxu0
        %v8018 = vadd.f32 %v7891, %v8017
        %v8019 = vpop.f32.mrf.mxu0
        %8020 = vdwg.mxu0
        %v8021 = vadd.f32 %v7723, %v7983
        %v8022 = vadd.f32 %v7724, %v7988
        %v8023 = vadd.f32 %v7725, %v7993
        %v8024 = vadd.f32 %v7726, %v7998
        %v8025 = vadd.f32 %v7727, %v8003
        %v8026 = vadd.f32 %v7728, %v8008
        %v8027 = vadd.f32 %v7729, %v8013
        %v8028 = vadd.f32 %v7730, %v8018
        %v8029 = vsel %vm518, %v8021, 0.0
        %8030 = vadd.xlane.f32.xlu0 %v8029
        %v8031 = vpop.xlane.xlu0 %8030
        %v8032 = vsel %vm518, %v8022, 0.0
        %8033 = vadd.xlane.f32.xlu0 %v8032
        %v8034 = vpop.xlane.xlu0 %8033
        %v8035 = vsel %vm518, %v8023, 0.0
        %8036 = vadd.xlane.f32.xlu0 %v8035
        %v8037 = vpop.xlane.xlu0 %8036
        %v8038 = vsel %vm518, %v8024, 0.0
        %8039 = vadd.xlane.f32.xlu0 %v8038
        %v8040 = vpop.xlane.xlu0 %8039
        %v8041 = vsel %vm518, %v8025, 0.0
        %8042 = vadd.xlane.f32.xlu0 %v8041
        %v8043 = vpop.xlane.xlu0 %8042
        %v8044 = vsel %vm518, %v8026, 0.0
        %8045 = vadd.xlane.f32.xlu0 %v8044
        %v8046 = vpop.xlane.xlu0 %8045
        %v8047 = vsel %vm518, %v8027, 0.0
        %8048 = vadd.xlane.f32.xlu0 %v8047
        %v8049 = vpop.xlane.xlu0 %8048
        %v8050 = vsel %vm518, %v8028, 0.0
        %8051 = vadd.xlane.f32.xlu0 %v8050
        %v8052 = vpop.xlane.xlu0 %8051
        %v8053 = vmul.f32 %v8031, %v4004
        %v8054 = vmul.f32 %v8034, %v4004
        %v8055 = vmul.f32 %v8037, %v4004
        %v8056 = vmul.f32 %v8040, %v4004
        %v8057 = vmul.f32 %v8043, %v4004
        %v8058 = vmul.f32 %v8046, %v4004
        %v8059 = vmul.f32 %v8049, %v4004
        %v8060 = vmul.f32 %v8052, %v4004
        %v8061 = vsub.f32 %v8021, %v8053
        %v8062 = vsub.f32 %v8022, %v8054
        %v8063 = vsub.f32 %v8023, %v8055
        %v8064 = vsub.f32 %v8024, %v8056
        %v8065 = vsub.f32 %v8025, %v8057
        %v8066 = vsub.f32 %v8026, %v8058
        %v8067 = vsub.f32 %v8027, %v8059
        %v8068 = vsub.f32 %v8028, %v8060
        %v8069 = vmul.f32 %v8061, %v8061
        %v8070 = vmul.f32 %v8062, %v8062
        %v8071 = vmul.f32 %v8063, %v8063
        %v8072 = vmul.f32 %v8064, %v8064
        %v8073 = vmul.f32 %v8065, %v8065
        %v8074 = vmul.f32 %v8066, %v8066
        %v8075 = vmul.f32 %v8067, %v8067
        %v8076 = vmul.f32 %v8068, %v8068
        %v8077 = vsel %vm518, %v8069, 0.0
        %8078 = vadd.xlane.f32.xlu0 %v8077
        %v8079 = vpop.xlane.xlu0 %8078
        %v8080 = vsel %vm518, %v8070, 0.0
        %8081 = vadd.xlane.f32.xlu0 %v8080
        %v8082 = vpop.xlane.xlu0 %8081
        %v8083 = vsel %vm518, %v8071, 0.0
        %8084 = vadd.xlane.f32.xlu0 %v8083
        %v8085 = vpop.xlane.xlu0 %8084
        %v8086 = vsel %vm518, %v8072, 0.0
        %8087 = vadd.xlane.f32.xlu0 %v8086
        %v8088 = vpop.xlane.xlu0 %8087
        %v8089 = vsel %vm518, %v8073, 0.0
        %8090 = vadd.xlane.f32.xlu0 %v8089
        %v8091 = vpop.xlane.xlu0 %8090
        %v8092 = vsel %vm518, %v8074, 0.0
        %8093 = vadd.xlane.f32.xlu0 %v8092
        %v8094 = vpop.xlane.xlu0 %8093
        %v8095 = vsel %vm518, %v8075, 0.0
        %8096 = vadd.xlane.f32.xlu0 %v8095
        %v8097 = vpop.xlane.xlu0 %8096
        %v8098 = vsel %vm518, %v8076, 0.0
        %8099 = vadd.xlane.f32.xlu0 %v8098
        %v8100 = vpop.xlane.xlu0 %8099
        %v8101 = vmul.f32 %v8079, %v4004
        %v8102 = vmul.f32 %v8082, %v4004
        %v8103 = vmul.f32 %v8085, %v4004
        %v8104 = vmul.f32 %v8088, %v4004
        %v8105 = vmul.f32 %v8091, %v4004
        %v8106 = vmul.f32 %v8094, %v4004
        %v8107 = vmul.f32 %v8097, %v4004
        %v8108 = vmul.f32 %v8100, %v4004
        %v8109 = vadd.f32 %v8101, 1e-05
        %v8110 = vadd.f32 %v8102, 1e-05
        %v8111 = vadd.f32 %v8103, 1e-05
        %v8112 = vadd.f32 %v8104, 1e-05
        %v8113 = vadd.f32 %v8105, 1e-05
        %v8114 = vadd.f32 %v8106, 1e-05
        %v8115 = vadd.f32 %v8107, 1e-05
        %v8116 = vadd.f32 %v8108, 1e-05
        %v8117 = vrsqrt.pop %v8109
        %v8118 = vrsqrt.pop %v8110
        %v8119 = vrsqrt.pop %v8111
        %v8120 = vrsqrt.pop %v8112
        %v8121 = vrsqrt.pop %v8113
        %v8122 = vrsqrt.pop %v8114
        %v8123 = vrsqrt.pop %v8115
        %v8124 = vrsqrt.pop %v8116
        %v8125 = vmul.f32 %v8061, %v8117
        %v8126 = vmul.f32 %v8062, %v8118
        %v8127 = vmul.f32 %v8063, %v8119
        %v8128 = vmul.f32 %v8064, %v8120
        %v8129 = vmul.f32 %v8065, %v8121
        %v8130 = vmul.f32 %v8066, %v8122
        %v8131 = vmul.f32 %v8067, %v8123
        %v8132 = vmul.f32 %v8068, %v8124
        %v8133 = vlaneseq
        %v8134 = vshrl.u32 %v8133, 7
        %v8135 = vsub.s32 1, %v8134
        %v8136 = vrot.slane %v7879, %v8135
        %v8137 = vmul.f32 %v8125, %v8136
        %v8138 = vmul.f32 %v8126, %v8136
        %v8139 = vmul.f32 %v8127, %v8136
        %v8140 = vmul.f32 %v8128, %v8136
        %v8141 = vmul.f32 %v8129, %v8136
        %v8142 = vmul.f32 %v8130, %v8136
        %v8143 = vmul.f32 %v8131, %v8136
        %v8144 = vmul.f32 %v8132, %v8136
        %v8145 = vlaneseq
        %v8146 = vshrl.u32 %v8145, 7
        %v8147 = vsub.s32 2, %v8146
        %v8148 = vrot.slane %v7879, %v8147
        %v8149 = vadd.f32 %v8137, %v8148
        %v8150 = vadd.f32 %v8138, %v8148
        %v8151 = vadd.f32 %v8139, %v8148
        %v8152 = vadd.f32 %v8140, %v8148
        %v8153 = vadd.f32 %v8141, %v8148
        %v8154 = vadd.f32 %v8142, %v8148
        %v8155 = vadd.f32 %v8143, %v8148
        %v8156 = vadd.f32 %v8144, %v8148
        %8157 = vst.msk [vmem:[%s477] sm:$0xff] %vm518, %v8149
        %8158 = vst.msk [vmem:[%s477 + $0x8] sm:$0xff] %vm518, %v8150
        %8159 = vst.msk [vmem:[%s477 + $0x10] sm:$0xff] %vm518, %v8151
        %8160 = vst.msk [vmem:[%s477 + $0x18] sm:$0xff] %vm518, %v8152
        %8161 = vst.msk [vmem:[%s477 + $0x20] sm:$0xff] %vm518, %v8153
        %8162 = vst.msk [vmem:[%s477 + $0x28] sm:$0xff] %vm518, %v8154
        %8163 = vst.msk [vmem:[%s477 + $0x30] sm:$0xff] %vm518, %v8155
        %8164 = vst.msk [vmem:[%s477 + $0x38] sm:$0xff] %vm518, %v8156
        %s8165 = sand.u32 %s340, 1
        %s8166 = scalar_lea.sflag [#allocation3], %s8165
        %s8167 = sand.u32 %s340, 1
        %s8168 = smul.addr %s8167, 64
        %s8169 = scalar_lea.vmem [#allocation2], %s8168
        // Predicated region
        $region77: #{mask_guide_attention.1} parent=75 // pred_check
          %p8170 = pneg %p350
        $region78: #{mask_guide_attention.1} parent=75 // pred_check_branch
          %8172 = sbr.rel (%p8170) target = $region80
        $region79: #{mask_guide_attention.1} parent=75 // pred_region
          %s8173 = smul.u32 8, %s28
          %s8175 = ssub.s32 1024, 1024
          %8176 = vsyncadd %s8166, %s8175
          %s8177 = smul.addr %s8173, 128
          %s8178 = scalar_lea.hbm %s14, %s8177
          %s8179 = sshll.u32 %s8169, 4
          %s8180 = int_to_ptr.vmem [resolvable:$true] %s8179
          %8185 = dma.vmem_to_hbm [thread:$0]  %s8180, 1024, %s8178, %s8166, 128, 128, 8
        $region80: #{mask_guide_attention.1} parent=75 // pred_fallthru
          _
      $region76: #{mask_guide_attention.1} parent=5 // pred_fallthru
        _
      %p8186 = scmp.le.s32.totalorder 2, %s23
      // Predicated region
      $region81: #{mask_guide_attention.1} parent=5 // pred_check
        %p8187 = pneg %p8186
      $region82: #{mask_guide_attention.1} parent=5 // pred_check_branch
        %8189 = sbr.rel (%p8187) target = $region84
      $region83: #{mask_guide_attention.1} parent=5 // pred_region
        %s8190 = ssub.s32 %s23, 2
        // Predicated region
        $region85: #{mask_guide_attention.1} parent=83 // pred_check
          %p8191 = pneg %p356
        $region86: #{mask_guide_attention.1} parent=83 // pred_check_branch
          %8193 = sbr.rel (%p8191) target = $region88
        $region87: #{mask_guide_attention.1} parent=83 // pred_region
          %s8194 = sand.u32 %s341, 1
          %s8195 = scalar_lea.sflag [#allocation3], %s8194
          %s8196 = sand.u32 %s341, 1
          %s8197 = smul.addr %s8196, 64
          %s8198 = scalar_lea.vmem [#allocation2], %s8197
          %8199 = dma.done %s8195, 1024
        $region88: #{mask_guide_attention.1} parent=83 // pred_fallthru
          _
      $region84: #{mask_guide_attention.1} parent=5 // pred_fallthru
        _
    $region6: #{mask_guide_attention.1} parent=1 // loop_footer
      %s27 = sadd.s32 1, %s23
    $region7: #{mask_guide_attention.1} parent=1 // loop_footer_branch
      %22 = sbr.rel target = $region3
    $region8: #{mask_guide_attention.1} parent=1 // loop_exit
      _
    %8200 = vsyncpa [#allocation3], 1
    %s8201 = scalar_lea.sflag [#allocation3], 1
    %8202 = vsyncpa %s8201, 1

</llo_original>
